<compile_context>
chip_gen: v5e
topology: v5e:2x2
jax: 0.10.0
libtpu: 0.0.40
codegen_flags: <defaults>
</compile_context>

<pallas_src>
import functools
import math

import jax
import jax.numpy as jnp
from jax.experimental import pallas as pl
from jax.experimental.pallas import tpu as pltpu


def _round_up(v, m):
    return ((v + m - 1) // m) * m


def _conv1d_kernel(*refs, axis, k, pad, has_add):
    """One (k,1) or (1,k) conv tile: sum over taps of [rows,Cin]x[Cin,Cout]."""
    if has_add:
        x_ref, w_ref, b_ref, add_ref, o_ref, xp_ref, acc_ref = refs
    else:
        x_ref, w_ref, b_ref, o_ref, xp_ref, acc_ref = refs
        add_ref = None

    cin = w_ref.shape[1]
    cout = w_ref.shape[2]
    oh, ow = o_ref.shape[1], o_ref.shape[2]
    rows = oh * ow
    cdt = xp_ref.dtype                       # MXU compute dtype (bf16)

    x = x_ref[0].astype(cdt)                 # (block_h, block_w, cin)

    # Build the zero-padded tile in VMEM scratch (halo only along the
    # convolved axis, which is fully resident in this block).
    if axis == 0:                            # conv along H; W is tiled
        L = x.shape[0]
        if pad > 0:
            zrow = jnp.zeros((pad, x.shape[1], cin), cdt)
            xp_ref[0:pad] = zrow
            xp_ref[pad + L:2 * pad + L] = zrow
        xp_ref[pad:pad + L] = x
        out_len = oh
    else:                                    # conv along W; H is tiled
        L = x.shape[1]
        if pad > 0:
            zcol = jnp.zeros((x.shape[0], pad, cin), cdt)
            xp_ref[:, 0:pad] = zcol
            xp_ref[:, pad + L:2 * pad + L] = zcol
        xp_ref[:, pad:pad + L] = x
        out_len = ow

    # k is small and static: unrolled loop over taps, f32 VMEM accumulator.
    for t in range(k):
        if axis == 0:
            xs = xp_ref[t:t + out_len, :, :]
        else:
            xs = xp_ref[:, t:t + out_len, :]
        contrib = jnp.dot(xs.reshape(rows, cin), w_ref[t],
                          preferred_element_type=jnp.float32)
        if t == 0:
            acc_ref[...] = contrib
        else:
            acc_ref[...] += contrib

    out = (acc_ref[...] + b_ref[...].astype(jnp.float32)).reshape(oh, ow, cout)
    if has_add:
        out = out + add_ref[0].astype(jnp.float32)     # fused branch sum
    o_ref[0] = out.astype(o_ref.dtype)


def _pick_tile(length, unit_bytes, budget, max_rows=None):
    """Largest divisor of `length` that is a multiple of 8 (or == length),
    fits the byte budget, and respects max_rows; falls back to the smallest
    valid divisor."""
    cands = [d for d in range(1, length + 1)
             if length % d == 0 and (d % 8 == 0 or d == length)]
    ok = [d for d in cands
          if d * unit_bytes <= budget and (max_rows is None or d <= max_rows)]
    return max(ok) if ok else min(cands)


def conv1d_nhwc(x, w, b, *, axis, pad, add=None,
                block_budget_bytes=2 * 1024 * 1024,
                max_spatial_tile=None,
                compute_dtype=jnp.bfloat16):
    """1-D conv along a spatial axis of an NHWC tensor.

    x:   (N, H, W, Cin)
    w:   (k, Cin, Cout_pad)   bf16, zero padded along Cin/Cout as needed
    b:   (1, Cout_pad)        f32, zero padded
    axis: 0 -> conv along H (torch kernel (k,1)); 1 -> conv along W ((1,k))
    add: optional (N, out_h, out_w, Cout_pad) tensor fused into the output.
    """
    n, h, wd, cin = x.shape
    k, wcin, cout = w.shape
    assert wcin == cin, (wcin, cin)
    itemsize = x.dtype.itemsize

    if axis == 0:                                     # conv along H, tile W
        out_h, out_w = h + 2 * pad - k + 1, wd
        tile = _pick_tile(wd, h * cin * itemsize, block_budget_bytes,
                          max_spatial_tile)
        grid = (n, wd // tile)
        x_spec = pl.BlockSpec((1, h, tile, cin), lambda i, j: (i, 0, j, 0))
        o_spec = pl.BlockSpec((1, out_h, tile, cout), lambda i, j: (i, 0, j, 0))
        xp_shape = (h + 2 * pad, tile, cin)
        rows = out_h * tile
    else:                                             # conv along W, tile H
        out_h, out_w = h, wd + 2 * pad - k + 1
        tile = _pick_tile(h, wd * cin * itemsize, block_budget_bytes,
                          max_spatial_tile)
        grid = (n, h // tile)
        x_spec = pl.BlockSpec((1, tile, wd, cin), lambda i, j: (i, j, 0, 0))
        o_spec = pl.BlockSpec((1, tile, out_w, cout), lambda i, j: (i, j, 0, 0))
        xp_shape = (tile, wd + 2 * pad, cin)
        rows = tile * out_w

    in_specs = [x_spec,
                pl.BlockSpec((k, cin, cout), lambda i, j: (0, 0, 0)),
                pl.BlockSpec((1, cout), lambda i, j: (0, 0))]
    args = [x, w, b]
    has_add = add is not None
    if has_add:
        assert add.shape == (n, out_h, out_w, cout), (add.shape,
                                                      (n, out_h, out_w, cout))
        in_specs.append(o_spec)
        args.append(add)

    kern = functools.partial(_conv1d_kernel, axis=axis, k=k, pad=pad,
                             has_add=has_add)

    return pl.pallas_call(
        kern,
        out_shape=jax.ShapeDtypeStruct((n, out_h, out_w, cout), x.dtype),
        grid_spec=pltpu.PrefetchScalarGridSpec(
            num_scalar_prefetch=0,
            grid=grid,
            in_specs=in_specs,
            out_specs=o_spec,
            scratch_shapes=[pltpu.VMEM(xp_shape, compute_dtype),   # padded tile
                            pltpu.VMEM((rows, cout), jnp.float32)],  # accumulator
        ),
        compiler_params=pltpu.CompilerParams(
            dimension_semantics=("parallel", "parallel"),
            vmem_limit_bytes=32 * 1024 * 1024),
    )(*args)


def _torch_default_conv_init(key_w, key_b, cout, cin, kh, kw):
    """Deterministic init mimicking torch.nn.Conv2d default U(-1/sqrt(fan_in), .)."""
    fan_in = cin * kh * kw
    bound = 1.0 / math.sqrt(fan_in)
    w = jax.random.uniform(key_w, (cout, cin, kh, kw), jnp.float32, -bound, bound)
    b = jax.random.uniform(key_b, (cout,), jnp.float32, -bound, bound)
    return w, b


def _prep_w(w_oihw, axis, cin_pad, cout_pad, dtype):
    """torch OIHW separable weight -> (k, Cin_pad, Cout_pad), zero padded, bf16."""
    if axis == 0:                       # (k, 1) kernel -> conv along H
        wk = w_oihw[:, :, :, 0]         # (Cout, Cin, k)
    else:                               # (1, k) kernel -> conv along W
        wk = w_oihw[:, :, 0, :]
    wk = jnp.transpose(wk, (2, 1, 0))   # (k, Cin, Cout)
    k, cin, cout = wk.shape
    wk = jnp.pad(wk, ((0, 0), (0, cin_pad - cin), (0, cout_pad - cout)))
    return wk.astype(dtype)


def _prep_b(b, cout_pad):
    return jnp.pad(b, (0, cout_pad - b.shape[0])).reshape(1, cout_pad).astype(
        jnp.float32)


class GlobalConvModulePallas:
    """Pallas port of _GlobalConvModule. Input/output are NCHW like PyTorch."""

    def __init__(self, in_dim, out_dim, kernel_size, key, *,
                 mxu_dtype=jnp.bfloat16, max_spatial_tile=None):
        k0, k1 = kernel_size
        self.k0, self.k1 = k0, k1
        self.pad0 = (k0 - 1) // 2
        self.pad1 = (k1 - 1) // 2
        self.out_dim = out_dim
        self.cout_pad = _round_up(out_dim, 128)   # lane-dense output stores
        self.mxu_dtype = mxu_dtype
        self.max_spatial_tile = max_spatial_tile

        ks = jax.random.split(key, 8)
        # torch OIHW weights / biases (f32, also used by the reference)
        self.wl1, self.bl1 = _torch_default_conv_init(ks[0], ks[1], out_dim, in_dim, k0, 1)
        self.wl2, self.bl2 = _torch_default_conv_init(ks[2], ks[3], out_dim, out_dim, 1, k1)
        self.wr1, self.br1 = _torch_default_conv_init(ks[4], ks[5], out_dim, in_dim, 1, k1)
        self.wr2, self.br2 = _torch_default_conv_init(ks[6], ks[7], out_dim, out_dim, k0, 1)

        cp = self.cout_pad
        # kernel-friendly layouts: (k, Cin_pad, Cout_pad), bf16, zero padded
        self.wl1_p = _prep_w(self.wl1, 0, in_dim, cp, mxu_dtype)   # conv along H
        self.wl2_p = _prep_w(self.wl2, 1, cp, cp, mxu_dtype)       # conv along W
        self.wr1_p = _prep_w(self.wr1, 1, in_dim, cp, mxu_dtype)   # conv along W
        self.wr2_p = _prep_w(self.wr2, 0, cp, cp, mxu_dtype)       # conv along H
        self.bl1_p = _prep_b(self.bl1, cp)
        self.bl2_p = _prep_b(self.bl2, cp)
        self.br1_p = _prep_b(self.br1, cp)
        self.br2_p = _prep_b(self.br2, cp)

    def __call__(self, x_nchw):
        # TODO(synk): fold the NCHW<->NHWC layout change into the first/last
        # kernel instead of relying on standalone XLA transposes.
        x = jnp.transpose(x_nchw, (0, 2, 3, 1))          # -> NHWC
        kw = dict(compute_dtype=self.mxu_dtype,
                  max_spatial_tile=self.max_spatial_tile)
        x_l = conv1d_nhwc(x, self.wl1_p, self.bl1_p, axis=0, pad=self.pad0, **kw)
        x_l = conv1d_nhwc(x_l, self.wl2_p, self.bl2_p, axis=1, pad=self.pad1, **kw)
        # TODO(synk): conv_l1 and conv_r1 both read x; a single fused
        # pallas_call with a halo along one axis would halve that HBM read.
        x_r = conv1d_nhwc(x, self.wr1_p, self.br1_p, axis=1, pad=self.pad1, **kw)
        # last conv fuses the branch sum: x_r2 + x_l
        y = conv1d_nhwc(x_r, self.wr2_p, self.br2_p, axis=0, pad=self.pad0,
                        add=x_l, **kw)
        y = y[..., :self.out_dim]                        # drop lane padding
        return jnp.transpose(y, (0, 3, 1, 2))            # -> NCHW


def _ref_forward(x, mod, operand_dtype=jnp.float32):
    """Pure-JAX reference reproducing the PyTorch forward.

    operand_dtype=f32  -> PyTorch semantics.
    operand_dtype=bf16 -> mirrors the kernel's MXU numerics (bf16 operands,
                          f32 accumulation) for a tight check.
    """
    def conv(x, w, b, pad):
        y = jax.lax.conv_general_dilated(
            x.astype(operand_dtype), w.astype(operand_dtype),
            window_strides=(1, 1),
            padding=((pad[0], pad[0]), (pad[1], pad[1])),
            dimension_numbers=('NCHW', 'OIHW', 'NCHW'),
            preferred_element_type=jnp.float32,
            precision=jax.lax.Precision.HIGHEST)
        return y + b[None, :, None, None]
    x_l = conv(x, mod.wl1, mod.bl1, (mod.pad0, 0))
    x_l = conv(x_l, mod.wl2, mod.bl2, (0, mod.pad1))
    x_r = conv(x, mod.wr1, mod.br1, (0, mod.pad1))
    x_r = conv(x_r, mod.wr2, mod.br2, (mod.pad0, 0))
    return x_l + x_r


if __name__ == "__main__":
    key = jax.random.PRNGKey(0)
    k_x, k_params = jax.random.split(key)

    N, C_IN, H, W = 2, 4, 16, 16
    C_OUT = 8
    KERNEL = (7, 7)  # odd kernel -> "same" spatial output, as in typical GCN use

    x = jax.random.normal(k_x, (N, C_IN, H, W), dtype=jnp.float32)  # NCHW
    # max_spatial_tile=8 exercises the multi-tile (N, tiles) grid at these
    # small test shapes; leave it None for production sizes (budget-picked).
    mod = GlobalConvModulePallas(C_IN, C_OUT, KERNEL, k_params,
                                 max_spatial_tile=8)

    y = jax.block_until_ready(jax.jit(mod.__call__)(x))
    assert y.shape == (N, C_OUT, H, W), y.shape

    # Tight check against a reference that mirrors the kernel numerics.
    y_bf = jax.block_until_ready(_ref_forward(x, mod, jnp.bfloat16))
    err_bf = jnp.max(jnp.abs(y - y_bf))
    assert jnp.allclose(y, y_bf, atol=1e-2, rtol=1e-2), f"bf16-ref max err {err_bf}"

    # PyTorch-semantics (f32) reference; tolerance covers bf16 MXU operands.
    y_f32 = jax.block_until_ready(_ref_forward(x, mod, jnp.float32))
    err_f32 = jnp.max(jnp.abs(y - y_f32))
    assert jnp.allclose(y, y_f32, atol=2e-2, rtol=2e-2), f"f32-ref max err {err_f32}"

    print("KERNEL_OK")
</pallas_src>

<mosaic_0001>
module attributes {stable_mosaic.version = 11 : i64} {
  func.func @_conv1d_kernel(%arg0: i32, %arg1: i32, %arg2: memref<1x8x16x128xf32, #tpu.memory_space<vmem>>, %arg3: memref<7x128x128xbf16, #tpu.memory_space<vmem>>, %arg4: memref<1x128xf32, #tpu.memory_space<vmem>>, %arg5: memref<1x8x16x128xf32, #tpu.memory_space<vmem>>, %arg6: memref<8x22x128xbf16, #tpu.memory_space<vmem>>, %arg7: memref<128x128xf32, #tpu.memory_space<vmem>>) attributes {dimension_semantics = [#tpu.dimension_semantics<parallel>, #tpu.dimension_semantics<parallel>], iteration_bounds = array<i64: 2, 2>, scalar_prefetch = 0 : i64, scratch_operands = 2 : i64, tpu.core_type = #tpu.core_type<tc>, window_params = [{transform_indices = @transform_0, window_bounds = array<i64: 1, 8, 16, 128>}, {pipeline_mode = #tpu.pipeline_mode<synchronous>, transform_indices = @transform_1, window_bounds = array<i64: 7, 128, 128>}, {pipeline_mode = #tpu.pipeline_mode<synchronous>, transform_indices = @transform_2, window_bounds = array<i64: 1, 128>}, {transform_indices = @transform_3, window_bounds = array<i64: 1, 8, 16, 128>}]} {
    %c0 = arith.constant 0 : index
    %c0_0 = arith.constant 0 : index
    %c0_1 = arith.constant 0 : index
    %c0_2 = arith.constant 0 : index
    %0 = vector.load %arg2[%c0, %c0_0, %c0_1, %c0_2] : memref<1x8x16x128xf32, #tpu.memory_space<vmem>>, vector<1x8x16x128xf32>
    %1 = vector.shape_cast %0 : vector<1x8x16x128xf32> to vector<8x16x128xf32>
    %2 = arith.truncf %1 : vector<8x16x128xf32> to vector<8x16x128xbf16>
    %cst = arith.constant 0.000000e+00 : bf16
    %3 = vector.broadcast %cst : bf16 to vector<8x3x128xbf16>
    %c0_3 = arith.constant 0 : index
    %c0_4 = arith.constant 0 : index
    %c0_5 = arith.constant 0 : index
    %4 = vector.load %arg6[%c0_3, %c0_4, %c0_5] : memref<8x22x128xbf16, #tpu.memory_space<vmem>>, vector<8x3x128xbf16>
    tpu.vector_store %arg6[%c0_3, %c0_4, %c0_5], %3 {strides = array<i32>} : memref<8x22x128xbf16, #tpu.memory_space<vmem>>, vector<8x3x128xbf16>,
    %c0_6 = arith.constant 0 : index
    %c19 = arith.constant 19 : index
    %c0_7 = arith.constant 0 : index
    %5 = vector.load %arg6[%c0_6, %c19, %c0_7] : memref<8x22x128xbf16, #tpu.memory_space<vmem>>, vector<8x3x128xbf16>
    tpu.vector_store %arg6[%c0_6, %c19, %c0_7], %3 {strides = array<i32>} : memref<8x22x128xbf16, #tpu.memory_space<vmem>>, vector<8x3x128xbf16>,
    %c0_8 = arith.constant 0 : index
    %c3 = arith.constant 3 : index
    %c0_9 = arith.constant 0 : index
    %6 = vector.load %arg6[%c0_8, %c3, %c0_9] : memref<8x22x128xbf16, #tpu.memory_space<vmem>>, vector<8x16x128xbf16>
    tpu.vector_store %arg6[%c0_8, %c3, %c0_9], %2 {strides = array<i32>} : memref<8x22x128xbf16, #tpu.memory_space<vmem>>, vector<8x16x128xbf16>,
    %c0_10 = arith.constant 0 : index
    %c0_11 = arith.constant 0 : index
    %c0_12 = arith.constant 0 : index
    %7 = vector.load %arg6[%c0_10, %c0_11, %c0_12] : memref<8x22x128xbf16, #tpu.memory_space<vmem>>, vector<8x16x128xbf16>
    %8 = vector.shape_cast %7 : vector<8x16x128xbf16> to vector<128x128xbf16>
    %c0_13 = arith.constant 0 : index
    %c0_14 = arith.constant 0 : index
    %c0_15 = arith.constant 0 : index
    %9 = vector.load %arg3[%c0_13, %c0_14, %c0_15] : memref<7x128x128xbf16, #tpu.memory_space<vmem>>, vector<1x128x128xbf16>
    %10 = vector.shape_cast %9 : vector<1x128x128xbf16> to vector<128x128xbf16>
    %cst_16 = arith.constant dense<0.000000e+00> : vector<128x128xf32>
    %11 = tpu.matmul %8, %10, %cst_16 {dimension_numbers = #tpu.dot_dimension_numbers<[1], [0], [0], [1], [0, 0, 1, 1], [], []>} : vector<128x128xbf16>, vector<128x128xbf16>, vector<128x128xf32> -> vector<128x128xf32>
    %c0_17 = arith.constant 0 : index
    %c0_18 = arith.constant 0 : index
    %12 = vector.load %arg7[%c0_17, %c0_18] : memref<128x128xf32, #tpu.memory_space<vmem>>, vector<128x128xf32>
    tpu.vector_store %arg7[%c0_17, %c0_18], %11 {strides = array<i32>} : memref<128x128xf32, #tpu.memory_space<vmem>>, vector<128x128xf32>,
    %c0_19 = arith.constant 0 : index
    %c1 = arith.constant 1 : index
    %c0_20 = arith.constant 0 : index
    %13 = vector.load %arg6[%c0_19, %c1, %c0_20] : memref<8x22x128xbf16, #tpu.memory_space<vmem>>, vector<8x16x128xbf16>
    %14 = vector.shape_cast %13 : vector<8x16x128xbf16> to vector<128x128xbf16>
    %c1_21 = arith.constant 1 : index
    %c0_22 = arith.constant 0 : index
    %c0_23 = arith.constant 0 : index
    %15 = vector.load %arg3[%c1_21, %c0_22, %c0_23] : memref<7x128x128xbf16, #tpu.memory_space<vmem>>, vector<1x128x128xbf16>
    %16 = vector.shape_cast %15 : vector<1x128x128xbf16> to vector<128x128xbf16>
    %cst_24 = arith.constant dense<0.000000e+00> : vector<128x128xf32>
    %17 = tpu.matmul %14, %16, %cst_24 {dimension_numbers = #tpu.dot_dimension_numbers<[1], [0], [0], [1], [0, 0, 1, 1], [], []>} : vector<128x128xbf16>, vector<128x128xbf16>, vector<128x128xf32> -> vector<128x128xf32>
    %c0_25 = arith.constant 0 : index
    %c0_26 = arith.constant 0 : index
    %18 = vector.load %arg7[%c0_25, %c0_26] : memref<128x128xf32, #tpu.memory_space<vmem>>, vector<128x128xf32>
    %19 = arith.addf %18, %17 : vector<128x128xf32>
    %c0_27 = arith.constant 0 : index
    %c0_28 = arith.constant 0 : index
    %20 = vector.load %arg7[%c0_27, %c0_28] : memref<128x128xf32, #tpu.memory_space<vmem>>, vector<128x128xf32>
    tpu.vector_store %arg7[%c0_27, %c0_28], %19 {strides = array<i32>} : memref<128x128xf32, #tpu.memory_space<vmem>>, vector<128x128xf32>,
    %c0_29 = arith.constant 0 : index
    %c2 = arith.constant 2 : index
    %c0_30 = arith.constant 0 : index
    %21 = vector.load %arg6[%c0_29, %c2, %c0_30] : memref<8x22x128xbf16, #tpu.memory_space<vmem>>, vector<8x16x128xbf16>
    %22 = vector.shape_cast %21 : vector<8x16x128xbf16> to vector<128x128xbf16>
    %c2_31 = arith.constant 2 : index
    %c0_32 = arith.constant 0 : index
    %c0_33 = arith.constant 0 : index
    %23 = vector.load %arg3[%c2_31, %c0_32, %c0_33] : memref<7x128x128xbf16, #tpu.memory_space<vmem>>, vector<1x128x128xbf16>
    %24 = vector.shape_cast %23 : vector<1x128x128xbf16> to vector<128x128xbf16>
    %cst_34 = arith.constant dense<0.000000e+00> : vector<128x128xf32>
    %25 = tpu.matmul %22, %24, %cst_34 {dimension_numbers = #tpu.dot_dimension_numbers<[1], [0], [0], [1], [0, 0, 1, 1], [], []>} : vector<128x128xbf16>, vector<128x128xbf16>, vector<128x128xf32> -> vector<128x128xf32>
    %c0_35 = arith.constant 0 : index
    %c0_36 = arith.constant 0 : index
    %26 = vector.load %arg7[%c0_35, %c0_36] : memref<128x128xf32, #tpu.memory_space<vmem>>, vector<128x128xf32>
    %27 = arith.addf %26, %25 : vector<128x128xf32>
    %c0_37 = arith.constant 0 : index
    %c0_38 = arith.constant 0 : index
    %28 = vector.load %arg7[%c0_37, %c0_38] : memref<128x128xf32, #tpu.memory_space<vmem>>, vector<128x128xf32>
    tpu.vector_store %arg7[%c0_37, %c0_38], %27 {strides = array<i32>} : memref<128x128xf32, #tpu.memory_space<vmem>>, vector<128x128xf32>,
    %c0_39 = arith.constant 0 : index
    %c3_40 = arith.constant 3 : index
    %c0_41 = arith.constant 0 : index
    %29 = vector.load %arg6[%c0_39, %c3_40, %c0_41] : memref<8x22x128xbf16, #tpu.memory_space<vmem>>, vector<8x16x128xbf16>
    %30 = vector.shape_cast %29 : vector<8x16x128xbf16> to vector<128x128xbf16>
    %c3_42 = arith.constant 3 : index
    %c0_43 = arith.constant 0 : index
    %c0_44 = arith.constant 0 : index
    %31 = vector.load %arg3[%c3_42, %c0_43, %c0_44] : memref<7x128x128xbf16, #tpu.memory_space<vmem>>, vector<1x128x128xbf16>
    %32 = vector.shape_cast %31 : vector<1x128x128xbf16> to vector<128x128xbf16>
    %cst_45 = arith.constant dense<0.000000e+00> : vector<128x128xf32>
    %33 = tpu.matmul %30, %32, %cst_45 {dimension_numbers = #tpu.dot_dimension_numbers<[1], [0], [0], [1], [0, 0, 1, 1], [], []>} : vector<128x128xbf16>, vector<128x128xbf16>, vector<128x128xf32> -> vector<128x128xf32>
    %c0_46 = arith.constant 0 : index
    %c0_47 = arith.constant 0 : index
    %34 = vector.load %arg7[%c0_46, %c0_47] : memref<128x128xf32, #tpu.memory_space<vmem>>, vector<128x128xf32>
    %35 = arith.addf %34, %33 : vector<128x128xf32>
    %c0_48 = arith.constant 0 : index
    %c0_49 = arith.constant 0 : index
    %36 = vector.load %arg7[%c0_48, %c0_49] : memref<128x128xf32, #tpu.memory_space<vmem>>, vector<128x128xf32>
    tpu.vector_store %arg7[%c0_48, %c0_49], %35 {strides = array<i32>} : memref<128x128xf32, #tpu.memory_space<vmem>>, vector<128x128xf32>,
    %c0_50 = arith.constant 0 : index
    %c4 = arith.constant 4 : index
    %c0_51 = arith.constant 0 : index
    %37 = vector.load %arg6[%c0_50, %c4, %c0_51] : memref<8x22x128xbf16, #tpu.memory_space<vmem>>, vector<8x16x128xbf16>
    %38 = vector.shape_cast %37 : vector<8x16x128xbf16> to vector<128x128xbf16>
    %c4_52 = arith.constant 4 : index
    %c0_53 = arith.constant 0 : index
    %c0_54 = arith.constant 0 : index
    %39 = vector.load %arg3[%c4_52, %c0_53, %c0_54] : memref<7x128x128xbf16, #tpu.memory_space<vmem>>, vector<1x128x128xbf16>
    %40 = vector.shape_cast %39 : vector<1x128x128xbf16> to vector<128x128xbf16>
    %cst_55 = arith.constant dense<0.000000e+00> : vector<128x128xf32>
    %41 = tpu.matmul %38, %40, %cst_55 {dimension_numbers = #tpu.dot_dimension_numbers<[1], [0], [0], [1], [0, 0, 1, 1], [], []>} : vector<128x128xbf16>, vector<128x128xbf16>, vector<128x128xf32> -> vector<128x128xf32>
    %c0_56 = arith.constant 0 : index
    %c0_57 = arith.constant 0 : index
    %42 = vector.load %arg7[%c0_56, %c0_57] : memref<128x128xf32, #tpu.memory_space<vmem>>, vector<128x128xf32>
    %43 = arith.addf %42, %41 : vector<128x128xf32>
    %c0_58 = arith.constant 0 : index
    %c0_59 = arith.constant 0 : index
    %44 = vector.load %arg7[%c0_58, %c0_59] : memref<128x128xf32, #tpu.memory_space<vmem>>, vector<128x128xf32>
    tpu.vector_store %arg7[%c0_58, %c0_59], %43 {strides = array<i32>} : memref<128x128xf32, #tpu.memory_space<vmem>>, vector<128x128xf32>,
    %c0_60 = arith.constant 0 : index
    %c5 = arith.constant 5 : index
    %c0_61 = arith.constant 0 : index
    %45 = vector.load %arg6[%c0_60, %c5, %c0_61] : memref<8x22x128xbf16, #tpu.memory_space<vmem>>, vector<8x16x128xbf16>
    %46 = vector.shape_cast %45 : vector<8x16x128xbf16> to vector<128x128xbf16>
    %c5_62 = arith.constant 5 : index
    %c0_63 = arith.constant 0 : index
    %c0_64 = arith.constant 0 : index
    %47 = vector.load %arg3[%c5_62, %c0_63, %c0_64] : memref<7x128x128xbf16, #tpu.memory_space<vmem>>, vector<1x128x128xbf16>
    %48 = vector.shape_cast %47 : vector<1x128x128xbf16> to vector<128x128xbf16>
    %cst_65 = arith.constant dense<0.000000e+00> : vector<128x128xf32>
    %49 = tpu.matmul %46, %48, %cst_65 {dimension_numbers = #tpu.dot_dimension_numbers<[1], [0], [0], [1], [0, 0, 1, 1], [], []>} : vector<128x128xbf16>, vector<128x128xbf16>, vector<128x128xf32> -> vector<128x128xf32>
    %c0_66 = arith.constant 0 : index
    %c0_67 = arith.constant 0 : index
    %50 = vector.load %arg7[%c0_66, %c0_67] : memref<128x128xf32, #tpu.memory_space<vmem>>, vector<128x128xf32>
    %51 = arith.addf %50, %49 : vector<128x128xf32>
    %c0_68 = arith.constant 0 : index
    %c0_69 = arith.constant 0 : index
    %52 = vector.load %arg7[%c0_68, %c0_69] : memref<128x128xf32, #tpu.memory_space<vmem>>, vector<128x128xf32>
    tpu.vector_store %arg7[%c0_68, %c0_69], %51 {strides = array<i32>} : memref<128x128xf32, #tpu.memory_space<vmem>>, vector<128x128xf32>,
    %c0_70 = arith.constant 0 : index
    %c6 = arith.constant 6 : index
    %c0_71 = arith.constant 0 : index
    %53 = vector.load %arg6[%c0_70, %c6, %c0_71] : memref<8x22x128xbf16, #tpu.memory_space<vmem>>, vector<8x16x128xbf16>
    %54 = vector.shape_cast %53 : vector<8x16x128xbf16> to vector<128x128xbf16>
    %c6_72 = arith.constant 6 : index
    %c0_73 = arith.constant 0 : index
    %c0_74 = arith.constant 0 : index
    %55 = vector.load %arg3[%c6_72, %c0_73, %c0_74] : memref<7x128x128xbf16, #tpu.memory_space<vmem>>, vector<1x128x128xbf16>
    %56 = vector.shape_cast %55 : vector<1x128x128xbf16> to vector<128x128xbf16>
    %cst_75 = arith.constant dense<0.000000e+00> : vector<128x128xf32>
    %57 = tpu.matmul %54, %56, %cst_75 {dimension_numbers = #tpu.dot_dimension_numbers<[1], [0], [0], [1], [0, 0, 1, 1], [], []>} : vector<128x128xbf16>, vector<128x128xbf16>, vector<128x128xf32> -> vector<128x128xf32>
    %c0_76 = arith.constant 0 : index
    %c0_77 = arith.constant 0 : index
    %58 = vector.load %arg7[%c0_76, %c0_77] : memref<128x128xf32, #tpu.memory_space<vmem>>, vector<128x128xf32>
    %59 = arith.addf %58, %57 : vector<128x128xf32>
    %c0_78 = arith.constant 0 : index
    %c0_79 = arith.constant 0 : index
    %60 = vector.load %arg7[%c0_78, %c0_79] : memref<128x128xf32, #tpu.memory_space<vmem>>, vector<128x128xf32>
    tpu.vector_store %arg7[%c0_78, %c0_79], %59 {strides = array<i32>} : memref<128x128xf32, #tpu.memory_space<vmem>>, vector<128x128xf32>,
    %c0_80 = arith.constant 0 : index
    %c0_81 = arith.constant 0 : index
    %61 = vector.load %arg7[%c0_80, %c0_81] : memref<128x128xf32, #tpu.memory_space<vmem>>, vector<128x128xf32>
    %c0_82 = arith.constant 0 : index
    %c0_83 = arith.constant 0 : index
    %62 = vector.load %arg4[%c0_82, %c0_83] : memref<1x128xf32, #tpu.memory_space<vmem>>, vector<1x128xf32>
    %63 = vector.broadcast %62 : vector<1x128xf32> to vector<128x128xf32>
    %64 = arith.addf %61, %63 : vector<128x128xf32>
    %65 = vector.shape_cast %64 : vector<128x128xf32> to vector<8x16x128xf32>
    %c0_84 = arith.constant 0 : index
    %c0_85 = arith.constant 0 : index
    %c0_86 = arith.constant 0 : index
    %c0_87 = arith.constant 0 : index
    %66 = vector.load %arg5[%c0_84, %c0_85, %c0_86, %c0_87] : memref<1x8x16x128xf32, #tpu.memory_space<vmem>>, vector<1x8x16x128xf32>
    %67 = vector.shape_cast %66 : vector<1x8x16x128xf32> to vector<8x16x128xf32>
    %68 = vector.shape_cast %65 : vector<8x16x128xf32> to vector<1x8x16x128xf32>
    tpu.vector_store %arg5[%c0_84, %c0_85, %c0_86, %c0_87], %68 {strides = array<i32>} : memref<1x8x16x128xf32, #tpu.memory_space<vmem>>, vector<1x8x16x128xf32>,
    return
  }
  func.func @transform_0(%arg0: i32, %arg1: i32) -> (i32, i32, i32, i32) {
    %c0_i32 = arith.constant 0 : i32
    %c0_i32_0 = arith.constant 0 : i32
    %c0_i32_1 = arith.constant 0 : i32
    return %arg0, %arg1, %c0_i32, %c0_i32_0 : i32, i32, i32, i32
  }
  func.func @transform_1(%arg0: i32, %arg1: i32) -> (i32, i32, i32) {
    %c0_i32 = arith.constant 0 : i32
    %c0_i32_0 = arith.constant 0 : i32
    %c0_i32_1 = arith.constant 0 : i32
    %c0_i32_2 = arith.constant 0 : i32
    return %c0_i32, %c0_i32_0, %c0_i32_1 : i32, i32, i32
  }
  func.func @transform_2(%arg0: i32, %arg1: i32) -> (i32, i32) {
    %c0_i32 = arith.constant 0 : i32
    %c0_i32_0 = arith.constant 0 : i32
    %c0_i32_1 = arith.constant 0 : i32
    return %c0_i32, %c0_i32_0 : i32, i32
  }
  func.func @transform_3(%arg0: i32, %arg1: i32) -> (i32, i32, i32, i32) {
    %c0_i32 = arith.constant 0 : i32
    %c0_i32_0 = arith.constant 0 : i32
    %c0_i32_1 = arith.constant 0 : i32
    return %arg0, %arg1, %c0_i32, %c0_i32_0 : i32, i32, i32, i32
  }
}

module attributes {stable_mosaic.version = 11 : i64} {
  func.func @_conv1d_kernel(%arg0: i32, %arg1: i32, %arg2: memref<1x8x16x4xf32, #tpu.memory_space<vmem>>, %arg3: memref<7x4x128xbf16, #tpu.memory_space<vmem>>, %arg4: memref<1x128xf32, #tpu.memory_space<vmem>>, %arg5: memref<1x8x16x128xf32, #tpu.memory_space<vmem>>, %arg6: memref<8x22x4xbf16, #tpu.memory_space<vmem>>, %arg7: memref<128x128xf32, #tpu.memory_space<vmem>>) attributes {dimension_semantics = [#tpu.dimension_semantics<parallel>, #tpu.dimension_semantics<parallel>], iteration_bounds = array<i64: 2, 2>, scalar_prefetch = 0 : i64, scratch_operands = 2 : i64, tpu.core_type = #tpu.core_type<tc>, window_params = [{transform_indices = @transform_0, window_bounds = array<i64: 1, 8, 16, 4>}, {pipeline_mode = #tpu.pipeline_mode<synchronous>, transform_indices = @transform_1, window_bounds = array<i64: 7, 4, 128>}, {pipeline_mode = #tpu.pipeline_mode<synchronous>, transform_indices = @transform_2, window_bounds = array<i64: 1, 128>}, {transform_indices = @transform_3, window_bounds = array<i64: 1, 8, 16, 128>}]} {
    %c0 = arith.constant 0 : index
    %c0_0 = arith.constant 0 : index
    %c0_1 = arith.constant 0 : index
    %c0_2 = arith.constant 0 : index
    %0 = vector.load %arg2[%c0, %c0_0, %c0_1, %c0_2] : memref<1x8x16x4xf32, #tpu.memory_space<vmem>>, vector<1x8x16x4xf32>
    %1 = vector.shape_cast %0 : vector<1x8x16x4xf32> to vector<8x16x4xf32>
    %2 = arith.truncf %1 : vector<8x16x4xf32> to vector<8x16x4xbf16>
    %cst = arith.constant 0.000000e+00 : bf16
    %3 = vector.broadcast %cst : bf16 to vector<8x3x4xbf16>
    %c0_3 = arith.constant 0 : index
    %c0_4 = arith.constant 0 : index
    %c0_5 = arith.constant 0 : index
    %4 = vector.load %arg6[%c0_3, %c0_4, %c0_5] : memref<8x22x4xbf16, #tpu.memory_space<vmem>>, vector<8x3x4xbf16>
    tpu.vector_store %arg6[%c0_3, %c0_4, %c0_5], %3 {strides = array<i32>} : memref<8x22x4xbf16, #tpu.memory_space<vmem>>, vector<8x3x4xbf16>,
    %c0_6 = arith.constant 0 : index
    %c19 = arith.constant 19 : index
    %c0_7 = arith.constant 0 : index
    %5 = vector.load %arg6[%c0_6, %c19, %c0_7] : memref<8x22x4xbf16, #tpu.memory_space<vmem>>, vector<8x3x4xbf16>
    tpu.vector_store %arg6[%c0_6, %c19, %c0_7], %3 {strides = array<i32>} : memref<8x22x4xbf16, #tpu.memory_space<vmem>>, vector<8x3x4xbf16>,
    %c0_8 = arith.constant 0 : index
    %c3 = arith.constant 3 : index
    %c0_9 = arith.constant 0 : index
    %6 = vector.load %arg6[%c0_8, %c3, %c0_9] : memref<8x22x4xbf16, #tpu.memory_space<vmem>>, vector<8x16x4xbf16>
    tpu.vector_store %arg6[%c0_8, %c3, %c0_9], %2 {strides = array<i32>} : memref<8x22x4xbf16, #tpu.memory_space<vmem>>, vector<8x16x4xbf16>,
    %c0_10 = arith.constant 0 : index
    %c0_11 = arith.constant 0 : index
    %c0_12 = arith.constant 0 : index
    %7 = vector.load %arg6[%c0_10, %c0_11, %c0_12] : memref<8x22x4xbf16, #tpu.memory_space<vmem>>, vector<8x16x4xbf16>
    %8 = vector.shape_cast %7 : vector<8x16x4xbf16> to vector<128x4xbf16>
    %c0_13 = arith.constant 0 : index
    %c0_14 = arith.constant 0 : index
    %c0_15 = arith.constant 0 : index
    %9 = vector.load %arg3[%c0_13, %c0_14, %c0_15] : memref<7x4x128xbf16, #tpu.memory_space<vmem>>, vector<1x4x128xbf16>
    %10 = vector.shape_cast %9 : vector<1x4x128xbf16> to vector<4x128xbf16>
    %cst_16 = arith.constant dense<0.000000e+00> : vector<128x128xf32>
    %11 = tpu.matmul %8, %10, %cst_16 {dimension_numbers = #tpu.dot_dimension_numbers<[1], [0], [0], [1], [0, 0, 1, 1], [], []>} : vector<128x4xbf16>, vector<4x128xbf16>, vector<128x128xf32> -> vector<128x128xf32>
    %c0_17 = arith.constant 0 : index
    %c0_18 = arith.constant 0 : index
    %12 = vector.load %arg7[%c0_17, %c0_18] : memref<128x128xf32, #tpu.memory_space<vmem>>, vector<128x128xf32>
    tpu.vector_store %arg7[%c0_17, %c0_18], %11 {strides = array<i32>} : memref<128x128xf32, #tpu.memory_space<vmem>>, vector<128x128xf32>,
    %c0_19 = arith.constant 0 : index
    %c1 = arith.constant 1 : index
    %c0_20 = arith.constant 0 : index
    %13 = vector.load %arg6[%c0_19, %c1, %c0_20] : memref<8x22x4xbf16, #tpu.memory_space<vmem>>, vector<8x16x4xbf16>
    %14 = vector.shape_cast %13 : vector<8x16x4xbf16> to vector<128x4xbf16>
    %c1_21 = arith.constant 1 : index
    %c0_22 = arith.constant 0 : index
    %c0_23 = arith.constant 0 : index
    %15 = vector.load %arg3[%c1_21, %c0_22, %c0_23] : memref<7x4x128xbf16, #tpu.memory_space<vmem>>, vector<1x4x128xbf16>
    %16 = vector.shape_cast %15 : vector<1x4x128xbf16> to vector<4x128xbf16>
    %cst_24 = arith.constant dense<0.000000e+00> : vector<128x128xf32>
    %17 = tpu.matmul %14, %16, %cst_24 {dimension_numbers = #tpu.dot_dimension_numbers<[1], [0], [0], [1], [0, 0, 1, 1], [], []>} : vector<128x4xbf16>, vector<4x128xbf16>, vector<128x128xf32> -> vector<128x128xf32>
    %c0_25 = arith.constant 0 : index
    %c0_26 = arith.constant 0 : index
    %18 = vector.load %arg7[%c0_25, %c0_26] : memref<128x128xf32, #tpu.memory_space<vmem>>, vector<128x128xf32>
    %19 = arith.addf %18, %17 : vector<128x128xf32>
    %c0_27 = arith.constant 0 : index
    %c0_28 = arith.constant 0 : index
    %20 = vector.load %arg7[%c0_27, %c0_28] : memref<128x128xf32, #tpu.memory_space<vmem>>, vector<128x128xf32>
    tpu.vector_store %arg7[%c0_27, %c0_28], %19 {strides = array<i32>} : memref<128x128xf32, #tpu.memory_space<vmem>>, vector<128x128xf32>,
    %c0_29 = arith.constant 0 : index
    %c2 = arith.constant 2 : index
    %c0_30 = arith.constant 0 : index
    %21 = vector.load %arg6[%c0_29, %c2, %c0_30] : memref<8x22x4xbf16, #tpu.memory_space<vmem>>, vector<8x16x4xbf16>
    %22 = vector.shape_cast %21 : vector<8x16x4xbf16> to vector<128x4xbf16>
    %c2_31 = arith.constant 2 : index
    %c0_32 = arith.constant 0 : index
    %c0_33 = arith.constant 0 : index
    %23 = vector.load %arg3[%c2_31, %c0_32, %c0_33] : memref<7x4x128xbf16, #tpu.memory_space<vmem>>, vector<1x4x128xbf16>
    %24 = vector.shape_cast %23 : vector<1x4x128xbf16> to vector<4x128xbf16>
    %cst_34 = arith.constant dense<0.000000e+00> : vector<128x128xf32>
    %25 = tpu.matmul %22, %24, %cst_34 {dimension_numbers = #tpu.dot_dimension_numbers<[1], [0], [0], [1], [0, 0, 1, 1], [], []>} : vector<128x4xbf16>, vector<4x128xbf16>, vector<128x128xf32> -> vector<128x128xf32>
    %c0_35 = arith.constant 0 : index
    %c0_36 = arith.constant 0 : index
    %26 = vector.load %arg7[%c0_35, %c0_36] : memref<128x128xf32, #tpu.memory_space<vmem>>, vector<128x128xf32>
    %27 = arith.addf %26, %25 : vector<128x128xf32>
    %c0_37 = arith.constant 0 : index
    %c0_38 = arith.constant 0 : index
    %28 = vector.load %arg7[%c0_37, %c0_38] : memref<128x128xf32, #tpu.memory_space<vmem>>, vector<128x128xf32>
    tpu.vector_store %arg7[%c0_37, %c0_38], %27 {strides = array<i32>} : memref<128x128xf32, #tpu.memory_space<vmem>>, vector<128x128xf32>,
    %c0_39 = arith.constant 0 : index
    %c3_40 = arith.constant 3 : index
    %c0_41 = arith.constant 0 : index
    %29 = vector.load %arg6[%c0_39, %c3_40, %c0_41] : memref<8x22x4xbf16, #tpu.memory_space<vmem>>, vector<8x16x4xbf16>
    %30 = vector.shape_cast %29 : vector<8x16x4xbf16> to vector<128x4xbf16>
    %c3_42 = arith.constant 3 : index
    %c0_43 = arith.constant 0 : index
    %c0_44 = arith.constant 0 : index
    %31 = vector.load %arg3[%c3_42, %c0_43, %c0_44] : memref<7x4x128xbf16, #tpu.memory_space<vmem>>, vector<1x4x128xbf16>
    %32 = vector.shape_cast %31 : vector<1x4x128xbf16> to vector<4x128xbf16>
    %cst_45 = arith.constant dense<0.000000e+00> : vector<128x128xf32>
    %33 = tpu.matmul %30, %32, %cst_45 {dimension_numbers = #tpu.dot_dimension_numbers<[1], [0], [0], [1], [0, 0, 1, 1], [], []>} : vector<128x4xbf16>, vector<4x128xbf16>, vector<128x128xf32> -> vector<128x128xf32>
    %c0_46 = arith.constant 0 : index
    %c0_47 = arith.constant 0 : index
    %34 = vector.load %arg7[%c0_46, %c0_47] : memref<128x128xf32, #tpu.memory_space<vmem>>, vector<128x128xf32>
    %35 = arith.addf %34, %33 : vector<128x128xf32>
    %c0_48 = arith.constant 0 : index
    %c0_49 = arith.constant 0 : index
    %36 = vector.load %arg7[%c0_48, %c0_49] : memref<128x128xf32, #tpu.memory_space<vmem>>, vector<128x128xf32>
    tpu.vector_store %arg7[%c0_48, %c0_49], %35 {strides = array<i32>} : memref<128x128xf32, #tpu.memory_space<vmem>>, vector<128x128xf32>,
    %c0_50 = arith.constant 0 : index
    %c4 = arith.constant 4 : index
    %c0_51 = arith.constant 0 : index
    %37 = vector.load %arg6[%c0_50, %c4, %c0_51] : memref<8x22x4xbf16, #tpu.memory_space<vmem>>, vector<8x16x4xbf16>
    %38 = vector.shape_cast %37 : vector<8x16x4xbf16> to vector<128x4xbf16>
    %c4_52 = arith.constant 4 : index
    %c0_53 = arith.constant 0 : index
    %c0_54 = arith.constant 0 : index
    %39 = vector.load %arg3[%c4_52, %c0_53, %c0_54] : memref<7x4x128xbf16, #tpu.memory_space<vmem>>, vector<1x4x128xbf16>
    %40 = vector.shape_cast %39 : vector<1x4x128xbf16> to vector<4x128xbf16>
    %cst_55 = arith.constant dense<0.000000e+00> : vector<128x128xf32>
    %41 = tpu.matmul %38, %40, %cst_55 {dimension_numbers = #tpu.dot_dimension_numbers<[1], [0], [0], [1], [0, 0, 1, 1], [], []>} : vector<128x4xbf16>, vector<4x128xbf16>, vector<128x128xf32> -> vector<128x128xf32>
    %c0_56 = arith.constant 0 : index
    %c0_57 = arith.constant 0 : index
    %42 = vector.load %arg7[%c0_56, %c0_57] : memref<128x128xf32, #tpu.memory_space<vmem>>, vector<128x128xf32>
    %43 = arith.addf %42, %41 : vector<128x128xf32>
    %c0_58 = arith.constant 0 : index
    %c0_59 = arith.constant 0 : index
    %44 = vector.load %arg7[%c0_58, %c0_59] : memref<128x128xf32, #tpu.memory_space<vmem>>, vector<128x128xf32>
    tpu.vector_store %arg7[%c0_58, %c0_59], %43 {strides = array<i32>} : memref<128x128xf32, #tpu.memory_space<vmem>>, vector<128x128xf32>,
    %c0_60 = arith.constant 0 : index
    %c5 = arith.constant 5 : index
    %c0_61 = arith.constant 0 : index
    %45 = vector.load %arg6[%c0_60, %c5, %c0_61] : memref<8x22x4xbf16, #tpu.memory_space<vmem>>, vector<8x16x4xbf16>
    %46 = vector.shape_cast %45 : vector<8x16x4xbf16> to vector<128x4xbf16>
    %c5_62 = arith.constant 5 : index
    %c0_63 = arith.constant 0 : index
    %c0_64 = arith.constant 0 : index
    %47 = vector.load %arg3[%c5_62, %c0_63, %c0_64] : memref<7x4x128xbf16, #tpu.memory_space<vmem>>, vector<1x4x128xbf16>
    %48 = vector.shape_cast %47 : vector<1x4x128xbf16> to vector<4x128xbf16>
    %cst_65 = arith.constant dense<0.000000e+00> : vector<128x128xf32>
    %49 = tpu.matmul %46, %48, %cst_65 {dimension_numbers = #tpu.dot_dimension_numbers<[1], [0], [0], [1], [0, 0, 1, 1], [], []>} : vector<128x4xbf16>, vector<4x128xbf16>, vector<128x128xf32> -> vector<128x128xf32>
    %c0_66 = arith.constant 0 : index
    %c0_67 = arith.constant 0 : index
    %50 = vector.load %arg7[%c0_66, %c0_67] : memref<128x128xf32, #tpu.memory_space<vmem>>, vector<128x128xf32>
    %51 = arith.addf %50, %49 : vector<128x128xf32>
    %c0_68 = arith.constant 0 : index
    %c0_69 = arith.constant 0 : index
    %52 = vector.load %arg7[%c0_68, %c0_69] : memref<128x128xf32, #tpu.memory_space<vmem>>, vector<128x128xf32>
    tpu.vector_store %arg7[%c0_68, %c0_69], %51 {strides = array<i32>} : memref<128x128xf32, #tpu.memory_space<vmem>>, vector<128x128xf32>,
    %c0_70 = arith.constant 0 : index
    %c6 = arith.constant 6 : index
    %c0_71 = arith.constant 0 : index
    %53 = vector.load %arg6[%c0_70, %c6, %c0_71] : memref<8x22x4xbf16, #tpu.memory_space<vmem>>, vector<8x16x4xbf16>
    %54 = vector.shape_cast %53 : vector<8x16x4xbf16> to vector<128x4xbf16>
    %c6_72 = arith.constant 6 : index
    %c0_73 = arith.constant 0 : index
    %c0_74 = arith.constant 0 : index
    %55 = vector.load %arg3[%c6_72, %c0_73, %c0_74] : memref<7x4x128xbf16, #tpu.memory_space<vmem>>, vector<1x4x128xbf16>
    %56 = vector.shape_cast %55 : vector<1x4x128xbf16> to vector<4x128xbf16>
    %cst_75 = arith.constant dense<0.000000e+00> : vector<128x128xf32>
    %57 = tpu.matmul %54, %56, %cst_75 {dimension_numbers = #tpu.dot_dimension_numbers<[1], [0], [0], [1], [0, 0, 1, 1], [], []>} : vector<128x4xbf16>, vector<4x128xbf16>, vector<128x128xf32> -> vector<128x128xf32>
    %c0_76 = arith.constant 0 : index
    %c0_77 = arith.constant 0 : index
    %58 = vector.load %arg7[%c0_76, %c0_77] : memref<128x128xf32, #tpu.memory_space<vmem>>, vector<128x128xf32>
    %59 = arith.addf %58, %57 : vector<128x128xf32>
    %c0_78 = arith.constant 0 : index
    %c0_79 = arith.constant 0 : index
    %60 = vector.load %arg7[%c0_78, %c0_79] : memref<128x128xf32, #tpu.memory_space<vmem>>, vector<128x128xf32>
    tpu.vector_store %arg7[%c0_78, %c0_79], %59 {strides = array<i32>} : memref<128x128xf32, #tpu.memory_space<vmem>>, vector<128x128xf32>,
    %c0_80 = arith.constant 0 : index
    %c0_81 = arith.constant 0 : index
    %61 = vector.load %arg7[%c0_80, %c0_81] : memref<128x128xf32, #tpu.memory_space<vmem>>, vector<128x128xf32>
    %c0_82 = arith.constant 0 : index
    %c0_83 = arith.constant 0 : index
    %62 = vector.load %arg4[%c0_82, %c0_83] : memref<1x128xf32, #tpu.memory_space<vmem>>, vector<1x128xf32>
    %63 = vector.broadcast %62 : vector<1x128xf32> to vector<128x128xf32>
    %64 = arith.addf %61, %63 : vector<128x128xf32>
    %65 = vector.shape_cast %64 : vector<128x128xf32> to vector<8x16x128xf32>
    %c0_84 = arith.constant 0 : index
    %c0_85 = arith.constant 0 : index
    %c0_86 = arith.constant 0 : index
    %c0_87 = arith.constant 0 : index
    %66 = vector.load %arg5[%c0_84, %c0_85, %c0_86, %c0_87] : memref<1x8x16x128xf32, #tpu.memory_space<vmem>>, vector<1x8x16x128xf32>
    %67 = vector.shape_cast %66 : vector<1x8x16x128xf32> to vector<8x16x128xf32>
    %68 = vector.shape_cast %65 : vector<8x16x128xf32> to vector<1x8x16x128xf32>
    tpu.vector_store %arg5[%c0_84, %c0_85, %c0_86, %c0_87], %68 {strides = array<i32>} : memref<1x8x16x128xf32, #tpu.memory_space<vmem>>, vector<1x8x16x128xf32>,
    return
  }
  func.func @transform_0(%arg0: i32, %arg1: i32) -> (i32, i32, i32, i32) {
    %c0_i32 = arith.constant 0 : i32
    %c0_i32_0 = arith.constant 0 : i32
    %c0_i32_1 = arith.constant 0 : i32
    return %arg0, %arg1, %c0_i32, %c0_i32_0 : i32, i32, i32, i32
  }
  func.func @transform_1(%arg0: i32, %arg1: i32) -> (i32, i32, i32) {
    %c0_i32 = arith.constant 0 : i32
    %c0_i32_0 = arith.constant 0 : i32
    %c0_i32_1 = arith.constant 0 : i32
    %c0_i32_2 = arith.constant 0 : i32
    return %c0_i32, %c0_i32_0, %c0_i32_1 : i32, i32, i32
  }
  func.func @transform_2(%arg0: i32, %arg1: i32) -> (i32, i32) {
    %c0_i32 = arith.constant 0 : i32
    %c0_i32_0 = arith.constant 0 : i32
    %c0_i32_1 = arith.constant 0 : i32
    return %c0_i32, %c0_i32_0 : i32, i32
  }
  func.func @transform_3(%arg0: i32, %arg1: i32) -> (i32, i32, i32, i32) {
    %c0_i32 = arith.constant 0 : i32
    %c0_i32_0 = arith.constant 0 : i32
    %c0_i32_1 = arith.constant 0 : i32
    return %arg0, %arg1, %c0_i32, %c0_i32_0 : i32, i32, i32, i32
  }
}

module attributes {stable_mosaic.version = 11 : i64} {
  func.func @_conv1d_kernel(%arg0: i32, %arg1: i32, %arg2: memref<1x16x8x4xf32, #tpu.memory_space<vmem>>, %arg3: memref<7x4x128xbf16, #tpu.memory_space<vmem>>, %arg4: memref<1x128xf32, #tpu.memory_space<vmem>>, %arg5: memref<1x16x8x128xf32, #tpu.memory_space<vmem>>, %arg6: memref<22x8x4xbf16, #tpu.memory_space<vmem>>, %arg7: memref<128x128xf32, #tpu.memory_space<vmem>>) attributes {dimension_semantics = [#tpu.dimension_semantics<parallel>, #tpu.dimension_semantics<parallel>], iteration_bounds = array<i64: 2, 2>, scalar_prefetch = 0 : i64, scratch_operands = 2 : i64, tpu.core_type = #tpu.core_type<tc>, window_params = [{transform_indices = @transform_0, window_bounds = array<i64: 1, 16, 8, 4>}, {pipeline_mode = #tpu.pipeline_mode<synchronous>, transform_indices = @transform_1, window_bounds = array<i64: 7, 4, 128>}, {pipeline_mode = #tpu.pipeline_mode<synchronous>, transform_indices = @transform_2, window_bounds = array<i64: 1, 128>}, {transform_indices = @transform_3, window_bounds = array<i64: 1, 16, 8, 128>}]} {
    %c0 = arith.constant 0 : index
    %c0_0 = arith.constant 0 : index
    %c0_1 = arith.constant 0 : index
    %c0_2 = arith.constant 0 : index
    %0 = vector.load %arg2[%c0, %c0_0, %c0_1, %c0_2] : memref<1x16x8x4xf32, #tpu.memory_space<vmem>>, vector<1x16x8x4xf32>
    %1 = vector.shape_cast %0 : vector<1x16x8x4xf32> to vector<16x8x4xf32>
    %2 = arith.truncf %1 : vector<16x8x4xf32> to vector<16x8x4xbf16>
    %cst = arith.constant 0.000000e+00 : bf16
    %3 = vector.broadcast %cst : bf16 to vector<3x8x4xbf16>
    %c0_3 = arith.constant 0 : index
    %c0_4 = arith.constant 0 : index
    %c0_5 = arith.constant 0 : index
    %4 = vector.load %arg6[%c0_3, %c0_4, %c0_5] : memref<22x8x4xbf16, #tpu.memory_space<vmem>>, vector<3x8x4xbf16>
    tpu.vector_store %arg6[%c0_3, %c0_4, %c0_5], %3 {strides = array<i32>} : memref<22x8x4xbf16, #tpu.memory_space<vmem>>, vector<3x8x4xbf16>,
    %c19 = arith.constant 19 : index
    %c0_6 = arith.constant 0 : index
    %c0_7 = arith.constant 0 : index
    %5 = vector.load %arg6[%c19, %c0_6, %c0_7] : memref<22x8x4xbf16, #tpu.memory_space<vmem>>, vector<3x8x4xbf16>
    tpu.vector_store %arg6[%c19, %c0_6, %c0_7], %3 {strides = array<i32>} : memref<22x8x4xbf16, #tpu.memory_space<vmem>>, vector<3x8x4xbf16>,
    %c3 = arith.constant 3 : index
    %c0_8 = arith.constant 0 : index
    %c0_9 = arith.constant 0 : index
    %6 = vector.load %arg6[%c3, %c0_8, %c0_9] : memref<22x8x4xbf16, #tpu.memory_space<vmem>>, vector<16x8x4xbf16>
    tpu.vector_store %arg6[%c3, %c0_8, %c0_9], %2 {strides = array<i32>} : memref<22x8x4xbf16, #tpu.memory_space<vmem>>, vector<16x8x4xbf16>,
    %c0_10 = arith.constant 0 : index
    %c0_11 = arith.constant 0 : index
    %c0_12 = arith.constant 0 : index
    %7 = vector.load %arg6[%c0_10, %c0_11, %c0_12] : memref<22x8x4xbf16, #tpu.memory_space<vmem>>, vector<16x8x4xbf16>
    %8 = vector.shape_cast %7 : vector<16x8x4xbf16> to vector<128x4xbf16>
    %c0_13 = arith.constant 0 : index
    %c0_14 = arith.constant 0 : index
    %c0_15 = arith.constant 0 : index
    %9 = vector.load %arg3[%c0_13, %c0_14, %c0_15] : memref<7x4x128xbf16, #tpu.memory_space<vmem>>, vector<1x4x128xbf16>
    %10 = vector.shape_cast %9 : vector<1x4x128xbf16> to vector<4x128xbf16>
    %cst_16 = arith.constant dense<0.000000e+00> : vector<128x128xf32>
    %11 = tpu.matmul %8, %10, %cst_16 {dimension_numbers = #tpu.dot_dimension_numbers<[1], [0], [0], [1], [0, 0, 1, 1], [], []>} : vector<128x4xbf16>, vector<4x128xbf16>, vector<128x128xf32> -> vector<128x128xf32>
    %c0_17 = arith.constant 0 : index
    %c0_18 = arith.constant 0 : index
    %12 = vector.load %arg7[%c0_17, %c0_18] : memref<128x128xf32, #tpu.memory_space<vmem>>, vector<128x128xf32>
    tpu.vector_store %arg7[%c0_17, %c0_18], %11 {strides = array<i32>} : memref<128x128xf32, #tpu.memory_space<vmem>>, vector<128x128xf32>,
    %c1 = arith.constant 1 : index
    %c0_19 = arith.constant 0 : index
    %c0_20 = arith.constant 0 : index
    %13 = vector.load %arg6[%c1, %c0_19, %c0_20] : memref<22x8x4xbf16, #tpu.memory_space<vmem>>, vector<16x8x4xbf16>
    %14 = vector.shape_cast %13 : vector<16x8x4xbf16> to vector<128x4xbf16>
    %c1_21 = arith.constant 1 : index
    %c0_22 = arith.constant 0 : index
    %c0_23 = arith.constant 0 : index
    %15 = vector.load %arg3[%c1_21, %c0_22, %c0_23] : memref<7x4x128xbf16, #tpu.memory_space<vmem>>, vector<1x4x128xbf16>
    %16 = vector.shape_cast %15 : vector<1x4x128xbf16> to vector<4x128xbf16>
    %cst_24 = arith.constant dense<0.000000e+00> : vector<128x128xf32>
    %17 = tpu.matmul %14, %16, %cst_24 {dimension_numbers = #tpu.dot_dimension_numbers<[1], [0], [0], [1], [0, 0, 1, 1], [], []>} : vector<128x4xbf16>, vector<4x128xbf16>, vector<128x128xf32> -> vector<128x128xf32>
    %c0_25 = arith.constant 0 : index
    %c0_26 = arith.constant 0 : index
    %18 = vector.load %arg7[%c0_25, %c0_26] : memref<128x128xf32, #tpu.memory_space<vmem>>, vector<128x128xf32>
    %19 = arith.addf %18, %17 : vector<128x128xf32>
    %c0_27 = arith.constant 0 : index
    %c0_28 = arith.constant 0 : index
    %20 = vector.load %arg7[%c0_27, %c0_28] : memref<128x128xf32, #tpu.memory_space<vmem>>, vector<128x128xf32>
    tpu.vector_store %arg7[%c0_27, %c0_28], %19 {strides = array<i32>} : memref<128x128xf32, #tpu.memory_space<vmem>>, vector<128x128xf32>,
    %c2 = arith.constant 2 : index
    %c0_29 = arith.constant 0 : index
    %c0_30 = arith.constant 0 : index
    %21 = vector.load %arg6[%c2, %c0_29, %c0_30] : memref<22x8x4xbf16, #tpu.memory_space<vmem>>, vector<16x8x4xbf16>
    %22 = vector.shape_cast %21 : vector<16x8x4xbf16> to vector<128x4xbf16>
    %c2_31 = arith.constant 2 : index
    %c0_32 = arith.constant 0 : index
    %c0_33 = arith.constant 0 : index
    %23 = vector.load %arg3[%c2_31, %c0_32, %c0_33] : memref<7x4x128xbf16, #tpu.memory_space<vmem>>, vector<1x4x128xbf16>
    %24 = vector.shape_cast %23 : vector<1x4x128xbf16> to vector<4x128xbf16>
    %cst_34 = arith.constant dense<0.000000e+00> : vector<128x128xf32>
    %25 = tpu.matmul %22, %24, %cst_34 {dimension_numbers = #tpu.dot_dimension_numbers<[1], [0], [0], [1], [0, 0, 1, 1], [], []>} : vector<128x4xbf16>, vector<4x128xbf16>, vector<128x128xf32> -> vector<128x128xf32>
    %c0_35 = arith.constant 0 : index
    %c0_36 = arith.constant 0 : index
    %26 = vector.load %arg7[%c0_35, %c0_36] : memref<128x128xf32, #tpu.memory_space<vmem>>, vector<128x128xf32>
    %27 = arith.addf %26, %25 : vector<128x128xf32>
    %c0_37 = arith.constant 0 : index
    %c0_38 = arith.constant 0 : index
    %28 = vector.load %arg7[%c0_37, %c0_38] : memref<128x128xf32, #tpu.memory_space<vmem>>, vector<128x128xf32>
    tpu.vector_store %arg7[%c0_37, %c0_38], %27 {strides = array<i32>} : memref<128x128xf32, #tpu.memory_space<vmem>>, vector<128x128xf32>,
    %c3_39 = arith.constant 3 : index
    %c0_40 = arith.constant 0 : index
    %c0_41 = arith.constant 0 : index
    %29 = vector.load %arg6[%c3_39, %c0_40, %c0_41] : memref<22x8x4xbf16, #tpu.memory_space<vmem>>, vector<16x8x4xbf16>
    %30 = vector.shape_cast %29 : vector<16x8x4xbf16> to vector<128x4xbf16>
    %c3_42 = arith.constant 3 : index
    %c0_43 = arith.constant 0 : index
    %c0_44 = arith.constant 0 : index
    %31 = vector.load %arg3[%c3_42, %c0_43, %c0_44] : memref<7x4x128xbf16, #tpu.memory_space<vmem>>, vector<1x4x128xbf16>
    %32 = vector.shape_cast %31 : vector<1x4x128xbf16> to vector<4x128xbf16>
    %cst_45 = arith.constant dense<0.000000e+00> : vector<128x128xf32>
    %33 = tpu.matmul %30, %32, %cst_45 {dimension_numbers = #tpu.dot_dimension_numbers<[1], [0], [0], [1], [0, 0, 1, 1], [], []>} : vector<128x4xbf16>, vector<4x128xbf16>, vector<128x128xf32> -> vector<128x128xf32>
    %c0_46 = arith.constant 0 : index
    %c0_47 = arith.constant 0 : index
    %34 = vector.load %arg7[%c0_46, %c0_47] : memref<128x128xf32, #tpu.memory_space<vmem>>, vector<128x128xf32>
    %35 = arith.addf %34, %33 : vector<128x128xf32>
    %c0_48 = arith.constant 0 : index
    %c0_49 = arith.constant 0 : index
    %36 = vector.load %arg7[%c0_48, %c0_49] : memref<128x128xf32, #tpu.memory_space<vmem>>, vector<128x128xf32>
    tpu.vector_store %arg7[%c0_48, %c0_49], %35 {strides = array<i32>} : memref<128x128xf32, #tpu.memory_space<vmem>>, vector<128x128xf32>,
    %c4 = arith.constant 4 : index
    %c0_50 = arith.constant 0 : index
    %c0_51 = arith.constant 0 : index
    %37 = vector.load %arg6[%c4, %c0_50, %c0_51] : memref<22x8x4xbf16, #tpu.memory_space<vmem>>, vector<16x8x4xbf16>
    %38 = vector.shape_cast %37 : vector<16x8x4xbf16> to vector<128x4xbf16>
    %c4_52 = arith.constant 4 : index
    %c0_53 = arith.constant 0 : index
    %c0_54 = arith.constant 0 : index
    %39 = vector.load %arg3[%c4_52, %c0_53, %c0_54] : memref<7x4x128xbf16, #tpu.memory_space<vmem>>, vector<1x4x128xbf16>
    %40 = vector.shape_cast %39 : vector<1x4x128xbf16> to vector<4x128xbf16>
    %cst_55 = arith.constant dense<0.000000e+00> : vector<128x128xf32>
    %41 = tpu.matmul %38, %40, %cst_55 {dimension_numbers = #tpu.dot_dimension_numbers<[1], [0], [0], [1], [0, 0, 1, 1], [], []>} : vector<128x4xbf16>, vector<4x128xbf16>, vector<128x128xf32> -> vector<128x128xf32>
    %c0_56 = arith.constant 0 : index
    %c0_57 = arith.constant 0 : index
    %42 = vector.load %arg7[%c0_56, %c0_57] : memref<128x128xf32, #tpu.memory_space<vmem>>, vector<128x128xf32>
    %43 = arith.addf %42, %41 : vector<128x128xf32>
    %c0_58 = arith.constant 0 : index
    %c0_59 = arith.constant 0 : index
    %44 = vector.load %arg7[%c0_58, %c0_59] : memref<128x128xf32, #tpu.memory_space<vmem>>, vector<128x128xf32>
    tpu.vector_store %arg7[%c0_58, %c0_59], %43 {strides = array<i32>} : memref<128x128xf32, #tpu.memory_space<vmem>>, vector<128x128xf32>,
    %c5 = arith.constant 5 : index
    %c0_60 = arith.constant 0 : index
    %c0_61 = arith.constant 0 : index
    %45 = vector.load %arg6[%c5, %c0_60, %c0_61] : memref<22x8x4xbf16, #tpu.memory_space<vmem>>, vector<16x8x4xbf16>
    %46 = vector.shape_cast %45 : vector<16x8x4xbf16> to vector<128x4xbf16>
    %c5_62 = arith.constant 5 : index
    %c0_63 = arith.constant 0 : index
    %c0_64 = arith.constant 0 : index
    %47 = vector.load %arg3[%c5_62, %c0_63, %c0_64] : memref<7x4x128xbf16, #tpu.memory_space<vmem>>, vector<1x4x128xbf16>
    %48 = vector.shape_cast %47 : vector<1x4x128xbf16> to vector<4x128xbf16>
    %cst_65 = arith.constant dense<0.000000e+00> : vector<128x128xf32>
    %49 = tpu.matmul %46, %48, %cst_65 {dimension_numbers = #tpu.dot_dimension_numbers<[1], [0], [0], [1], [0, 0, 1, 1], [], []>} : vector<128x4xbf16>, vector<4x128xbf16>, vector<128x128xf32> -> vector<128x128xf32>
    %c0_66 = arith.constant 0 : index
    %c0_67 = arith.constant 0 : index
    %50 = vector.load %arg7[%c0_66, %c0_67] : memref<128x128xf32, #tpu.memory_space<vmem>>, vector<128x128xf32>
    %51 = arith.addf %50, %49 : vector<128x128xf32>
    %c0_68 = arith.constant 0 : index
    %c0_69 = arith.constant 0 : index
    %52 = vector.load %arg7[%c0_68, %c0_69] : memref<128x128xf32, #tpu.memory_space<vmem>>, vector<128x128xf32>
    tpu.vector_store %arg7[%c0_68, %c0_69], %51 {strides = array<i32>} : memref<128x128xf32, #tpu.memory_space<vmem>>, vector<128x128xf32>,
    %c6 = arith.constant 6 : index
    %c0_70 = arith.constant 0 : index
    %c0_71 = arith.constant 0 : index
    %53 = vector.load %arg6[%c6, %c0_70, %c0_71] : memref<22x8x4xbf16, #tpu.memory_space<vmem>>, vector<16x8x4xbf16>
    %54 = vector.shape_cast %53 : vector<16x8x4xbf16> to vector<128x4xbf16>
    %c6_72 = arith.constant 6 : index
    %c0_73 = arith.constant 0 : index
    %c0_74 = arith.constant 0 : index
    %55 = vector.load %arg3[%c6_72, %c0_73, %c0_74] : memref<7x4x128xbf16, #tpu.memory_space<vmem>>, vector<1x4x128xbf16>
    %56 = vector.shape_cast %55 : vector<1x4x128xbf16> to vector<4x128xbf16>
    %cst_75 = arith.constant dense<0.000000e+00> : vector<128x128xf32>
    %57 = tpu.matmul %54, %56, %cst_75 {dimension_numbers = #tpu.dot_dimension_numbers<[1], [0], [0], [1], [0, 0, 1, 1], [], []>} : vector<128x4xbf16>, vector<4x128xbf16>, vector<128x128xf32> -> vector<128x128xf32>
    %c0_76 = arith.constant 0 : index
    %c0_77 = arith.constant 0 : index
    %58 = vector.load %arg7[%c0_76, %c0_77] : memref<128x128xf32, #tpu.memory_space<vmem>>, vector<128x128xf32>
    %59 = arith.addf %58, %57 : vector<128x128xf32>
    %c0_78 = arith.constant 0 : index
    %c0_79 = arith.constant 0 : index
    %60 = vector.load %arg7[%c0_78, %c0_79] : memref<128x128xf32, #tpu.memory_space<vmem>>, vector<128x128xf32>
    tpu.vector_store %arg7[%c0_78, %c0_79], %59 {strides = array<i32>} : memref<128x128xf32, #tpu.memory_space<vmem>>, vector<128x128xf32>,
    %c0_80 = arith.constant 0 : index
    %c0_81 = arith.constant 0 : index
    %61 = vector.load %arg7[%c0_80, %c0_81] : memref<128x128xf32, #tpu.memory_space<vmem>>, vector<128x128xf32>
    %c0_82 = arith.constant 0 : index
    %c0_83 = arith.constant 0 : index
    %62 = vector.load %arg4[%c0_82, %c0_83] : memref<1x128xf32, #tpu.memory_space<vmem>>, vector<1x128xf32>
    %63 = vector.broadcast %62 : vector<1x128xf32> to vector<128x128xf32>
    %64 = arith.addf %61, %63 : vector<128x128xf32>
    %65 = vector.shape_cast %64 : vector<128x128xf32> to vector<16x8x128xf32>
    %c0_84 = arith.constant 0 : index
    %c0_85 = arith.constant 0 : index
    %c0_86 = arith.constant 0 : index
    %c0_87 = arith.constant 0 : index
    %66 = vector.load %arg5[%c0_84, %c0_85, %c0_86, %c0_87] : memref<1x16x8x128xf32, #tpu.memory_space<vmem>>, vector<1x16x8x128xf32>
    %67 = vector.shape_cast %66 : vector<1x16x8x128xf32> to vector<16x8x128xf32>
    %68 = vector.shape_cast %65 : vector<16x8x128xf32> to vector<1x16x8x128xf32>
    tpu.vector_store %arg5[%c0_84, %c0_85, %c0_86, %c0_87], %68 {strides = array<i32>} : memref<1x16x8x128xf32, #tpu.memory_space<vmem>>, vector<1x16x8x128xf32>,
    return
  }
  func.func @transform_0(%arg0: i32, %arg1: i32) -> (i32, i32, i32, i32) {
    %c0_i32 = arith.constant 0 : i32
    %c0_i32_0 = arith.constant 0 : i32
    %c0_i32_1 = arith.constant 0 : i32
    return %arg0, %c0_i32, %arg1, %c0_i32_0 : i32, i32, i32, i32
  }
  func.func @transform_1(%arg0: i32, %arg1: i32) -> (i32, i32, i32) {
    %c0_i32 = arith.constant 0 : i32
    %c0_i32_0 = arith.constant 0 : i32
    %c0_i32_1 = arith.constant 0 : i32
    %c0_i32_2 = arith.constant 0 : i32
    return %c0_i32, %c0_i32_0, %c0_i32_1 : i32, i32, i32
  }
  func.func @transform_2(%arg0: i32, %arg1: i32) -> (i32, i32) {
    %c0_i32 = arith.constant 0 : i32
    %c0_i32_0 = arith.constant 0 : i32
    %c0_i32_1 = arith.constant 0 : i32
    return %c0_i32, %c0_i32_0 : i32, i32
  }
  func.func @transform_3(%arg0: i32, %arg1: i32) -> (i32, i32, i32, i32) {
    %c0_i32 = arith.constant 0 : i32
    %c0_i32_0 = arith.constant 0 : i32
    %c0_i32_1 = arith.constant 0 : i32
    return %arg0, %c0_i32, %arg1, %c0_i32_0 : i32, i32, i32, i32
  }
}

module attributes {stable_mosaic.version = 11 : i64} {
  func.func @_conv1d_kernel(%arg0: i32, %arg1: i32, %arg2: memref<1x16x8x128xf32, #tpu.memory_space<vmem>>, %arg3: memref<7x128x128xbf16, #tpu.memory_space<vmem>>, %arg4: memref<1x128xf32, #tpu.memory_space<vmem>>, %arg5: memref<1x16x8x128xf32, #tpu.memory_space<vmem>>, %arg6: memref<1x16x8x128xf32, #tpu.memory_space<vmem>>, %arg7: memref<22x8x128xbf16, #tpu.memory_space<vmem>>, %arg8: memref<128x128xf32, #tpu.memory_space<vmem>>) attributes {dimension_semantics = [#tpu.dimension_semantics<parallel>, #tpu.dimension_semantics<parallel>], iteration_bounds = array<i64: 2, 2>, scalar_prefetch = 0 : i64, scratch_operands = 2 : i64, tpu.core_type = #tpu.core_type<tc>, window_params = [{transform_indices = @transform_0, window_bounds = array<i64: 1, 16, 8, 128>}, {pipeline_mode = #tpu.pipeline_mode<synchronous>, transform_indices = @transform_1, window_bounds = array<i64: 7, 128, 128>}, {pipeline_mode = #tpu.pipeline_mode<synchronous>, transform_indices = @transform_2, window_bounds = array<i64: 1, 128>}, {transform_indices = @transform_3, window_bounds = array<i64: 1, 16, 8, 128>}, {transform_indices = @transform_4, window_bounds = array<i64: 1, 16, 8, 128>}]} {
    %c0 = arith.constant 0 : index
    %c0_0 = arith.constant 0 : index
    %c0_1 = arith.constant 0 : index
    %c0_2 = arith.constant 0 : index
    %0 = vector.load %arg2[%c0, %c0_0, %c0_1, %c0_2] : memref<1x16x8x128xf32, #tpu.memory_space<vmem>>, vector<1x16x8x128xf32>
    %1 = vector.shape_cast %0 : vector<1x16x8x128xf32> to vector<16x8x128xf32>
    %2 = arith.truncf %1 : vector<16x8x128xf32> to vector<16x8x128xbf16>
    %cst = arith.constant 0.000000e+00 : bf16
    %3 = vector.broadcast %cst : bf16 to vector<3x8x128xbf16>
    %c0_3 = arith.constant 0 : index
    %c0_4 = arith.constant 0 : index
    %c0_5 = arith.constant 0 : index
    %4 = vector.load %arg7[%c0_3, %c0_4, %c0_5] : memref<22x8x128xbf16, #tpu.memory_space<vmem>>, vector<3x8x128xbf16>
    tpu.vector_store %arg7[%c0_3, %c0_4, %c0_5], %3 {strides = array<i32>} : memref<22x8x128xbf16, #tpu.memory_space<vmem>>, vector<3x8x128xbf16>,
    %c19 = arith.constant 19 : index
    %c0_6 = arith.constant 0 : index
    %c0_7 = arith.constant 0 : index
    %5 = vector.load %arg7[%c19, %c0_6, %c0_7] : memref<22x8x128xbf16, #tpu.memory_space<vmem>>, vector<3x8x128xbf16>
    tpu.vector_store %arg7[%c19, %c0_6, %c0_7], %3 {strides = array<i32>} : memref<22x8x128xbf16, #tpu.memory_space<vmem>>, vector<3x8x128xbf16>,
    %c3 = arith.constant 3 : index
    %c0_8 = arith.constant 0 : index
    %c0_9 = arith.constant 0 : index
    %6 = vector.load %arg7[%c3, %c0_8, %c0_9] : memref<22x8x128xbf16, #tpu.memory_space<vmem>>, vector<16x8x128xbf16>
    tpu.vector_store %arg7[%c3, %c0_8, %c0_9], %2 {strides = array<i32>} : memref<22x8x128xbf16, #tpu.memory_space<vmem>>, vector<16x8x128xbf16>,
    %c0_10 = arith.constant 0 : index
    %c0_11 = arith.constant 0 : index
    %c0_12 = arith.constant 0 : index
    %7 = vector.load %arg7[%c0_10, %c0_11, %c0_12] : memref<22x8x128xbf16, #tpu.memory_space<vmem>>, vector<16x8x128xbf16>
    %8 = vector.shape_cast %7 : vector<16x8x128xbf16> to vector<128x128xbf16>
    %c0_13 = arith.constant 0 : index
    %c0_14 = arith.constant 0 : index
    %c0_15 = arith.constant 0 : index
    %9 = vector.load %arg3[%c0_13, %c0_14, %c0_15] : memref<7x128x128xbf16, #tpu.memory_space<vmem>>, vector<1x128x128xbf16>
    %10 = vector.shape_cast %9 : vector<1x128x128xbf16> to vector<128x128xbf16>
    %cst_16 = arith.constant dense<0.000000e+00> : vector<128x128xf32>
    %11 = tpu.matmul %8, %10, %cst_16 {dimension_numbers = #tpu.dot_dimension_numbers<[1], [0], [0], [1], [0, 0, 1, 1], [], []>} : vector<128x128xbf16>, vector<128x128xbf16>, vector<128x128xf32> -> vector<128x128xf32>
    %c0_17 = arith.constant 0 : index
    %c0_18 = arith.constant 0 : index
    %12 = vector.load %arg8[%c0_17, %c0_18] : memref<128x128xf32, #tpu.memory_space<vmem>>, vector<128x128xf32>
    tpu.vector_store %arg8[%c0_17, %c0_18], %11 {strides = array<i32>} : memref<128x128xf32, #tpu.memory_space<vmem>>, vector<128x128xf32>,
    %c1 = arith.constant 1 : index
    %c0_19 = arith.constant 0 : index
    %c0_20 = arith.constant 0 : index
    %13 = vector.load %arg7[%c1, %c0_19, %c0_20] : memref<22x8x128xbf16, #tpu.memory_space<vmem>>, vector<16x8x128xbf16>
    %14 = vector.shape_cast %13 : vector<16x8x128xbf16> to vector<128x128xbf16>
    %c1_21 = arith.constant 1 : index
    %c0_22 = arith.constant 0 : index
    %c0_23 = arith.constant 0 : index
    %15 = vector.load %arg3[%c1_21, %c0_22, %c0_23] : memref<7x128x128xbf16, #tpu.memory_space<vmem>>, vector<1x128x128xbf16>
    %16 = vector.shape_cast %15 : vector<1x128x128xbf16> to vector<128x128xbf16>
    %cst_24 = arith.constant dense<0.000000e+00> : vector<128x128xf32>
    %17 = tpu.matmul %14, %16, %cst_24 {dimension_numbers = #tpu.dot_dimension_numbers<[1], [0], [0], [1], [0, 0, 1, 1], [], []>} : vector<128x128xbf16>, vector<128x128xbf16>, vector<128x128xf32> -> vector<128x128xf32>
    %c0_25 = arith.constant 0 : index
    %c0_26 = arith.constant 0 : index
    %18 = vector.load %arg8[%c0_25, %c0_26] : memref<128x128xf32, #tpu.memory_space<vmem>>, vector<128x128xf32>
    %19 = arith.addf %18, %17 : vector<128x128xf32>
    %c0_27 = arith.constant 0 : index
    %c0_28 = arith.constant 0 : index
    %20 = vector.load %arg8[%c0_27, %c0_28] : memref<128x128xf32, #tpu.memory_space<vmem>>, vector<128x128xf32>
    tpu.vector_store %arg8[%c0_27, %c0_28], %19 {strides = array<i32>} : memref<128x128xf32, #tpu.memory_space<vmem>>, vector<128x128xf32>,
    %c2 = arith.constant 2 : index
    %c0_29 = arith.constant 0 : index
    %c0_30 = arith.constant 0 : index
    %21 = vector.load %arg7[%c2, %c0_29, %c0_30] : memref<22x8x128xbf16, #tpu.memory_space<vmem>>, vector<16x8x128xbf16>
    %22 = vector.shape_cast %21 : vector<16x8x128xbf16> to vector<128x128xbf16>
    %c2_31 = arith.constant 2 : index
    %c0_32 = arith.constant 0 : index
    %c0_33 = arith.constant 0 : index
    %23 = vector.load %arg3[%c2_31, %c0_32, %c0_33] : memref<7x128x128xbf16, #tpu.memory_space<vmem>>, vector<1x128x128xbf16>
    %24 = vector.shape_cast %23 : vector<1x128x128xbf16> to vector<128x128xbf16>
    %cst_34 = arith.constant dense<0.000000e+00> : vector<128x128xf32>
    %25 = tpu.matmul %22, %24, %cst_34 {dimension_numbers = #tpu.dot_dimension_numbers<[1], [0], [0], [1], [0, 0, 1, 1], [], []>} : vector<128x128xbf16>, vector<128x128xbf16>, vector<128x128xf32> -> vector<128x128xf32>
    %c0_35 = arith.constant 0 : index
    %c0_36 = arith.constant 0 : index
    %26 = vector.load %arg8[%c0_35, %c0_36] : memref<128x128xf32, #tpu.memory_space<vmem>>, vector<128x128xf32>
    %27 = arith.addf %26, %25 : vector<128x128xf32>
    %c0_37 = arith.constant 0 : index
    %c0_38 = arith.constant 0 : index
    %28 = vector.load %arg8[%c0_37, %c0_38] : memref<128x128xf32, #tpu.memory_space<vmem>>, vector<128x128xf32>
    tpu.vector_store %arg8[%c0_37, %c0_38], %27 {strides = array<i32>} : memref<128x128xf32, #tpu.memory_space<vmem>>, vector<128x128xf32>,
    %c3_39 = arith.constant 3 : index
    %c0_40 = arith.constant 0 : index
    %c0_41 = arith.constant 0 : index
    %29 = vector.load %arg7[%c3_39, %c0_40, %c0_41] : memref<22x8x128xbf16, #tpu.memory_space<vmem>>, vector<16x8x128xbf16>
    %30 = vector.shape_cast %29 : vector<16x8x128xbf16> to vector<128x128xbf16>
    %c3_42 = arith.constant 3 : index
    %c0_43 = arith.constant 0 : index
    %c0_44 = arith.constant 0 : index
    %31 = vector.load %arg3[%c3_42, %c0_43, %c0_44] : memref<7x128x128xbf16, #tpu.memory_space<vmem>>, vector<1x128x128xbf16>
    %32 = vector.shape_cast %31 : vector<1x128x128xbf16> to vector<128x128xbf16>
    %cst_45 = arith.constant dense<0.000000e+00> : vector<128x128xf32>
    %33 = tpu.matmul %30, %32, %cst_45 {dimension_numbers = #tpu.dot_dimension_numbers<[1], [0], [0], [1], [0, 0, 1, 1], [], []>} : vector<128x128xbf16>, vector<128x128xbf16>, vector<128x128xf32> -> vector<128x128xf32>
    %c0_46 = arith.constant 0 : index
    %c0_47 = arith.constant 0 : index
    %34 = vector.load %arg8[%c0_46, %c0_47] : memref<128x128xf32, #tpu.memory_space<vmem>>, vector<128x128xf32>
    %35 = arith.addf %34, %33 : vector<128x128xf32>
    %c0_48 = arith.constant 0 : index
    %c0_49 = arith.constant 0 : index
    %36 = vector.load %arg8[%c0_48, %c0_49] : memref<128x128xf32, #tpu.memory_space<vmem>>, vector<128x128xf32>
    tpu.vector_store %arg8[%c0_48, %c0_49], %35 {strides = array<i32>} : memref<128x128xf32, #tpu.memory_space<vmem>>, vector<128x128xf32>,
    %c4 = arith.constant 4 : index
    %c0_50 = arith.constant 0 : index
    %c0_51 = arith.constant 0 : index
    %37 = vector.load %arg7[%c4, %c0_50, %c0_51] : memref<22x8x128xbf16, #tpu.memory_space<vmem>>, vector<16x8x128xbf16>
    %38 = vector.shape_cast %37 : vector<16x8x128xbf16> to vector<128x128xbf16>
    %c4_52 = arith.constant 4 : index
    %c0_53 = arith.constant 0 : index
    %c0_54 = arith.constant 0 : index
    %39 = vector.load %arg3[%c4_52, %c0_53, %c0_54] : memref<7x128x128xbf16, #tpu.memory_space<vmem>>, vector<1x128x128xbf16>
    %40 = vector.shape_cast %39 : vector<1x128x128xbf16> to vector<128x128xbf16>
    %cst_55 = arith.constant dense<0.000000e+00> : vector<128x128xf32>
    %41 = tpu.matmul %38, %40, %cst_55 {dimension_numbers = #tpu.dot_dimension_numbers<[1], [0], [0], [1], [0, 0, 1, 1], [], []>} : vector<128x128xbf16>, vector<128x128xbf16>, vector<128x128xf32> -> vector<128x128xf32>
    %c0_56 = arith.constant 0 : index
    %c0_57 = arith.constant 0 : index
    %42 = vector.load %arg8[%c0_56, %c0_57] : memref<128x128xf32, #tpu.memory_space<vmem>>, vector<128x128xf32>
    %43 = arith.addf %42, %41 : vector<128x128xf32>
    %c0_58 = arith.constant 0 : index
    %c0_59 = arith.constant 0 : index
    %44 = vector.load %arg8[%c0_58, %c0_59] : memref<128x128xf32, #tpu.memory_space<vmem>>, vector<128x128xf32>
    tpu.vector_store %arg8[%c0_58, %c0_59], %43 {strides = array<i32>} : memref<128x128xf32, #tpu.memory_space<vmem>>, vector<128x128xf32>,
    %c5 = arith.constant 5 : index
    %c0_60 = arith.constant 0 : index
    %c0_61 = arith.constant 0 : index
    %45 = vector.load %arg7[%c5, %c0_60, %c0_61] : memref<22x8x128xbf16, #tpu.memory_space<vmem>>, vector<16x8x128xbf16>
    %46 = vector.shape_cast %45 : vector<16x8x128xbf16> to vector<128x128xbf16>
    %c5_62 = arith.constant 5 : index
    %c0_63 = arith.constant 0 : index
    %c0_64 = arith.constant 0 : index
    %47 = vector.load %arg3[%c5_62, %c0_63, %c0_64] : memref<7x128x128xbf16, #tpu.memory_space<vmem>>, vector<1x128x128xbf16>
    %48 = vector.shape_cast %47 : vector<1x128x128xbf16> to vector<128x128xbf16>
    %cst_65 = arith.constant dense<0.000000e+00> : vector<128x128xf32>
    %49 = tpu.matmul %46, %48, %cst_65 {dimension_numbers = #tpu.dot_dimension_numbers<[1], [0], [0], [1], [0, 0, 1, 1], [], []>} : vector<128x128xbf16>, vector<128x128xbf16>, vector<128x128xf32> -> vector<128x128xf32>
    %c0_66 = arith.constant 0 : index
    %c0_67 = arith.constant 0 : index
    %50 = vector.load %arg8[%c0_66, %c0_67] : memref<128x128xf32, #tpu.memory_space<vmem>>, vector<128x128xf32>
    %51 = arith.addf %50, %49 : vector<128x128xf32>
    %c0_68 = arith.constant 0 : index
    %c0_69 = arith.constant 0 : index
    %52 = vector.load %arg8[%c0_68, %c0_69] : memref<128x128xf32, #tpu.memory_space<vmem>>, vector<128x128xf32>
    tpu.vector_store %arg8[%c0_68, %c0_69], %51 {strides = array<i32>} : memref<128x128xf32, #tpu.memory_space<vmem>>, vector<128x128xf32>,
    %c6 = arith.constant 6 : index
    %c0_70 = arith.constant 0 : index
    %c0_71 = arith.constant 0 : index
    %53 = vector.load %arg7[%c6, %c0_70, %c0_71] : memref<22x8x128xbf16, #tpu.memory_space<vmem>>, vector<16x8x128xbf16>
    %54 = vector.shape_cast %53 : vector<16x8x128xbf16> to vector<128x128xbf16>
    %c6_72 = arith.constant 6 : index
    %c0_73 = arith.constant 0 : index
    %c0_74 = arith.constant 0 : index
    %55 = vector.load %arg3[%c6_72, %c0_73, %c0_74] : memref<7x128x128xbf16, #tpu.memory_space<vmem>>, vector<1x128x128xbf16>
    %56 = vector.shape_cast %55 : vector<1x128x128xbf16> to vector<128x128xbf16>
    %cst_75 = arith.constant dense<0.000000e+00> : vector<128x128xf32>
    %57 = tpu.matmul %54, %56, %cst_75 {dimension_numbers = #tpu.dot_dimension_numbers<[1], [0], [0], [1], [0, 0, 1, 1], [], []>} : vector<128x128xbf16>, vector<128x128xbf16>, vector<128x128xf32> -> vector<128x128xf32>
    %c0_76 = arith.constant 0 : index
    %c0_77 = arith.constant 0 : index
    %58 = vector.load %arg8[%c0_76, %c0_77] : memref<128x128xf32, #tpu.memory_space<vmem>>, vector<128x128xf32>
    %59 = arith.addf %58, %57 : vector<128x128xf32>
    %c0_78 = arith.constant 0 : index
    %c0_79 = arith.constant 0 : index
    %60 = vector.load %arg8[%c0_78, %c0_79] : memref<128x128xf32, #tpu.memory_space<vmem>>, vector<128x128xf32>
    tpu.vector_store %arg8[%c0_78, %c0_79], %59 {strides = array<i32>} : memref<128x128xf32, #tpu.memory_space<vmem>>, vector<128x128xf32>,
    %c0_80 = arith.constant 0 : index
    %c0_81 = arith.constant 0 : index
    %61 = vector.load %arg8[%c0_80, %c0_81] : memref<128x128xf32, #tpu.memory_space<vmem>>, vector<128x128xf32>
    %c0_82 = arith.constant 0 : index
    %c0_83 = arith.constant 0 : index
    %62 = vector.load %arg4[%c0_82, %c0_83] : memref<1x128xf32, #tpu.memory_space<vmem>>, vector<1x128xf32>
    %63 = vector.broadcast %62 : vector<1x128xf32> to vector<128x128xf32>
    %64 = arith.addf %61, %63 : vector<128x128xf32>
    %65 = vector.shape_cast %64 : vector<128x128xf32> to vector<16x8x128xf32>
    %c0_84 = arith.constant 0 : index
    %c0_85 = arith.constant 0 : index
    %c0_86 = arith.constant 0 : index
    %c0_87 = arith.constant 0 : index
    %66 = vector.load %arg5[%c0_84, %c0_85, %c0_86, %c0_87] : memref<1x16x8x128xf32, #tpu.memory_space<vmem>>, vector<1x16x8x128xf32>
    %67 = vector.shape_cast %66 : vector<1x16x8x128xf32> to vector<16x8x128xf32>
    %68 = arith.addf %65, %67 : vector<16x8x128xf32>
    %c0_88 = arith.constant 0 : index
    %c0_89 = arith.constant 0 : index
    %c0_90 = arith.constant 0 : index
    %c0_91 = arith.constant 0 : index
    %69 = vector.load %arg6[%c0_88, %c0_89, %c0_90, %c0_91] : memref<1x16x8x128xf32, #tpu.memory_space<vmem>>, vector<1x16x8x128xf32>
    %70 = vector.shape_cast %69 : vector<1x16x8x128xf32> to vector<16x8x128xf32>
    %71 = vector.shape_cast %68 : vector<16x8x128xf32> to vector<1x16x8x128xf32>
    tpu.vector_store %arg6[%c0_88, %c0_89, %c0_90, %c0_91], %71 {strides = array<i32>} : memref<1x16x8x128xf32, #tpu.memory_space<vmem>>, vector<1x16x8x128xf32>,
    return
  }
  func.func @transform_0(%arg0: i32, %arg1: i32) -> (i32, i32, i32, i32) {
    %c0_i32 = arith.constant 0 : i32
    %c0_i32_0 = arith.constant 0 : i32
    %c0_i32_1 = arith.constant 0 : i32
    return %arg0, %c0_i32, %arg1, %c0_i32_0 : i32, i32, i32, i32
  }
  func.func @transform_1(%arg0: i32, %arg1: i32) -> (i32, i32, i32) {
    %c0_i32 = arith.constant 0 : i32
    %c0_i32_0 = arith.constant 0 : i32
    %c0_i32_1 = arith.constant 0 : i32
    %c0_i32_2 = arith.constant 0 : i32
    return %c0_i32, %c0_i32_0, %c0_i32_1 : i32, i32, i32
  }
  func.func @transform_2(%arg0: i32, %arg1: i32) -> (i32, i32) {
    %c0_i32 = arith.constant 0 : i32
    %c0_i32_0 = arith.constant 0 : i32
    %c0_i32_1 = arith.constant 0 : i32
    return %c0_i32, %c0_i32_0 : i32, i32
  }
  func.func @transform_3(%arg0: i32, %arg1: i32) -> (i32, i32, i32, i32) {
    %c0_i32 = arith.constant 0 : i32
    %c0_i32_0 = arith.constant 0 : i32
    %c0_i32_1 = arith.constant 0 : i32
    return %arg0, %c0_i32, %arg1, %c0_i32_0 : i32, i32, i32, i32
  }
  func.func @transform_4(%arg0: i32, %arg1: i32) -> (i32, i32, i32, i32) {
    %c0_i32 = arith.constant 0 : i32
    %c0_i32_0 = arith.constant 0 : i32
    %c0_i32_1 = arith.constant 0 : i32
    return %arg0, %c0_i32, %arg1, %c0_i32_0 : i32, i32, i32, i32
  }
}

</mosaic_0001>

<llo_original>
// kernel: a_call__.4
$region0: #{a_call__.4}
  #allocation0 [shape = 'u32[]', space=smem, size = 0x4, offset = 0x4, fixed_abs, tag = 'smem constant byte address 0x4 - core index']
  #allocation1 [shape = 'u32[72,128]{1,0:T(1,128)}', space=vmem, size = 0x9000, scoped, tag = 'internal scratch']
  #allocation2 [shape = 'bf16[22,8,4]{2,1,0:T(8,128)(2,1)}', space=vmem, size = 0xb000, scoped, tag = 'scratch operand']
  #allocation3 [shape = 'f32[128,128]{1,0:T(8,128)}', space=vmem, size = 0x10000, scoped, tag = 'scratch operand']
  %s0 = inlined_call_operand.vmem [shape: f32[2,16,16,4], index: 0, kind: input, shape index: {}]
  %s1 = inlined_call_operand.vmem [shape: bf16[7,4,128], index: 1, kind: input, shape index: {}]
  %s2 = inlined_call_operand.vmem [shape: f32[1,128], index: 2, kind: input, shape index: {}]
  %s3 = inlined_call_operand.vmem [shape: f32[2,16,16,128], index: 3, kind: output, shape index: {}]
  %s4 = sld [smem:[#allocation0]]
  $region117: #{a_call__.4} parent=0
    _
  %s6 = ssub.s32 1, %s4
  %s7 = scalar_select 0, %s6, %s4
  $region1: #{a_call__.4} parent=0
    #allocation4 [shape = 'u8[131072]{0}', space=vmem, size = 0x20000, scoped, tag = 'input window, operand 0']
    #allocation5 [shape = 'u8[131072]{0}', space=vmem, size = 0x20000, scoped, tag = 'output window, operand 0']
    loop: start=0, step=1, limit=6
    $region2: #{a_call__.4} parent=1 // loop_pre_header
      _
    $region3: #{a_call__.4} parent=1 // loop_header
      %s9 = sphi 0, %s13
      %p10 = scmp.ge.s32.totalorder %s9, 6
      %s16 = sphi 0, %s28
      %s17 = sphi 0, %s24
      %s18 = sphi 0, %s16
      %s19 = sphi 0, %s17
      %s20 = sphi 0, %s18
      %s21 = sphi 0, %s19
      %s33 = sphi 0, %s35
      %s36 = sphi 0, %s33
      %s37 = sphi 0, %s36
      %s53 = sphi 0, %s37
      %s57 = sphi 0, %s57
      %s59 = sphi 0, %s57
      %s60 = sphi 0, %s59
      %s74 = sphi 0, %s60
      %s78 = sphi 0, %s78
      %s80 = sphi 0, %s78
      %s81 = sphi 0, %s80
      %s95 = sphi 0, %s81
      %s103 = sphi 0, %s105
      %s106 = sphi 0, %s103
      %s107 = sphi 0, %s106
      %s123 = sphi 0, %s107
    $region4: #{a_call__.4} parent=1 // loop_header_branch
      %12 = sbr.rel (%p10) target = $region8
    $region5: #{a_call__.4} parent=1 // loop_body
      %s14 = ssub.s32 %s9, 1
      %s15 = ssub.s32 %s9, 2
      %s22 = sadd.s32 1, %s17
      %p23 = scmp.ge.s32.totalorder %s22, 2
      %s24 = scalar_select %p23, 0, %s22
      %s25 = sadd.s32 1, %s16
      %s26 = scalar_select %p23, %s25, %s16
      %p27 = scmp.ge.s32.totalorder %s26, 2
      %s28 = scalar_select %p27, 0, %s26
      %s29 = ssub.s32 %s16, %s28
      %s30 = ssub.s32 %s17, %s24
      %s31 = sor.u32 %s29, %s30
      %p32 = scmp.eq.s32.totalorder %s31, 0
      %s34 = sadd.s32 %s33, 1
      %s35 = scalar_select %p32, %s33, %s34
      %p38 = pneg %p32
      %p39 = scmp.eq.s32.totalorder %s9, 3
      %p40 = por %p38, %p39
      %p41 = scmp.ne.s32.totalorder %s33, %s36
      %p42 = scmp.eq.s32.totalorder %s9, 0
      %p43 = por %p41, %p42
      %p44 = scmp.ne.s32.totalorder %s33, %s36
      %p45 = scmp.eq.s32.totalorder %s14, 3
      %p46 = por %p44, %p45
      %p47 = scmp.ne.s32.totalorder %s36, %s37
      %p48 = scmp.eq.s32.totalorder %s14, 0
      %p49 = por %p47, %p48
      %p50 = scmp.ne.s32.totalorder %s36, %s37
      %p51 = scmp.eq.s32.totalorder %s15, 3
      %p52 = por %p50, %p51
      %p54 = scmp.ne.s32.totalorder %s37, %s53
      %p55 = scmp.eq.s32.totalorder %s15, 0
      %p56 = por %p54, %p55
      %s58 = sadd.s32 %s57, 1
      %p61 = scmp.eq.s32.totalorder %s9, 3
      %p62 = scmp.ne.s32.totalorder %s57, %s59
      %p63 = scmp.eq.s32.totalorder %s9, 0
      %p64 = por %p62, %p63
      %p65 = scmp.ne.s32.totalorder %s57, %s59
      %p66 = scmp.eq.s32.totalorder %s14, 3
      %p67 = por %p65, %p66
      %p68 = scmp.ne.s32.totalorder %s59, %s60
      %p69 = scmp.eq.s32.totalorder %s14, 0
      %p70 = por %p68, %p69
      %p71 = scmp.ne.s32.totalorder %s59, %s60
      %p72 = scmp.eq.s32.totalorder %s15, 3
      %p73 = por %p71, %p72
      %p75 = scmp.ne.s32.totalorder %s60, %s74
      %p76 = scmp.eq.s32.totalorder %s15, 0
      %p77 = por %p75, %p76
      %s79 = sadd.s32 %s78, 1
      %p82 = scmp.eq.s32.totalorder %s9, 3
      %p83 = scmp.ne.s32.totalorder %s78, %s80
      %p84 = scmp.eq.s32.totalorder %s9, 0
      %p85 = por %p83, %p84
      %p86 = scmp.ne.s32.totalorder %s78, %s80
      %p87 = scmp.eq.s32.totalorder %s14, 3
      %p88 = por %p86, %p87
      %p89 = scmp.ne.s32.totalorder %s80, %s81
      %p90 = scmp.eq.s32.totalorder %s14, 0
      %p91 = por %p89, %p90
      %p92 = scmp.ne.s32.totalorder %s80, %s81
      %p93 = scmp.eq.s32.totalorder %s15, 3
      %p94 = por %p92, %p93
      %p96 = scmp.ne.s32.totalorder %s81, %s95
      %p97 = scmp.eq.s32.totalorder %s15, 0
      %p98 = por %p96, %p97
      %s99 = ssub.s32 %s16, %s28
      %s100 = ssub.s32 %s17, %s24
      %s101 = sor.u32 %s99, %s100
      %p102 = scmp.eq.s32.totalorder %s101, 0
      %s104 = sadd.s32 %s103, 1
      %s105 = scalar_select %p102, %s103, %s104
      %p108 = pneg %p102
      %p109 = scmp.eq.s32.totalorder %s9, 3
      %p110 = por %p108, %p109
      %p111 = scmp.ne.s32.totalorder %s103, %s106
      %p112 = scmp.eq.s32.totalorder %s9, 0
      %p113 = por %p111, %p112
      %p114 = scmp.ne.s32.totalorder %s103, %s106
      %p115 = scmp.eq.s32.totalorder %s14, 3
      %p116 = por %p114, %p115
      %p117 = scmp.ne.s32.totalorder %s106, %s107
      %p118 = scmp.eq.s32.totalorder %s14, 0
      %p119 = por %p117, %p118
      %p120 = scmp.ne.s32.totalorder %s106, %s107
      %p121 = scmp.eq.s32.totalorder %s15, 3
      %p122 = por %p120, %p121
      %p124 = scmp.ne.s32.totalorder %s107, %s123
      %p125 = scmp.eq.s32.totalorder %s15, 0
      %p126 = por %p124, %p125
      %p127 = scmp.le.s32.totalorder 1, %s9
      %p128 = scmp.lt.s32.totalorder %s9, 5
      %p129 = pnand %p127, %p128
      %p130 = pneg %p129
      // Predicated region
      $region9: #{a_call__.4} parent=5 // pred_check
        _
      $region10: #{a_call__.4} parent=5 // pred_check_branch
        %132 = sbr.rel (%p129) target = $region12
      $region11: #{a_call__.4} parent=5 // pred_region
        %s133 = ssub.s32 %s9, 1
        // Predicated region
        $region13: #{a_call__.4} parent=11 // pred_check
          %p134 = pneg %p70
        $region14: #{a_call__.4} parent=11 // pred_check_branch
          %136 = sbr.rel (%p134) target = $region16
        $region15: #{a_call__.4} parent=11 // pred_region
          _
        $region16: #{a_call__.4} parent=11 // pred_fallthru
          _
        // Predicated region
        $region17: #{a_call__.4} parent=11 // pred_check
          %p137 = pneg %p91
        $region18: #{a_call__.4} parent=11 // pred_check_branch
          %139 = sbr.rel (%p137) target = $region20
        $region19: #{a_call__.4} parent=11 // pred_region
          _
        $region20: #{a_call__.4} parent=11 // pred_fallthru
          _
      $region12: #{a_call__.4} parent=5 // pred_fallthru
        _
      %p140 = scmp.lt.s32.totalorder %s9, 4
      // Predicated region
      $region21: #{a_call__.4} parent=5 // pred_check
        %p141 = pneg %p140
      $region22: #{a_call__.4} parent=5 // pred_check_branch
        %143 = sbr.rel (%p141) target = $region24
      $region23: #{a_call__.4} parent=5 // pred_region
        // Predicated region
        $region25: #{a_call__.4} parent=23 // pred_check
          %p144 = pneg %p43
        $region26: #{a_call__.4} parent=23 // pred_check_branch
          %146 = sbr.rel (%p144) target = $region28
        $region27: #{a_call__.4} parent=23 // pred_region
          %s147 = sand.u32 %s33, 1
          %s148 = sand.u32 %s33, 1
          %s149 = smul.addr %s148, 128
          %s150 = scalar_lea.vmem [#allocation4], %s149
          %s151 = smul.addr %s16, 32
          %s152 = sadd.s32 %s17, %s151
          %s153 = smul.addr %s152, 8
          %s154 = scalar_lea.vmem %s0, %s153
          // Predicated region
          $region29: #{a_call__.4} parent=27 // pred_check
            _
          $region30: #{a_call__.4} parent=27 // pred_check_branch
            %156 = sbr.rel (0) target = $region32
          $region31: #{a_call__.4} parent=27 // pred_region
            // Predicated region
            $region33: #{a_call__.4} parent=31 // pred_check
              _
            $region34: #{a_call__.4} parent=31 // pred_check_branch
              %158 = sbr.rel (0) target = $region36
            $region35: #{a_call__.4} parent=31 // pred_region
              // Predicated region
              $region48: #{a_call__.4} parent=35 // pred_check
                _
              $region49: #{a_call__.4} parent=35 // pred_check_branch
                %204 = sbr.rel (0) target = $region51
              $region50: #{a_call__.4} parent=35 // pred_region
                loop: start=0, step=1, limit=1
                $region52: #{a_call__.4} parent=50 // loop_pre_header
                  _
                $region53: #{a_call__.4} parent=50 // loop_header
                  %s206 = sphi 0, %s210
                  %p207 = scmp.ge.s32.totalorder %s206, 1
                  %s211 = sphi %s154, %s154
                  %s212 = sphi %s150, %s150
                $region54: #{a_call__.4} parent=50 // loop_header_branch
                  %209 = sbr.rel (%p207) target = $region58
                $region55: #{a_call__.4} parent=50 // loop_body
                  %v213 = vld [vmem:[%s211] sm:$0xff]
                  %214 = vst [vmem:[%s212] sm:$0xff] %v213
                  %v215 = vld [vmem:[%s211 + $0x10] sm:$0xff]
                  %216 = vst [vmem:[%s212 + $0x8] sm:$0xff] %v215
                  %v217 = vld [vmem:[%s211 + $0x20] sm:$0xff]
                  %218 = vst [vmem:[%s212 + $0x10] sm:$0xff] %v217
                  %v219 = vld [vmem:[%s211 + $0x30] sm:$0xff]
                  %220 = vst [vmem:[%s212 + $0x18] sm:$0xff] %v219
                  %v221 = vld [vmem:[%s211 + $0x40] sm:$0xff]
                  %222 = vst [vmem:[%s212 + $0x20] sm:$0xff] %v221
                  %v223 = vld [vmem:[%s211 + $0x50] sm:$0xff]
                  %224 = vst [vmem:[%s212 + $0x28] sm:$0xff] %v223
                  %v225 = vld [vmem:[%s211 + $0x60] sm:$0xff]
                  %226 = vst [vmem:[%s212 + $0x30] sm:$0xff] %v225
                  %v227 = vld [vmem:[%s211 + $0x70] sm:$0xff]
                  %228 = vst [vmem:[%s212 + $0x38] sm:$0xff] %v227
                  %v229 = vld [vmem:[%s211 + $0x80] sm:$0xff]
                  %230 = vst [vmem:[%s212 + $0x40] sm:$0xff] %v229
                  %v231 = vld [vmem:[%s211 + $0x90] sm:$0xff]
                  %232 = vst [vmem:[%s212 + $0x48] sm:$0xff] %v231
                  %v233 = vld [vmem:[%s211 + $0xa0] sm:$0xff]
                  %234 = vst [vmem:[%s212 + $0x50] sm:$0xff] %v233
                  %v235 = vld [vmem:[%s211 + $0xb0] sm:$0xff]
                  %236 = vst [vmem:[%s212 + $0x58] sm:$0xff] %v235
                  %v237 = vld [vmem:[%s211 + $0xc0] sm:$0xff]
                  %238 = vst [vmem:[%s212 + $0x60] sm:$0xff] %v237
                  %v239 = vld [vmem:[%s211 + $0xd0] sm:$0xff]
                  %240 = vst [vmem:[%s212 + $0x68] sm:$0xff] %v239
                  %v241 = vld [vmem:[%s211 + $0xe0] sm:$0xff]
                  %242 = vst [vmem:[%s212 + $0x70] sm:$0xff] %v241
                  %v243 = vld [vmem:[%s211 + $0xf0] sm:$0xff]
                  %244 = vst [vmem:[%s212 + $0x78] sm:$0xff] %v243
                $region56: #{a_call__.4} parent=50 // loop_footer
                  %s210 = sadd.s32 1, %s206
                $region57: #{a_call__.4} parent=50 // loop_footer_branch
                  %205 = sbr.rel target = $region53
                $region58: #{a_call__.4} parent=50 // loop_exit
                  _
              $region51: #{a_call__.4} parent=35 // pred_fallthru
                _
              // Predicated region
              $region59: #{a_call__.4} parent=35 // pred_check
                _
              $region60: #{a_call__.4} parent=35 // pred_check_branch
                %246 = sbr.rel target = $region62
              $region61: #{a_call__.4} parent=35 // pred_region
                _
              $region62: #{a_call__.4} parent=35 // pred_fallthru
                _
            $region36: #{a_call__.4} parent=31 // pred_fallthru
              _
            // Predicated region
            $region37: #{a_call__.4} parent=31 // pred_check
              _
            $region38: #{a_call__.4} parent=31 // pred_check_branch
              %160 = sbr.rel target = $region40
            $region39: #{a_call__.4} parent=31 // pred_region
              %s162 = ssub.s32 256, 1
              loop: start=0, step=1, limit=1
              $region41: #{a_call__.4} parent=39 // loop_pre_header
                _
              $region42: #{a_call__.4} parent=39 // loop_header
                %s164 = sphi 0, %s168
                %p165 = scmp.ge.s32.totalorder %s164, 1
                %s169 = sphi %s154, %s154
                %s170 = sphi %s150, %s150
              $region43: #{a_call__.4} parent=39 // loop_header_branch
                %167 = sbr.rel (%p165) target = $region47
              $region44: #{a_call__.4} parent=39 // loop_body
                %v171 = vld [vmem:[%s169] sm:%s162]
                %172 = vst [vmem:[%s170] sm:%s162] %v171
                %v173 = vld [vmem:[%s169 + $0x10] sm:%s162]
                %174 = vst [vmem:[%s170 + $0x8] sm:%s162] %v173
                %v175 = vld [vmem:[%s169 + $0x20] sm:%s162]
                %176 = vst [vmem:[%s170 + $0x10] sm:%s162] %v175
                %v177 = vld [vmem:[%s169 + $0x30] sm:%s162]
                %178 = vst [vmem:[%s170 + $0x18] sm:%s162] %v177
                %v179 = vld [vmem:[%s169 + $0x40] sm:%s162]
                %180 = vst [vmem:[%s170 + $0x20] sm:%s162] %v179
                %v181 = vld [vmem:[%s169 + $0x50] sm:%s162]
                %182 = vst [vmem:[%s170 + $0x28] sm:%s162] %v181
                %v183 = vld [vmem:[%s169 + $0x60] sm:%s162]
                %184 = vst [vmem:[%s170 + $0x30] sm:%s162] %v183
                %v185 = vld [vmem:[%s169 + $0x70] sm:%s162]
                %186 = vst [vmem:[%s170 + $0x38] sm:%s162] %v185
                %v187 = vld [vmem:[%s169 + $0x80] sm:%s162]
                %188 = vst [vmem:[%s170 + $0x40] sm:%s162] %v187
                %v189 = vld [vmem:[%s169 + $0x90] sm:%s162]
                %190 = vst [vmem:[%s170 + $0x48] sm:%s162] %v189
                %v191 = vld [vmem:[%s169 + $0xa0] sm:%s162]
                %192 = vst [vmem:[%s170 + $0x50] sm:%s162] %v191
                %v193 = vld [vmem:[%s169 + $0xb0] sm:%s162]
                %194 = vst [vmem:[%s170 + $0x58] sm:%s162] %v193
                %v195 = vld [vmem:[%s169 + $0xc0] sm:%s162]
                %196 = vst [vmem:[%s170 + $0x60] sm:%s162] %v195
                %v197 = vld [vmem:[%s169 + $0xd0] sm:%s162]
                %198 = vst [vmem:[%s170 + $0x68] sm:%s162] %v197
                %v199 = vld [vmem:[%s169 + $0xe0] sm:%s162]
                %200 = vst [vmem:[%s170 + $0x70] sm:%s162] %v199
                %v201 = vld [vmem:[%s169 + $0xf0] sm:%s162]
                %202 = vst [vmem:[%s170 + $0x78] sm:%s162] %v201
              $region45: #{a_call__.4} parent=39 // loop_footer
                %s168 = sadd.s32 1, %s164
              $region46: #{a_call__.4} parent=39 // loop_footer_branch
                %163 = sbr.rel target = $region42
              $region47: #{a_call__.4} parent=39 // loop_exit
                _
            $region40: #{a_call__.4} parent=31 // pred_fallthru
              _
          $region32: #{a_call__.4} parent=27 // pred_fallthru
            _
          %247 = vnop
        $region28: #{a_call__.4} parent=23 // pred_fallthru
          _
      $region24: #{a_call__.4} parent=5 // pred_fallthru
        _
      %p248 = scmp.le.s32.totalorder 1, %s9
      %p249 = scmp.lt.s32.totalorder %s9, 5
      %p250 = pnand %p248, %p249
      %p251 = pneg %p250
      // Predicated region
      $region63: #{a_call__.4} parent=5 // pred_check
        _
      $region64: #{a_call__.4} parent=5 // pred_check_branch
        %253 = sbr.rel (%p250) target = $region66
      $region65: #{a_call__.4} parent=5 // pred_region
        %s254 = ssub.s32 %s9, 1
        %s255 = sand.u32 %s36, 1
        %s256 = sand.u32 %s36, 1
        %s257 = smul.addr %s256, 128
        %s258 = scalar_lea.vmem [#allocation4], %s257
        // Predicated region
        $region67: #{a_call__.4} parent=65 // pred_check
          %p259 = pneg %p49
        $region68: #{a_call__.4} parent=65 // pred_check_branch
          %261 = sbr.rel (%p259) target = $region70
        $region69: #{a_call__.4} parent=65 // pred_region
          _
        $region70: #{a_call__.4} parent=65 // pred_fallthru
          _
        %s262 = sand.u32 %s36, 1
        %s263 = sand.u32 %s36, 1
        %s264 = smul.addr %s263, 128
        %s265 = scalar_lea.vmem [#allocation4], %s264
        %p266 = pneg %p49
        %p267 = pneg %p46
        %p268 = pneg %p70
        %p269 = pneg %p67
        %p270 = pneg %p91
        %p271 = pneg %p88
        %p272 = pneg %p119
        %p273 = pneg %p116
        %s274 = sand.u32 %s106, 1
        %s275 = sand.u32 %s106, 1
        %s276 = smul.addr %s275, 128
        %s277 = scalar_lea.vmem [#allocation5], %s276
        %v279 = vld [vmem:[%s258] sm:$0xff]
        %v280 = vld [vmem:[%s258 + $0x8] sm:$0xff]
        %v281 = vld [vmem:[%s258 + $0x10] sm:$0xff]
        %v282 = vld [vmem:[%s258 + $0x18] sm:$0xff]
        %v283 = vld [vmem:[%s258 + $0x20] sm:$0xff]
        %v284 = vld [vmem:[%s258 + $0x28] sm:$0xff]
        %v285 = vld [vmem:[%s258 + $0x30] sm:$0xff]
        %v286 = vld [vmem:[%s258 + $0x38] sm:$0xff]
        %v287 = vld [vmem:[%s258 + $0x40] sm:$0xff]
        %v288 = vld [vmem:[%s258 + $0x48] sm:$0xff]
        %v289 = vld [vmem:[%s258 + $0x50] sm:$0xff]
        %v290 = vld [vmem:[%s258 + $0x58] sm:$0xff]
        %v291 = vld [vmem:[%s258 + $0x60] sm:$0xff]
        %v292 = vld [vmem:[%s258 + $0x68] sm:$0xff]
        %v293 = vld [vmem:[%s258 + $0x70] sm:$0xff]
        %v294 = vld [vmem:[%s258 + $0x78] sm:$0xff]
        %v295 = vpack.c.bf16 %v279, %v279
        %v296 = vpack.c.bf16 %v280, %v280
        %v297 = vpack.c.bf16 %v281, %v281
        %v298 = vpack.c.bf16 %v282, %v282
        %v299 = vpack.c.bf16 %v283, %v283
        %v300 = vpack.c.bf16 %v284, %v284
        %v301 = vpack.c.bf16 %v285, %v285
        %v302 = vpack.c.bf16 %v286, %v286
        %v303 = vpack.c.bf16 %v287, %v287
        %v304 = vpack.c.bf16 %v288, %v288
        %v305 = vpack.c.bf16 %v289, %v289
        %v306 = vpack.c.bf16 %v290, %v290
        %v307 = vpack.c.bf16 %v291, %v291
        %v308 = vpack.c.bf16 %v292, %v292
        %v309 = vpack.c.bf16 %v293, %v293
        %v310 = vpack.c.bf16 %v294, %v294
        %vm311 = vcmask 27648
        %312 = vst.msk [vmem:[#allocation2] sm:$0xf] %vm311, 0
        %313 = vst.msk [vmem:[#allocation2 + $0x4] sm:$0xf] %vm311, 0
        %314 = vst.msk [vmem:[#allocation2 + $0x8] sm:$0xf] %vm311, 0
        %s315 = scalar_lea.vmem [#allocation2], 76
        %316 = vst.msk [vmem:[%s315] sm:$0xf] %vm311, 0
        %317 = vst.msk [vmem:[%s315 + $0x4] sm:$0xf] %vm311, 0
        %318 = vst.msk [vmem:[%s315 + $0x8] sm:$0xf] %vm311, 0
        %s319 = scalar_lea.vmem [#allocation2], 12
        %320 = vst.msk [vmem:[%s319] sm:$0xf] %vm311, %v295
        %321 = vst.msk [vmem:[%s319 + $0x4] sm:$0xf] %vm311, %v296
        %322 = vst.msk [vmem:[%s319 + $0x8] sm:$0xf] %vm311, %v297
        %323 = vst.msk [vmem:[%s319 + $0xc] sm:$0xf] %vm311, %v298
        %324 = vst.msk [vmem:[%s319 + $0x10] sm:$0xf] %vm311, %v299
        %325 = vst.msk [vmem:[%s319 + $0x14] sm:$0xf] %vm311, %v300
        %326 = vst.msk [vmem:[%s319 + $0x18] sm:$0xf] %vm311, %v301
        %327 = vst.msk [vmem:[%s319 + $0x1c] sm:$0xf] %vm311, %v302
        %328 = vst.msk [vmem:[%s319 + $0x20] sm:$0xf] %vm311, %v303
        %329 = vst.msk [vmem:[%s319 + $0x24] sm:$0xf] %vm311, %v304
        %330 = vst.msk [vmem:[%s319 + $0x28] sm:$0xf] %vm311, %v305
        %331 = vst.msk [vmem:[%s319 + $0x2c] sm:$0xf] %vm311, %v306
        %332 = vst.msk [vmem:[%s319 + $0x30] sm:$0xf] %vm311, %v307
        %333 = vst.msk [vmem:[%s319 + $0x34] sm:$0xf] %vm311, %v308
        %334 = vst.msk [vmem:[%s319 + $0x38] sm:$0xf] %vm311, %v309
        %335 = vst.msk [vmem:[%s319 + $0x3c] sm:$0xf] %vm311, %v310
        %v336 = vld [vmem:[#allocation2] sm:$0xf]
        %v337 = vld [vmem:[#allocation2 + $0x4] sm:$0xf]
        %v338 = vld [vmem:[#allocation2 + $0x8] sm:$0xf]
        %v339 = vld [vmem:[#allocation2 + $0xc] sm:$0xf]
        %v340 = vld [vmem:[#allocation2 + $0x10] sm:$0xf]
        %v341 = vld [vmem:[#allocation2 + $0x14] sm:$0xf]
        %v342 = vld [vmem:[#allocation2 + $0x18] sm:$0xf]
        %v343 = vld [vmem:[#allocation2 + $0x1c] sm:$0xf]
        %v344 = vld [vmem:[#allocation2 + $0x20] sm:$0xf]
        %v345 = vld [vmem:[#allocation2 + $0x24] sm:$0xf]
        %v346 = vld [vmem:[#allocation2 + $0x28] sm:$0xf]
        %v347 = vld [vmem:[#allocation2 + $0x2c] sm:$0xf]
        %v348 = vld [vmem:[#allocation2 + $0x30] sm:$0xf]
        %v349 = vld [vmem:[#allocation2 + $0x34] sm:$0xf]
        %v350 = vld [vmem:[#allocation2 + $0x38] sm:$0xf]
        %v351 = vld [vmem:[#allocation2 + $0x3c] sm:$0xf]
        %v352 = vld [vmem:[%s1] sm:$0x3]
        %v369 = vunpack.c.l.b16 %v336
        %v370 = vunpack.c.l.b16 %v337
        %v371 = vunpack.c.l.b16 %v338
        %v372 = vunpack.c.l.b16 %v339
        %v373 = vunpack.c.l.b16 %v340
        %v374 = vunpack.c.l.b16 %v341
        %v375 = vunpack.c.l.b16 %v342
        %v376 = vunpack.c.l.b16 %v343
        %v377 = vunpack.c.l.b16 %v344
        %v378 = vunpack.c.l.b16 %v345
        %v379 = vunpack.c.l.b16 %v346
        %v380 = vunpack.c.l.b16 %v347
        %v381 = vunpack.c.l.b16 %v348
        %v382 = vunpack.c.l.b16 %v349
        %v383 = vunpack.c.l.b16 %v350
        %v384 = vunpack.c.l.b16 %v351
        %v385 = vpack.c.b16 %v370, %v369
        %v386 = vpack.c.b16 %v372, %v371
        %v387 = vpack.c.b16 %v374, %v373
        %v388 = vpack.c.b16 %v376, %v375
        %v389 = vpack.c.b16 %v378, %v377
        %v390 = vpack.c.b16 %v380, %v379
        %v391 = vpack.c.b16 %v382, %v381
        %v392 = vpack.c.b16 %v384, %v383
        %vm393 = vcmask 31744
        %v395 = vsel %vm393, %v385, 0
        %v398 = vsel %vm393, %v386, 0
        %v401 = vsel %vm393, %v387, 0
        %v404 = vsel %vm393, %v388, 0
        %v407 = vsel %vm393, %v389, 0
        %v410 = vsel %vm393, %v390, 0
        %v413 = vsel %vm393, %v391, 0
        %v416 = vsel %vm393, %v392, 0
        %vm418 = vcmask 1041408
        %v420 = vsel %vm418, %v352, 0
        %422 = vmatpush.bf16.msra.mxu0 0
        %423 = vmatpush.bf16.msra.mxu0 0
        %424 = vmatpush.bf16.msra.mxu0 0
        %425 = vmatpush.bf16.msra.mxu0 0
        %426 = vmatpush.bf16.msra.mxu0 0
        %427 = vmatpush.bf16.msra.mxu0 0
        %428 = vmatpush.bf16.msra.mxu0 0
        %429 = vmatpush.bf16.msra.mxu0 %v420
        %430 = vmatmul.bf16.gmra.mxu0 %v395
        %v431 = vpop.f32.mrf.mxu0
        %v432 = vadd.f32 0.0, %v431
        %v433 = vpop.f32.mrf.mxu0
        %v434 = vadd.f32 0.0, %v433
        %435 = vmatmul.bf16.gmra.mxu0 %v398
        %v436 = vpop.f32.mrf.mxu0
        %v437 = vadd.f32 0.0, %v436
        %v438 = vpop.f32.mrf.mxu0
        %v439 = vadd.f32 0.0, %v438
        %440 = vmatmul.bf16.gmra.mxu0 %v401
        %v441 = vpop.f32.mrf.mxu0
        %v442 = vadd.f32 0.0, %v441
        %v443 = vpop.f32.mrf.mxu0
        %v444 = vadd.f32 0.0, %v443
        %445 = vmatmul.bf16.gmra.mxu0 %v404
        %v446 = vpop.f32.mrf.mxu0
        %v447 = vadd.f32 0.0, %v446
        %v448 = vpop.f32.mrf.mxu0
        %v449 = vadd.f32 0.0, %v448
        %450 = vmatmul.bf16.gmra.mxu0 %v407
        %v451 = vpop.f32.mrf.mxu0
        %v452 = vadd.f32 0.0, %v451
        %v453 = vpop.f32.mrf.mxu0
        %v454 = vadd.f32 0.0, %v453
        %455 = vmatmul.bf16.gmra.mxu0 %v410
        %v456 = vpop.f32.mrf.mxu0
        %v457 = vadd.f32 0.0, %v456
        %v458 = vpop.f32.mrf.mxu0
        %v459 = vadd.f32 0.0, %v458
        %460 = vmatmul.bf16.gmra.mxu0 %v413
        %v461 = vpop.f32.mrf.mxu0
        %v462 = vadd.f32 0.0, %v461
        %v463 = vpop.f32.mrf.mxu0
        %v464 = vadd.f32 0.0, %v463
        %465 = vmatmul.bf16.gmra.mxu0 %v416
        %v466 = vpop.f32.mrf.mxu0
        %v467 = vadd.f32 0.0, %v466
        %v468 = vpop.f32.mrf.mxu0
        %v469 = vadd.f32 0.0, %v468
        %470 = vdwg.mxu0
        %471 = vst [vmem:[#allocation3] sm:$0xff] %v432
        %472 = vst [vmem:[#allocation3 + $0x8] sm:$0xff] %v434
        %473 = vst [vmem:[#allocation3 + $0x10] sm:$0xff] %v437
        %474 = vst [vmem:[#allocation3 + $0x18] sm:$0xff] %v439
        %475 = vst [vmem:[#allocation3 + $0x20] sm:$0xff] %v442
        %476 = vst [vmem:[#allocation3 + $0x28] sm:$0xff] %v444
        %477 = vst [vmem:[#allocation3 + $0x30] sm:$0xff] %v447
        %478 = vst [vmem:[#allocation3 + $0x38] sm:$0xff] %v449
        %479 = vst [vmem:[#allocation3 + $0x40] sm:$0xff] %v452
        %480 = vst [vmem:[#allocation3 + $0x48] sm:$0xff] %v454
        %481 = vst [vmem:[#allocation3 + $0x50] sm:$0xff] %v457
        %482 = vst [vmem:[#allocation3 + $0x58] sm:$0xff] %v459
        %483 = vst [vmem:[#allocation3 + $0x60] sm:$0xff] %v462
        %484 = vst [vmem:[#allocation3 + $0x68] sm:$0xff] %v464
        %485 = vst [vmem:[#allocation3 + $0x70] sm:$0xff] %v467
        %486 = vst [vmem:[#allocation3 + $0x78] sm:$0xff] %v469
        %s487 = scalar_lea.vmem [#allocation2], 4
        %v488 = vld [vmem:[%s487] sm:$0xf]
        %v489 = vld [vmem:[%s487 + $0x4] sm:$0xf]
        %v490 = vld [vmem:[%s487 + $0x8] sm:$0xf]
        %v491 = vld [vmem:[%s487 + $0xc] sm:$0xf]
        %v492 = vld [vmem:[%s487 + $0x10] sm:$0xf]
        %v493 = vld [vmem:[%s487 + $0x14] sm:$0xf]
        %v494 = vld [vmem:[%s487 + $0x18] sm:$0xf]
        %v495 = vld [vmem:[%s487 + $0x1c] sm:$0xf]
        %v496 = vld [vmem:[%s487 + $0x20] sm:$0xf]
        %v497 = vld [vmem:[%s487 + $0x24] sm:$0xf]
        %v498 = vld [vmem:[%s487 + $0x28] sm:$0xf]
        %v499 = vld [vmem:[%s487 + $0x2c] sm:$0xf]
        %v500 = vld [vmem:[%s487 + $0x30] sm:$0xf]
        %v501 = vld [vmem:[%s487 + $0x34] sm:$0xf]
        %v502 = vld [vmem:[%s487 + $0x38] sm:$0xf]
        %v503 = vld [vmem:[%s487 + $0x3c] sm:$0xf]
        %s504 = scalar_lea.vmem %s1, 2
        %v505 = vld [vmem:[%s504] sm:$0x3]
        %v522 = vunpack.c.l.b16 %v488
        %v523 = vunpack.c.l.b16 %v489
        %v524 = vunpack.c.l.b16 %v490
        %v525 = vunpack.c.l.b16 %v491
        %v526 = vunpack.c.l.b16 %v492
        %v527 = vunpack.c.l.b16 %v493
        %v528 = vunpack.c.l.b16 %v494
        %v529 = vunpack.c.l.b16 %v495
        %v530 = vunpack.c.l.b16 %v496
        %v531 = vunpack.c.l.b16 %v497
        %v532 = vunpack.c.l.b16 %v498
        %v533 = vunpack.c.l.b16 %v499
        %v534 = vunpack.c.l.b16 %v500
        %v535 = vunpack.c.l.b16 %v501
        %v536 = vunpack.c.l.b16 %v502
        %v537 = vunpack.c.l.b16 %v503
        %v538 = vpack.c.b16 %v523, %v522
        %v539 = vpack.c.b16 %v525, %v524
        %v540 = vpack.c.b16 %v527, %v526
        %v541 = vpack.c.b16 %v529, %v528
        %v542 = vpack.c.b16 %v531, %v530
        %v543 = vpack.c.b16 %v533, %v532
        %v544 = vpack.c.b16 %v535, %v534
        %v545 = vpack.c.b16 %v537, %v536
        %v547 = vsel %vm393, %v538, 0
        %v550 = vsel %vm393, %v539, 0
        %v553 = vsel %vm393, %v540, 0
        %v556 = vsel %vm393, %v541, 0
        %v559 = vsel %vm393, %v542, 0
        %v562 = vsel %vm393, %v543, 0
        %v565 = vsel %vm393, %v544, 0
        %v568 = vsel %vm393, %v545, 0
        %v571 = vsel %vm418, %v505, 0
        %573 = vmatpush.bf16.msra.mxu0 0
        %574 = vmatpush.bf16.msra.mxu0 0
        %575 = vmatpush.bf16.msra.mxu0 0
        %576 = vmatpush.bf16.msra.mxu0 0
        %577 = vmatpush.bf16.msra.mxu0 0
        %578 = vmatpush.bf16.msra.mxu0 0
        %579 = vmatpush.bf16.msra.mxu0 0
        %580 = vmatpush.bf16.msra.mxu0 %v571
        %581 = vmatmul.bf16.gmra.mxu0 %v547
        %v582 = vpop.f32.mrf.mxu0
        %v583 = vadd.f32 0.0, %v582
        %v584 = vpop.f32.mrf.mxu0
        %v585 = vadd.f32 0.0, %v584
        %586 = vmatmul.bf16.gmra.mxu0 %v550
        %v587 = vpop.f32.mrf.mxu0
        %v588 = vadd.f32 0.0, %v587
        %v589 = vpop.f32.mrf.mxu0
        %v590 = vadd.f32 0.0, %v589
        %591 = vmatmul.bf16.gmra.mxu0 %v553
        %v592 = vpop.f32.mrf.mxu0
        %v593 = vadd.f32 0.0, %v592
        %v594 = vpop.f32.mrf.mxu0
        %v595 = vadd.f32 0.0, %v594
        %596 = vmatmul.bf16.gmra.mxu0 %v556
        %v597 = vpop.f32.mrf.mxu0
        %v598 = vadd.f32 0.0, %v597
        %v599 = vpop.f32.mrf.mxu0
        %v600 = vadd.f32 0.0, %v599
        %601 = vmatmul.bf16.gmra.mxu0 %v559
        %v602 = vpop.f32.mrf.mxu0
        %v603 = vadd.f32 0.0, %v602
        %v604 = vpop.f32.mrf.mxu0
        %v605 = vadd.f32 0.0, %v604
        %606 = vmatmul.bf16.gmra.mxu0 %v562
        %v607 = vpop.f32.mrf.mxu0
        %v608 = vadd.f32 0.0, %v607
        %v609 = vpop.f32.mrf.mxu0
        %v610 = vadd.f32 0.0, %v609
        %611 = vmatmul.bf16.gmra.mxu0 %v565
        %v612 = vpop.f32.mrf.mxu0
        %v613 = vadd.f32 0.0, %v612
        %v614 = vpop.f32.mrf.mxu0
        %v615 = vadd.f32 0.0, %v614
        %616 = vmatmul.bf16.gmra.mxu0 %v568
        %v617 = vpop.f32.mrf.mxu0
        %v618 = vadd.f32 0.0, %v617
        %v619 = vpop.f32.mrf.mxu0
        %v620 = vadd.f32 0.0, %v619
        %621 = vdwg.mxu0
        %v622 = vld [vmem:[#allocation3] sm:$0xff]
        %v623 = vld [vmem:[#allocation3 + $0x8] sm:$0xff]
        %v624 = vld [vmem:[#allocation3 + $0x10] sm:$0xff]
        %v625 = vld [vmem:[#allocation3 + $0x18] sm:$0xff]
        %v626 = vld [vmem:[#allocation3 + $0x20] sm:$0xff]
        %v627 = vld [vmem:[#allocation3 + $0x28] sm:$0xff]
        %v628 = vld [vmem:[#allocation3 + $0x30] sm:$0xff]
        %v629 = vld [vmem:[#allocation3 + $0x38] sm:$0xff]
        %v630 = vld [vmem:[#allocation3 + $0x40] sm:$0xff]
        %v631 = vld [vmem:[#allocation3 + $0x48] sm:$0xff]
        %v632 = vld [vmem:[#allocation3 + $0x50] sm:$0xff]
        %v633 = vld [vmem:[#allocation3 + $0x58] sm:$0xff]
        %v634 = vld [vmem:[#allocation3 + $0x60] sm:$0xff]
        %v635 = vld [vmem:[#allocation3 + $0x68] sm:$0xff]
        %v636 = vld [vmem:[#allocation3 + $0x70] sm:$0xff]
        %v637 = vld [vmem:[#allocation3 + $0x78] sm:$0xff]
        %v638 = vadd.f32 %v622, %v583
        %v639 = vadd.f32 %v623, %v585
        %v640 = vadd.f32 %v624, %v588
        %v641 = vadd.f32 %v625, %v590
        %v642 = vadd.f32 %v626, %v593
        %v643 = vadd.f32 %v627, %v595
        %v644 = vadd.f32 %v628, %v598
        %v645 = vadd.f32 %v629, %v600
        %v646 = vadd.f32 %v630, %v603
        %v647 = vadd.f32 %v631, %v605
        %v648 = vadd.f32 %v632, %v608
        %v649 = vadd.f32 %v633, %v610
        %v650 = vadd.f32 %v634, %v613
        %v651 = vadd.f32 %v635, %v615
        %v652 = vadd.f32 %v636, %v618
        %v653 = vadd.f32 %v637, %v620
        %654 = vst [vmem:[#allocation3] sm:$0xff] %v638
        %655 = vst [vmem:[#allocation3 + $0x8] sm:$0xff] %v639
        %656 = vst [vmem:[#allocation3 + $0x10] sm:$0xff] %v640
        %657 = vst [vmem:[#allocation3 + $0x18] sm:$0xff] %v641
        %658 = vst [vmem:[#allocation3 + $0x20] sm:$0xff] %v642
        %659 = vst [vmem:[#allocation3 + $0x28] sm:$0xff] %v643
        %660 = vst [vmem:[#allocation3 + $0x30] sm:$0xff] %v644
        %661 = vst [vmem:[#allocation3 + $0x38] sm:$0xff] %v645
        %662 = vst [vmem:[#allocation3 + $0x40] sm:$0xff] %v646
        %663 = vst [vmem:[#allocation3 + $0x48] sm:$0xff] %v647
        %664 = vst [vmem:[#allocation3 + $0x50] sm:$0xff] %v648
        %665 = vst [vmem:[#allocation3 + $0x58] sm:$0xff] %v649
        %666 = vst [vmem:[#allocation3 + $0x60] sm:$0xff] %v650
        %667 = vst [vmem:[#allocation3 + $0x68] sm:$0xff] %v651
        %668 = vst [vmem:[#allocation3 + $0x70] sm:$0xff] %v652
        %669 = vst [vmem:[#allocation3 + $0x78] sm:$0xff] %v653
        %s670 = scalar_lea.vmem [#allocation2], 8
        %v671 = vld [vmem:[%s670] sm:$0xf]
        %v672 = vld [vmem:[%s670 + $0x4] sm:$0xf]
        %v673 = vld [vmem:[%s670 + $0x8] sm:$0xf]
        %v674 = vld [vmem:[%s670 + $0xc] sm:$0xf]
        %v675 = vld [vmem:[%s670 + $0x10] sm:$0xf]
        %v676 = vld [vmem:[%s670 + $0x14] sm:$0xf]
        %v677 = vld [vmem:[%s670 + $0x18] sm:$0xf]
        %v678 = vld [vmem:[%s670 + $0x1c] sm:$0xf]
        %v679 = vld [vmem:[%s670 + $0x20] sm:$0xf]
        %v680 = vld [vmem:[%s670 + $0x24] sm:$0xf]
        %v681 = vld [vmem:[%s670 + $0x28] sm:$0xf]
        %v682 = vld [vmem:[%s670 + $0x2c] sm:$0xf]
        %v683 = vld [vmem:[%s670 + $0x30] sm:$0xf]
        %v684 = vld [vmem:[%s670 + $0x34] sm:$0xf]
        %v685 = vld [vmem:[%s670 + $0x38] sm:$0xf]
        %v686 = vld [vmem:[%s670 + $0x3c] sm:$0xf]
        %s687 = scalar_lea.vmem %s1, 4
        %v688 = vld [vmem:[%s687] sm:$0x3]
        %v705 = vunpack.c.l.b16 %v671
        %v706 = vunpack.c.l.b16 %v672
        %v707 = vunpack.c.l.b16 %v673
        %v708 = vunpack.c.l.b16 %v674
        %v709 = vunpack.c.l.b16 %v675
        %v710 = vunpack.c.l.b16 %v676
        %v711 = vunpack.c.l.b16 %v677
        %v712 = vunpack.c.l.b16 %v678
        %v713 = vunpack.c.l.b16 %v679
        %v714 = vunpack.c.l.b16 %v680
        %v715 = vunpack.c.l.b16 %v681
        %v716 = vunpack.c.l.b16 %v682
        %v717 = vunpack.c.l.b16 %v683
        %v718 = vunpack.c.l.b16 %v684
        %v719 = vunpack.c.l.b16 %v685
        %v720 = vunpack.c.l.b16 %v686
        %v721 = vpack.c.b16 %v706, %v705
        %v722 = vpack.c.b16 %v708, %v707
        %v723 = vpack.c.b16 %v710, %v709
        %v724 = vpack.c.b16 %v712, %v711
        %v725 = vpack.c.b16 %v714, %v713
        %v726 = vpack.c.b16 %v716, %v715
        %v727 = vpack.c.b16 %v718, %v717
        %v728 = vpack.c.b16 %v720, %v719
        %v730 = vsel %vm393, %v721, 0
        %v733 = vsel %vm393, %v722, 0
        %v736 = vsel %vm393, %v723, 0
        %v739 = vsel %vm393, %v724, 0
        %v742 = vsel %vm393, %v725, 0
        %v745 = vsel %vm393, %v726, 0
        %v748 = vsel %vm393, %v727, 0
        %v751 = vsel %vm393, %v728, 0
        %v754 = vsel %vm418, %v688, 0
        %756 = vmatpush.bf16.msra.mxu0 0
        %757 = vmatpush.bf16.msra.mxu0 0
        %758 = vmatpush.bf16.msra.mxu0 0
        %759 = vmatpush.bf16.msra.mxu0 0
        %760 = vmatpush.bf16.msra.mxu0 0
        %761 = vmatpush.bf16.msra.mxu0 0
        %762 = vmatpush.bf16.msra.mxu0 0
        %763 = vmatpush.bf16.msra.mxu0 %v754
        %764 = vmatmul.bf16.gmra.mxu0 %v730
        %v765 = vpop.f32.mrf.mxu0
        %v766 = vadd.f32 0.0, %v765
        %v767 = vpop.f32.mrf.mxu0
        %v768 = vadd.f32 0.0, %v767
        %769 = vmatmul.bf16.gmra.mxu0 %v733
        %v770 = vpop.f32.mrf.mxu0
        %v771 = vadd.f32 0.0, %v770
        %v772 = vpop.f32.mrf.mxu0
        %v773 = vadd.f32 0.0, %v772
        %774 = vmatmul.bf16.gmra.mxu0 %v736
        %v775 = vpop.f32.mrf.mxu0
        %v776 = vadd.f32 0.0, %v775
        %v777 = vpop.f32.mrf.mxu0
        %v778 = vadd.f32 0.0, %v777
        %779 = vmatmul.bf16.gmra.mxu0 %v739
        %v780 = vpop.f32.mrf.mxu0
        %v781 = vadd.f32 0.0, %v780
        %v782 = vpop.f32.mrf.mxu0
        %v783 = vadd.f32 0.0, %v782
        %784 = vmatmul.bf16.gmra.mxu0 %v742
        %v785 = vpop.f32.mrf.mxu0
        %v786 = vadd.f32 0.0, %v785
        %v787 = vpop.f32.mrf.mxu0
        %v788 = vadd.f32 0.0, %v787
        %789 = vmatmul.bf16.gmra.mxu0 %v745
        %v790 = vpop.f32.mrf.mxu0
        %v791 = vadd.f32 0.0, %v790
        %v792 = vpop.f32.mrf.mxu0
        %v793 = vadd.f32 0.0, %v792
        %794 = vmatmul.bf16.gmra.mxu0 %v748
        %v795 = vpop.f32.mrf.mxu0
        %v796 = vadd.f32 0.0, %v795
        %v797 = vpop.f32.mrf.mxu0
        %v798 = vadd.f32 0.0, %v797
        %799 = vmatmul.bf16.gmra.mxu0 %v751
        %v800 = vpop.f32.mrf.mxu0
        %v801 = vadd.f32 0.0, %v800
        %v802 = vpop.f32.mrf.mxu0
        %v803 = vadd.f32 0.0, %v802
        %804 = vdwg.mxu0
        %v805 = vld [vmem:[#allocation3] sm:$0xff]
        %v806 = vld [vmem:[#allocation3 + $0x8] sm:$0xff]
        %v807 = vld [vmem:[#allocation3 + $0x10] sm:$0xff]
        %v808 = vld [vmem:[#allocation3 + $0x18] sm:$0xff]
        %v809 = vld [vmem:[#allocation3 + $0x20] sm:$0xff]
        %v810 = vld [vmem:[#allocation3 + $0x28] sm:$0xff]
        %v811 = vld [vmem:[#allocation3 + $0x30] sm:$0xff]
        %v812 = vld [vmem:[#allocation3 + $0x38] sm:$0xff]
        %v813 = vld [vmem:[#allocation3 + $0x40] sm:$0xff]
        %v814 = vld [vmem:[#allocation3 + $0x48] sm:$0xff]
        %v815 = vld [vmem:[#allocation3 + $0x50] sm:$0xff]
        %v816 = vld [vmem:[#allocation3 + $0x58] sm:$0xff]
        %v817 = vld [vmem:[#allocation3 + $0x60] sm:$0xff]
        %v818 = vld [vmem:[#allocation3 + $0x68] sm:$0xff]
        %v819 = vld [vmem:[#allocation3 + $0x70] sm:$0xff]
        %v820 = vld [vmem:[#allocation3 + $0x78] sm:$0xff]
        %v821 = vadd.f32 %v805, %v766
        %v822 = vadd.f32 %v806, %v768
        %v823 = vadd.f32 %v807, %v771
        %v824 = vadd.f32 %v808, %v773
        %v825 = vadd.f32 %v809, %v776
        %v826 = vadd.f32 %v810, %v778
        %v827 = vadd.f32 %v811, %v781
        %v828 = vadd.f32 %v812, %v783
        %v829 = vadd.f32 %v813, %v786
        %v830 = vadd.f32 %v814, %v788
        %v831 = vadd.f32 %v815, %v791
        %v832 = vadd.f32 %v816, %v793
        %v833 = vadd.f32 %v817, %v796
        %v834 = vadd.f32 %v818, %v798
        %v835 = vadd.f32 %v819, %v801
        %v836 = vadd.f32 %v820, %v803
        %837 = vst [vmem:[#allocation3] sm:$0xff] %v821
        %838 = vst [vmem:[#allocation3 + $0x8] sm:$0xff] %v822
        %839 = vst [vmem:[#allocation3 + $0x10] sm:$0xff] %v823
        %840 = vst [vmem:[#allocation3 + $0x18] sm:$0xff] %v824
        %841 = vst [vmem:[#allocation3 + $0x20] sm:$0xff] %v825
        %842 = vst [vmem:[#allocation3 + $0x28] sm:$0xff] %v826
        %843 = vst [vmem:[#allocation3 + $0x30] sm:$0xff] %v827
        %844 = vst [vmem:[#allocation3 + $0x38] sm:$0xff] %v828
        %845 = vst [vmem:[#allocation3 + $0x40] sm:$0xff] %v829
        %846 = vst [vmem:[#allocation3 + $0x48] sm:$0xff] %v830
        %847 = vst [vmem:[#allocation3 + $0x50] sm:$0xff] %v831
        %848 = vst [vmem:[#allocation3 + $0x58] sm:$0xff] %v832
        %849 = vst [vmem:[#allocation3 + $0x60] sm:$0xff] %v833
        %850 = vst [vmem:[#allocation3 + $0x68] sm:$0xff] %v834
        %851 = vst [vmem:[#allocation3 + $0x70] sm:$0xff] %v835
        %852 = vst [vmem:[#allocation3 + $0x78] sm:$0xff] %v836
        %v853 = vld [vmem:[%s319] sm:$0xf]
        %v854 = vld [vmem:[%s319 + $0x4] sm:$0xf]
        %v855 = vld [vmem:[%s319 + $0x8] sm:$0xf]
        %v856 = vld [vmem:[%s319 + $0xc] sm:$0xf]
        %v857 = vld [vmem:[%s319 + $0x10] sm:$0xf]
        %v858 = vld [vmem:[%s319 + $0x14] sm:$0xf]
        %v859 = vld [vmem:[%s319 + $0x18] sm:$0xf]
        %v860 = vld [vmem:[%s319 + $0x1c] sm:$0xf]
        %v861 = vld [vmem:[%s319 + $0x20] sm:$0xf]
        %v862 = vld [vmem:[%s319 + $0x24] sm:$0xf]
        %v863 = vld [vmem:[%s319 + $0x28] sm:$0xf]
        %v864 = vld [vmem:[%s319 + $0x2c] sm:$0xf]
        %v865 = vld [vmem:[%s319 + $0x30] sm:$0xf]
        %v866 = vld [vmem:[%s319 + $0x34] sm:$0xf]
        %v867 = vld [vmem:[%s319 + $0x38] sm:$0xf]
        %v868 = vld [vmem:[%s319 + $0x3c] sm:$0xf]
        %s869 = scalar_lea.vmem %s1, 6
        %v870 = vld [vmem:[%s869] sm:$0x3]
        %v887 = vunpack.c.l.b16 %v853
        %v888 = vunpack.c.l.b16 %v854
        %v889 = vunpack.c.l.b16 %v855
        %v890 = vunpack.c.l.b16 %v856
        %v891 = vunpack.c.l.b16 %v857
        %v892 = vunpack.c.l.b16 %v858
        %v893 = vunpack.c.l.b16 %v859
        %v894 = vunpack.c.l.b16 %v860
        %v895 = vunpack.c.l.b16 %v861
        %v896 = vunpack.c.l.b16 %v862
        %v897 = vunpack.c.l.b16 %v863
        %v898 = vunpack.c.l.b16 %v864
        %v899 = vunpack.c.l.b16 %v865
        %v900 = vunpack.c.l.b16 %v866
        %v901 = vunpack.c.l.b16 %v867
        %v902 = vunpack.c.l.b16 %v868
        %v903 = vpack.c.b16 %v888, %v887
        %v904 = vpack.c.b16 %v890, %v889
        %v905 = vpack.c.b16 %v892, %v891
        %v906 = vpack.c.b16 %v894, %v893
        %v907 = vpack.c.b16 %v896, %v895
        %v908 = vpack.c.b16 %v898, %v897
        %v909 = vpack.c.b16 %v900, %v899
        %v910 = vpack.c.b16 %v902, %v901
        %v912 = vsel %vm393, %v903, 0
        %v915 = vsel %vm393, %v904, 0
        %v918 = vsel %vm393, %v905, 0
        %v921 = vsel %vm393, %v906, 0
        %v924 = vsel %vm393, %v907, 0
        %v927 = vsel %vm393, %v908, 0
        %v930 = vsel %vm393, %v909, 0
        %v933 = vsel %vm393, %v910, 0
        %v936 = vsel %vm418, %v870, 0
        %938 = vmatpush.bf16.msra.mxu0 0
        %939 = vmatpush.bf16.msra.mxu0 0
        %940 = vmatpush.bf16.msra.mxu0 0
        %941 = vmatpush.bf16.msra.mxu0 0
        %942 = vmatpush.bf16.msra.mxu0 0
        %943 = vmatpush.bf16.msra.mxu0 0
        %944 = vmatpush.bf16.msra.mxu0 0
        %945 = vmatpush.bf16.msra.mxu0 %v936
        %946 = vmatmul.bf16.gmra.mxu0 %v912
        %v947 = vpop.f32.mrf.mxu0
        %v948 = vadd.f32 0.0, %v947
        %v949 = vpop.f32.mrf.mxu0
        %v950 = vadd.f32 0.0, %v949
        %951 = vmatmul.bf16.gmra.mxu0 %v915
        %v952 = vpop.f32.mrf.mxu0
        %v953 = vadd.f32 0.0, %v952
        %v954 = vpop.f32.mrf.mxu0
        %v955 = vadd.f32 0.0, %v954
        %956 = vmatmul.bf16.gmra.mxu0 %v918
        %v957 = vpop.f32.mrf.mxu0
        %v958 = vadd.f32 0.0, %v957
        %v959 = vpop.f32.mrf.mxu0
        %v960 = vadd.f32 0.0, %v959
        %961 = vmatmul.bf16.gmra.mxu0 %v921
        %v962 = vpop.f32.mrf.mxu0
        %v963 = vadd.f32 0.0, %v962
        %v964 = vpop.f32.mrf.mxu0
        %v965 = vadd.f32 0.0, %v964
        %966 = vmatmul.bf16.gmra.mxu0 %v924
        %v967 = vpop.f32.mrf.mxu0
        %v968 = vadd.f32 0.0, %v967
        %v969 = vpop.f32.mrf.mxu0
        %v970 = vadd.f32 0.0, %v969
        %971 = vmatmul.bf16.gmra.mxu0 %v927
        %v972 = vpop.f32.mrf.mxu0
        %v973 = vadd.f32 0.0, %v972
        %v974 = vpop.f32.mrf.mxu0
        %v975 = vadd.f32 0.0, %v974
        %976 = vmatmul.bf16.gmra.mxu0 %v930
        %v977 = vpop.f32.mrf.mxu0
        %v978 = vadd.f32 0.0, %v977
        %v979 = vpop.f32.mrf.mxu0
        %v980 = vadd.f32 0.0, %v979
        %981 = vmatmul.bf16.gmra.mxu0 %v933
        %v982 = vpop.f32.mrf.mxu0
        %v983 = vadd.f32 0.0, %v982
        %v984 = vpop.f32.mrf.mxu0
        %v985 = vadd.f32 0.0, %v984
        %986 = vdwg.mxu0
        %v987 = vld [vmem:[#allocation3] sm:$0xff]
        %v988 = vld [vmem:[#allocation3 + $0x8] sm:$0xff]
        %v989 = vld [vmem:[#allocation3 + $0x10] sm:$0xff]
        %v990 = vld [vmem:[#allocation3 + $0x18] sm:$0xff]
        %v991 = vld [vmem:[#allocation3 + $0x20] sm:$0xff]
        %v992 = vld [vmem:[#allocation3 + $0x28] sm:$0xff]
        %v993 = vld [vmem:[#allocation3 + $0x30] sm:$0xff]
        %v994 = vld [vmem:[#allocation3 + $0x38] sm:$0xff]
        %v995 = vld [vmem:[#allocation3 + $0x40] sm:$0xff]
        %v996 = vld [vmem:[#allocation3 + $0x48] sm:$0xff]
        %v997 = vld [vmem:[#allocation3 + $0x50] sm:$0xff]
        %v998 = vld [vmem:[#allocation3 + $0x58] sm:$0xff]
        %v999 = vld [vmem:[#allocation3 + $0x60] sm:$0xff]
        %v1000 = vld [vmem:[#allocation3 + $0x68] sm:$0xff]
        %v1001 = vld [vmem:[#allocation3 + $0x70] sm:$0xff]
        %v1002 = vld [vmem:[#allocation3 + $0x78] sm:$0xff]
        %v1003 = vadd.f32 %v987, %v948
        %v1004 = vadd.f32 %v988, %v950
        %v1005 = vadd.f32 %v989, %v953
        %v1006 = vadd.f32 %v990, %v955
        %v1007 = vadd.f32 %v991, %v958
        %v1008 = vadd.f32 %v992, %v960
        %v1009 = vadd.f32 %v993, %v963
        %v1010 = vadd.f32 %v994, %v965
        %v1011 = vadd.f32 %v995, %v968
        %v1012 = vadd.f32 %v996, %v970
        %v1013 = vadd.f32 %v997, %v973
        %v1014 = vadd.f32 %v998, %v975
        %v1015 = vadd.f32 %v999, %v978
        %v1016 = vadd.f32 %v1000, %v980
        %v1017 = vadd.f32 %v1001, %v983
        %v1018 = vadd.f32 %v1002, %v985
        %1019 = vst [vmem:[#allocation3] sm:$0xff] %v1003
        %1020 = vst [vmem:[#allocation3 + $0x8] sm:$0xff] %v1004
        %1021 = vst [vmem:[#allocation3 + $0x10] sm:$0xff] %v1005
        %1022 = vst [vmem:[#allocation3 + $0x18] sm:$0xff] %v1006
        %1023 = vst [vmem:[#allocation3 + $0x20] sm:$0xff] %v1007
        %1024 = vst [vmem:[#allocation3 + $0x28] sm:$0xff] %v1008
        %1025 = vst [vmem:[#allocation3 + $0x30] sm:$0xff] %v1009
        %1026 = vst [vmem:[#allocation3 + $0x38] sm:$0xff] %v1010
        %1027 = vst [vmem:[#allocation3 + $0x40] sm:$0xff] %v1011
        %1028 = vst [vmem:[#allocation3 + $0x48] sm:$0xff] %v1012
        %1029 = vst [vmem:[#allocation3 + $0x50] sm:$0xff] %v1013
        %1030 = vst [vmem:[#allocation3 + $0x58] sm:$0xff] %v1014
        %1031 = vst [vmem:[#allocation3 + $0x60] sm:$0xff] %v1015
        %1032 = vst [vmem:[#allocation3 + $0x68] sm:$0xff] %v1016
        %1033 = vst [vmem:[#allocation3 + $0x70] sm:$0xff] %v1017
        %1034 = vst [vmem:[#allocation3 + $0x78] sm:$0xff] %v1018
        %s1035 = scalar_lea.vmem [#allocation2], 16
        %v1036 = vld [vmem:[%s1035] sm:$0xf]
        %v1037 = vld [vmem:[%s1035 + $0x4] sm:$0xf]
        %v1038 = vld [vmem:[%s1035 + $0x8] sm:$0xf]
        %v1039 = vld [vmem:[%s1035 + $0xc] sm:$0xf]
        %v1040 = vld [vmem:[%s1035 + $0x10] sm:$0xf]
        %v1041 = vld [vmem:[%s1035 + $0x14] sm:$0xf]
        %v1042 = vld [vmem:[%s1035 + $0x18] sm:$0xf]
        %v1043 = vld [vmem:[%s1035 + $0x1c] sm:$0xf]
        %v1044 = vld [vmem:[%s1035 + $0x20] sm:$0xf]
        %v1045 = vld [vmem:[%s1035 + $0x24] sm:$0xf]
        %v1046 = vld [vmem:[%s1035 + $0x28] sm:$0xf]
        %v1047 = vld [vmem:[%s1035 + $0x2c] sm:$0xf]
        %v1048 = vld [vmem:[%s1035 + $0x30] sm:$0xf]
        %v1049 = vld [vmem:[%s1035 + $0x34] sm:$0xf]
        %v1050 = vld [vmem:[%s1035 + $0x38] sm:$0xf]
        %v1051 = vld [vmem:[%s1035 + $0x3c] sm:$0xf]
        %s1052 = scalar_lea.vmem %s1, 8
        %v1053 = vld [vmem:[%s1052] sm:$0x3]
        %v1070 = vunpack.c.l.b16 %v1036
        %v1071 = vunpack.c.l.b16 %v1037
        %v1072 = vunpack.c.l.b16 %v1038
        %v1073 = vunpack.c.l.b16 %v1039
        %v1074 = vunpack.c.l.b16 %v1040
        %v1075 = vunpack.c.l.b16 %v1041
        %v1076 = vunpack.c.l.b16 %v1042
        %v1077 = vunpack.c.l.b16 %v1043
        %v1078 = vunpack.c.l.b16 %v1044
        %v1079 = vunpack.c.l.b16 %v1045
        %v1080 = vunpack.c.l.b16 %v1046
        %v1081 = vunpack.c.l.b16 %v1047
        %v1082 = vunpack.c.l.b16 %v1048
        %v1083 = vunpack.c.l.b16 %v1049
        %v1084 = vunpack.c.l.b16 %v1050
        %v1085 = vunpack.c.l.b16 %v1051
        %v1086 = vpack.c.b16 %v1071, %v1070
        %v1087 = vpack.c.b16 %v1073, %v1072
        %v1088 = vpack.c.b16 %v1075, %v1074
        %v1089 = vpack.c.b16 %v1077, %v1076
        %v1090 = vpack.c.b16 %v1079, %v1078
        %v1091 = vpack.c.b16 %v1081, %v1080
        %v1092 = vpack.c.b16 %v1083, %v1082
        %v1093 = vpack.c.b16 %v1085, %v1084
        %v1095 = vsel %vm393, %v1086, 0
        %v1098 = vsel %vm393, %v1087, 0
        %v1101 = vsel %vm393, %v1088, 0
        %v1104 = vsel %vm393, %v1089, 0
        %v1107 = vsel %vm393, %v1090, 0
        %v1110 = vsel %vm393, %v1091, 0
        %v1113 = vsel %vm393, %v1092, 0
        %v1116 = vsel %vm393, %v1093, 0
        %v1119 = vsel %vm418, %v1053, 0
        %1121 = vmatpush.bf16.msra.mxu0 0
        %1122 = vmatpush.bf16.msra.mxu0 0
        %1123 = vmatpush.bf16.msra.mxu0 0
        %1124 = vmatpush.bf16.msra.mxu0 0
        %1125 = vmatpush.bf16.msra.mxu0 0
        %1126 = vmatpush.bf16.msra.mxu0 0
        %1127 = vmatpush.bf16.msra.mxu0 0
        %1128 = vmatpush.bf16.msra.mxu0 %v1119
        %1129 = vmatmul.bf16.gmra.mxu0 %v1095
        %v1130 = vpop.f32.mrf.mxu0
        %v1131 = vadd.f32 0.0, %v1130
        %v1132 = vpop.f32.mrf.mxu0
        %v1133 = vadd.f32 0.0, %v1132
        %1134 = vmatmul.bf16.gmra.mxu0 %v1098
        %v1135 = vpop.f32.mrf.mxu0
        %v1136 = vadd.f32 0.0, %v1135
        %v1137 = vpop.f32.mrf.mxu0
        %v1138 = vadd.f32 0.0, %v1137
        %1139 = vmatmul.bf16.gmra.mxu0 %v1101
        %v1140 = vpop.f32.mrf.mxu0
        %v1141 = vadd.f32 0.0, %v1140
        %v1142 = vpop.f32.mrf.mxu0
        %v1143 = vadd.f32 0.0, %v1142
        %1144 = vmatmul.bf16.gmra.mxu0 %v1104
        %v1145 = vpop.f32.mrf.mxu0
        %v1146 = vadd.f32 0.0, %v1145
        %v1147 = vpop.f32.mrf.mxu0
        %v1148 = vadd.f32 0.0, %v1147
        %1149 = vmatmul.bf16.gmra.mxu0 %v1107
        %v1150 = vpop.f32.mrf.mxu0
        %v1151 = vadd.f32 0.0, %v1150
        %v1152 = vpop.f32.mrf.mxu0
        %v1153 = vadd.f32 0.0, %v1152
        %1154 = vmatmul.bf16.gmra.mxu0 %v1110
        %v1155 = vpop.f32.mrf.mxu0
        %v1156 = vadd.f32 0.0, %v1155
        %v1157 = vpop.f32.mrf.mxu0
        %v1158 = vadd.f32 0.0, %v1157
        %1159 = vmatmul.bf16.gmra.mxu0 %v1113
        %v1160 = vpop.f32.mrf.mxu0
        %v1161 = vadd.f32 0.0, %v1160
        %v1162 = vpop.f32.mrf.mxu0
        %v1163 = vadd.f32 0.0, %v1162
        %1164 = vmatmul.bf16.gmra.mxu0 %v1116
        %v1165 = vpop.f32.mrf.mxu0
        %v1166 = vadd.f32 0.0, %v1165
        %v1167 = vpop.f32.mrf.mxu0
        %v1168 = vadd.f32 0.0, %v1167
        %1169 = vdwg.mxu0
        %v1170 = vld [vmem:[#allocation3] sm:$0xff]
        %v1171 = vld [vmem:[#allocation3 + $0x8] sm:$0xff]
        %v1172 = vld [vmem:[#allocation3 + $0x10] sm:$0xff]
        %v1173 = vld [vmem:[#allocation3 + $0x18] sm:$0xff]
        %v1174 = vld [vmem:[#allocation3 + $0x20] sm:$0xff]
        %v1175 = vld [vmem:[#allocation3 + $0x28] sm:$0xff]
        %v1176 = vld [vmem:[#allocation3 + $0x30] sm:$0xff]
        %v1177 = vld [vmem:[#allocation3 + $0x38] sm:$0xff]
        %v1178 = vld [vmem:[#allocation3 + $0x40] sm:$0xff]
        %v1179 = vld [vmem:[#allocation3 + $0x48] sm:$0xff]
        %v1180 = vld [vmem:[#allocation3 + $0x50] sm:$0xff]
        %v1181 = vld [vmem:[#allocation3 + $0x58] sm:$0xff]
        %v1182 = vld [vmem:[#allocation3 + $0x60] sm:$0xff]
        %v1183 = vld [vmem:[#allocation3 + $0x68] sm:$0xff]
        %v1184 = vld [vmem:[#allocation3 + $0x70] sm:$0xff]
        %v1185 = vld [vmem:[#allocation3 + $0x78] sm:$0xff]
        %v1186 = vadd.f32 %v1170, %v1131
        %v1187 = vadd.f32 %v1171, %v1133
        %v1188 = vadd.f32 %v1172, %v1136
        %v1189 = vadd.f32 %v1173, %v1138
        %v1190 = vadd.f32 %v1174, %v1141
        %v1191 = vadd.f32 %v1175, %v1143
        %v1192 = vadd.f32 %v1176, %v1146
        %v1193 = vadd.f32 %v1177, %v1148
        %v1194 = vadd.f32 %v1178, %v1151
        %v1195 = vadd.f32 %v1179, %v1153
        %v1196 = vadd.f32 %v1180, %v1156
        %v1197 = vadd.f32 %v1181, %v1158
        %v1198 = vadd.f32 %v1182, %v1161
        %v1199 = vadd.f32 %v1183, %v1163
        %v1200 = vadd.f32 %v1184, %v1166
        %v1201 = vadd.f32 %v1185, %v1168
        %1202 = vst [vmem:[#allocation3] sm:$0xff] %v1186
        %1203 = vst [vmem:[#allocation3 + $0x8] sm:$0xff] %v1187
        %1204 = vst [vmem:[#allocation3 + $0x10] sm:$0xff] %v1188
        %1205 = vst [vmem:[#allocation3 + $0x18] sm:$0xff] %v1189
        %1206 = vst [vmem:[#allocation3 + $0x20] sm:$0xff] %v1190
        %1207 = vst [vmem:[#allocation3 + $0x28] sm:$0xff] %v1191
        %1208 = vst [vmem:[#allocation3 + $0x30] sm:$0xff] %v1192
        %1209 = vst [vmem:[#allocation3 + $0x38] sm:$0xff] %v1193
        %1210 = vst [vmem:[#allocation3 + $0x40] sm:$0xff] %v1194
        %1211 = vst [vmem:[#allocation3 + $0x48] sm:$0xff] %v1195
        %1212 = vst [vmem:[#allocation3 + $0x50] sm:$0xff] %v1196
        %1213 = vst [vmem:[#allocation3 + $0x58] sm:$0xff] %v1197
        %1214 = vst [vmem:[#allocation3 + $0x60] sm:$0xff] %v1198
        %1215 = vst [vmem:[#allocation3 + $0x68] sm:$0xff] %v1199
        %1216 = vst [vmem:[#allocation3 + $0x70] sm:$0xff] %v1200
        %1217 = vst [vmem:[#allocation3 + $0x78] sm:$0xff] %v1201
        %s1218 = scalar_lea.vmem [#allocation2], 20
        %v1219 = vld [vmem:[%s1218] sm:$0xf]
        %v1220 = vld [vmem:[%s1218 + $0x4] sm:$0xf]
        %v1221 = vld [vmem:[%s1218 + $0x8] sm:$0xf]
        %v1222 = vld [vmem:[%s1218 + $0xc] sm:$0xf]
        %v1223 = vld [vmem:[%s1218 + $0x10] sm:$0xf]
        %v1224 = vld [vmem:[%s1218 + $0x14] sm:$0xf]
        %v1225 = vld [vmem:[%s1218 + $0x18] sm:$0xf]
        %v1226 = vld [vmem:[%s1218 + $0x1c] sm:$0xf]
        %v1227 = vld [vmem:[%s1218 + $0x20] sm:$0xf]
        %v1228 = vld [vmem:[%s1218 + $0x24] sm:$0xf]
        %v1229 = vld [vmem:[%s1218 + $0x28] sm:$0xf]
        %v1230 = vld [vmem:[%s1218 + $0x2c] sm:$0xf]
        %v1231 = vld [vmem:[%s1218 + $0x30] sm:$0xf]
        %v1232 = vld [vmem:[%s1218 + $0x34] sm:$0xf]
        %v1233 = vld [vmem:[%s1218 + $0x38] sm:$0xf]
        %v1234 = vld [vmem:[%s1218 + $0x3c] sm:$0xf]
        %s1235 = scalar_lea.vmem %s1, 10
        %v1236 = vld [vmem:[%s1235] sm:$0x3]
        %v1253 = vunpack.c.l.b16 %v1219
        %v1254 = vunpack.c.l.b16 %v1220
        %v1255 = vunpack.c.l.b16 %v1221
        %v1256 = vunpack.c.l.b16 %v1222
        %v1257 = vunpack.c.l.b16 %v1223
        %v1258 = vunpack.c.l.b16 %v1224
        %v1259 = vunpack.c.l.b16 %v1225
        %v1260 = vunpack.c.l.b16 %v1226
        %v1261 = vunpack.c.l.b16 %v1227
        %v1262 = vunpack.c.l.b16 %v1228
        %v1263 = vunpack.c.l.b16 %v1229
        %v1264 = vunpack.c.l.b16 %v1230
        %v1265 = vunpack.c.l.b16 %v1231
        %v1266 = vunpack.c.l.b16 %v1232
        %v1267 = vunpack.c.l.b16 %v1233
        %v1268 = vunpack.c.l.b16 %v1234
        %v1269 = vpack.c.b16 %v1254, %v1253
        %v1270 = vpack.c.b16 %v1256, %v1255
        %v1271 = vpack.c.b16 %v1258, %v1257
        %v1272 = vpack.c.b16 %v1260, %v1259
        %v1273 = vpack.c.b16 %v1262, %v1261
        %v1274 = vpack.c.b16 %v1264, %v1263
        %v1275 = vpack.c.b16 %v1266, %v1265
        %v1276 = vpack.c.b16 %v1268, %v1267
        %v1278 = vsel %vm393, %v1269, 0
        %v1281 = vsel %vm393, %v1270, 0
        %v1284 = vsel %vm393, %v1271, 0
        %v1287 = vsel %vm393, %v1272, 0
        %v1290 = vsel %vm393, %v1273, 0
        %v1293 = vsel %vm393, %v1274, 0
        %v1296 = vsel %vm393, %v1275, 0
        %v1299 = vsel %vm393, %v1276, 0
        %v1302 = vsel %vm418, %v1236, 0
        %1304 = vmatpush.bf16.msra.mxu0 0
        %1305 = vmatpush.bf16.msra.mxu0 0
        %1306 = vmatpush.bf16.msra.mxu0 0
        %1307 = vmatpush.bf16.msra.mxu0 0
        %1308 = vmatpush.bf16.msra.mxu0 0
        %1309 = vmatpush.bf16.msra.mxu0 0
        %1310 = vmatpush.bf16.msra.mxu0 0
        %1311 = vmatpush.bf16.msra.mxu0 %v1302
        %1312 = vmatmul.bf16.gmra.mxu0 %v1278
        %v1313 = vpop.f32.mrf.mxu0
        %v1314 = vadd.f32 0.0, %v1313
        %v1315 = vpop.f32.mrf.mxu0
        %v1316 = vadd.f32 0.0, %v1315
        %1317 = vmatmul.bf16.gmra.mxu0 %v1281
        %v1318 = vpop.f32.mrf.mxu0
        %v1319 = vadd.f32 0.0, %v1318
        %v1320 = vpop.f32.mrf.mxu0
        %v1321 = vadd.f32 0.0, %v1320
        %1322 = vmatmul.bf16.gmra.mxu0 %v1284
        %v1323 = vpop.f32.mrf.mxu0
        %v1324 = vadd.f32 0.0, %v1323
        %v1325 = vpop.f32.mrf.mxu0
        %v1326 = vadd.f32 0.0, %v1325
        %1327 = vmatmul.bf16.gmra.mxu0 %v1287
        %v1328 = vpop.f32.mrf.mxu0
        %v1329 = vadd.f32 0.0, %v1328
        %v1330 = vpop.f32.mrf.mxu0
        %v1331 = vadd.f32 0.0, %v1330
        %1332 = vmatmul.bf16.gmra.mxu0 %v1290
        %v1333 = vpop.f32.mrf.mxu0
        %v1334 = vadd.f32 0.0, %v1333
        %v1335 = vpop.f32.mrf.mxu0
        %v1336 = vadd.f32 0.0, %v1335
        %1337 = vmatmul.bf16.gmra.mxu0 %v1293
        %v1338 = vpop.f32.mrf.mxu0
        %v1339 = vadd.f32 0.0, %v1338
        %v1340 = vpop.f32.mrf.mxu0
        %v1341 = vadd.f32 0.0, %v1340
        %1342 = vmatmul.bf16.gmra.mxu0 %v1296
        %v1343 = vpop.f32.mrf.mxu0
        %v1344 = vadd.f32 0.0, %v1343
        %v1345 = vpop.f32.mrf.mxu0
        %v1346 = vadd.f32 0.0, %v1345
        %1347 = vmatmul.bf16.gmra.mxu0 %v1299
        %v1348 = vpop.f32.mrf.mxu0
        %v1349 = vadd.f32 0.0, %v1348
        %v1350 = vpop.f32.mrf.mxu0
        %v1351 = vadd.f32 0.0, %v1350
        %1352 = vdwg.mxu0
        %v1353 = vld [vmem:[#allocation3] sm:$0xff]
        %v1354 = vld [vmem:[#allocation3 + $0x8] sm:$0xff]
        %v1355 = vld [vmem:[#allocation3 + $0x10] sm:$0xff]
        %v1356 = vld [vmem:[#allocation3 + $0x18] sm:$0xff]
        %v1357 = vld [vmem:[#allocation3 + $0x20] sm:$0xff]
        %v1358 = vld [vmem:[#allocation3 + $0x28] sm:$0xff]
        %v1359 = vld [vmem:[#allocation3 + $0x30] sm:$0xff]
        %v1360 = vld [vmem:[#allocation3 + $0x38] sm:$0xff]
        %v1361 = vld [vmem:[#allocation3 + $0x40] sm:$0xff]
        %v1362 = vld [vmem:[#allocation3 + $0x48] sm:$0xff]
        %v1363 = vld [vmem:[#allocation3 + $0x50] sm:$0xff]
        %v1364 = vld [vmem:[#allocation3 + $0x58] sm:$0xff]
        %v1365 = vld [vmem:[#allocation3 + $0x60] sm:$0xff]
        %v1366 = vld [vmem:[#allocation3 + $0x68] sm:$0xff]
        %v1367 = vld [vmem:[#allocation3 + $0x70] sm:$0xff]
        %v1368 = vld [vmem:[#allocation3 + $0x78] sm:$0xff]
        %v1369 = vadd.f32 %v1353, %v1314
        %v1370 = vadd.f32 %v1354, %v1316
        %v1371 = vadd.f32 %v1355, %v1319
        %v1372 = vadd.f32 %v1356, %v1321
        %v1373 = vadd.f32 %v1357, %v1324
        %v1374 = vadd.f32 %v1358, %v1326
        %v1375 = vadd.f32 %v1359, %v1329
        %v1376 = vadd.f32 %v1360, %v1331
        %v1377 = vadd.f32 %v1361, %v1334
        %v1378 = vadd.f32 %v1362, %v1336
        %v1379 = vadd.f32 %v1363, %v1339
        %v1380 = vadd.f32 %v1364, %v1341
        %v1381 = vadd.f32 %v1365, %v1344
        %v1382 = vadd.f32 %v1366, %v1346
        %v1383 = vadd.f32 %v1367, %v1349
        %v1384 = vadd.f32 %v1368, %v1351
        %1385 = vst [vmem:[#allocation3] sm:$0xff] %v1369
        %1386 = vst [vmem:[#allocation3 + $0x8] sm:$0xff] %v1370
        %1387 = vst [vmem:[#allocation3 + $0x10] sm:$0xff] %v1371
        %1388 = vst [vmem:[#allocation3 + $0x18] sm:$0xff] %v1372
        %1389 = vst [vmem:[#allocation3 + $0x20] sm:$0xff] %v1373
        %1390 = vst [vmem:[#allocation3 + $0x28] sm:$0xff] %v1374
        %1391 = vst [vmem:[#allocation3 + $0x30] sm:$0xff] %v1375
        %1392 = vst [vmem:[#allocation3 + $0x38] sm:$0xff] %v1376
        %1393 = vst [vmem:[#allocation3 + $0x40] sm:$0xff] %v1377
        %1394 = vst [vmem:[#allocation3 + $0x48] sm:$0xff] %v1378
        %1395 = vst [vmem:[#allocation3 + $0x50] sm:$0xff] %v1379
        %1396 = vst [vmem:[#allocation3 + $0x58] sm:$0xff] %v1380
        %1397 = vst [vmem:[#allocation3 + $0x60] sm:$0xff] %v1381
        %1398 = vst [vmem:[#allocation3 + $0x68] sm:$0xff] %v1382
        %1399 = vst [vmem:[#allocation3 + $0x70] sm:$0xff] %v1383
        %1400 = vst [vmem:[#allocation3 + $0x78] sm:$0xff] %v1384
        %s1401 = scalar_lea.vmem [#allocation2], 24
        %v1402 = vld [vmem:[%s1401] sm:$0xf]
        %v1403 = vld [vmem:[%s1401 + $0x4] sm:$0xf]
        %v1404 = vld [vmem:[%s1401 + $0x8] sm:$0xf]
        %v1405 = vld [vmem:[%s1401 + $0xc] sm:$0xf]
        %v1406 = vld [vmem:[%s1401 + $0x10] sm:$0xf]
        %v1407 = vld [vmem:[%s1401 + $0x14] sm:$0xf]
        %v1408 = vld [vmem:[%s1401 + $0x18] sm:$0xf]
        %v1409 = vld [vmem:[%s1401 + $0x1c] sm:$0xf]
        %v1410 = vld [vmem:[%s1401 + $0x20] sm:$0xf]
        %v1411 = vld [vmem:[%s1401 + $0x24] sm:$0xf]
        %v1412 = vld [vmem:[%s1401 + $0x28] sm:$0xf]
        %v1413 = vld [vmem:[%s1401 + $0x2c] sm:$0xf]
        %v1414 = vld [vmem:[%s1401 + $0x30] sm:$0xf]
        %v1415 = vld [vmem:[%s1401 + $0x34] sm:$0xf]
        %v1416 = vld [vmem:[%s1401 + $0x38] sm:$0xf]
        %v1417 = vld [vmem:[%s1401 + $0x3c] sm:$0xf]
        %s1418 = scalar_lea.vmem %s1, 12
        %v1419 = vld [vmem:[%s1418] sm:$0x3]
        %v1436 = vunpack.c.l.b16 %v1402
        %v1437 = vunpack.c.l.b16 %v1403
        %v1438 = vunpack.c.l.b16 %v1404
        %v1439 = vunpack.c.l.b16 %v1405
        %v1440 = vunpack.c.l.b16 %v1406
        %v1441 = vunpack.c.l.b16 %v1407
        %v1442 = vunpack.c.l.b16 %v1408
        %v1443 = vunpack.c.l.b16 %v1409
        %v1444 = vunpack.c.l.b16 %v1410
        %v1445 = vunpack.c.l.b16 %v1411
        %v1446 = vunpack.c.l.b16 %v1412
        %v1447 = vunpack.c.l.b16 %v1413
        %v1448 = vunpack.c.l.b16 %v1414
        %v1449 = vunpack.c.l.b16 %v1415
        %v1450 = vunpack.c.l.b16 %v1416
        %v1451 = vunpack.c.l.b16 %v1417
        %v1452 = vpack.c.b16 %v1437, %v1436
        %v1453 = vpack.c.b16 %v1439, %v1438
        %v1454 = vpack.c.b16 %v1441, %v1440
        %v1455 = vpack.c.b16 %v1443, %v1442
        %v1456 = vpack.c.b16 %v1445, %v1444
        %v1457 = vpack.c.b16 %v1447, %v1446
        %v1458 = vpack.c.b16 %v1449, %v1448
        %v1459 = vpack.c.b16 %v1451, %v1450
        %v1461 = vsel %vm393, %v1452, 0
        %v1464 = vsel %vm393, %v1453, 0
        %v1467 = vsel %vm393, %v1454, 0
        %v1470 = vsel %vm393, %v1455, 0
        %v1473 = vsel %vm393, %v1456, 0
        %v1476 = vsel %vm393, %v1457, 0
        %v1479 = vsel %vm393, %v1458, 0
        %v1482 = vsel %vm393, %v1459, 0
        %v1485 = vsel %vm418, %v1419, 0
        %1487 = vmatpush.bf16.msra.mxu0 0
        %1488 = vmatpush.bf16.msra.mxu0 0
        %1489 = vmatpush.bf16.msra.mxu0 0
        %1490 = vmatpush.bf16.msra.mxu0 0
        %1491 = vmatpush.bf16.msra.mxu0 0
        %1492 = vmatpush.bf16.msra.mxu0 0
        %1493 = vmatpush.bf16.msra.mxu0 0
        %1494 = vmatpush.bf16.msra.mxu0 %v1485
        %1495 = vmatmul.bf16.gmra.mxu0 %v1461
        %v1496 = vpop.f32.mrf.mxu0
        %v1497 = vadd.f32 0.0, %v1496
        %v1498 = vpop.f32.mrf.mxu0
        %v1499 = vadd.f32 0.0, %v1498
        %1500 = vmatmul.bf16.gmra.mxu0 %v1464
        %v1501 = vpop.f32.mrf.mxu0
        %v1502 = vadd.f32 0.0, %v1501
        %v1503 = vpop.f32.mrf.mxu0
        %v1504 = vadd.f32 0.0, %v1503
        %1505 = vmatmul.bf16.gmra.mxu0 %v1467
        %v1506 = vpop.f32.mrf.mxu0
        %v1507 = vadd.f32 0.0, %v1506
        %v1508 = vpop.f32.mrf.mxu0
        %v1509 = vadd.f32 0.0, %v1508
        %1510 = vmatmul.bf16.gmra.mxu0 %v1470
        %v1511 = vpop.f32.mrf.mxu0
        %v1512 = vadd.f32 0.0, %v1511
        %v1513 = vpop.f32.mrf.mxu0
        %v1514 = vadd.f32 0.0, %v1513
        %1515 = vmatmul.bf16.gmra.mxu0 %v1473
        %v1516 = vpop.f32.mrf.mxu0
        %v1517 = vadd.f32 0.0, %v1516
        %v1518 = vpop.f32.mrf.mxu0
        %v1519 = vadd.f32 0.0, %v1518
        %1520 = vmatmul.bf16.gmra.mxu0 %v1476
        %v1521 = vpop.f32.mrf.mxu0
        %v1522 = vadd.f32 0.0, %v1521
        %v1523 = vpop.f32.mrf.mxu0
        %v1524 = vadd.f32 0.0, %v1523
        %1525 = vmatmul.bf16.gmra.mxu0 %v1479
        %v1526 = vpop.f32.mrf.mxu0
        %v1527 = vadd.f32 0.0, %v1526
        %v1528 = vpop.f32.mrf.mxu0
        %v1529 = vadd.f32 0.0, %v1528
        %1530 = vmatmul.bf16.gmra.mxu0 %v1482
        %v1531 = vpop.f32.mrf.mxu0
        %v1532 = vadd.f32 0.0, %v1531
        %v1533 = vpop.f32.mrf.mxu0
        %v1534 = vadd.f32 0.0, %v1533
        %1535 = vdwg.mxu0
        %v1536 = vld [vmem:[#allocation3] sm:$0xff]
        %v1537 = vld [vmem:[#allocation3 + $0x8] sm:$0xff]
        %v1538 = vld [vmem:[#allocation3 + $0x10] sm:$0xff]
        %v1539 = vld [vmem:[#allocation3 + $0x18] sm:$0xff]
        %v1540 = vld [vmem:[#allocation3 + $0x20] sm:$0xff]
        %v1541 = vld [vmem:[#allocation3 + $0x28] sm:$0xff]
        %v1542 = vld [vmem:[#allocation3 + $0x30] sm:$0xff]
        %v1543 = vld [vmem:[#allocation3 + $0x38] sm:$0xff]
        %v1544 = vld [vmem:[#allocation3 + $0x40] sm:$0xff]
        %v1545 = vld [vmem:[#allocation3 + $0x48] sm:$0xff]
        %v1546 = vld [vmem:[#allocation3 + $0x50] sm:$0xff]
        %v1547 = vld [vmem:[#allocation3 + $0x58] sm:$0xff]
        %v1548 = vld [vmem:[#allocation3 + $0x60] sm:$0xff]
        %v1549 = vld [vmem:[#allocation3 + $0x68] sm:$0xff]
        %v1550 = vld [vmem:[#allocation3 + $0x70] sm:$0xff]
        %v1551 = vld [vmem:[#allocation3 + $0x78] sm:$0xff]
        %v1552 = vadd.f32 %v1536, %v1497
        %v1553 = vadd.f32 %v1537, %v1499
        %v1554 = vadd.f32 %v1538, %v1502
        %v1555 = vadd.f32 %v1539, %v1504
        %v1556 = vadd.f32 %v1540, %v1507
        %v1557 = vadd.f32 %v1541, %v1509
        %v1558 = vadd.f32 %v1542, %v1512
        %v1559 = vadd.f32 %v1543, %v1514
        %v1560 = vadd.f32 %v1544, %v1517
        %v1561 = vadd.f32 %v1545, %v1519
        %v1562 = vadd.f32 %v1546, %v1522
        %v1563 = vadd.f32 %v1547, %v1524
        %v1564 = vadd.f32 %v1548, %v1527
        %v1565 = vadd.f32 %v1549, %v1529
        %v1566 = vadd.f32 %v1550, %v1532
        %v1567 = vadd.f32 %v1551, %v1534
        %1568 = vst [vmem:[#allocation3] sm:$0xff] %v1552
        %1569 = vst [vmem:[#allocation3 + $0x8] sm:$0xff] %v1553
        %1570 = vst [vmem:[#allocation3 + $0x10] sm:$0xff] %v1554
        %1571 = vst [vmem:[#allocation3 + $0x18] sm:$0xff] %v1555
        %1572 = vst [vmem:[#allocation3 + $0x20] sm:$0xff] %v1556
        %1573 = vst [vmem:[#allocation3 + $0x28] sm:$0xff] %v1557
        %1574 = vst [vmem:[#allocation3 + $0x30] sm:$0xff] %v1558
        %1575 = vst [vmem:[#allocation3 + $0x38] sm:$0xff] %v1559
        %1576 = vst [vmem:[#allocation3 + $0x40] sm:$0xff] %v1560
        %1577 = vst [vmem:[#allocation3 + $0x48] sm:$0xff] %v1561
        %1578 = vst [vmem:[#allocation3 + $0x50] sm:$0xff] %v1562
        %1579 = vst [vmem:[#allocation3 + $0x58] sm:$0xff] %v1563
        %1580 = vst [vmem:[#allocation3 + $0x60] sm:$0xff] %v1564
        %1581 = vst [vmem:[#allocation3 + $0x68] sm:$0xff] %v1565
        %1582 = vst [vmem:[#allocation3 + $0x70] sm:$0xff] %v1566
        %1583 = vst [vmem:[#allocation3 + $0x78] sm:$0xff] %v1567
        %v1584 = vld [vmem:[#allocation3] sm:$0xff]
        %v1585 = vld [vmem:[#allocation3 + $0x8] sm:$0xff]
        %v1586 = vld [vmem:[#allocation3 + $0x10] sm:$0xff]
        %v1587 = vld [vmem:[#allocation3 + $0x18] sm:$0xff]
        %v1588 = vld [vmem:[#allocation3 + $0x20] sm:$0xff]
        %v1589 = vld [vmem:[#allocation3 + $0x28] sm:$0xff]
        %v1590 = vld [vmem:[#allocation3 + $0x30] sm:$0xff]
        %v1591 = vld [vmem:[#allocation3 + $0x38] sm:$0xff]
        %v1592 = vld [vmem:[#allocation3 + $0x40] sm:$0xff]
        %v1593 = vld [vmem:[#allocation3 + $0x48] sm:$0xff]
        %v1594 = vld [vmem:[#allocation3 + $0x50] sm:$0xff]
        %v1595 = vld [vmem:[#allocation3 + $0x58] sm:$0xff]
        %v1596 = vld [vmem:[#allocation3 + $0x60] sm:$0xff]
        %v1597 = vld [vmem:[#allocation3 + $0x68] sm:$0xff]
        %v1598 = vld [vmem:[#allocation3 + $0x70] sm:$0xff]
        %v1599 = vld [vmem:[#allocation3 + $0x78] sm:$0xff]
        %v1600 = vld [vmem:[%s2] sm:$0x1]
        %v1602 = vperm.slane %v1600, 0
        %v1604 = vadd.f32 %v1584, %v1602
        %v1605 = vadd.f32 %v1585, %v1602
        %v1606 = vadd.f32 %v1586, %v1602
        %v1607 = vadd.f32 %v1587, %v1602
        %v1608 = vadd.f32 %v1588, %v1602
        %v1609 = vadd.f32 %v1589, %v1602
        %v1610 = vadd.f32 %v1590, %v1602
        %v1611 = vadd.f32 %v1591, %v1602
        %v1612 = vadd.f32 %v1592, %v1602
        %v1613 = vadd.f32 %v1593, %v1602
        %v1614 = vadd.f32 %v1594, %v1602
        %v1615 = vadd.f32 %v1595, %v1602
        %v1616 = vadd.f32 %v1596, %v1602
        %v1617 = vadd.f32 %v1597, %v1602
        %v1618 = vadd.f32 %v1598, %v1602
        %v1619 = vadd.f32 %v1599, %v1602
        %1620 = vst [vmem:[%s277] sm:$0xff] %v1604
        %1621 = vst [vmem:[%s277 + $0x8] sm:$0xff] %v1605
        %1622 = vst [vmem:[%s277 + $0x10] sm:$0xff] %v1606
        %1623 = vst [vmem:[%s277 + $0x18] sm:$0xff] %v1607
        %1624 = vst [vmem:[%s277 + $0x20] sm:$0xff] %v1608
        %1625 = vst [vmem:[%s277 + $0x28] sm:$0xff] %v1609
        %1626 = vst [vmem:[%s277 + $0x30] sm:$0xff] %v1610
        %1627 = vst [vmem:[%s277 + $0x38] sm:$0xff] %v1611
        %1628 = vst [vmem:[%s277 + $0x40] sm:$0xff] %v1612
        %1629 = vst [vmem:[%s277 + $0x48] sm:$0xff] %v1613
        %1630 = vst [vmem:[%s277 + $0x50] sm:$0xff] %v1614
        %1631 = vst [vmem:[%s277 + $0x58] sm:$0xff] %v1615
        %1632 = vst [vmem:[%s277 + $0x60] sm:$0xff] %v1616
        %1633 = vst [vmem:[%s277 + $0x68] sm:$0xff] %v1617
        %1634 = vst [vmem:[%s277 + $0x70] sm:$0xff] %v1618
        %1635 = vst [vmem:[%s277 + $0x78] sm:$0xff] %v1619
        %s1636 = sand.u32 %s106, 1
        %s1637 = sand.u32 %s106, 1
        %s1638 = smul.addr %s1637, 128
        %s1639 = scalar_lea.vmem [#allocation5], %s1638
        // Predicated region
        $region71: #{a_call__.4} parent=65 // pred_check
          %p1640 = pneg %p116
        $region72: #{a_call__.4} parent=65 // pred_check_branch
          %1642 = sbr.rel (%p1640) target = $region74
        $region73: #{a_call__.4} parent=65 // pred_region
          %s1643 = smul.addr %s18, 32
          %s1644 = sadd.s32 %s19, %s1643
          %s1645 = smul.addr %s1644, 8
          %s1646 = scalar_lea.vmem %s3, %s1645
          // Predicated region
          $region75: #{a_call__.4} parent=73 // pred_check
            _
          $region76: #{a_call__.4} parent=73 // pred_check_branch
            %1648 = sbr.rel (0) target = $region78
          $region77: #{a_call__.4} parent=73 // pred_region
            // Predicated region
            $region79: #{a_call__.4} parent=77 // pred_check
              _
            $region80: #{a_call__.4} parent=77 // pred_check_branch
              %1650 = sbr.rel (0) target = $region82
            $region81: #{a_call__.4} parent=77 // pred_region
              // Predicated region
              $region94: #{a_call__.4} parent=81 // pred_check
                _
              $region95: #{a_call__.4} parent=81 // pred_check_branch
                %1696 = sbr.rel (0) target = $region97
              $region96: #{a_call__.4} parent=81 // pred_region
                loop: start=0, step=1, limit=1
                $region98: #{a_call__.4} parent=96 // loop_pre_header
                  _
                $region99: #{a_call__.4} parent=96 // loop_header
                  %s1698 = sphi 0, %s1702
                  %p1699 = scmp.ge.s32.totalorder %s1698, 1
                  %s1703 = sphi %s1639, %s1639
                  %s1704 = sphi %s1646, %s1646
                $region100: #{a_call__.4} parent=96 // loop_header_branch
                  %1701 = sbr.rel (%p1699) target = $region104
                $region101: #{a_call__.4} parent=96 // loop_body
                  %v1705 = vld [vmem:[%s1703] sm:$0xff]
                  %1706 = vst [vmem:[%s1704] sm:$0xff] %v1705
                  %v1707 = vld [vmem:[%s1703 + $0x8] sm:$0xff]
                  %1708 = vst [vmem:[%s1704 + $0x10] sm:$0xff] %v1707
                  %v1709 = vld [vmem:[%s1703 + $0x10] sm:$0xff]
                  %1710 = vst [vmem:[%s1704 + $0x20] sm:$0xff] %v1709
                  %v1711 = vld [vmem:[%s1703 + $0x18] sm:$0xff]
                  %1712 = vst [vmem:[%s1704 + $0x30] sm:$0xff] %v1711
                  %v1713 = vld [vmem:[%s1703 + $0x20] sm:$0xff]
                  %1714 = vst [vmem:[%s1704 + $0x40] sm:$0xff] %v1713
                  %v1715 = vld [vmem:[%s1703 + $0x28] sm:$0xff]
                  %1716 = vst [vmem:[%s1704 + $0x50] sm:$0xff] %v1715
                  %v1717 = vld [vmem:[%s1703 + $0x30] sm:$0xff]
                  %1718 = vst [vmem:[%s1704 + $0x60] sm:$0xff] %v1717
                  %v1719 = vld [vmem:[%s1703 + $0x38] sm:$0xff]
                  %1720 = vst [vmem:[%s1704 + $0x70] sm:$0xff] %v1719
                  %v1721 = vld [vmem:[%s1703 + $0x40] sm:$0xff]
                  %1722 = vst [vmem:[%s1704 + $0x80] sm:$0xff] %v1721
                  %v1723 = vld [vmem:[%s1703 + $0x48] sm:$0xff]
                  %1724 = vst [vmem:[%s1704 + $0x90] sm:$0xff] %v1723
                  %v1725 = vld [vmem:[%s1703 + $0x50] sm:$0xff]
                  %1726 = vst [vmem:[%s1704 + $0xa0] sm:$0xff] %v1725
                  %v1727 = vld [vmem:[%s1703 + $0x58] sm:$0xff]
                  %1728 = vst [vmem:[%s1704 + $0xb0] sm:$0xff] %v1727
                  %v1729 = vld [vmem:[%s1703 + $0x60] sm:$0xff]
                  %1730 = vst [vmem:[%s1704 + $0xc0] sm:$0xff] %v1729
                  %v1731 = vld [vmem:[%s1703 + $0x68] sm:$0xff]
                  %1732 = vst [vmem:[%s1704 + $0xd0] sm:$0xff] %v1731
                  %v1733 = vld [vmem:[%s1703 + $0x70] sm:$0xff]
                  %1734 = vst [vmem:[%s1704 + $0xe0] sm:$0xff] %v1733
                  %v1735 = vld [vmem:[%s1703 + $0x78] sm:$0xff]
                  %1736 = vst [vmem:[%s1704 + $0xf0] sm:$0xff] %v1735
                $region102: #{a_call__.4} parent=96 // loop_footer
                  %s1702 = sadd.s32 1, %s1698
                $region103: #{a_call__.4} parent=96 // loop_footer_branch
                  %1697 = sbr.rel target = $region99
                $region104: #{a_call__.4} parent=96 // loop_exit
                  _
              $region97: #{a_call__.4} parent=81 // pred_fallthru
                _
              // Predicated region
              $region105: #{a_call__.4} parent=81 // pred_check
                _
              $region106: #{a_call__.4} parent=81 // pred_check_branch
                %1738 = sbr.rel target = $region108
              $region107: #{a_call__.4} parent=81 // pred_region
                _
              $region108: #{a_call__.4} parent=81 // pred_fallthru
                _
            $region82: #{a_call__.4} parent=77 // pred_fallthru
              _
            // Predicated region
            $region83: #{a_call__.4} parent=77 // pred_check
              _
            $region84: #{a_call__.4} parent=77 // pred_check_branch
              %1652 = sbr.rel target = $region86
            $region85: #{a_call__.4} parent=77 // pred_region
              %s1654 = ssub.s32 256, 1
              loop: start=0, step=1, limit=1
              $region87: #{a_call__.4} parent=85 // loop_pre_header
                _
              $region88: #{a_call__.4} parent=85 // loop_header
                %s1656 = sphi 0, %s1660
                %p1657 = scmp.ge.s32.totalorder %s1656, 1
                %s1661 = sphi %s1639, %s1639
                %s1662 = sphi %s1646, %s1646
              $region89: #{a_call__.4} parent=85 // loop_header_branch
                %1659 = sbr.rel (%p1657) target = $region93
              $region90: #{a_call__.4} parent=85 // loop_body
                %v1663 = vld [vmem:[%s1661] sm:%s1654]
                %1664 = vst [vmem:[%s1662] sm:%s1654] %v1663
                %v1665 = vld [vmem:[%s1661 + $0x8] sm:%s1654]
                %1666 = vst [vmem:[%s1662 + $0x10] sm:%s1654] %v1665
                %v1667 = vld [vmem:[%s1661 + $0x10] sm:%s1654]
                %1668 = vst [vmem:[%s1662 + $0x20] sm:%s1654] %v1667
                %v1669 = vld [vmem:[%s1661 + $0x18] sm:%s1654]
                %1670 = vst [vmem:[%s1662 + $0x30] sm:%s1654] %v1669
                %v1671 = vld [vmem:[%s1661 + $0x20] sm:%s1654]
                %1672 = vst [vmem:[%s1662 + $0x40] sm:%s1654] %v1671
                %v1673 = vld [vmem:[%s1661 + $0x28] sm:%s1654]
                %1674 = vst [vmem:[%s1662 + $0x50] sm:%s1654] %v1673
                %v1675 = vld [vmem:[%s1661 + $0x30] sm:%s1654]
                %1676 = vst [vmem:[%s1662 + $0x60] sm:%s1654] %v1675
                %v1677 = vld [vmem:[%s1661 + $0x38] sm:%s1654]
                %1678 = vst [vmem:[%s1662 + $0x70] sm:%s1654] %v1677
                %v1679 = vld [vmem:[%s1661 + $0x40] sm:%s1654]
                %1680 = vst [vmem:[%s1662 + $0x80] sm:%s1654] %v1679
                %v1681 = vld [vmem:[%s1661 + $0x48] sm:%s1654]
                %1682 = vst [vmem:[%s1662 + $0x90] sm:%s1654] %v1681
                %v1683 = vld [vmem:[%s1661 + $0x50] sm:%s1654]
                %1684 = vst [vmem:[%s1662 + $0xa0] sm:%s1654] %v1683
                %v1685 = vld [vmem:[%s1661 + $0x58] sm:%s1654]
                %1686 = vst [vmem:[%s1662 + $0xb0] sm:%s1654] %v1685
                %v1687 = vld [vmem:[%s1661 + $0x60] sm:%s1654]
                %1688 = vst [vmem:[%s1662 + $0xc0] sm:%s1654] %v1687
                %v1689 = vld [vmem:[%s1661 + $0x68] sm:%s1654]
                %1690 = vst [vmem:[%s1662 + $0xd0] sm:%s1654] %v1689
                %v1691 = vld [vmem:[%s1661 + $0x70] sm:%s1654]
                %1692 = vst [vmem:[%s1662 + $0xe0] sm:%s1654] %v1691
                %v1693 = vld [vmem:[%s1661 + $0x78] sm:%s1654]
                %1694 = vst [vmem:[%s1662 + $0xf0] sm:%s1654] %v1693
              $region91: #{a_call__.4} parent=85 // loop_footer
                %s1660 = sadd.s32 1, %s1656
              $region92: #{a_call__.4} parent=85 // loop_footer_branch
                %1655 = sbr.rel target = $region88
              $region93: #{a_call__.4} parent=85 // loop_exit
                _
            $region86: #{a_call__.4} parent=77 // pred_fallthru
              _
          $region78: #{a_call__.4} parent=73 // pred_fallthru
            _
          %1739 = vnop
        $region74: #{a_call__.4} parent=65 // pred_fallthru
          _
      $region66: #{a_call__.4} parent=5 // pred_fallthru
        _
      %p1740 = scmp.le.s32.totalorder 2, %s9
      // Predicated region
      $region109: #{a_call__.4} parent=5 // pred_check
        %p1741 = pneg %p1740
      $region110: #{a_call__.4} parent=5 // pred_check_branch
        %1743 = sbr.rel (%p1741) target = $region112
      $region111: #{a_call__.4} parent=5 // pred_region
        %s1744 = ssub.s32 %s9, 2
        // Predicated region
        $region113: #{a_call__.4} parent=111 // pred_check
          %p1745 = pneg %p122
        $region114: #{a_call__.4} parent=111 // pred_check_branch
          %1747 = sbr.rel (%p1745) target = $region116
        $region115: #{a_call__.4} parent=111 // pred_region
          %s1748 = sand.u32 %s107, 1
          %s1749 = sand.u32 %s107, 1
          %s1750 = smul.addr %s1749, 128
          %s1751 = scalar_lea.vmem [#allocation5], %s1750
        $region116: #{a_call__.4} parent=111 // pred_fallthru
          _
      $region112: #{a_call__.4} parent=5 // pred_fallthru
        _
    $region6: #{a_call__.4} parent=1 // loop_footer
      %s13 = sadd.s32 1, %s9
    $region7: #{a_call__.4} parent=1 // loop_footer_branch
      %8 = sbr.rel target = $region3
    $region8: #{a_call__.4} parent=1 // loop_exit
      _

// kernel: a_call__.6
$region0: #{a_call__.6}
  #allocation0 [shape = 'u32[]', space=smem, size = 0x4, offset = 0x4, fixed_abs, tag = 'smem constant byte address 0x4 - core index']
  #allocation1 [shape = 'u32[72,128]{1,0:T(1,128)}', space=vmem, size = 0x9000, scoped, tag = 'internal scratch']
  #allocation2 [shape = 'bf16[8,22,4]{2,1,0:T(8,128)(2,1)}', space=vmem, size = 0xc000, scoped, tag = 'scratch operand']
  #allocation3 [shape = 'f32[128,128]{1,0:T(8,128)}', space=vmem, size = 0x10000, scoped, tag = 'scratch operand']
  %s0 = inlined_call_operand.vmem [shape: f32[2,16,16,4], index: 0, kind: input, shape index: {}]
  %s1 = inlined_call_operand.vmem [shape: bf16[7,4,128], index: 1, kind: input, shape index: {}]
  %s2 = inlined_call_operand.vmem [shape: f32[1,128], index: 2, kind: input, shape index: {}]
  %s3 = inlined_call_operand.vmem [shape: f32[2,16,16,128], index: 3, kind: output, shape index: {}]
  %s4 = sld [smem:[#allocation0]]
  $region45: #{a_call__.6} parent=0
    _
  %s6 = ssub.s32 1, %s4
  %s7 = scalar_select 0, %s6, %s4
  loop: start=0, step=1, limit=6
  $region2: #{a_call__.6} parent=0 // loop_pre_header
    _
  $region3: #{a_call__.6} parent=0 // loop_header
    %s9 = sphi 0, %s13
    %p10 = scmp.ge.s32.totalorder %s9, 6
    %s16 = sphi 0, %s28
    %s17 = sphi 0, %s24
    %s18 = sphi 0, %s16
    %s19 = sphi 0, %s17
    %s20 = sphi 0, %s18
    %s21 = sphi 0, %s19
    %s33 = sphi 0, %s35
    %s36 = sphi 0, %s33
    %s37 = sphi 0, %s36
    %s53 = sphi 0, %s37
    %s57 = sphi 0, %s57
    %s59 = sphi 0, %s57
    %s60 = sphi 0, %s59
    %s74 = sphi 0, %s60
    %s78 = sphi 0, %s78
    %s80 = sphi 0, %s78
    %s81 = sphi 0, %s80
    %s95 = sphi 0, %s81
    %s103 = sphi 0, %s105
    %s106 = sphi 0, %s103
    %s107 = sphi 0, %s106
    %s123 = sphi 0, %s107
  $region4: #{a_call__.6} parent=0 // loop_header_branch
    %12 = sbr.rel (%p10) target = $region8
  $region5: #{a_call__.6} parent=0 // loop_body
    %s14 = ssub.s32 %s9, 1
    %s15 = ssub.s32 %s9, 2
    %s22 = sadd.s32 1, %s17
    %p23 = scmp.ge.s32.totalorder %s22, 2
    %s24 = scalar_select %p23, 0, %s22
    %s25 = sadd.s32 1, %s16
    %s26 = scalar_select %p23, %s25, %s16
    %p27 = scmp.ge.s32.totalorder %s26, 2
    %s28 = scalar_select %p27, 0, %s26
    %s29 = ssub.s32 %s16, %s28
    %s30 = ssub.s32 %s17, %s24
    %s31 = sor.u32 %s29, %s30
    %p32 = scmp.eq.s32.totalorder %s31, 0
    %s34 = sadd.s32 %s33, 1
    %s35 = scalar_select %p32, %s33, %s34
    %p38 = pneg %p32
    %p39 = scmp.eq.s32.totalorder %s9, 3
    %p40 = por %p38, %p39
    %p41 = scmp.ne.s32.totalorder %s33, %s36
    %p42 = scmp.eq.s32.totalorder %s9, 0
    %p43 = por %p41, %p42
    %p44 = scmp.ne.s32.totalorder %s33, %s36
    %p45 = scmp.eq.s32.totalorder %s14, 3
    %p46 = por %p44, %p45
    %p47 = scmp.ne.s32.totalorder %s36, %s37
    %p48 = scmp.eq.s32.totalorder %s14, 0
    %p49 = por %p47, %p48
    %p50 = scmp.ne.s32.totalorder %s36, %s37
    %p51 = scmp.eq.s32.totalorder %s15, 3
    %p52 = por %p50, %p51
    %p54 = scmp.ne.s32.totalorder %s37, %s53
    %p55 = scmp.eq.s32.totalorder %s15, 0
    %p56 = por %p54, %p55
    %s58 = sadd.s32 %s57, 1
    %p61 = scmp.eq.s32.totalorder %s9, 3
    %p62 = scmp.ne.s32.totalorder %s57, %s59
    %p63 = scmp.eq.s32.totalorder %s9, 0
    %p64 = por %p62, %p63
    %p65 = scmp.ne.s32.totalorder %s57, %s59
    %p66 = scmp.eq.s32.totalorder %s14, 3
    %p67 = por %p65, %p66
    %p68 = scmp.ne.s32.totalorder %s59, %s60
    %p69 = scmp.eq.s32.totalorder %s14, 0
    %p70 = por %p68, %p69
    %p71 = scmp.ne.s32.totalorder %s59, %s60
    %p72 = scmp.eq.s32.totalorder %s15, 3
    %p73 = por %p71, %p72
    %p75 = scmp.ne.s32.totalorder %s60, %s74
    %p76 = scmp.eq.s32.totalorder %s15, 0
    %p77 = por %p75, %p76
    %s79 = sadd.s32 %s78, 1
    %p82 = scmp.eq.s32.totalorder %s9, 3
    %p83 = scmp.ne.s32.totalorder %s78, %s80
    %p84 = scmp.eq.s32.totalorder %s9, 0
    %p85 = por %p83, %p84
    %p86 = scmp.ne.s32.totalorder %s78, %s80
    %p87 = scmp.eq.s32.totalorder %s14, 3
    %p88 = por %p86, %p87
    %p89 = scmp.ne.s32.totalorder %s80, %s81
    %p90 = scmp.eq.s32.totalorder %s14, 0
    %p91 = por %p89, %p90
    %p92 = scmp.ne.s32.totalorder %s80, %s81
    %p93 = scmp.eq.s32.totalorder %s15, 3
    %p94 = por %p92, %p93
    %p96 = scmp.ne.s32.totalorder %s81, %s95
    %p97 = scmp.eq.s32.totalorder %s15, 0
    %p98 = por %p96, %p97
    %s99 = ssub.s32 %s16, %s28
    %s100 = ssub.s32 %s17, %s24
    %s101 = sor.u32 %s99, %s100
    %p102 = scmp.eq.s32.totalorder %s101, 0
    %s104 = sadd.s32 %s103, 1
    %s105 = scalar_select %p102, %s103, %s104
    %p108 = pneg %p102
    %p109 = scmp.eq.s32.totalorder %s9, 3
    %p110 = por %p108, %p109
    %p111 = scmp.ne.s32.totalorder %s103, %s106
    %p112 = scmp.eq.s32.totalorder %s9, 0
    %p113 = por %p111, %p112
    %p114 = scmp.ne.s32.totalorder %s103, %s106
    %p115 = scmp.eq.s32.totalorder %s14, 3
    %p116 = por %p114, %p115
    %p117 = scmp.ne.s32.totalorder %s106, %s107
    %p118 = scmp.eq.s32.totalorder %s14, 0
    %p119 = por %p117, %p118
    %p120 = scmp.ne.s32.totalorder %s106, %s107
    %p121 = scmp.eq.s32.totalorder %s15, 3
    %p122 = por %p120, %p121
    %p124 = scmp.ne.s32.totalorder %s107, %s123
    %p125 = scmp.eq.s32.totalorder %s15, 0
    %p126 = por %p124, %p125
    %p127 = scmp.le.s32.totalorder 1, %s9
    %p128 = scmp.lt.s32.totalorder %s9, 5
    %p129 = pnand %p127, %p128
    %p130 = pneg %p129
    // Predicated region
    $region9: #{a_call__.6} parent=5 // pred_check
      _
    $region10: #{a_call__.6} parent=5 // pred_check_branch
      %132 = sbr.rel (%p129) target = $region12
    $region11: #{a_call__.6} parent=5 // pred_region
      %s133 = ssub.s32 %s9, 1
      // Predicated region
      $region13: #{a_call__.6} parent=11 // pred_check
        %p134 = pneg %p70
      $region14: #{a_call__.6} parent=11 // pred_check_branch
        %136 = sbr.rel (%p134) target = $region16
      $region15: #{a_call__.6} parent=11 // pred_region
        _
      $region16: #{a_call__.6} parent=11 // pred_fallthru
        _
      // Predicated region
      $region17: #{a_call__.6} parent=11 // pred_check
        %p137 = pneg %p91
      $region18: #{a_call__.6} parent=11 // pred_check_branch
        %139 = sbr.rel (%p137) target = $region20
      $region19: #{a_call__.6} parent=11 // pred_region
        _
      $region20: #{a_call__.6} parent=11 // pred_fallthru
        _
    $region12: #{a_call__.6} parent=5 // pred_fallthru
      _
    %p140 = scmp.lt.s32.totalorder %s9, 4
    // Predicated region
    $region21: #{a_call__.6} parent=5 // pred_check
      %p141 = pneg %p140
    $region22: #{a_call__.6} parent=5 // pred_check_branch
      %143 = sbr.rel (%p141) target = $region24
    $region23: #{a_call__.6} parent=5 // pred_region
      // Predicated region
      $region25: #{a_call__.6} parent=23 // pred_check
        %p144 = pneg %p43
      $region26: #{a_call__.6} parent=23 // pred_check_branch
        %146 = sbr.rel (%p144) target = $region28
      $region27: #{a_call__.6} parent=23 // pred_region
        %s147 = smul.u32 8, %s17
        %p148 = scmp.lt.s32.totalorder %s16, 1
        %s149 = scalar_select %p148, %s16, 1
        %p150 = scmp.lt.s32.totalorder %s147, 15
        %s151 = scalar_select %p150, %s147, 15
        %s152 = smul.addr %s151, 2
        %s153 = smul.addr %s149, 32
        %s154 = sadd.s32 %s152, %s153
        %s155 = smul.addr %s154, 8
        %s156 = scalar_lea.vmem %s0, %s155
        %s157 = smul.u32 8, %s17
      $region28: #{a_call__.6} parent=23 // pred_fallthru
        _
    $region24: #{a_call__.6} parent=5 // pred_fallthru
      _
    %p158 = scmp.le.s32.totalorder 1, %s9
    %p159 = scmp.lt.s32.totalorder %s9, 5
    %p160 = pnand %p158, %p159
    %p161 = pneg %p160
    // Predicated region
    $region29: #{a_call__.6} parent=5 // pred_check
      _
    $region30: #{a_call__.6} parent=5 // pred_check_branch
      %163 = sbr.rel (%p160) target = $region32
    $region31: #{a_call__.6} parent=5 // pred_region
      %s164 = ssub.s32 %s9, 1
      %s165 = smul.u32 8, %s19
      %p166 = scmp.lt.s32.totalorder %s18, 1
      %s167 = scalar_select %p166, %s18, 1
      %p168 = scmp.lt.s32.totalorder %s165, 15
      %s169 = scalar_select %p168, %s165, 15
      %s170 = smul.addr %s169, 2
      %s171 = smul.addr %s167, 32
      %s172 = sadd.s32 %s170, %s171
      %s173 = smul.addr %s172, 8
      %s174 = scalar_lea.vmem %s0, %s173
      %p175 = pneg %p49
      %p176 = pneg %p46
      %p177 = pneg %p70
      %p178 = pneg %p67
      %p179 = pneg %p91
      %p180 = pneg %p88
      %p181 = pneg %p119
      %p182 = pneg %p116
      %s183 = smul.u32 8, %s19
      %p184 = scmp.lt.s32.totalorder %s18, 1
      %s185 = scalar_select %p184, %s18, 1
      %p186 = scmp.lt.s32.totalorder %s183, 15
      %s187 = scalar_select %p186, %s183, 15
      %s188 = smul.addr %s187, 2
      %s189 = smul.addr %s185, 32
      %s190 = sadd.s32 %s188, %s189
      %s191 = smul.addr %s190, 8
      %s192 = scalar_lea.vmem %s3, %s191
      %s193 = smul.u32 8, %s19
      %p194 = scmp.lt.s32.totalorder %s18, 1
      %s195 = scalar_select %p194, %s18, 1
      %p196 = scmp.lt.s32.totalorder %s193, 15
      %s197 = scalar_select %p196, %s193, 15
      %s198 = smul.addr %s197, 2
      %s199 = smul.addr %s195, 32
      %s200 = sadd.s32 %s198, %s199
      %s201 = smul.addr %s200, 8
      %s202 = scalar_lea.vmem %s0, %s201
      %s203 = smul.u32 8, %s19
      %s204 = smul.u32 8, %s19
      %p205 = scmp.lt.s32.totalorder %s18, 1
      %s206 = scalar_select %p205, %s18, 1
      %p207 = scmp.lt.s32.totalorder %s204, 15
      %s208 = scalar_select %p207, %s204, 15
      %s209 = smul.addr %s208, 2
      %s210 = smul.addr %s206, 32
      %s211 = sadd.s32 %s209, %s210
      %s212 = smul.addr %s211, 8
      %s213 = scalar_lea.vmem %s3, %s212
      %s214 = smul.u32 8, %s19
      %v216 = vld [vmem:[%s202] sm:$0xff]
      %v217 = vld [vmem:[%s202 + $0x8] sm:$0xff]
      %v218 = vld [vmem:[%s202 + $0x10] sm:$0xff]
      %v219 = vld [vmem:[%s202 + $0x18] sm:$0xff]
      %v220 = vld [vmem:[%s202 + $0x20] sm:$0xff]
      %v221 = vld [vmem:[%s202 + $0x28] sm:$0xff]
      %v222 = vld [vmem:[%s202 + $0x30] sm:$0xff]
      %v223 = vld [vmem:[%s202 + $0x38] sm:$0xff]
      %v224 = vld [vmem:[%s202 + $0x40] sm:$0xff]
      %v225 = vld [vmem:[%s202 + $0x48] sm:$0xff]
      %v226 = vld [vmem:[%s202 + $0x50] sm:$0xff]
      %v227 = vld [vmem:[%s202 + $0x58] sm:$0xff]
      %v228 = vld [vmem:[%s202 + $0x60] sm:$0xff]
      %v229 = vld [vmem:[%s202 + $0x68] sm:$0xff]
      %v230 = vld [vmem:[%s202 + $0x70] sm:$0xff]
      %v231 = vld [vmem:[%s202 + $0x78] sm:$0xff]
      %v232 = vpack.c.bf16 %v216, %v216
      %v233 = vpack.c.bf16 %v217, %v217
      %v234 = vpack.c.bf16 %v218, %v218
      %v235 = vpack.c.bf16 %v219, %v219
      %v236 = vpack.c.bf16 %v220, %v220
      %v237 = vpack.c.bf16 %v221, %v221
      %v238 = vpack.c.bf16 %v222, %v222
      %v239 = vpack.c.bf16 %v223, %v223
      %v240 = vpack.c.bf16 %v224, %v224
      %v241 = vpack.c.bf16 %v225, %v225
      %v242 = vpack.c.bf16 %v226, %v226
      %v243 = vpack.c.bf16 %v227, %v227
      %v244 = vpack.c.bf16 %v228, %v228
      %v245 = vpack.c.bf16 %v229, %v229
      %v246 = vpack.c.bf16 %v230, %v230
      %v247 = vpack.c.bf16 %v231, %v231
      %vm248 = vcmask 25600
      %vm249 = vsmask.f32 1280
      %vm250 = vmand %vm248, %vm249
      %v251 = vld [vmem:[#allocation2] sm:$0x3]
      %v252 = vsel %vm250, 0, %v251
      %253 = vst [vmem:[#allocation2] sm:$0x3] %v252
      %v254 = vld [vmem:[#allocation2 + $0xc] sm:$0x3]
      %v255 = vsel %vm250, 0, %v254
      %256 = vst [vmem:[#allocation2 + $0xc] sm:$0x3] %v255
      %v257 = vld [vmem:[#allocation2 + $0x18] sm:$0x3]
      %v258 = vsel %vm250, 0, %v257
      %259 = vst [vmem:[#allocation2 + $0x18] sm:$0x3] %v258
      %v260 = vld [vmem:[#allocation2 + $0x24] sm:$0x3]
      %v261 = vsel %vm250, 0, %v260
      %262 = vst [vmem:[#allocation2 + $0x24] sm:$0x3] %v261
      %v263 = vld [vmem:[#allocation2 + $0x30] sm:$0x3]
      %v264 = vsel %vm250, 0, %v263
      %265 = vst [vmem:[#allocation2 + $0x30] sm:$0x3] %v264
      %v266 = vld [vmem:[#allocation2 + $0x3c] sm:$0x3]
      %v267 = vsel %vm250, 0, %v266
      %268 = vst [vmem:[#allocation2 + $0x3c] sm:$0x3] %v267
      %v269 = vld [vmem:[#allocation2 + $0x48] sm:$0x3]
      %v270 = vsel %vm250, 0, %v269
      %271 = vst [vmem:[#allocation2 + $0x48] sm:$0x3] %v270
      %v272 = vld [vmem:[#allocation2 + $0x54] sm:$0x3]
      %v273 = vsel %vm250, 0, %v272
      %274 = vst [vmem:[#allocation2 + $0x54] sm:$0x3] %v273
      %vm275 = vcmask 26625
      %vm276 = vsmask.f32 7942
      %vm277 = vmand %vm275, %vm276
      %v278 = vld [vmem:[#allocation2 + $0x8] sm:$0x6]
      %v279 = vsel %vm277, 0, %v278
      %280 = vst [vmem:[#allocation2 + $0x8] sm:$0x6] %v279
      %v281 = vld [vmem:[#allocation2 + $0x14] sm:$0x6]
      %v282 = vsel %vm277, 0, %v281
      %283 = vst [vmem:[#allocation2 + $0x14] sm:$0x6] %v282
      %v284 = vld [vmem:[#allocation2 + $0x20] sm:$0x6]
      %v285 = vsel %vm277, 0, %v284
      %286 = vst [vmem:[#allocation2 + $0x20] sm:$0x6] %v285
      %v287 = vld [vmem:[#allocation2 + $0x2c] sm:$0x6]
      %v288 = vsel %vm277, 0, %v287
      %289 = vst [vmem:[#allocation2 + $0x2c] sm:$0x6] %v288
      %v290 = vld [vmem:[#allocation2 + $0x38] sm:$0x6]
      %v291 = vsel %vm277, 0, %v290
      %292 = vst [vmem:[#allocation2 + $0x38] sm:$0x6] %v291
      %v293 = vld [vmem:[#allocation2 + $0x44] sm:$0x6]
      %v294 = vsel %vm277, 0, %v293
      %295 = vst [vmem:[#allocation2 + $0x44] sm:$0x6] %v294
      %v296 = vld [vmem:[#allocation2 + $0x50] sm:$0x6]
      %v297 = vsel %vm277, 0, %v296
      %298 = vst [vmem:[#allocation2 + $0x50] sm:$0x6] %v297
      %v299 = vld [vmem:[#allocation2 + $0x5c] sm:$0x6]
      %v300 = vsel %vm277, 0, %v299
      %301 = vst [vmem:[#allocation2 + $0x5c] sm:$0x6] %v300
      %vm302 = vsmask.f32 5392
      %vm303 = vmor %vm249, %vm302
      %v305 = vshrl.u32 %v232, 16
      %v307 = vrot.slane %v305, 6
      %v308 = vshll.u32 %v232, 16
      %v310 = vrot.slane %v308, 7
      %v311 = vor.u32 %v307, %v310
      %v312 = vrot.slane %v311, 4
      %v314 = vshrl.u32 %v233, 16
      %v316 = vrot.slane %v314, 6
      %v317 = vshll.u32 %v233, 16
      %v319 = vrot.slane %v317, 7
      %v320 = vor.u32 %v316, %v319
      %v321 = vsel %vm303, %v312, %v320
      %v322 = vrot.slane %v320, 4
      %v324 = vshrl.u32 %v234, 16
      %v326 = vrot.slane %v324, 6
      %v327 = vshll.u32 %v234, 16
      %v329 = vrot.slane %v327, 7
      %v330 = vor.u32 %v326, %v329
      %v331 = vrot.slane %v330, 4
      %v333 = vshrl.u32 %v235, 16
      %v335 = vrot.slane %v333, 6
      %v336 = vshll.u32 %v235, 16
      %v338 = vrot.slane %v336, 7
      %v339 = vor.u32 %v335, %v338
      %v340 = vsel %vm303, %v331, %v339
      %v341 = vrot.slane %v339, 4
      %v343 = vshrl.u32 %v236, 16
      %v345 = vrot.slane %v343, 6
      %v346 = vshll.u32 %v236, 16
      %v348 = vrot.slane %v346, 7
      %v349 = vor.u32 %v345, %v348
      %v350 = vrot.slane %v349, 4
      %v352 = vshrl.u32 %v237, 16
      %v354 = vrot.slane %v352, 6
      %v355 = vshll.u32 %v237, 16
      %v357 = vrot.slane %v355, 7
      %v358 = vor.u32 %v354, %v357
      %v359 = vsel %vm303, %v350, %v358
      %v360 = vrot.slane %v358, 4
      %v362 = vshrl.u32 %v238, 16
      %v364 = vrot.slane %v362, 6
      %v365 = vshll.u32 %v238, 16
      %v367 = vrot.slane %v365, 7
      %v368 = vor.u32 %v364, %v367
      %v369 = vrot.slane %v368, 4
      %v371 = vshrl.u32 %v239, 16
      %v373 = vrot.slane %v371, 6
      %v374 = vshll.u32 %v239, 16
      %v376 = vrot.slane %v374, 7
      %v377 = vor.u32 %v373, %v376
      %v378 = vsel %vm303, %v369, %v377
      %v379 = vrot.slane %v377, 4
      %v381 = vshrl.u32 %v240, 16
      %v383 = vrot.slane %v381, 6
      %v384 = vshll.u32 %v240, 16
      %v386 = vrot.slane %v384, 7
      %v387 = vor.u32 %v383, %v386
      %v388 = vrot.slane %v387, 4
      %v390 = vshrl.u32 %v241, 16
      %v392 = vrot.slane %v390, 6
      %v393 = vshll.u32 %v241, 16
      %v395 = vrot.slane %v393, 7
      %v396 = vor.u32 %v392, %v395
      %v397 = vsel %vm303, %v388, %v396
      %v398 = vrot.slane %v396, 4
      %v400 = vshrl.u32 %v242, 16
      %v402 = vrot.slane %v400, 6
      %v403 = vshll.u32 %v242, 16
      %v405 = vrot.slane %v403, 7
      %v406 = vor.u32 %v402, %v405
      %v407 = vrot.slane %v406, 4
      %v409 = vshrl.u32 %v243, 16
      %v411 = vrot.slane %v409, 6
      %v412 = vshll.u32 %v243, 16
      %v414 = vrot.slane %v412, 7
      %v415 = vor.u32 %v411, %v414
      %v416 = vsel %vm303, %v407, %v415
      %v417 = vrot.slane %v415, 4
      %v419 = vshrl.u32 %v244, 16
      %v421 = vrot.slane %v419, 6
      %v422 = vshll.u32 %v244, 16
      %v424 = vrot.slane %v422, 7
      %v425 = vor.u32 %v421, %v424
      %v426 = vrot.slane %v425, 4
      %v428 = vshrl.u32 %v245, 16
      %v430 = vrot.slane %v428, 6
      %v431 = vshll.u32 %v245, 16
      %v433 = vrot.slane %v431, 7
      %v434 = vor.u32 %v430, %v433
      %v435 = vsel %vm303, %v426, %v434
      %v436 = vrot.slane %v434, 4
      %v438 = vshrl.u32 %v246, 16
      %v440 = vrot.slane %v438, 6
      %v441 = vshll.u32 %v246, 16
      %v443 = vrot.slane %v441, 7
      %v444 = vor.u32 %v440, %v443
      %v445 = vrot.slane %v444, 4
      %v447 = vshrl.u32 %v247, 16
      %v449 = vrot.slane %v447, 6
      %v450 = vshll.u32 %v247, 16
      %v452 = vrot.slane %v450, 7
      %v453 = vor.u32 %v449, %v452
      %v454 = vsel %vm303, %v445, %v453
      %v455 = vrot.slane %v453, 4
      %vm480 = vcmask 27649
      %vm481 = vmand %vm480, %vm276
      %v482 = vld [vmem:[#allocation2] sm:$0xe]
      %v483 = vsel %vm481, %v311, %v482
      %484 = vst [vmem:[#allocation2] sm:$0xe] %v483
      %vm485 = vcmask 27648
      %486 = vst.msk [vmem:[#allocation2 + $0x4] sm:$0xf] %vm485, %v321
      %v487 = vld [vmem:[#allocation2 + $0x8] sm:$0x3]
      %v488 = vsel %vm250, %v322, %v487
      %489 = vst [vmem:[#allocation2 + $0x8] sm:$0x3] %v488
      %v490 = vld [vmem:[#allocation2 + $0xc] sm:$0xe]
      %v491 = vsel %vm481, %v330, %v490
      %492 = vst [vmem:[#allocation2 + $0xc] sm:$0xe] %v491
      %493 = vst.msk [vmem:[#allocation2 + $0x10] sm:$0xf] %vm485, %v340
      %v494 = vld [vmem:[#allocation2 + $0x14] sm:$0x3]
      %v495 = vsel %vm250, %v341, %v494
      %496 = vst [vmem:[#allocation2 + $0x14] sm:$0x3] %v495
      %v497 = vld [vmem:[#allocation2 + $0x18] sm:$0xe]
      %v498 = vsel %vm481, %v349, %v497
      %499 = vst [vmem:[#allocation2 + $0x18] sm:$0xe] %v498
      %500 = vst.msk [vmem:[#allocation2 + $0x1c] sm:$0xf] %vm485, %v359
      %v501 = vld [vmem:[#allocation2 + $0x20] sm:$0x3]
      %v502 = vsel %vm250, %v360, %v501
      %503 = vst [vmem:[#allocation2 + $0x20] sm:$0x3] %v502
      %v504 = vld [vmem:[#allocation2 + $0x24] sm:$0xe]
      %v505 = vsel %vm481, %v368, %v504
      %506 = vst [vmem:[#allocation2 + $0x24] sm:$0xe] %v505
      %507 = vst.msk [vmem:[#allocation2 + $0x28] sm:$0xf] %vm485, %v378
      %v508 = vld [vmem:[#allocation2 + $0x2c] sm:$0x3]
      %v509 = vsel %vm250, %v379, %v508
      %510 = vst [vmem:[#allocation2 + $0x2c] sm:$0x3] %v509
      %v511 = vld [vmem:[#allocation2 + $0x30] sm:$0xe]
      %v512 = vsel %vm481, %v387, %v511
      %513 = vst [vmem:[#allocation2 + $0x30] sm:$0xe] %v512
      %514 = vst.msk [vmem:[#allocation2 + $0x34] sm:$0xf] %vm485, %v397
      %v515 = vld [vmem:[#allocation2 + $0x38] sm:$0x3]
      %v516 = vsel %vm250, %v398, %v515
      %517 = vst [vmem:[#allocation2 + $0x38] sm:$0x3] %v516
      %v518 = vld [vmem:[#allocation2 + $0x3c] sm:$0xe]
      %v519 = vsel %vm481, %v406, %v518
      %520 = vst [vmem:[#allocation2 + $0x3c] sm:$0xe] %v519
      %521 = vst.msk [vmem:[#allocation2 + $0x40] sm:$0xf] %vm485, %v416
      %v522 = vld [vmem:[#allocation2 + $0x44] sm:$0x3]
      %v523 = vsel %vm250, %v417, %v522
      %524 = vst [vmem:[#allocation2 + $0x44] sm:$0x3] %v523
      %v525 = vld [vmem:[#allocation2 + $0x48] sm:$0xe]
      %v526 = vsel %vm481, %v425, %v525
      %527 = vst [vmem:[#allocation2 + $0x48] sm:$0xe] %v526
      %528 = vst.msk [vmem:[#allocation2 + $0x4c] sm:$0xf] %vm485, %v435
      %v529 = vld [vmem:[#allocation2 + $0x50] sm:$0x3]
      %v530 = vsel %vm250, %v436, %v529
      %531 = vst [vmem:[#allocation2 + $0x50] sm:$0x3] %v530
      %v532 = vld [vmem:[#allocation2 + $0x54] sm:$0xe]
      %v533 = vsel %vm481, %v444, %v532
      %534 = vst [vmem:[#allocation2 + $0x54] sm:$0xe] %v533
      %535 = vst.msk [vmem:[#allocation2 + $0x58] sm:$0xf] %vm485, %v454
      %v536 = vld [vmem:[#allocation2 + $0x5c] sm:$0x3]
      %v537 = vsel %vm250, %v455, %v536
      %538 = vst [vmem:[#allocation2 + $0x5c] sm:$0x3] %v537
      %v539 = vld [vmem:[#allocation2] sm:$0xf]
      %v540 = vld [vmem:[#allocation2 + $0x4] sm:$0xf]
      %v541 = vld [vmem:[#allocation2 + $0xc] sm:$0xf]
      %v542 = vld [vmem:[#allocation2 + $0x10] sm:$0xf]
      %v543 = vld [vmem:[#allocation2 + $0x18] sm:$0xf]
      %v544 = vld [vmem:[#allocation2 + $0x1c] sm:$0xf]
      %v545 = vld [vmem:[#allocation2 + $0x24] sm:$0xf]
      %v546 = vld [vmem:[#allocation2 + $0x28] sm:$0xf]
      %v547 = vld [vmem:[#allocation2 + $0x30] sm:$0xf]
      %v548 = vld [vmem:[#allocation2 + $0x34] sm:$0xf]
      %v549 = vld [vmem:[#allocation2 + $0x3c] sm:$0xf]
      %v550 = vld [vmem:[#allocation2 + $0x40] sm:$0xf]
      %v551 = vld [vmem:[#allocation2 + $0x48] sm:$0xf]
      %v552 = vld [vmem:[#allocation2 + $0x4c] sm:$0xf]
      %v553 = vld [vmem:[#allocation2 + $0x54] sm:$0xf]
      %v554 = vld [vmem:[#allocation2 + $0x58] sm:$0xf]
      %v555 = vld [vmem:[%s1] sm:$0x3]
      %v572 = vunpack.c.l.b16 %v539
      %v573 = vunpack.c.l.b16 %v540
      %v574 = vunpack.c.l.b16 %v541
      %v575 = vunpack.c.l.b16 %v542
      %v576 = vunpack.c.l.b16 %v543
      %v577 = vunpack.c.l.b16 %v544
      %v578 = vunpack.c.l.b16 %v545
      %v579 = vunpack.c.l.b16 %v546
      %v580 = vunpack.c.l.b16 %v547
      %v581 = vunpack.c.l.b16 %v548
      %v582 = vunpack.c.l.b16 %v549
      %v583 = vunpack.c.l.b16 %v550
      %v584 = vunpack.c.l.b16 %v551
      %v585 = vunpack.c.l.b16 %v552
      %v586 = vunpack.c.l.b16 %v553
      %v587 = vunpack.c.l.b16 %v554
      %v588 = vpack.c.b16 %v573, %v572
      %v589 = vpack.c.b16 %v575, %v574
      %v590 = vpack.c.b16 %v577, %v576
      %v591 = vpack.c.b16 %v579, %v578
      %v592 = vpack.c.b16 %v581, %v580
      %v593 = vpack.c.b16 %v583, %v582
      %v594 = vpack.c.b16 %v585, %v584
      %v595 = vpack.c.b16 %v587, %v586
      %vm596 = vcmask 31744
      %v598 = vsel %vm596, %v588, 0
      %v601 = vsel %vm596, %v589, 0
      %v604 = vsel %vm596, %v590, 0
      %v607 = vsel %vm596, %v591, 0
      %v610 = vsel %vm596, %v592, 0
      %v613 = vsel %vm596, %v593, 0
      %v616 = vsel %vm596, %v594, 0
      %v619 = vsel %vm596, %v595, 0
      %vm621 = vcmask 1041408
      %v623 = vsel %vm621, %v555, 0
      %625 = vmatpush.bf16.msra.mxu0 0
      %626 = vmatpush.bf16.msra.mxu0 0
      %627 = vmatpush.bf16.msra.mxu0 0
      %628 = vmatpush.bf16.msra.mxu0 0
      %629 = vmatpush.bf16.msra.mxu0 0
      %630 = vmatpush.bf16.msra.mxu0 0
      %631 = vmatpush.bf16.msra.mxu0 0
      %632 = vmatpush.bf16.msra.mxu0 %v623
      %633 = vmatmul.bf16.gmra.mxu0 %v598
      %v634 = vpop.f32.mrf.mxu0
      %v635 = vadd.f32 0.0, %v634
      %v636 = vpop.f32.mrf.mxu0
      %v637 = vadd.f32 0.0, %v636
      %638 = vmatmul.bf16.gmra.mxu0 %v601
      %v639 = vpop.f32.mrf.mxu0
      %v640 = vadd.f32 0.0, %v639
      %v641 = vpop.f32.mrf.mxu0
      %v642 = vadd.f32 0.0, %v641
      %643 = vmatmul.bf16.gmra.mxu0 %v604
      %v644 = vpop.f32.mrf.mxu0
      %v645 = vadd.f32 0.0, %v644
      %v646 = vpop.f32.mrf.mxu0
      %v647 = vadd.f32 0.0, %v646
      %648 = vmatmul.bf16.gmra.mxu0 %v607
      %v649 = vpop.f32.mrf.mxu0
      %v650 = vadd.f32 0.0, %v649
      %v651 = vpop.f32.mrf.mxu0
      %v652 = vadd.f32 0.0, %v651
      %653 = vmatmul.bf16.gmra.mxu0 %v610
      %v654 = vpop.f32.mrf.mxu0
      %v655 = vadd.f32 0.0, %v654
      %v656 = vpop.f32.mrf.mxu0
      %v657 = vadd.f32 0.0, %v656
      %658 = vmatmul.bf16.gmra.mxu0 %v613
      %v659 = vpop.f32.mrf.mxu0
      %v660 = vadd.f32 0.0, %v659
      %v661 = vpop.f32.mrf.mxu0
      %v662 = vadd.f32 0.0, %v661
      %663 = vmatmul.bf16.gmra.mxu0 %v616
      %v664 = vpop.f32.mrf.mxu0
      %v665 = vadd.f32 0.0, %v664
      %v666 = vpop.f32.mrf.mxu0
      %v667 = vadd.f32 0.0, %v666
      %668 = vmatmul.bf16.gmra.mxu0 %v619
      %v669 = vpop.f32.mrf.mxu0
      %v670 = vadd.f32 0.0, %v669
      %v671 = vpop.f32.mrf.mxu0
      %v672 = vadd.f32 0.0, %v671
      %673 = vdwg.mxu0
      %674 = vst [vmem:[#allocation3] sm:$0xff] %v635
      %675 = vst [vmem:[#allocation3 + $0x8] sm:$0xff] %v637
      %676 = vst [vmem:[#allocation3 + $0x10] sm:$0xff] %v640
      %677 = vst [vmem:[#allocation3 + $0x18] sm:$0xff] %v642
      %678 = vst [vmem:[#allocation3 + $0x20] sm:$0xff] %v645
      %679 = vst [vmem:[#allocation3 + $0x28] sm:$0xff] %v647
      %680 = vst [vmem:[#allocation3 + $0x30] sm:$0xff] %v650
      %681 = vst [vmem:[#allocation3 + $0x38] sm:$0xff] %v652
      %682 = vst [vmem:[#allocation3 + $0x40] sm:$0xff] %v655
      %683 = vst [vmem:[#allocation3 + $0x48] sm:$0xff] %v657
      %684 = vst [vmem:[#allocation3 + $0x50] sm:$0xff] %v660
      %685 = vst [vmem:[#allocation3 + $0x58] sm:$0xff] %v662
      %686 = vst [vmem:[#allocation3 + $0x60] sm:$0xff] %v665
      %687 = vst [vmem:[#allocation3 + $0x68] sm:$0xff] %v667
      %688 = vst [vmem:[#allocation3 + $0x70] sm:$0xff] %v670
      %689 = vst [vmem:[#allocation3 + $0x78] sm:$0xff] %v672
      %v690 = vld [vmem:[#allocation2] sm:$0xf]
      %v691 = vld [vmem:[#allocation2 + $0x4] sm:$0xf]
      %v692 = vld [vmem:[#allocation2 + $0x8] sm:$0x1]
      %v693 = vld [vmem:[#allocation2 + $0xc] sm:$0xf]
      %v694 = vld [vmem:[#allocation2 + $0x10] sm:$0xf]
      %v695 = vld [vmem:[#allocation2 + $0x14] sm:$0x1]
      %v696 = vld [vmem:[#allocation2 + $0x18] sm:$0xf]
      %v697 = vld [vmem:[#allocation2 + $0x1c] sm:$0xf]
      %v698 = vld [vmem:[#allocation2 + $0x20] sm:$0x1]
      %v699 = vld [vmem:[#allocation2 + $0x24] sm:$0xf]
      %v700 = vld [vmem:[#allocation2 + $0x28] sm:$0xf]
      %v701 = vld [vmem:[#allocation2 + $0x2c] sm:$0x1]
      %v702 = vld [vmem:[#allocation2 + $0x30] sm:$0xf]
      %v703 = vld [vmem:[#allocation2 + $0x34] sm:$0xf]
      %v704 = vld [vmem:[#allocation2 + $0x38] sm:$0x1]
      %v705 = vld [vmem:[#allocation2 + $0x3c] sm:$0xf]
      %v706 = vld [vmem:[#allocation2 + $0x40] sm:$0xf]
      %v707 = vld [vmem:[#allocation2 + $0x44] sm:$0x1]
      %v708 = vld [vmem:[#allocation2 + $0x48] sm:$0xf]
      %v709 = vld [vmem:[#allocation2 + $0x4c] sm:$0xf]
      %v710 = vld [vmem:[#allocation2 + $0x50] sm:$0x1]
      %v711 = vld [vmem:[#allocation2 + $0x54] sm:$0xf]
      %v712 = vld [vmem:[#allocation2 + $0x58] sm:$0xf]
      %v713 = vld [vmem:[#allocation2 + $0x5c] sm:$0x1]
      %vm714 = vsmask.f32 3328
      %vm715 = vsmask.f32 7440
      %vm716 = vmor %vm714, %vm715
      %v718 = vshrl.u32 %v690, 16
      %v720 = vrot.slane %v718, 4
      %v721 = vshll.u32 %v690, 16
      %v723 = vrot.slane %v721, 5
      %v724 = vor.u32 %v720, %v723
      %v725 = vrot.slane %v724, 4
      %v727 = vshll.u32 %v691, 16
      %v729 = vrot.slane %v727, 5
      %v730 = vsel %vm716, %v725, %v729
      %v731 = vshrl.u32 %v691, 16
      %v733 = vrot.slane %v731, 4
      %v734 = vor.u32 %v733, %v729
      %v735 = vrot.slane %v734, 4
      %v737 = vshll.u32 %v692, 16
      %v739 = vrot.slane %v737, 5
      %v740 = vsel %vm716, %v735, %v739
      %v742 = vshrl.u32 %v693, 16
      %v744 = vrot.slane %v742, 4
      %v745 = vshll.u32 %v693, 16
      %v747 = vrot.slane %v745, 5
      %v748 = vor.u32 %v744, %v747
      %v749 = vrot.slane %v748, 4
      %v751 = vshll.u32 %v694, 16
      %v753 = vrot.slane %v751, 5
      %v754 = vsel %vm716, %v749, %v753
      %v755 = vshrl.u32 %v694, 16
      %v757 = vrot.slane %v755, 4
      %v758 = vor.u32 %v757, %v753
      %v759 = vrot.slane %v758, 4
      %v761 = vshll.u32 %v695, 16
      %v763 = vrot.slane %v761, 5
      %v764 = vsel %vm716, %v759, %v763
      %v766 = vshrl.u32 %v696, 16
      %v768 = vrot.slane %v766, 4
      %v769 = vshll.u32 %v696, 16
      %v771 = vrot.slane %v769, 5
      %v772 = vor.u32 %v768, %v771
      %v773 = vrot.slane %v772, 4
      %v775 = vshll.u32 %v697, 16
      %v777 = vrot.slane %v775, 5
      %v778 = vsel %vm716, %v773, %v777
      %v779 = vshrl.u32 %v697, 16
      %v781 = vrot.slane %v779, 4
      %v782 = vor.u32 %v781, %v777
      %v783 = vrot.slane %v782, 4
      %v785 = vshll.u32 %v698, 16
      %v787 = vrot.slane %v785, 5
      %v788 = vsel %vm716, %v783, %v787
      %v790 = vshrl.u32 %v699, 16
      %v792 = vrot.slane %v790, 4
      %v793 = vshll.u32 %v699, 16
      %v795 = vrot.slane %v793, 5
      %v796 = vor.u32 %v792, %v795
      %v797 = vrot.slane %v796, 4
      %v799 = vshll.u32 %v700, 16
      %v801 = vrot.slane %v799, 5
      %v802 = vsel %vm716, %v797, %v801
      %v803 = vshrl.u32 %v700, 16
      %v805 = vrot.slane %v803, 4
      %v806 = vor.u32 %v805, %v801
      %v807 = vrot.slane %v806, 4
      %v809 = vshll.u32 %v701, 16
      %v811 = vrot.slane %v809, 5
      %v812 = vsel %vm716, %v807, %v811
      %v814 = vshrl.u32 %v702, 16
      %v816 = vrot.slane %v814, 4
      %v817 = vshll.u32 %v702, 16
      %v819 = vrot.slane %v817, 5
      %v820 = vor.u32 %v816, %v819
      %v821 = vrot.slane %v820, 4
      %v823 = vshll.u32 %v703, 16
      %v825 = vrot.slane %v823, 5
      %v826 = vsel %vm716, %v821, %v825
      %v827 = vshrl.u32 %v703, 16
      %v829 = vrot.slane %v827, 4
      %v830 = vor.u32 %v829, %v825
      %v831 = vrot.slane %v830, 4
      %v833 = vshll.u32 %v704, 16
      %v835 = vrot.slane %v833, 5
      %v836 = vsel %vm716, %v831, %v835
      %v838 = vshrl.u32 %v705, 16
      %v840 = vrot.slane %v838, 4
      %v841 = vshll.u32 %v705, 16
      %v843 = vrot.slane %v841, 5
      %v844 = vor.u32 %v840, %v843
      %v845 = vrot.slane %v844, 4
      %v847 = vshll.u32 %v706, 16
      %v849 = vrot.slane %v847, 5
      %v850 = vsel %vm716, %v845, %v849
      %v851 = vshrl.u32 %v706, 16
      %v853 = vrot.slane %v851, 4
      %v854 = vor.u32 %v853, %v849
      %v855 = vrot.slane %v854, 4
      %v857 = vshll.u32 %v707, 16
      %v859 = vrot.slane %v857, 5
      %v860 = vsel %vm716, %v855, %v859
      %v862 = vshrl.u32 %v708, 16
      %v864 = vrot.slane %v862, 4
      %v865 = vshll.u32 %v708, 16
      %v867 = vrot.slane %v865, 5
      %v868 = vor.u32 %v864, %v867
      %v869 = vrot.slane %v868, 4
      %v871 = vshll.u32 %v709, 16
      %v873 = vrot.slane %v871, 5
      %v874 = vsel %vm716, %v869, %v873
      %v875 = vshrl.u32 %v709, 16
      %v877 = vrot.slane %v875, 4
      %v878 = vor.u32 %v877, %v873
      %v879 = vrot.slane %v878, 4
      %v881 = vshll.u32 %v710, 16
      %v883 = vrot.slane %v881, 5
      %v884 = vsel %vm716, %v879, %v883
      %v886 = vshrl.u32 %v711, 16
      %v888 = vrot.slane %v886, 4
      %v889 = vshll.u32 %v711, 16
      %v891 = vrot.slane %v889, 5
      %v892 = vor.u32 %v888, %v891
      %v893 = vrot.slane %v892, 4
      %v895 = vshll.u32 %v712, 16
      %v897 = vrot.slane %v895, 5
      %v898 = vsel %vm716, %v893, %v897
      %v899 = vshrl.u32 %v712, 16
      %v901 = vrot.slane %v899, 4
      %v902 = vor.u32 %v901, %v897
      %v903 = vrot.slane %v902, 4
      %v905 = vshll.u32 %v713, 16
      %v907 = vrot.slane %v905, 5
      %v908 = vsel %vm716, %v903, %v907
      %s909 = scalar_lea.vmem %s1, 2
      %v910 = vld [vmem:[%s909] sm:$0x3]
      %v911 = vunpack.c.l.b16 %v730
      %v912 = vunpack.c.l.b16 %v740
      %v913 = vunpack.c.l.b16 %v754
      %v914 = vunpack.c.l.b16 %v764
      %v915 = vunpack.c.l.b16 %v778
      %v916 = vunpack.c.l.b16 %v788
      %v917 = vunpack.c.l.b16 %v802
      %v918 = vunpack.c.l.b16 %v812
      %v919 = vunpack.c.l.b16 %v826
      %v920 = vunpack.c.l.b16 %v836
      %v921 = vunpack.c.l.b16 %v850
      %v922 = vunpack.c.l.b16 %v860
      %v923 = vunpack.c.l.b16 %v874
      %v924 = vunpack.c.l.b16 %v884
      %v925 = vunpack.c.l.b16 %v898
      %v926 = vunpack.c.l.b16 %v908
      %v927 = vpack.c.b16 %v912, %v911
      %v928 = vpack.c.b16 %v914, %v913
      %v929 = vpack.c.b16 %v916, %v915
      %v930 = vpack.c.b16 %v918, %v917
      %v931 = vpack.c.b16 %v920, %v919
      %v932 = vpack.c.b16 %v922, %v921
      %v933 = vpack.c.b16 %v924, %v923
      %v934 = vpack.c.b16 %v926, %v925
      %v936 = vsel %vm596, %v927, 0
      %v939 = vsel %vm596, %v928, 0
      %v942 = vsel %vm596, %v929, 0
      %v945 = vsel %vm596, %v930, 0
      %v948 = vsel %vm596, %v931, 0
      %v951 = vsel %vm596, %v932, 0
      %v954 = vsel %vm596, %v933, 0
      %v957 = vsel %vm596, %v934, 0
      %v960 = vsel %vm621, %v910, 0
      %962 = vmatpush.bf16.msra.mxu0 0
      %963 = vmatpush.bf16.msra.mxu0 0
      %964 = vmatpush.bf16.msra.mxu0 0
      %965 = vmatpush.bf16.msra.mxu0 0
      %966 = vmatpush.bf16.msra.mxu0 0
      %967 = vmatpush.bf16.msra.mxu0 0
      %968 = vmatpush.bf16.msra.mxu0 0
      %969 = vmatpush.bf16.msra.mxu0 %v960
      %970 = vmatmul.bf16.gmra.mxu0 %v936
      %v971 = vpop.f32.mrf.mxu0
      %v972 = vadd.f32 0.0, %v971
      %v973 = vpop.f32.mrf.mxu0
      %v974 = vadd.f32 0.0, %v973
      %975 = vmatmul.bf16.gmra.mxu0 %v939
      %v976 = vpop.f32.mrf.mxu0
      %v977 = vadd.f32 0.0, %v976
      %v978 = vpop.f32.mrf.mxu0
      %v979 = vadd.f32 0.0, %v978
      %980 = vmatmul.bf16.gmra.mxu0 %v942
      %v981 = vpop.f32.mrf.mxu0
      %v982 = vadd.f32 0.0, %v981
      %v983 = vpop.f32.mrf.mxu0
      %v984 = vadd.f32 0.0, %v983
      %985 = vmatmul.bf16.gmra.mxu0 %v945
      %v986 = vpop.f32.mrf.mxu0
      %v987 = vadd.f32 0.0, %v986
      %v988 = vpop.f32.mrf.mxu0
      %v989 = vadd.f32 0.0, %v988
      %990 = vmatmul.bf16.gmra.mxu0 %v948
      %v991 = vpop.f32.mrf.mxu0
      %v992 = vadd.f32 0.0, %v991
      %v993 = vpop.f32.mrf.mxu0
      %v994 = vadd.f32 0.0, %v993
      %995 = vmatmul.bf16.gmra.mxu0 %v951
      %v996 = vpop.f32.mrf.mxu0
      %v997 = vadd.f32 0.0, %v996
      %v998 = vpop.f32.mrf.mxu0
      %v999 = vadd.f32 0.0, %v998
      %1000 = vmatmul.bf16.gmra.mxu0 %v954
      %v1001 = vpop.f32.mrf.mxu0
      %v1002 = vadd.f32 0.0, %v1001
      %v1003 = vpop.f32.mrf.mxu0
      %v1004 = vadd.f32 0.0, %v1003
      %1005 = vmatmul.bf16.gmra.mxu0 %v957
      %v1006 = vpop.f32.mrf.mxu0
      %v1007 = vadd.f32 0.0, %v1006
      %v1008 = vpop.f32.mrf.mxu0
      %v1009 = vadd.f32 0.0, %v1008
      %1010 = vdwg.mxu0
      %v1011 = vld [vmem:[#allocation3] sm:$0xff]
      %v1012 = vld [vmem:[#allocation3 + $0x8] sm:$0xff]
      %v1013 = vld [vmem:[#allocation3 + $0x10] sm:$0xff]
      %v1014 = vld [vmem:[#allocation3 + $0x18] sm:$0xff]
      %v1015 = vld [vmem:[#allocation3 + $0x20] sm:$0xff]
      %v1016 = vld [vmem:[#allocation3 + $0x28] sm:$0xff]
      %v1017 = vld [vmem:[#allocation3 + $0x30] sm:$0xff]
      %v1018 = vld [vmem:[#allocation3 + $0x38] sm:$0xff]
      %v1019 = vld [vmem:[#allocation3 + $0x40] sm:$0xff]
      %v1020 = vld [vmem:[#allocation3 + $0x48] sm:$0xff]
      %v1021 = vld [vmem:[#allocation3 + $0x50] sm:$0xff]
      %v1022 = vld [vmem:[#allocation3 + $0x58] sm:$0xff]
      %v1023 = vld [vmem:[#allocation3 + $0x60] sm:$0xff]
      %v1024 = vld [vmem:[#allocation3 + $0x68] sm:$0xff]
      %v1025 = vld [vmem:[#allocation3 + $0x70] sm:$0xff]
      %v1026 = vld [vmem:[#allocation3 + $0x78] sm:$0xff]
      %v1027 = vadd.f32 %v1011, %v972
      %v1028 = vadd.f32 %v1012, %v974
      %v1029 = vadd.f32 %v1013, %v977
      %v1030 = vadd.f32 %v1014, %v979
      %v1031 = vadd.f32 %v1015, %v982
      %v1032 = vadd.f32 %v1016, %v984
      %v1033 = vadd.f32 %v1017, %v987
      %v1034 = vadd.f32 %v1018, %v989
      %v1035 = vadd.f32 %v1019, %v992
      %v1036 = vadd.f32 %v1020, %v994
      %v1037 = vadd.f32 %v1021, %v997
      %v1038 = vadd.f32 %v1022, %v999
      %v1039 = vadd.f32 %v1023, %v1002
      %v1040 = vadd.f32 %v1024, %v1004
      %v1041 = vadd.f32 %v1025, %v1007
      %v1042 = vadd.f32 %v1026, %v1009
      %1043 = vst [vmem:[#allocation3] sm:$0xff] %v1027
      %1044 = vst [vmem:[#allocation3 + $0x8] sm:$0xff] %v1028
      %1045 = vst [vmem:[#allocation3 + $0x10] sm:$0xff] %v1029
      %1046 = vst [vmem:[#allocation3 + $0x18] sm:$0xff] %v1030
      %1047 = vst [vmem:[#allocation3 + $0x20] sm:$0xff] %v1031
      %1048 = vst [vmem:[#allocation3 + $0x28] sm:$0xff] %v1032
      %1049 = vst [vmem:[#allocation3 + $0x30] sm:$0xff] %v1033
      %1050 = vst [vmem:[#allocation3 + $0x38] sm:$0xff] %v1034
      %1051 = vst [vmem:[#allocation3 + $0x40] sm:$0xff] %v1035
      %1052 = vst [vmem:[#allocation3 + $0x48] sm:$0xff] %v1036
      %1053 = vst [vmem:[#allocation3 + $0x50] sm:$0xff] %v1037
      %1054 = vst [vmem:[#allocation3 + $0x58] sm:$0xff] %v1038
      %1055 = vst [vmem:[#allocation3 + $0x60] sm:$0xff] %v1039
      %1056 = vst [vmem:[#allocation3 + $0x68] sm:$0xff] %v1040
      %1057 = vst [vmem:[#allocation3 + $0x70] sm:$0xff] %v1041
      %1058 = vst [vmem:[#allocation3 + $0x78] sm:$0xff] %v1042
      %v1059 = vld [vmem:[#allocation2] sm:$0xe]
      %v1060 = vld [vmem:[#allocation2 + $0x4] sm:$0xf]
      %v1061 = vld [vmem:[#allocation2 + $0x8] sm:$0x1]
      %v1062 = vld [vmem:[#allocation2 + $0xc] sm:$0xe]
      %v1063 = vld [vmem:[#allocation2 + $0x10] sm:$0xf]
      %v1064 = vld [vmem:[#allocation2 + $0x14] sm:$0x1]
      %v1065 = vld [vmem:[#allocation2 + $0x18] sm:$0xe]
      %v1066 = vld [vmem:[#allocation2 + $0x1c] sm:$0xf]
      %v1067 = vld [vmem:[#allocation2 + $0x20] sm:$0x1]
      %v1068 = vld [vmem:[#allocation2 + $0x24] sm:$0xe]
      %v1069 = vld [vmem:[#allocation2 + $0x28] sm:$0xf]
      %v1070 = vld [vmem:[#allocation2 + $0x2c] sm:$0x1]
      %v1071 = vld [vmem:[#allocation2 + $0x30] sm:$0xe]
      %v1072 = vld [vmem:[#allocation2 + $0x34] sm:$0xf]
      %v1073 = vld [vmem:[#allocation2 + $0x38] sm:$0x1]
      %v1074 = vld [vmem:[#allocation2 + $0x3c] sm:$0xe]
      %v1075 = vld [vmem:[#allocation2 + $0x40] sm:$0xf]
      %v1076 = vld [vmem:[#allocation2 + $0x44] sm:$0x1]
      %v1077 = vld [vmem:[#allocation2 + $0x48] sm:$0xe]
      %v1078 = vld [vmem:[#allocation2 + $0x4c] sm:$0xf]
      %v1079 = vld [vmem:[#allocation2 + $0x50] sm:$0x1]
      %v1080 = vld [vmem:[#allocation2 + $0x54] sm:$0xe]
      %v1081 = vld [vmem:[#allocation2 + $0x58] sm:$0xf]
      %v1082 = vld [vmem:[#allocation2 + $0x5c] sm:$0x1]
      %vm1107 = vcmask 1042432
      %vm1108 = vcmask 1046532
      %vm1109 = vmor %vm1107, %vm1108
      %v1110 = vrot.slane %v1059, 5
      %v1111 = vrot.slane %v1110, 4
      %v1112 = vrot.slane %v1060, 5
      %v1113 = vsel %vm1109, %v1111, %v1112
      %v1114 = vrot.slane %v1112, 4
      %v1115 = vrot.slane %v1061, 5
      %v1116 = vsel %vm1109, %v1114, %v1115
      %v1117 = vrot.slane %v1062, 5
      %v1118 = vrot.slane %v1117, 4
      %v1119 = vrot.slane %v1063, 5
      %v1120 = vsel %vm1109, %v1118, %v1119
      %v1121 = vrot.slane %v1119, 4
      %v1122 = vrot.slane %v1064, 5
      %v1123 = vsel %vm1109, %v1121, %v1122
      %v1124 = vrot.slane %v1065, 5
      %v1125 = vrot.slane %v1124, 4
      %v1126 = vrot.slane %v1066, 5
      %v1127 = vsel %vm1109, %v1125, %v1126
      %v1128 = vrot.slane %v1126, 4
      %v1129 = vrot.slane %v1067, 5
      %v1130 = vsel %vm1109, %v1128, %v1129
      %v1131 = vrot.slane %v1068, 5
      %v1132 = vrot.slane %v1131, 4
      %v1133 = vrot.slane %v1069, 5
      %v1134 = vsel %vm1109, %v1132, %v1133
      %v1135 = vrot.slane %v1133, 4
      %v1136 = vrot.slane %v1070, 5
      %v1137 = vsel %vm1109, %v1135, %v1136
      %v1138 = vrot.slane %v1071, 5
      %v1139 = vrot.slane %v1138, 4
      %v1140 = vrot.slane %v1072, 5
      %v1141 = vsel %vm1109, %v1139, %v1140
      %v1142 = vrot.slane %v1140, 4
      %v1143 = vrot.slane %v1073, 5
      %v1144 = vsel %vm1109, %v1142, %v1143
      %v1145 = vrot.slane %v1074, 5
      %v1146 = vrot.slane %v1145, 4
      %v1147 = vrot.slane %v1075, 5
      %v1148 = vsel %vm1109, %v1146, %v1147
      %v1149 = vrot.slane %v1147, 4
      %v1150 = vrot.slane %v1076, 5
      %v1151 = vsel %vm1109, %v1149, %v1150
      %v1152 = vrot.slane %v1077, 5
      %v1153 = vrot.slane %v1152, 4
      %v1154 = vrot.slane %v1078, 5
      %v1155 = vsel %vm1109, %v1153, %v1154
      %v1156 = vrot.slane %v1154, 4
      %v1157 = vrot.slane %v1079, 5
      %v1158 = vsel %vm1109, %v1156, %v1157
      %v1159 = vrot.slane %v1080, 5
      %v1160 = vrot.slane %v1159, 4
      %v1161 = vrot.slane %v1081, 5
      %v1162 = vsel %vm1109, %v1160, %v1161
      %v1163 = vrot.slane %v1161, 4
      %v1164 = vrot.slane %v1082, 5
      %v1165 = vsel %vm1109, %v1163, %v1164
      %s1166 = scalar_lea.vmem %s1, 4
      %v1167 = vld [vmem:[%s1166] sm:$0x3]
      %v1168 = vunpack.c.l.b16 %v1113
      %v1169 = vunpack.c.l.b16 %v1116
      %v1170 = vunpack.c.l.b16 %v1120
      %v1171 = vunpack.c.l.b16 %v1123
      %v1172 = vunpack.c.l.b16 %v1127
      %v1173 = vunpack.c.l.b16 %v1130
      %v1174 = vunpack.c.l.b16 %v1134
      %v1175 = vunpack.c.l.b16 %v1137
      %v1176 = vunpack.c.l.b16 %v1141
      %v1177 = vunpack.c.l.b16 %v1144
      %v1178 = vunpack.c.l.b16 %v1148
      %v1179 = vunpack.c.l.b16 %v1151
      %v1180 = vunpack.c.l.b16 %v1155
      %v1181 = vunpack.c.l.b16 %v1158
      %v1182 = vunpack.c.l.b16 %v1162
      %v1183 = vunpack.c.l.b16 %v1165
      %v1184 = vpack.c.b16 %v1169, %v1168
      %v1185 = vpack.c.b16 %v1171, %v1170
      %v1186 = vpack.c.b16 %v1173, %v1172
      %v1187 = vpack.c.b16 %v1175, %v1174
      %v1188 = vpack.c.b16 %v1177, %v1176
      %v1189 = vpack.c.b16 %v1179, %v1178
      %v1190 = vpack.c.b16 %v1181, %v1180
      %v1191 = vpack.c.b16 %v1183, %v1182
      %v1193 = vsel %vm596, %v1184, 0
      %v1196 = vsel %vm596, %v1185, 0
      %v1199 = vsel %vm596, %v1186, 0
      %v1202 = vsel %vm596, %v1187, 0
      %v1205 = vsel %vm596, %v1188, 0
      %v1208 = vsel %vm596, %v1189, 0
      %v1211 = vsel %vm596, %v1190, 0
      %v1214 = vsel %vm596, %v1191, 0
      %v1217 = vsel %vm621, %v1167, 0
      %1219 = vmatpush.bf16.msra.mxu0 0
      %1220 = vmatpush.bf16.msra.mxu0 0
      %1221 = vmatpush.bf16.msra.mxu0 0
      %1222 = vmatpush.bf16.msra.mxu0 0
      %1223 = vmatpush.bf16.msra.mxu0 0
      %1224 = vmatpush.bf16.msra.mxu0 0
      %1225 = vmatpush.bf16.msra.mxu0 0
      %1226 = vmatpush.bf16.msra.mxu0 %v1217
      %1227 = vmatmul.bf16.gmra.mxu0 %v1193
      %v1228 = vpop.f32.mrf.mxu0
      %v1229 = vadd.f32 0.0, %v1228
      %v1230 = vpop.f32.mrf.mxu0
      %v1231 = vadd.f32 0.0, %v1230
      %1232 = vmatmul.bf16.gmra.mxu0 %v1196
      %v1233 = vpop.f32.mrf.mxu0
      %v1234 = vadd.f32 0.0, %v1233
      %v1235 = vpop.f32.mrf.mxu0
      %v1236 = vadd.f32 0.0, %v1235
      %1237 = vmatmul.bf16.gmra.mxu0 %v1199
      %v1238 = vpop.f32.mrf.mxu0
      %v1239 = vadd.f32 0.0, %v1238
      %v1240 = vpop.f32.mrf.mxu0
      %v1241 = vadd.f32 0.0, %v1240
      %1242 = vmatmul.bf16.gmra.mxu0 %v1202
      %v1243 = vpop.f32.mrf.mxu0
      %v1244 = vadd.f32 0.0, %v1243
      %v1245 = vpop.f32.mrf.mxu0
      %v1246 = vadd.f32 0.0, %v1245
      %1247 = vmatmul.bf16.gmra.mxu0 %v1205
      %v1248 = vpop.f32.mrf.mxu0
      %v1249 = vadd.f32 0.0, %v1248
      %v1250 = vpop.f32.mrf.mxu0
      %v1251 = vadd.f32 0.0, %v1250
      %1252 = vmatmul.bf16.gmra.mxu0 %v1208
      %v1253 = vpop.f32.mrf.mxu0
      %v1254 = vadd.f32 0.0, %v1253
      %v1255 = vpop.f32.mrf.mxu0
      %v1256 = vadd.f32 0.0, %v1255
      %1257 = vmatmul.bf16.gmra.mxu0 %v1211
      %v1258 = vpop.f32.mrf.mxu0
      %v1259 = vadd.f32 0.0, %v1258
      %v1260 = vpop.f32.mrf.mxu0
      %v1261 = vadd.f32 0.0, %v1260
      %1262 = vmatmul.bf16.gmra.mxu0 %v1214
      %v1263 = vpop.f32.mrf.mxu0
      %v1264 = vadd.f32 0.0, %v1263
      %v1265 = vpop.f32.mrf.mxu0
      %v1266 = vadd.f32 0.0, %v1265
      %1267 = vdwg.mxu0
      %v1268 = vld [vmem:[#allocation3] sm:$0xff]
      %v1269 = vld [vmem:[#allocation3 + $0x8] sm:$0xff]
      %v1270 = vld [vmem:[#allocation3 + $0x10] sm:$0xff]
      %v1271 = vld [vmem:[#allocation3 + $0x18] sm:$0xff]
      %v1272 = vld [vmem:[#allocation3 + $0x20] sm:$0xff]
      %v1273 = vld [vmem:[#allocation3 + $0x28] sm:$0xff]
      %v1274 = vld [vmem:[#allocation3 + $0x30] sm:$0xff]
      %v1275 = vld [vmem:[#allocation3 + $0x38] sm:$0xff]
      %v1276 = vld [vmem:[#allocation3 + $0x40] sm:$0xff]
      %v1277 = vld [vmem:[#allocation3 + $0x48] sm:$0xff]
      %v1278 = vld [vmem:[#allocation3 + $0x50] sm:$0xff]
      %v1279 = vld [vmem:[#allocation3 + $0x58] sm:$0xff]
      %v1280 = vld [vmem:[#allocation3 + $0x60] sm:$0xff]
      %v1281 = vld [vmem:[#allocation3 + $0x68] sm:$0xff]
      %v1282 = vld [vmem:[#allocation3 + $0x70] sm:$0xff]
      %v1283 = vld [vmem:[#allocation3 + $0x78] sm:$0xff]
      %v1284 = vadd.f32 %v1268, %v1229
      %v1285 = vadd.f32 %v1269, %v1231
      %v1286 = vadd.f32 %v1270, %v1234
      %v1287 = vadd.f32 %v1271, %v1236
      %v1288 = vadd.f32 %v1272, %v1239
      %v1289 = vadd.f32 %v1273, %v1241
      %v1290 = vadd.f32 %v1274, %v1244
      %v1291 = vadd.f32 %v1275, %v1246
      %v1292 = vadd.f32 %v1276, %v1249
      %v1293 = vadd.f32 %v1277, %v1251
      %v1294 = vadd.f32 %v1278, %v1254
      %v1295 = vadd.f32 %v1279, %v1256
      %v1296 = vadd.f32 %v1280, %v1259
      %v1297 = vadd.f32 %v1281, %v1261
      %v1298 = vadd.f32 %v1282, %v1264
      %v1299 = vadd.f32 %v1283, %v1266
      %1300 = vst [vmem:[#allocation3] sm:$0xff] %v1284
      %1301 = vst [vmem:[#allocation3 + $0x8] sm:$0xff] %v1285
      %1302 = vst [vmem:[#allocation3 + $0x10] sm:$0xff] %v1286
      %1303 = vst [vmem:[#allocation3 + $0x18] sm:$0xff] %v1287
      %1304 = vst [vmem:[#allocation3 + $0x20] sm:$0xff] %v1288
      %1305 = vst [vmem:[#allocation3 + $0x28] sm:$0xff] %v1289
      %1306 = vst [vmem:[#allocation3 + $0x30] sm:$0xff] %v1290
      %1307 = vst [vmem:[#allocation3 + $0x38] sm:$0xff] %v1291
      %1308 = vst [vmem:[#allocation3 + $0x40] sm:$0xff] %v1292
      %1309 = vst [vmem:[#allocation3 + $0x48] sm:$0xff] %v1293
      %1310 = vst [vmem:[#allocation3 + $0x50] sm:$0xff] %v1294
      %1311 = vst [vmem:[#allocation3 + $0x58] sm:$0xff] %v1295
      %1312 = vst [vmem:[#allocation3 + $0x60] sm:$0xff] %v1296
      %1313 = vst [vmem:[#allocation3 + $0x68] sm:$0xff] %v1297
      %1314 = vst [vmem:[#allocation3 + $0x70] sm:$0xff] %v1298
      %1315 = vst [vmem:[#allocation3 + $0x78] sm:$0xff] %v1299
      %v1316 = vld [vmem:[#allocation2] sm:$0xe]
      %v1317 = vld [vmem:[#allocation2 + $0x4] sm:$0xf]
      %v1318 = vld [vmem:[#allocation2 + $0x8] sm:$0x3]
      %v1319 = vld [vmem:[#allocation2 + $0xc] sm:$0xe]
      %v1320 = vld [vmem:[#allocation2 + $0x10] sm:$0xf]
      %v1321 = vld [vmem:[#allocation2 + $0x14] sm:$0x3]
      %v1322 = vld [vmem:[#allocation2 + $0x18] sm:$0xe]
      %v1323 = vld [vmem:[#allocation2 + $0x1c] sm:$0xf]
      %v1324 = vld [vmem:[#allocation2 + $0x20] sm:$0x3]
      %v1325 = vld [vmem:[#allocation2 + $0x24] sm:$0xe]
      %v1326 = vld [vmem:[#allocation2 + $0x28] sm:$0xf]
      %v1327 = vld [vmem:[#allocation2 + $0x2c] sm:$0x3]
      %v1328 = vld [vmem:[#allocation2 + $0x30] sm:$0xe]
      %v1329 = vld [vmem:[#allocation2 + $0x34] sm:$0xf]
      %v1330 = vld [vmem:[#allocation2 + $0x38] sm:$0x3]
      %v1331 = vld [vmem:[#allocation2 + $0x3c] sm:$0xe]
      %v1332 = vld [vmem:[#allocation2 + $0x40] sm:$0xf]
      %v1333 = vld [vmem:[#allocation2 + $0x44] sm:$0x3]
      %v1334 = vld [vmem:[#allocation2 + $0x48] sm:$0xe]
      %v1335 = vld [vmem:[#allocation2 + $0x4c] sm:$0xf]
      %v1336 = vld [vmem:[#allocation2 + $0x50] sm:$0x3]
      %v1337 = vld [vmem:[#allocation2 + $0x54] sm:$0xe]
      %v1338 = vld [vmem:[#allocation2 + $0x58] sm:$0xf]
      %v1339 = vld [vmem:[#allocation2 + $0x5c] sm:$0x3]
      %vm1340 = vsmask.f32 2304
      %vm1341 = vsmask.f32 6416
      %vm1342 = vmor %vm1340, %vm1341
      %v1344 = vshrl.u32 %v1316, 16
      %v1346 = vrot.slane %v1344, 5
      %v1347 = vshll.u32 %v1316, 16
      %v1349 = vrot.slane %v1347, 6
      %v1350 = vor.u32 %v1346, %v1349
      %v1351 = vrot.slane %v1350, 4
      %v1353 = vshrl.u32 %v1317, 16
      %v1355 = vrot.slane %v1353, 5
      %v1356 = vshll.u32 %v1317, 16
      %v1358 = vrot.slane %v1356, 6
      %v1359 = vor.u32 %v1355, %v1358
      %v1360 = vsel %vm1342, %v1351, %v1359
      %v1361 = vrot.slane %v1359, 4
      %v1363 = vshrl.u32 %v1318, 16
      %v1365 = vrot.slane %v1363, 5
      %v1366 = vshll.u32 %v1318, 16
      %v1368 = vrot.slane %v1366, 6
      %v1369 = vor.u32 %v1365, %v1368
      %v1370 = vsel %vm1342, %v1361, %v1369
      %v1372 = vshrl.u32 %v1319, 16
      %v1374 = vrot.slane %v1372, 5
      %v1375 = vshll.u32 %v1319, 16
      %v1377 = vrot.slane %v1375, 6
      %v1378 = vor.u32 %v1374, %v1377
      %v1379 = vrot.slane %v1378, 4
      %v1381 = vshrl.u32 %v1320, 16
      %v1383 = vrot.slane %v1381, 5
      %v1384 = vshll.u32 %v1320, 16
      %v1386 = vrot.slane %v1384, 6
      %v1387 = vor.u32 %v1383, %v1386
      %v1388 = vsel %vm1342, %v1379, %v1387
      %v1389 = vrot.slane %v1387, 4
      %v1391 = vshrl.u32 %v1321, 16
      %v1393 = vrot.slane %v1391, 5
      %v1394 = vshll.u32 %v1321, 16
      %v1396 = vrot.slane %v1394, 6
      %v1397 = vor.u32 %v1393, %v1396
      %v1398 = vsel %vm1342, %v1389, %v1397
      %v1400 = vshrl.u32 %v1322, 16
      %v1402 = vrot.slane %v1400, 5
      %v1403 = vshll.u32 %v1322, 16
      %v1405 = vrot.slane %v1403, 6
      %v1406 = vor.u32 %v1402, %v1405
      %v1407 = vrot.slane %v1406, 4
      %v1409 = vshrl.u32 %v1323, 16
      %v1411 = vrot.slane %v1409, 5
      %v1412 = vshll.u32 %v1323, 16
      %v1414 = vrot.slane %v1412, 6
      %v1415 = vor.u32 %v1411, %v1414
      %v1416 = vsel %vm1342, %v1407, %v1415
      %v1417 = vrot.slane %v1415, 4
      %v1419 = vshrl.u32 %v1324, 16
      %v1421 = vrot.slane %v1419, 5
      %v1422 = vshll.u32 %v1324, 16
      %v1424 = vrot.slane %v1422, 6
      %v1425 = vor.u32 %v1421, %v1424
      %v1426 = vsel %vm1342, %v1417, %v1425
      %v1428 = vshrl.u32 %v1325, 16
      %v1430 = vrot.slane %v1428, 5
      %v1431 = vshll.u32 %v1325, 16
      %v1433 = vrot.slane %v1431, 6
      %v1434 = vor.u32 %v1430, %v1433
      %v1435 = vrot.slane %v1434, 4
      %v1437 = vshrl.u32 %v1326, 16
      %v1439 = vrot.slane %v1437, 5
      %v1440 = vshll.u32 %v1326, 16
      %v1442 = vrot.slane %v1440, 6
      %v1443 = vor.u32 %v1439, %v1442
      %v1444 = vsel %vm1342, %v1435, %v1443
      %v1445 = vrot.slane %v1443, 4
      %v1447 = vshrl.u32 %v1327, 16
      %v1449 = vrot.slane %v1447, 5
      %v1450 = vshll.u32 %v1327, 16
      %v1452 = vrot.slane %v1450, 6
      %v1453 = vor.u32 %v1449, %v1452
      %v1454 = vsel %vm1342, %v1445, %v1453
      %v1456 = vshrl.u32 %v1328, 16
      %v1458 = vrot.slane %v1456, 5
      %v1459 = vshll.u32 %v1328, 16
      %v1461 = vrot.slane %v1459, 6
      %v1462 = vor.u32 %v1458, %v1461
      %v1463 = vrot.slane %v1462, 4
      %v1465 = vshrl.u32 %v1329, 16
      %v1467 = vrot.slane %v1465, 5
      %v1468 = vshll.u32 %v1329, 16
      %v1470 = vrot.slane %v1468, 6
      %v1471 = vor.u32 %v1467, %v1470
      %v1472 = vsel %vm1342, %v1463, %v1471
      %v1473 = vrot.slane %v1471, 4
      %v1475 = vshrl.u32 %v1330, 16
      %v1477 = vrot.slane %v1475, 5
      %v1478 = vshll.u32 %v1330, 16
      %v1480 = vrot.slane %v1478, 6
      %v1481 = vor.u32 %v1477, %v1480
      %v1482 = vsel %vm1342, %v1473, %v1481
      %v1484 = vshrl.u32 %v1331, 16
      %v1486 = vrot.slane %v1484, 5
      %v1487 = vshll.u32 %v1331, 16
      %v1489 = vrot.slane %v1487, 6
      %v1490 = vor.u32 %v1486, %v1489
      %v1491 = vrot.slane %v1490, 4
      %v1493 = vshrl.u32 %v1332, 16
      %v1495 = vrot.slane %v1493, 5
      %v1496 = vshll.u32 %v1332, 16
      %v1498 = vrot.slane %v1496, 6
      %v1499 = vor.u32 %v1495, %v1498
      %v1500 = vsel %vm1342, %v1491, %v1499
      %v1501 = vrot.slane %v1499, 4
      %v1503 = vshrl.u32 %v1333, 16
      %v1505 = vrot.slane %v1503, 5
      %v1506 = vshll.u32 %v1333, 16
      %v1508 = vrot.slane %v1506, 6
      %v1509 = vor.u32 %v1505, %v1508
      %v1510 = vsel %vm1342, %v1501, %v1509
      %v1512 = vshrl.u32 %v1334, 16
      %v1514 = vrot.slane %v1512, 5
      %v1515 = vshll.u32 %v1334, 16
      %v1517 = vrot.slane %v1515, 6
      %v1518 = vor.u32 %v1514, %v1517
      %v1519 = vrot.slane %v1518, 4
      %v1521 = vshrl.u32 %v1335, 16
      %v1523 = vrot.slane %v1521, 5
      %v1524 = vshll.u32 %v1335, 16
      %v1526 = vrot.slane %v1524, 6
      %v1527 = vor.u32 %v1523, %v1526
      %v1528 = vsel %vm1342, %v1519, %v1527
      %v1529 = vrot.slane %v1527, 4
      %v1531 = vshrl.u32 %v1336, 16
      %v1533 = vrot.slane %v1531, 5
      %v1534 = vshll.u32 %v1336, 16
      %v1536 = vrot.slane %v1534, 6
      %v1537 = vor.u32 %v1533, %v1536
      %v1538 = vsel %vm1342, %v1529, %v1537
      %v1540 = vshrl.u32 %v1337, 16
      %v1542 = vrot.slane %v1540, 5
      %v1543 = vshll.u32 %v1337, 16
      %v1545 = vrot.slane %v1543, 6
      %v1546 = vor.u32 %v1542, %v1545
      %v1547 = vrot.slane %v1546, 4
      %v1549 = vshrl.u32 %v1338, 16
      %v1551 = vrot.slane %v1549, 5
      %v1552 = vshll.u32 %v1338, 16
      %v1554 = vrot.slane %v1552, 6
      %v1555 = vor.u32 %v1551, %v1554
      %v1556 = vsel %vm1342, %v1547, %v1555
      %v1557 = vrot.slane %v1555, 4
      %v1559 = vshrl.u32 %v1339, 16
      %v1561 = vrot.slane %v1559, 5
      %v1562 = vshll.u32 %v1339, 16
      %v1564 = vrot.slane %v1562, 6
      %v1565 = vor.u32 %v1561, %v1564
      %v1566 = vsel %vm1342, %v1557, %v1565
      %s1567 = scalar_lea.vmem %s1, 6
      %v1568 = vld [vmem:[%s1567] sm:$0x3]
      %v1569 = vunpack.c.l.b16 %v1360
      %v1570 = vunpack.c.l.b16 %v1370
      %v1571 = vunpack.c.l.b16 %v1388
      %v1572 = vunpack.c.l.b16 %v1398
      %v1573 = vunpack.c.l.b16 %v1416
      %v1574 = vunpack.c.l.b16 %v1426
      %v1575 = vunpack.c.l.b16 %v1444
      %v1576 = vunpack.c.l.b16 %v1454
      %v1577 = vunpack.c.l.b16 %v1472
      %v1578 = vunpack.c.l.b16 %v1482
      %v1579 = vunpack.c.l.b16 %v1500
      %v1580 = vunpack.c.l.b16 %v1510
      %v1581 = vunpack.c.l.b16 %v1528
      %v1582 = vunpack.c.l.b16 %v1538
      %v1583 = vunpack.c.l.b16 %v1556
      %v1584 = vunpack.c.l.b16 %v1566
      %v1585 = vpack.c.b16 %v1570, %v1569
      %v1586 = vpack.c.b16 %v1572, %v1571
      %v1587 = vpack.c.b16 %v1574, %v1573
      %v1588 = vpack.c.b16 %v1576, %v1575
      %v1589 = vpack.c.b16 %v1578, %v1577
      %v1590 = vpack.c.b16 %v1580, %v1579
      %v1591 = vpack.c.b16 %v1582, %v1581
      %v1592 = vpack.c.b16 %v1584, %v1583
      %v1594 = vsel %vm596, %v1585, 0
      %v1597 = vsel %vm596, %v1586, 0
      %v1600 = vsel %vm596, %v1587, 0
      %v1603 = vsel %vm596, %v1588, 0
      %v1606 = vsel %vm596, %v1589, 0
      %v1609 = vsel %vm596, %v1590, 0
      %v1612 = vsel %vm596, %v1591, 0
      %v1615 = vsel %vm596, %v1592, 0
      %v1618 = vsel %vm621, %v1568, 0
      %1620 = vmatpush.bf16.msra.mxu0 0
      %1621 = vmatpush.bf16.msra.mxu0 0
      %1622 = vmatpush.bf16.msra.mxu0 0
      %1623 = vmatpush.bf16.msra.mxu0 0
      %1624 = vmatpush.bf16.msra.mxu0 0
      %1625 = vmatpush.bf16.msra.mxu0 0
      %1626 = vmatpush.bf16.msra.mxu0 0
      %1627 = vmatpush.bf16.msra.mxu0 %v1618
      %1628 = vmatmul.bf16.gmra.mxu0 %v1594
      %v1629 = vpop.f32.mrf.mxu0
      %v1630 = vadd.f32 0.0, %v1629
      %v1631 = vpop.f32.mrf.mxu0
      %v1632 = vadd.f32 0.0, %v1631
      %1633 = vmatmul.bf16.gmra.mxu0 %v1597
      %v1634 = vpop.f32.mrf.mxu0
      %v1635 = vadd.f32 0.0, %v1634
      %v1636 = vpop.f32.mrf.mxu0
      %v1637 = vadd.f32 0.0, %v1636
      %1638 = vmatmul.bf16.gmra.mxu0 %v1600
      %v1639 = vpop.f32.mrf.mxu0
      %v1640 = vadd.f32 0.0, %v1639
      %v1641 = vpop.f32.mrf.mxu0
      %v1642 = vadd.f32 0.0, %v1641
      %1643 = vmatmul.bf16.gmra.mxu0 %v1603
      %v1644 = vpop.f32.mrf.mxu0
      %v1645 = vadd.f32 0.0, %v1644
      %v1646 = vpop.f32.mrf.mxu0
      %v1647 = vadd.f32 0.0, %v1646
      %1648 = vmatmul.bf16.gmra.mxu0 %v1606
      %v1649 = vpop.f32.mrf.mxu0
      %v1650 = vadd.f32 0.0, %v1649
      %v1651 = vpop.f32.mrf.mxu0
      %v1652 = vadd.f32 0.0, %v1651
      %1653 = vmatmul.bf16.gmra.mxu0 %v1609
      %v1654 = vpop.f32.mrf.mxu0
      %v1655 = vadd.f32 0.0, %v1654
      %v1656 = vpop.f32.mrf.mxu0
      %v1657 = vadd.f32 0.0, %v1656
      %1658 = vmatmul.bf16.gmra.mxu0 %v1612
      %v1659 = vpop.f32.mrf.mxu0
      %v1660 = vadd.f32 0.0, %v1659
      %v1661 = vpop.f32.mrf.mxu0
      %v1662 = vadd.f32 0.0, %v1661
      %1663 = vmatmul.bf16.gmra.mxu0 %v1615
      %v1664 = vpop.f32.mrf.mxu0
      %v1665 = vadd.f32 0.0, %v1664
      %v1666 = vpop.f32.mrf.mxu0
      %v1667 = vadd.f32 0.0, %v1666
      %1668 = vdwg.mxu0
      %v1669 = vld [vmem:[#allocation3] sm:$0xff]
      %v1670 = vld [vmem:[#allocation3 + $0x8] sm:$0xff]
      %v1671 = vld [vmem:[#allocation3 + $0x10] sm:$0xff]
      %v1672 = vld [vmem:[#allocation3 + $0x18] sm:$0xff]
      %v1673 = vld [vmem:[#allocation3 + $0x20] sm:$0xff]
      %v1674 = vld [vmem:[#allocation3 + $0x28] sm:$0xff]
      %v1675 = vld [vmem:[#allocation3 + $0x30] sm:$0xff]
      %v1676 = vld [vmem:[#allocation3 + $0x38] sm:$0xff]
      %v1677 = vld [vmem:[#allocation3 + $0x40] sm:$0xff]
      %v1678 = vld [vmem:[#allocation3 + $0x48] sm:$0xff]
      %v1679 = vld [vmem:[#allocation3 + $0x50] sm:$0xff]
      %v1680 = vld [vmem:[#allocation3 + $0x58] sm:$0xff]
      %v1681 = vld [vmem:[#allocation3 + $0x60] sm:$0xff]
      %v1682 = vld [vmem:[#allocation3 + $0x68] sm:$0xff]
      %v1683 = vld [vmem:[#allocation3 + $0x70] sm:$0xff]
      %v1684 = vld [vmem:[#allocation3 + $0x78] sm:$0xff]
      %v1685 = vadd.f32 %v1669, %v1630
      %v1686 = vadd.f32 %v1670, %v1632
      %v1687 = vadd.f32 %v1671, %v1635
      %v1688 = vadd.f32 %v1672, %v1637
      %v1689 = vadd.f32 %v1673, %v1640
      %v1690 = vadd.f32 %v1674, %v1642
      %v1691 = vadd.f32 %v1675, %v1645
      %v1692 = vadd.f32 %v1676, %v1647
      %v1693 = vadd.f32 %v1677, %v1650
      %v1694 = vadd.f32 %v1678, %v1652
      %v1695 = vadd.f32 %v1679, %v1655
      %v1696 = vadd.f32 %v1680, %v1657
      %v1697 = vadd.f32 %v1681, %v1660
      %v1698 = vadd.f32 %v1682, %v1662
      %v1699 = vadd.f32 %v1683, %v1665
      %v1700 = vadd.f32 %v1684, %v1667
      %1701 = vst [vmem:[#allocation3] sm:$0xff] %v1685
      %1702 = vst [vmem:[#allocation3 + $0x8] sm:$0xff] %v1686
      %1703 = vst [vmem:[#allocation3 + $0x10] sm:$0xff] %v1687
      %1704 = vst [vmem:[#allocation3 + $0x18] sm:$0xff] %v1688
      %1705 = vst [vmem:[#allocation3 + $0x20] sm:$0xff] %v1689
      %1706 = vst [vmem:[#allocation3 + $0x28] sm:$0xff] %v1690
      %1707 = vst [vmem:[#allocation3 + $0x30] sm:$0xff] %v1691
      %1708 = vst [vmem:[#allocation3 + $0x38] sm:$0xff] %v1692
      %1709 = vst [vmem:[#allocation3 + $0x40] sm:$0xff] %v1693
      %1710 = vst [vmem:[#allocation3 + $0x48] sm:$0xff] %v1694
      %1711 = vst [vmem:[#allocation3 + $0x50] sm:$0xff] %v1695
      %1712 = vst [vmem:[#allocation3 + $0x58] sm:$0xff] %v1696
      %1713 = vst [vmem:[#allocation3 + $0x60] sm:$0xff] %v1697
      %1714 = vst [vmem:[#allocation3 + $0x68] sm:$0xff] %v1698
      %1715 = vst [vmem:[#allocation3 + $0x70] sm:$0xff] %v1699
      %1716 = vst [vmem:[#allocation3 + $0x78] sm:$0xff] %v1700
      %v1717 = vld [vmem:[#allocation2] sm:$0xc]
      %v1718 = vld [vmem:[#allocation2 + $0x4] sm:$0xf]
      %v1719 = vld [vmem:[#allocation2 + $0x8] sm:$0x3]
      %v1720 = vld [vmem:[#allocation2 + $0xc] sm:$0xc]
      %v1721 = vld [vmem:[#allocation2 + $0x10] sm:$0xf]
      %v1722 = vld [vmem:[#allocation2 + $0x14] sm:$0x3]
      %v1723 = vld [vmem:[#allocation2 + $0x18] sm:$0xc]
      %v1724 = vld [vmem:[#allocation2 + $0x1c] sm:$0xf]
      %v1725 = vld [vmem:[#allocation2 + $0x20] sm:$0x3]
      %v1726 = vld [vmem:[#allocation2 + $0x24] sm:$0xc]
      %v1727 = vld [vmem:[#allocation2 + $0x28] sm:$0xf]
      %v1728 = vld [vmem:[#allocation2 + $0x2c] sm:$0x3]
      %v1729 = vld [vmem:[#allocation2 + $0x30] sm:$0xc]
      %v1730 = vld [vmem:[#allocation2 + $0x34] sm:$0xf]
      %v1731 = vld [vmem:[#allocation2 + $0x38] sm:$0x3]
      %v1732 = vld [vmem:[#allocation2 + $0x3c] sm:$0xc]
      %v1733 = vld [vmem:[#allocation2 + $0x40] sm:$0xf]
      %v1734 = vld [vmem:[#allocation2 + $0x44] sm:$0x3]
      %v1735 = vld [vmem:[#allocation2 + $0x48] sm:$0xc]
      %v1736 = vld [vmem:[#allocation2 + $0x4c] sm:$0xf]
      %v1737 = vld [vmem:[#allocation2 + $0x50] sm:$0x3]
      %v1738 = vld [vmem:[#allocation2 + $0x54] sm:$0xc]
      %v1739 = vld [vmem:[#allocation2 + $0x58] sm:$0xf]
      %v1740 = vld [vmem:[#allocation2 + $0x5c] sm:$0x3]
      %vm1765 = vcmask 1041408
      %vm1766 = vcmask 1045508
      %vm1767 = vmor %vm1765, %vm1766
      %v1768 = vrot.slane %v1717, 6
      %v1769 = vrot.slane %v1768, 4
      %v1770 = vrot.slane %v1718, 6
      %v1771 = vsel %vm1767, %v1769, %v1770
      %v1772 = vrot.slane %v1770, 4
      %v1773 = vrot.slane %v1719, 6
      %v1774 = vsel %vm1767, %v1772, %v1773
      %v1775 = vrot.slane %v1720, 6
      %v1776 = vrot.slane %v1775, 4
      %v1777 = vrot.slane %v1721, 6
      %v1778 = vsel %vm1767, %v1776, %v1777
      %v1779 = vrot.slane %v1777, 4
      %v1780 = vrot.slane %v1722, 6
      %v1781 = vsel %vm1767, %v1779, %v1780
      %v1782 = vrot.slane %v1723, 6
      %v1783 = vrot.slane %v1782, 4
      %v1784 = vrot.slane %v1724, 6
      %v1785 = vsel %vm1767, %v1783, %v1784
      %v1786 = vrot.slane %v1784, 4
      %v1787 = vrot.slane %v1725, 6
      %v1788 = vsel %vm1767, %v1786, %v1787
      %v1789 = vrot.slane %v1726, 6
      %v1790 = vrot.slane %v1789, 4
      %v1791 = vrot.slane %v1727, 6
      %v1792 = vsel %vm1767, %v1790, %v1791
      %v1793 = vrot.slane %v1791, 4
      %v1794 = vrot.slane %v1728, 6
      %v1795 = vsel %vm1767, %v1793, %v1794
      %v1796 = vrot.slane %v1729, 6
      %v1797 = vrot.slane %v1796, 4
      %v1798 = vrot.slane %v1730, 6
      %v1799 = vsel %vm1767, %v1797, %v1798
      %v1800 = vrot.slane %v1798, 4
      %v1801 = vrot.slane %v1731, 6
      %v1802 = vsel %vm1767, %v1800, %v1801
      %v1803 = vrot.slane %v1732, 6
      %v1804 = vrot.slane %v1803, 4
      %v1805 = vrot.slane %v1733, 6
      %v1806 = vsel %vm1767, %v1804, %v1805
      %v1807 = vrot.slane %v1805, 4
      %v1808 = vrot.slane %v1734, 6
      %v1809 = vsel %vm1767, %v1807, %v1808
      %v1810 = vrot.slane %v1735, 6
      %v1811 = vrot.slane %v1810, 4
      %v1812 = vrot.slane %v1736, 6
      %v1813 = vsel %vm1767, %v1811, %v1812
      %v1814 = vrot.slane %v1812, 4
      %v1815 = vrot.slane %v1737, 6
      %v1816 = vsel %vm1767, %v1814, %v1815
      %v1817 = vrot.slane %v1738, 6
      %v1818 = vrot.slane %v1817, 4
      %v1819 = vrot.slane %v1739, 6
      %v1820 = vsel %vm1767, %v1818, %v1819
      %v1821 = vrot.slane %v1819, 4
      %v1822 = vrot.slane %v1740, 6
      %v1823 = vsel %vm1767, %v1821, %v1822
      %s1824 = scalar_lea.vmem %s1, 8
      %v1825 = vld [vmem:[%s1824] sm:$0x3]
      %v1826 = vunpack.c.l.b16 %v1771
      %v1827 = vunpack.c.l.b16 %v1774
      %v1828 = vunpack.c.l.b16 %v1778
      %v1829 = vunpack.c.l.b16 %v1781
      %v1830 = vunpack.c.l.b16 %v1785
      %v1831 = vunpack.c.l.b16 %v1788
      %v1832 = vunpack.c.l.b16 %v1792
      %v1833 = vunpack.c.l.b16 %v1795
      %v1834 = vunpack.c.l.b16 %v1799
      %v1835 = vunpack.c.l.b16 %v1802
      %v1836 = vunpack.c.l.b16 %v1806
      %v1837 = vunpack.c.l.b16 %v1809
      %v1838 = vunpack.c.l.b16 %v1813
      %v1839 = vunpack.c.l.b16 %v1816
      %v1840 = vunpack.c.l.b16 %v1820
      %v1841 = vunpack.c.l.b16 %v1823
      %v1842 = vpack.c.b16 %v1827, %v1826
      %v1843 = vpack.c.b16 %v1829, %v1828
      %v1844 = vpack.c.b16 %v1831, %v1830
      %v1845 = vpack.c.b16 %v1833, %v1832
      %v1846 = vpack.c.b16 %v1835, %v1834
      %v1847 = vpack.c.b16 %v1837, %v1836
      %v1848 = vpack.c.b16 %v1839, %v1838
      %v1849 = vpack.c.b16 %v1841, %v1840
      %v1851 = vsel %vm596, %v1842, 0
      %v1854 = vsel %vm596, %v1843, 0
      %v1857 = vsel %vm596, %v1844, 0
      %v1860 = vsel %vm596, %v1845, 0
      %v1863 = vsel %vm596, %v1846, 0
      %v1866 = vsel %vm596, %v1847, 0
      %v1869 = vsel %vm596, %v1848, 0
      %v1872 = vsel %vm596, %v1849, 0
      %v1875 = vsel %vm621, %v1825, 0
      %1877 = vmatpush.bf16.msra.mxu0 0
      %1878 = vmatpush.bf16.msra.mxu0 0
      %1879 = vmatpush.bf16.msra.mxu0 0
      %1880 = vmatpush.bf16.msra.mxu0 0
      %1881 = vmatpush.bf16.msra.mxu0 0
      %1882 = vmatpush.bf16.msra.mxu0 0
      %1883 = vmatpush.bf16.msra.mxu0 0
      %1884 = vmatpush.bf16.msra.mxu0 %v1875
      %1885 = vmatmul.bf16.gmra.mxu0 %v1851
      %v1886 = vpop.f32.mrf.mxu0
      %v1887 = vadd.f32 0.0, %v1886
      %v1888 = vpop.f32.mrf.mxu0
      %v1889 = vadd.f32 0.0, %v1888
      %1890 = vmatmul.bf16.gmra.mxu0 %v1854
      %v1891 = vpop.f32.mrf.mxu0
      %v1892 = vadd.f32 0.0, %v1891
      %v1893 = vpop.f32.mrf.mxu0
      %v1894 = vadd.f32 0.0, %v1893
      %1895 = vmatmul.bf16.gmra.mxu0 %v1857
      %v1896 = vpop.f32.mrf.mxu0
      %v1897 = vadd.f32 0.0, %v1896
      %v1898 = vpop.f32.mrf.mxu0
      %v1899 = vadd.f32 0.0, %v1898
      %1900 = vmatmul.bf16.gmra.mxu0 %v1860
      %v1901 = vpop.f32.mrf.mxu0
      %v1902 = vadd.f32 0.0, %v1901
      %v1903 = vpop.f32.mrf.mxu0
      %v1904 = vadd.f32 0.0, %v1903
      %1905 = vmatmul.bf16.gmra.mxu0 %v1863
      %v1906 = vpop.f32.mrf.mxu0
      %v1907 = vadd.f32 0.0, %v1906
      %v1908 = vpop.f32.mrf.mxu0
      %v1909 = vadd.f32 0.0, %v1908
      %1910 = vmatmul.bf16.gmra.mxu0 %v1866
      %v1911 = vpop.f32.mrf.mxu0
      %v1912 = vadd.f32 0.0, %v1911
      %v1913 = vpop.f32.mrf.mxu0
      %v1914 = vadd.f32 0.0, %v1913
      %1915 = vmatmul.bf16.gmra.mxu0 %v1869
      %v1916 = vpop.f32.mrf.mxu0
      %v1917 = vadd.f32 0.0, %v1916
      %v1918 = vpop.f32.mrf.mxu0
      %v1919 = vadd.f32 0.0, %v1918
      %1920 = vmatmul.bf16.gmra.mxu0 %v1872
      %v1921 = vpop.f32.mrf.mxu0
      %v1922 = vadd.f32 0.0, %v1921
      %v1923 = vpop.f32.mrf.mxu0
      %v1924 = vadd.f32 0.0, %v1923
      %1925 = vdwg.mxu0
      %v1926 = vld [vmem:[#allocation3] sm:$0xff]
      %v1927 = vld [vmem:[#allocation3 + $0x8] sm:$0xff]
      %v1928 = vld [vmem:[#allocation3 + $0x10] sm:$0xff]
      %v1929 = vld [vmem:[#allocation3 + $0x18] sm:$0xff]
      %v1930 = vld [vmem:[#allocation3 + $0x20] sm:$0xff]
      %v1931 = vld [vmem:[#allocation3 + $0x28] sm:$0xff]
      %v1932 = vld [vmem:[#allocation3 + $0x30] sm:$0xff]
      %v1933 = vld [vmem:[#allocation3 + $0x38] sm:$0xff]
      %v1934 = vld [vmem:[#allocation3 + $0x40] sm:$0xff]
      %v1935 = vld [vmem:[#allocation3 + $0x48] sm:$0xff]
      %v1936 = vld [vmem:[#allocation3 + $0x50] sm:$0xff]
      %v1937 = vld [vmem:[#allocation3 + $0x58] sm:$0xff]
      %v1938 = vld [vmem:[#allocation3 + $0x60] sm:$0xff]
      %v1939 = vld [vmem:[#allocation3 + $0x68] sm:$0xff]
      %v1940 = vld [vmem:[#allocation3 + $0x70] sm:$0xff]
      %v1941 = vld [vmem:[#allocation3 + $0x78] sm:$0xff]
      %v1942 = vadd.f32 %v1926, %v1887
      %v1943 = vadd.f32 %v1927, %v1889
      %v1944 = vadd.f32 %v1928, %v1892
      %v1945 = vadd.f32 %v1929, %v1894
      %v1946 = vadd.f32 %v1930, %v1897
      %v1947 = vadd.f32 %v1931, %v1899
      %v1948 = vadd.f32 %v1932, %v1902
      %v1949 = vadd.f32 %v1933, %v1904
      %v1950 = vadd.f32 %v1934, %v1907
      %v1951 = vadd.f32 %v1935, %v1909
      %v1952 = vadd.f32 %v1936, %v1912
      %v1953 = vadd.f32 %v1937, %v1914
      %v1954 = vadd.f32 %v1938, %v1917
      %v1955 = vadd.f32 %v1939, %v1919
      %v1956 = vadd.f32 %v1940, %v1922
      %v1957 = vadd.f32 %v1941, %v1924
      %1958 = vst [vmem:[#allocation3] sm:$0xff] %v1942
      %1959 = vst [vmem:[#allocation3 + $0x8] sm:$0xff] %v1943
      %1960 = vst [vmem:[#allocation3 + $0x10] sm:$0xff] %v1944
      %1961 = vst [vmem:[#allocation3 + $0x18] sm:$0xff] %v1945
      %1962 = vst [vmem:[#allocation3 + $0x20] sm:$0xff] %v1946
      %1963 = vst [vmem:[#allocation3 + $0x28] sm:$0xff] %v1947
      %1964 = vst [vmem:[#allocation3 + $0x30] sm:$0xff] %v1948
      %1965 = vst [vmem:[#allocation3 + $0x38] sm:$0xff] %v1949
      %1966 = vst [vmem:[#allocation3 + $0x40] sm:$0xff] %v1950
      %1967 = vst [vmem:[#allocation3 + $0x48] sm:$0xff] %v1951
      %1968 = vst [vmem:[#allocation3 + $0x50] sm:$0xff] %v1952
      %1969 = vst [vmem:[#allocation3 + $0x58] sm:$0xff] %v1953
      %1970 = vst [vmem:[#allocation3 + $0x60] sm:$0xff] %v1954
      %1971 = vst [vmem:[#allocation3 + $0x68] sm:$0xff] %v1955
      %1972 = vst [vmem:[#allocation3 + $0x70] sm:$0xff] %v1956
      %1973 = vst [vmem:[#allocation3 + $0x78] sm:$0xff] %v1957
      %v1974 = vld [vmem:[#allocation2] sm:$0xc]
      %v1975 = vld [vmem:[#allocation2 + $0x4] sm:$0xf]
      %v1976 = vld [vmem:[#allocation2 + $0x8] sm:$0x7]
      %v1977 = vld [vmem:[#allocation2 + $0xc] sm:$0xc]
      %v1978 = vld [vmem:[#allocation2 + $0x10] sm:$0xf]
      %v1979 = vld [vmem:[#allocation2 + $0x14] sm:$0x7]
      %v1980 = vld [vmem:[#allocation2 + $0x18] sm:$0xc]
      %v1981 = vld [vmem:[#allocation2 + $0x1c] sm:$0xf]
      %v1982 = vld [vmem:[#allocation2 + $0x20] sm:$0x7]
      %v1983 = vld [vmem:[#allocation2 + $0x24] sm:$0xc]
      %v1984 = vld [vmem:[#allocation2 + $0x28] sm:$0xf]
      %v1985 = vld [vmem:[#allocation2 + $0x2c] sm:$0x7]
      %v1986 = vld [vmem:[#allocation2 + $0x30] sm:$0xc]
      %v1987 = vld [vmem:[#allocation2 + $0x34] sm:$0xf]
      %v1988 = vld [vmem:[#allocation2 + $0x38] sm:$0x7]
      %v1989 = vld [vmem:[#allocation2 + $0x3c] sm:$0xc]
      %v1990 = vld [vmem:[#allocation2 + $0x40] sm:$0xf]
      %v1991 = vld [vmem:[#allocation2 + $0x44] sm:$0x7]
      %v1992 = vld [vmem:[#allocation2 + $0x48] sm:$0xc]
      %v1993 = vld [vmem:[#allocation2 + $0x4c] sm:$0xf]
      %v1994 = vld [vmem:[#allocation2 + $0x50] sm:$0x7]
      %v1995 = vld [vmem:[#allocation2 + $0x54] sm:$0xc]
      %v1996 = vld [vmem:[#allocation2 + $0x58] sm:$0xf]
      %v1997 = vld [vmem:[#allocation2 + $0x5c] sm:$0x7]
      %v1999 = vshrl.u32 %v1974, 16
      %v2001 = vrot.slane %v1999, 6
      %v2002 = vshll.u32 %v1974, 16
      %v2004 = vrot.slane %v2002, 7
      %v2005 = vor.u32 %v2001, %v2004
      %v2006 = vrot.slane %v2005, 4
      %v2008 = vshrl.u32 %v1975, 16
      %v2010 = vrot.slane %v2008, 6
      %v2011 = vshll.u32 %v1975, 16
      %v2013 = vrot.slane %v2011, 7
      %v2014 = vor.u32 %v2010, %v2013
      %v2015 = vsel %vm303, %v2006, %v2014
      %v2016 = vrot.slane %v2014, 4
      %v2018 = vshrl.u32 %v1976, 16
      %v2020 = vrot.slane %v2018, 6
      %v2021 = vshll.u32 %v1976, 16
      %v2023 = vrot.slane %v2021, 7
      %v2024 = vor.u32 %v2020, %v2023
      %v2025 = vsel %vm303, %v2016, %v2024
      %v2027 = vshrl.u32 %v1977, 16
      %v2029 = vrot.slane %v2027, 6
      %v2030 = vshll.u32 %v1977, 16
      %v2032 = vrot.slane %v2030, 7
      %v2033 = vor.u32 %v2029, %v2032
      %v2034 = vrot.slane %v2033, 4
      %v2036 = vshrl.u32 %v1978, 16
      %v2038 = vrot.slane %v2036, 6
      %v2039 = vshll.u32 %v1978, 16
      %v2041 = vrot.slane %v2039, 7
      %v2042 = vor.u32 %v2038, %v2041
      %v2043 = vsel %vm303, %v2034, %v2042
      %v2044 = vrot.slane %v2042, 4
      %v2046 = vshrl.u32 %v1979, 16
      %v2048 = vrot.slane %v2046, 6
      %v2049 = vshll.u32 %v1979, 16
      %v2051 = vrot.slane %v2049, 7
      %v2052 = vor.u32 %v2048, %v2051
      %v2053 = vsel %vm303, %v2044, %v2052
      %v2055 = vshrl.u32 %v1980, 16
      %v2057 = vrot.slane %v2055, 6
      %v2058 = vshll.u32 %v1980, 16
      %v2060 = vrot.slane %v2058, 7
      %v2061 = vor.u32 %v2057, %v2060
      %v2062 = vrot.slane %v2061, 4
      %v2064 = vshrl.u32 %v1981, 16
      %v2066 = vrot.slane %v2064, 6
      %v2067 = vshll.u32 %v1981, 16
      %v2069 = vrot.slane %v2067, 7
      %v2070 = vor.u32 %v2066, %v2069
      %v2071 = vsel %vm303, %v2062, %v2070
      %v2072 = vrot.slane %v2070, 4
      %v2074 = vshrl.u32 %v1982, 16
      %v2076 = vrot.slane %v2074, 6
      %v2077 = vshll.u32 %v1982, 16
      %v2079 = vrot.slane %v2077, 7
      %v2080 = vor.u32 %v2076, %v2079
      %v2081 = vsel %vm303, %v2072, %v2080
      %v2083 = vshrl.u32 %v1983, 16
      %v2085 = vrot.slane %v2083, 6
      %v2086 = vshll.u32 %v1983, 16
      %v2088 = vrot.slane %v2086, 7
      %v2089 = vor.u32 %v2085, %v2088
      %v2090 = vrot.slane %v2089, 4
      %v2092 = vshrl.u32 %v1984, 16
      %v2094 = vrot.slane %v2092, 6
      %v2095 = vshll.u32 %v1984, 16
      %v2097 = vrot.slane %v2095, 7
      %v2098 = vor.u32 %v2094, %v2097
      %v2099 = vsel %vm303, %v2090, %v2098
      %v2100 = vrot.slane %v2098, 4
      %v2102 = vshrl.u32 %v1985, 16
      %v2104 = vrot.slane %v2102, 6
      %v2105 = vshll.u32 %v1985, 16
      %v2107 = vrot.slane %v2105, 7
      %v2108 = vor.u32 %v2104, %v2107
      %v2109 = vsel %vm303, %v2100, %v2108
      %v2111 = vshrl.u32 %v1986, 16
      %v2113 = vrot.slane %v2111, 6
      %v2114 = vshll.u32 %v1986, 16
      %v2116 = vrot.slane %v2114, 7
      %v2117 = vor.u32 %v2113, %v2116
      %v2118 = vrot.slane %v2117, 4
      %v2120 = vshrl.u32 %v1987, 16
      %v2122 = vrot.slane %v2120, 6
      %v2123 = vshll.u32 %v1987, 16
      %v2125 = vrot.slane %v2123, 7
      %v2126 = vor.u32 %v2122, %v2125
      %v2127 = vsel %vm303, %v2118, %v2126
      %v2128 = vrot.slane %v2126, 4
      %v2130 = vshrl.u32 %v1988, 16
      %v2132 = vrot.slane %v2130, 6
      %v2133 = vshll.u32 %v1988, 16
      %v2135 = vrot.slane %v2133, 7
      %v2136 = vor.u32 %v2132, %v2135
      %v2137 = vsel %vm303, %v2128, %v2136
      %v2139 = vshrl.u32 %v1989, 16
      %v2141 = vrot.slane %v2139, 6
      %v2142 = vshll.u32 %v1989, 16
      %v2144 = vrot.slane %v2142, 7
      %v2145 = vor.u32 %v2141, %v2144
      %v2146 = vrot.slane %v2145, 4
      %v2148 = vshrl.u32 %v1990, 16
      %v2150 = vrot.slane %v2148, 6
      %v2151 = vshll.u32 %v1990, 16
      %v2153 = vrot.slane %v2151, 7
      %v2154 = vor.u32 %v2150, %v2153
      %v2155 = vsel %vm303, %v2146, %v2154
      %v2156 = vrot.slane %v2154, 4
      %v2158 = vshrl.u32 %v1991, 16
      %v2160 = vrot.slane %v2158, 6
      %v2161 = vshll.u32 %v1991, 16
      %v2163 = vrot.slane %v2161, 7
      %v2164 = vor.u32 %v2160, %v2163
      %v2165 = vsel %vm303, %v2156, %v2164
      %v2167 = vshrl.u32 %v1992, 16
      %v2169 = vrot.slane %v2167, 6
      %v2170 = vshll.u32 %v1992, 16
      %v2172 = vrot.slane %v2170, 7
      %v2173 = vor.u32 %v2169, %v2172
      %v2174 = vrot.slane %v2173, 4
      %v2176 = vshrl.u32 %v1993, 16
      %v2178 = vrot.slane %v2176, 6
      %v2179 = vshll.u32 %v1993, 16
      %v2181 = vrot.slane %v2179, 7
      %v2182 = vor.u32 %v2178, %v2181
      %v2183 = vsel %vm303, %v2174, %v2182
      %v2184 = vrot.slane %v2182, 4
      %v2186 = vshrl.u32 %v1994, 16
      %v2188 = vrot.slane %v2186, 6
      %v2189 = vshll.u32 %v1994, 16
      %v2191 = vrot.slane %v2189, 7
      %v2192 = vor.u32 %v2188, %v2191
      %v2193 = vsel %vm303, %v2184, %v2192
      %v2195 = vshrl.u32 %v1995, 16
      %v2197 = vrot.slane %v2195, 6
      %v2198 = vshll.u32 %v1995, 16
      %v2200 = vrot.slane %v2198, 7
      %v2201 = vor.u32 %v2197, %v2200
      %v2202 = vrot.slane %v2201, 4
      %v2204 = vshrl.u32 %v1996, 16
      %v2206 = vrot.slane %v2204, 6
      %v2207 = vshll.u32 %v1996, 16
      %v2209 = vrot.slane %v2207, 7
      %v2210 = vor.u32 %v2206, %v2209
      %v2211 = vsel %vm303, %v2202, %v2210
      %v2212 = vrot.slane %v2210, 4
      %v2214 = vshrl.u32 %v1997, 16
      %v2216 = vrot.slane %v2214, 6
      %v2217 = vshll.u32 %v1997, 16
      %v2219 = vrot.slane %v2217, 7
      %v2220 = vor.u32 %v2216, %v2219
      %v2221 = vsel %vm303, %v2212, %v2220
      %s2222 = scalar_lea.vmem %s1, 10
      %v2223 = vld [vmem:[%s2222] sm:$0x3]
      %v2224 = vunpack.c.l.b16 %v2015
      %v2225 = vunpack.c.l.b16 %v2025
      %v2226 = vunpack.c.l.b16 %v2043
      %v2227 = vunpack.c.l.b16 %v2053
      %v2228 = vunpack.c.l.b16 %v2071
      %v2229 = vunpack.c.l.b16 %v2081
      %v2230 = vunpack.c.l.b16 %v2099
      %v2231 = vunpack.c.l.b16 %v2109
      %v2232 = vunpack.c.l.b16 %v2127
      %v2233 = vunpack.c.l.b16 %v2137
      %v2234 = vunpack.c.l.b16 %v2155
      %v2235 = vunpack.c.l.b16 %v2165
      %v2236 = vunpack.c.l.b16 %v2183
      %v2237 = vunpack.c.l.b16 %v2193
      %v2238 = vunpack.c.l.b16 %v2211
      %v2239 = vunpack.c.l.b16 %v2221
      %v2240 = vpack.c.b16 %v2225, %v2224
      %v2241 = vpack.c.b16 %v2227, %v2226
      %v2242 = vpack.c.b16 %v2229, %v2228
      %v2243 = vpack.c.b16 %v2231, %v2230
      %v2244 = vpack.c.b16 %v2233, %v2232
      %v2245 = vpack.c.b16 %v2235, %v2234
      %v2246 = vpack.c.b16 %v2237, %v2236
      %v2247 = vpack.c.b16 %v2239, %v2238
      %v2249 = vsel %vm596, %v2240, 0
      %v2252 = vsel %vm596, %v2241, 0
      %v2255 = vsel %vm596, %v2242, 0
      %v2258 = vsel %vm596, %v2243, 0
      %v2261 = vsel %vm596, %v2244, 0
      %v2264 = vsel %vm596, %v2245, 0
      %v2267 = vsel %vm596, %v2246, 0
      %v2270 = vsel %vm596, %v2247, 0
      %v2273 = vsel %vm621, %v2223, 0
      %2275 = vmatpush.bf16.msra.mxu0 0
      %2276 = vmatpush.bf16.msra.mxu0 0
      %2277 = vmatpush.bf16.msra.mxu0 0
      %2278 = vmatpush.bf16.msra.mxu0 0
      %2279 = vmatpush.bf16.msra.mxu0 0
      %2280 = vmatpush.bf16.msra.mxu0 0
      %2281 = vmatpush.bf16.msra.mxu0 0
      %2282 = vmatpush.bf16.msra.mxu0 %v2273
      %2283 = vmatmul.bf16.gmra.mxu0 %v2249
      %v2284 = vpop.f32.mrf.mxu0
      %v2285 = vadd.f32 0.0, %v2284
      %v2286 = vpop.f32.mrf.mxu0
      %v2287 = vadd.f32 0.0, %v2286
      %2288 = vmatmul.bf16.gmra.mxu0 %v2252
      %v2289 = vpop.f32.mrf.mxu0
      %v2290 = vadd.f32 0.0, %v2289
      %v2291 = vpop.f32.mrf.mxu0
      %v2292 = vadd.f32 0.0, %v2291
      %2293 = vmatmul.bf16.gmra.mxu0 %v2255
      %v2294 = vpop.f32.mrf.mxu0
      %v2295 = vadd.f32 0.0, %v2294
      %v2296 = vpop.f32.mrf.mxu0
      %v2297 = vadd.f32 0.0, %v2296
      %2298 = vmatmul.bf16.gmra.mxu0 %v2258
      %v2299 = vpop.f32.mrf.mxu0
      %v2300 = vadd.f32 0.0, %v2299
      %v2301 = vpop.f32.mrf.mxu0
      %v2302 = vadd.f32 0.0, %v2301
      %2303 = vmatmul.bf16.gmra.mxu0 %v2261
      %v2304 = vpop.f32.mrf.mxu0
      %v2305 = vadd.f32 0.0, %v2304
      %v2306 = vpop.f32.mrf.mxu0
      %v2307 = vadd.f32 0.0, %v2306
      %2308 = vmatmul.bf16.gmra.mxu0 %v2264
      %v2309 = vpop.f32.mrf.mxu0
      %v2310 = vadd.f32 0.0, %v2309
      %v2311 = vpop.f32.mrf.mxu0
      %v2312 = vadd.f32 0.0, %v2311
      %2313 = vmatmul.bf16.gmra.mxu0 %v2267
      %v2314 = vpop.f32.mrf.mxu0
      %v2315 = vadd.f32 0.0, %v2314
      %v2316 = vpop.f32.mrf.mxu0
      %v2317 = vadd.f32 0.0, %v2316
      %2318 = vmatmul.bf16.gmra.mxu0 %v2270
      %v2319 = vpop.f32.mrf.mxu0
      %v2320 = vadd.f32 0.0, %v2319
      %v2321 = vpop.f32.mrf.mxu0
      %v2322 = vadd.f32 0.0, %v2321
      %2323 = vdwg.mxu0
      %v2324 = vld [vmem:[#allocation3] sm:$0xff]
      %v2325 = vld [vmem:[#allocation3 + $0x8] sm:$0xff]
      %v2326 = vld [vmem:[#allocation3 + $0x10] sm:$0xff]
      %v2327 = vld [vmem:[#allocation3 + $0x18] sm:$0xff]
      %v2328 = vld [vmem:[#allocation3 + $0x20] sm:$0xff]
      %v2329 = vld [vmem:[#allocation3 + $0x28] sm:$0xff]
      %v2330 = vld [vmem:[#allocation3 + $0x30] sm:$0xff]
      %v2331 = vld [vmem:[#allocation3 + $0x38] sm:$0xff]
      %v2332 = vld [vmem:[#allocation3 + $0x40] sm:$0xff]
      %v2333 = vld [vmem:[#allocation3 + $0x48] sm:$0xff]
      %v2334 = vld [vmem:[#allocation3 + $0x50] sm:$0xff]
      %v2335 = vld [vmem:[#allocation3 + $0x58] sm:$0xff]
      %v2336 = vld [vmem:[#allocation3 + $0x60] sm:$0xff]
      %v2337 = vld [vmem:[#allocation3 + $0x68] sm:$0xff]
      %v2338 = vld [vmem:[#allocation3 + $0x70] sm:$0xff]
      %v2339 = vld [vmem:[#allocation3 + $0x78] sm:$0xff]
      %v2340 = vadd.f32 %v2324, %v2285
      %v2341 = vadd.f32 %v2325, %v2287
      %v2342 = vadd.f32 %v2326, %v2290
      %v2343 = vadd.f32 %v2327, %v2292
      %v2344 = vadd.f32 %v2328, %v2295
      %v2345 = vadd.f32 %v2329, %v2297
      %v2346 = vadd.f32 %v2330, %v2300
      %v2347 = vadd.f32 %v2331, %v2302
      %v2348 = vadd.f32 %v2332, %v2305
      %v2349 = vadd.f32 %v2333, %v2307
      %v2350 = vadd.f32 %v2334, %v2310
      %v2351 = vadd.f32 %v2335, %v2312
      %v2352 = vadd.f32 %v2336, %v2315
      %v2353 = vadd.f32 %v2337, %v2317
      %v2354 = vadd.f32 %v2338, %v2320
      %v2355 = vadd.f32 %v2339, %v2322
      %2356 = vst [vmem:[#allocation3] sm:$0xff] %v2340
      %2357 = vst [vmem:[#allocation3 + $0x8] sm:$0xff] %v2341
      %2358 = vst [vmem:[#allocation3 + $0x10] sm:$0xff] %v2342
      %2359 = vst [vmem:[#allocation3 + $0x18] sm:$0xff] %v2343
      %2360 = vst [vmem:[#allocation3 + $0x20] sm:$0xff] %v2344
      %2361 = vst [vmem:[#allocation3 + $0x28] sm:$0xff] %v2345
      %2362 = vst [vmem:[#allocation3 + $0x30] sm:$0xff] %v2346
      %2363 = vst [vmem:[#allocation3 + $0x38] sm:$0xff] %v2347
      %2364 = vst [vmem:[#allocation3 + $0x40] sm:$0xff] %v2348
      %2365 = vst [vmem:[#allocation3 + $0x48] sm:$0xff] %v2349
      %2366 = vst [vmem:[#allocation3 + $0x50] sm:$0xff] %v2350
      %2367 = vst [vmem:[#allocation3 + $0x58] sm:$0xff] %v2351
      %2368 = vst [vmem:[#allocation3 + $0x60] sm:$0xff] %v2352
      %2369 = vst [vmem:[#allocation3 + $0x68] sm:$0xff] %v2353
      %2370 = vst [vmem:[#allocation3 + $0x70] sm:$0xff] %v2354
      %2371 = vst [vmem:[#allocation3 + $0x78] sm:$0xff] %v2355
      %v2372 = vld [vmem:[#allocation2] sm:$0x8]
      %v2373 = vld [vmem:[#allocation2 + $0x4] sm:$0xf]
      %v2374 = vld [vmem:[#allocation2 + $0x8] sm:$0x7]
      %v2375 = vld [vmem:[#allocation2 + $0xc] sm:$0x8]
      %v2376 = vld [vmem:[#allocation2 + $0x10] sm:$0xf]
      %v2377 = vld [vmem:[#allocation2 + $0x14] sm:$0x7]
      %v2378 = vld [vmem:[#allocation2 + $0x18] sm:$0x8]
      %v2379 = vld [vmem:[#allocation2 + $0x1c] sm:$0xf]
      %v2380 = vld [vmem:[#allocation2 + $0x20] sm:$0x7]
      %v2381 = vld [vmem:[#allocation2 + $0x24] sm:$0x8]
      %v2382 = vld [vmem:[#allocation2 + $0x28] sm:$0xf]
      %v2383 = vld [vmem:[#allocation2 + $0x2c] sm:$0x7]
      %v2384 = vld [vmem:[#allocation2 + $0x30] sm:$0x8]
      %v2385 = vld [vmem:[#allocation2 + $0x34] sm:$0xf]
      %v2386 = vld [vmem:[#allocation2 + $0x38] sm:$0x7]
      %v2387 = vld [vmem:[#allocation2 + $0x3c] sm:$0x8]
      %v2388 = vld [vmem:[#allocation2 + $0x40] sm:$0xf]
      %v2389 = vld [vmem:[#allocation2 + $0x44] sm:$0x7]
      %v2390 = vld [vmem:[#allocation2 + $0x48] sm:$0x8]
      %v2391 = vld [vmem:[#allocation2 + $0x4c] sm:$0xf]
      %v2392 = vld [vmem:[#allocation2 + $0x50] sm:$0x7]
      %v2393 = vld [vmem:[#allocation2 + $0x54] sm:$0x8]
      %v2394 = vld [vmem:[#allocation2 + $0x58] sm:$0xf]
      %v2395 = vld [vmem:[#allocation2 + $0x5c] sm:$0x7]
      %vm2420 = vcmask 1040384
      %vm2421 = vcmask 1044484
      %vm2422 = vmor %vm2420, %vm2421
      %v2423 = vrot.slane %v2372, 7
      %v2424 = vrot.slane %v2423, 4
      %v2425 = vrot.slane %v2373, 7
      %v2426 = vsel %vm2422, %v2424, %v2425
      %v2427 = vrot.slane %v2425, 4
      %v2428 = vrot.slane %v2374, 7
      %v2429 = vsel %vm2422, %v2427, %v2428
      %v2430 = vrot.slane %v2375, 7
      %v2431 = vrot.slane %v2430, 4
      %v2432 = vrot.slane %v2376, 7
      %v2433 = vsel %vm2422, %v2431, %v2432
      %v2434 = vrot.slane %v2432, 4
      %v2435 = vrot.slane %v2377, 7
      %v2436 = vsel %vm2422, %v2434, %v2435
      %v2437 = vrot.slane %v2378, 7
      %v2438 = vrot.slane %v2437, 4
      %v2439 = vrot.slane %v2379, 7
      %v2440 = vsel %vm2422, %v2438, %v2439
      %v2441 = vrot.slane %v2439, 4
      %v2442 = vrot.slane %v2380, 7
      %v2443 = vsel %vm2422, %v2441, %v2442
      %v2444 = vrot.slane %v2381, 7
      %v2445 = vrot.slane %v2444, 4
      %v2446 = vrot.slane %v2382, 7
      %v2447 = vsel %vm2422, %v2445, %v2446
      %v2448 = vrot.slane %v2446, 4
      %v2449 = vrot.slane %v2383, 7
      %v2450 = vsel %vm2422, %v2448, %v2449
      %v2451 = vrot.slane %v2384, 7
      %v2452 = vrot.slane %v2451, 4
      %v2453 = vrot.slane %v2385, 7
      %v2454 = vsel %vm2422, %v2452, %v2453
      %v2455 = vrot.slane %v2453, 4
      %v2456 = vrot.slane %v2386, 7
      %v2457 = vsel %vm2422, %v2455, %v2456
      %v2458 = vrot.slane %v2387, 7
      %v2459 = vrot.slane %v2458, 4
      %v2460 = vrot.slane %v2388, 7
      %v2461 = vsel %vm2422, %v2459, %v2460
      %v2462 = vrot.slane %v2460, 4
      %v2463 = vrot.slane %v2389, 7
      %v2464 = vsel %vm2422, %v2462, %v2463
      %v2465 = vrot.slane %v2390, 7
      %v2466 = vrot.slane %v2465, 4
      %v2467 = vrot.slane %v2391, 7
      %v2468 = vsel %vm2422, %v2466, %v2467
      %v2469 = vrot.slane %v2467, 4
      %v2470 = vrot.slane %v2392, 7
      %v2471 = vsel %vm2422, %v2469, %v2470
      %v2472 = vrot.slane %v2393, 7
      %v2473 = vrot.slane %v2472, 4
      %v2474 = vrot.slane %v2394, 7
      %v2475 = vsel %vm2422, %v2473, %v2474
      %v2476 = vrot.slane %v2474, 4
      %v2477 = vrot.slane %v2395, 7
      %v2478 = vsel %vm2422, %v2476, %v2477
      %s2479 = scalar_lea.vmem %s1, 12
      %v2480 = vld [vmem:[%s2479] sm:$0x3]
      %v2481 = vunpack.c.l.b16 %v2426
      %v2482 = vunpack.c.l.b16 %v2429
      %v2483 = vunpack.c.l.b16 %v2433
      %v2484 = vunpack.c.l.b16 %v2436
      %v2485 = vunpack.c.l.b16 %v2440
      %v2486 = vunpack.c.l.b16 %v2443
      %v2487 = vunpack.c.l.b16 %v2447
      %v2488 = vunpack.c.l.b16 %v2450
      %v2489 = vunpack.c.l.b16 %v2454
      %v2490 = vunpack.c.l.b16 %v2457
      %v2491 = vunpack.c.l.b16 %v2461
      %v2492 = vunpack.c.l.b16 %v2464
      %v2493 = vunpack.c.l.b16 %v2468
      %v2494 = vunpack.c.l.b16 %v2471
      %v2495 = vunpack.c.l.b16 %v2475
      %v2496 = vunpack.c.l.b16 %v2478
      %v2497 = vpack.c.b16 %v2482, %v2481
      %v2498 = vpack.c.b16 %v2484, %v2483
      %v2499 = vpack.c.b16 %v2486, %v2485
      %v2500 = vpack.c.b16 %v2488, %v2487
      %v2501 = vpack.c.b16 %v2490, %v2489
      %v2502 = vpack.c.b16 %v2492, %v2491
      %v2503 = vpack.c.b16 %v2494, %v2493
      %v2504 = vpack.c.b16 %v2496, %v2495
      %v2506 = vsel %vm596, %v2497, 0
      %v2509 = vsel %vm596, %v2498, 0
      %v2512 = vsel %vm596, %v2499, 0
      %v2515 = vsel %vm596, %v2500, 0
      %v2518 = vsel %vm596, %v2501, 0
      %v2521 = vsel %vm596, %v2502, 0
      %v2524 = vsel %vm596, %v2503, 0
      %v2527 = vsel %vm596, %v2504, 0
      %v2530 = vsel %vm621, %v2480, 0
      %2532 = vmatpush.bf16.msra.mxu0 0
      %2533 = vmatpush.bf16.msra.mxu0 0
      %2534 = vmatpush.bf16.msra.mxu0 0
      %2535 = vmatpush.bf16.msra.mxu0 0
      %2536 = vmatpush.bf16.msra.mxu0 0
      %2537 = vmatpush.bf16.msra.mxu0 0
      %2538 = vmatpush.bf16.msra.mxu0 0
      %2539 = vmatpush.bf16.msra.mxu0 %v2530
      %2540 = vmatmul.bf16.gmra.mxu0 %v2506
      %v2541 = vpop.f32.mrf.mxu0
      %v2542 = vadd.f32 0.0, %v2541
      %v2543 = vpop.f32.mrf.mxu0
      %v2544 = vadd.f32 0.0, %v2543
      %2545 = vmatmul.bf16.gmra.mxu0 %v2509
      %v2546 = vpop.f32.mrf.mxu0
      %v2547 = vadd.f32 0.0, %v2546
      %v2548 = vpop.f32.mrf.mxu0
      %v2549 = vadd.f32 0.0, %v2548
      %2550 = vmatmul.bf16.gmra.mxu0 %v2512
      %v2551 = vpop.f32.mrf.mxu0
      %v2552 = vadd.f32 0.0, %v2551
      %v2553 = vpop.f32.mrf.mxu0
      %v2554 = vadd.f32 0.0, %v2553
      %2555 = vmatmul.bf16.gmra.mxu0 %v2515
      %v2556 = vpop.f32.mrf.mxu0
      %v2557 = vadd.f32 0.0, %v2556
      %v2558 = vpop.f32.mrf.mxu0
      %v2559 = vadd.f32 0.0, %v2558
      %2560 = vmatmul.bf16.gmra.mxu0 %v2518
      %v2561 = vpop.f32.mrf.mxu0
      %v2562 = vadd.f32 0.0, %v2561
      %v2563 = vpop.f32.mrf.mxu0
      %v2564 = vadd.f32 0.0, %v2563
      %2565 = vmatmul.bf16.gmra.mxu0 %v2521
      %v2566 = vpop.f32.mrf.mxu0
      %v2567 = vadd.f32 0.0, %v2566
      %v2568 = vpop.f32.mrf.mxu0
      %v2569 = vadd.f32 0.0, %v2568
      %2570 = vmatmul.bf16.gmra.mxu0 %v2524
      %v2571 = vpop.f32.mrf.mxu0
      %v2572 = vadd.f32 0.0, %v2571
      %v2573 = vpop.f32.mrf.mxu0
      %v2574 = vadd.f32 0.0, %v2573
      %2575 = vmatmul.bf16.gmra.mxu0 %v2527
      %v2576 = vpop.f32.mrf.mxu0
      %v2577 = vadd.f32 0.0, %v2576
      %v2578 = vpop.f32.mrf.mxu0
      %v2579 = vadd.f32 0.0, %v2578
      %2580 = vdwg.mxu0
      %v2581 = vld [vmem:[#allocation3] sm:$0xff]
      %v2582 = vld [vmem:[#allocation3 + $0x8] sm:$0xff]
      %v2583 = vld [vmem:[#allocation3 + $0x10] sm:$0xff]
      %v2584 = vld [vmem:[#allocation3 + $0x18] sm:$0xff]
      %v2585 = vld [vmem:[#allocation3 + $0x20] sm:$0xff]
      %v2586 = vld [vmem:[#allocation3 + $0x28] sm:$0xff]
      %v2587 = vld [vmem:[#allocation3 + $0x30] sm:$0xff]
      %v2588 = vld [vmem:[#allocation3 + $0x38] sm:$0xff]
      %v2589 = vld [vmem:[#allocation3 + $0x40] sm:$0xff]
      %v2590 = vld [vmem:[#allocation3 + $0x48] sm:$0xff]
      %v2591 = vld [vmem:[#allocation3 + $0x50] sm:$0xff]
      %v2592 = vld [vmem:[#allocation3 + $0x58] sm:$0xff]
      %v2593 = vld [vmem:[#allocation3 + $0x60] sm:$0xff]
      %v2594 = vld [vmem:[#allocation3 + $0x68] sm:$0xff]
      %v2595 = vld [vmem:[#allocation3 + $0x70] sm:$0xff]
      %v2596 = vld [vmem:[#allocation3 + $0x78] sm:$0xff]
      %v2597 = vadd.f32 %v2581, %v2542
      %v2598 = vadd.f32 %v2582, %v2544
      %v2599 = vadd.f32 %v2583, %v2547
      %v2600 = vadd.f32 %v2584, %v2549
      %v2601 = vadd.f32 %v2585, %v2552
      %v2602 = vadd.f32 %v2586, %v2554
      %v2603 = vadd.f32 %v2587, %v2557
      %v2604 = vadd.f32 %v2588, %v2559
      %v2605 = vadd.f32 %v2589, %v2562
      %v2606 = vadd.f32 %v2590, %v2564
      %v2607 = vadd.f32 %v2591, %v2567
      %v2608 = vadd.f32 %v2592, %v2569
      %v2609 = vadd.f32 %v2593, %v2572
      %v2610 = vadd.f32 %v2594, %v2574
      %v2611 = vadd.f32 %v2595, %v2577
      %v2612 = vadd.f32 %v2596, %v2579
      %2613 = vst [vmem:[#allocation3] sm:$0xff] %v2597
      %2614 = vst [vmem:[#allocation3 + $0x8] sm:$0xff] %v2598
      %2615 = vst [vmem:[#allocation3 + $0x10] sm:$0xff] %v2599
      %2616 = vst [vmem:[#allocation3 + $0x18] sm:$0xff] %v2600
      %2617 = vst [vmem:[#allocation3 + $0x20] sm:$0xff] %v2601
      %2618 = vst [vmem:[#allocation3 + $0x28] sm:$0xff] %v2602
      %2619 = vst [vmem:[#allocation3 + $0x30] sm:$0xff] %v2603
      %2620 = vst [vmem:[#allocation3 + $0x38] sm:$0xff] %v2604
      %2621 = vst [vmem:[#allocation3 + $0x40] sm:$0xff] %v2605
      %2622 = vst [vmem:[#allocation3 + $0x48] sm:$0xff] %v2606
      %2623 = vst [vmem:[#allocation3 + $0x50] sm:$0xff] %v2607
      %2624 = vst [vmem:[#allocation3 + $0x58] sm:$0xff] %v2608
      %2625 = vst [vmem:[#allocation3 + $0x60] sm:$0xff] %v2609
      %2626 = vst [vmem:[#allocation3 + $0x68] sm:$0xff] %v2610
      %2627 = vst [vmem:[#allocation3 + $0x70] sm:$0xff] %v2611
      %2628 = vst [vmem:[#allocation3 + $0x78] sm:$0xff] %v2612
      %v2629 = vld [vmem:[#allocation3] sm:$0xff]
      %v2630 = vld [vmem:[#allocation3 + $0x8] sm:$0xff]
      %v2631 = vld [vmem:[#allocation3 + $0x10] sm:$0xff]
      %v2632 = vld [vmem:[#allocation3 + $0x18] sm:$0xff]
      %v2633 = vld [vmem:[#allocation3 + $0x20] sm:$0xff]
      %v2634 = vld [vmem:[#allocation3 + $0x28] sm:$0xff]
      %v2635 = vld [vmem:[#allocation3 + $0x30] sm:$0xff]
      %v2636 = vld [vmem:[#allocation3 + $0x38] sm:$0xff]
      %v2637 = vld [vmem:[#allocation3 + $0x40] sm:$0xff]
      %v2638 = vld [vmem:[#allocation3 + $0x48] sm:$0xff]
      %v2639 = vld [vmem:[#allocation3 + $0x50] sm:$0xff]
      %v2640 = vld [vmem:[#allocation3 + $0x58] sm:$0xff]
      %v2641 = vld [vmem:[#allocation3 + $0x60] sm:$0xff]
      %v2642 = vld [vmem:[#allocation3 + $0x68] sm:$0xff]
      %v2643 = vld [vmem:[#allocation3 + $0x70] sm:$0xff]
      %v2644 = vld [vmem:[#allocation3 + $0x78] sm:$0xff]
      %v2645 = vld [vmem:[%s2] sm:$0x1]
      %v2647 = vperm.slane %v2645, 0
      %v2649 = vadd.f32 %v2629, %v2647
      %v2650 = vadd.f32 %v2630, %v2647
      %v2651 = vadd.f32 %v2631, %v2647
      %v2652 = vadd.f32 %v2632, %v2647
      %v2653 = vadd.f32 %v2633, %v2647
      %v2654 = vadd.f32 %v2634, %v2647
      %v2655 = vadd.f32 %v2635, %v2647
      %v2656 = vadd.f32 %v2636, %v2647
      %v2657 = vadd.f32 %v2637, %v2647
      %v2658 = vadd.f32 %v2638, %v2647
      %v2659 = vadd.f32 %v2639, %v2647
      %v2660 = vadd.f32 %v2640, %v2647
      %v2661 = vadd.f32 %v2641, %v2647
      %v2662 = vadd.f32 %v2642, %v2647
      %v2663 = vadd.f32 %v2643, %v2647
      %v2664 = vadd.f32 %v2644, %v2647
      %2665 = vst [vmem:[%s213] sm:$0xff] %v2649
      %2666 = vst [vmem:[%s213 + $0x8] sm:$0xff] %v2650
      %2667 = vst [vmem:[%s213 + $0x10] sm:$0xff] %v2651
      %2668 = vst [vmem:[%s213 + $0x18] sm:$0xff] %v2652
      %2669 = vst [vmem:[%s213 + $0x20] sm:$0xff] %v2653
      %2670 = vst [vmem:[%s213 + $0x28] sm:$0xff] %v2654
      %2671 = vst [vmem:[%s213 + $0x30] sm:$0xff] %v2655
      %2672 = vst [vmem:[%s213 + $0x38] sm:$0xff] %v2656
      %2673 = vst [vmem:[%s213 + $0x40] sm:$0xff] %v2657
      %2674 = vst [vmem:[%s213 + $0x48] sm:$0xff] %v2658
      %2675 = vst [vmem:[%s213 + $0x50] sm:$0xff] %v2659
      %2676 = vst [vmem:[%s213 + $0x58] sm:$0xff] %v2660
      %2677 = vst [vmem:[%s213 + $0x60] sm:$0xff] %v2661
      %2678 = vst [vmem:[%s213 + $0x68] sm:$0xff] %v2662
      %2679 = vst [vmem:[%s213 + $0x70] sm:$0xff] %v2663
      %2680 = vst [vmem:[%s213 + $0x78] sm:$0xff] %v2664
      %s2681 = smul.u32 8, %s19
      %p2682 = scmp.lt.s32.totalorder %s18, 1
      %s2683 = scalar_select %p2682, %s18, 1
      %p2684 = scmp.lt.s32.totalorder %s2681, 15
      %s2685 = scalar_select %p2684, %s2681, 15
      %s2686 = smul.addr %s2685, 2
      %s2687 = smul.addr %s2683, 32
      %s2688 = sadd.s32 %s2686, %s2687
      %s2689 = smul.addr %s2688, 8
      %s2690 = scalar_lea.vmem %s3, %s2689
      // Predicated region
      $region33: #{a_call__.6} parent=31 // pred_check
        %p2691 = pneg %p116
      $region34: #{a_call__.6} parent=31 // pred_check_branch
        %2693 = sbr.rel (%p2691) target = $region36
      $region35: #{a_call__.6} parent=31 // pred_region
        %s2694 = smul.u32 8, %s19
      $region36: #{a_call__.6} parent=31 // pred_fallthru
        _
    $region32: #{a_call__.6} parent=5 // pred_fallthru
      _
    %p2695 = scmp.le.s32.totalorder 2, %s9
    // Predicated region
    $region37: #{a_call__.6} parent=5 // pred_check
      %p2696 = pneg %p2695
    $region38: #{a_call__.6} parent=5 // pred_check_branch
      %2698 = sbr.rel (%p2696) target = $region40
    $region39: #{a_call__.6} parent=5 // pred_region
      %s2699 = ssub.s32 %s9, 2
      // Predicated region
      $region41: #{a_call__.6} parent=39 // pred_check
        %p2700 = pneg %p122
      $region42: #{a_call__.6} parent=39 // pred_check_branch
        %2702 = sbr.rel (%p2700) target = $region44
      $region43: #{a_call__.6} parent=39 // pred_region
        %s2703 = smul.u32 8, %s21
        %p2704 = scmp.lt.s32.totalorder %s20, 1
        %s2705 = scalar_select %p2704, %s20, 1
        %p2706 = scmp.lt.s32.totalorder %s2703, 15
        %s2707 = scalar_select %p2706, %s2703, 15
        %s2708 = smul.addr %s2707, 2
        %s2709 = smul.addr %s2705, 32
        %s2710 = sadd.s32 %s2708, %s2709
        %s2711 = smul.addr %s2710, 8
        %s2712 = scalar_lea.vmem %s3, %s2711
      $region44: #{a_call__.6} parent=39 // pred_fallthru
        _
    $region40: #{a_call__.6} parent=5 // pred_fallthru
      _
  $region6: #{a_call__.6} parent=0 // loop_footer
    %s13 = sadd.s32 1, %s9
  $region7: #{a_call__.6} parent=0 // loop_footer_branch
    %8 = sbr.rel target = $region3
  $region8: #{a_call__.6} parent=0 // loop_exit
    _

// kernel: a_call__.7
$region0: #{a_call__.7}
  #allocation0 [shape = 'u32[]', space=smem, size = 0x4, offset = 0x4, fixed_abs, tag = 'smem constant byte address 0x4 - core index']
  #allocation1 [shape = 'u32[72,128]{1,0:T(1,128)}', space=vmem, size = 0x9000, scoped, tag = 'internal scratch']
  #allocation2 [shape = 'bf16[22,8,128]{2,1,0:T(8,128)(2,1)}', space=vmem, size = 0xb000, scoped, tag = 'scratch operand']
  #allocation3 [shape = 'f32[128,128]{1,0:T(8,128)}', space=vmem, size = 0x10000, scoped, tag = 'scratch operand']
  %s0 = inlined_call_operand.vmem [shape: f32[2,16,16,128], index: 0, kind: input, shape index: {}]
  %s1 = inlined_call_operand.vmem [shape: bf16[7,128,128], index: 1, kind: input, shape index: {}]
  %s2 = inlined_call_operand.vmem [shape: f32[1,128], index: 2, kind: input, shape index: {}]
  %s3 = inlined_call_operand.vmem [shape: f32[2,16,16,128], index: 3, kind: input, shape index: {}]
  %s4 = inlined_call_operand.vmem [shape: f32[2,16,16,128], index: 4, kind: output, shape index: {}]
  %s5 = sld [smem:[#allocation0]]
  $region159: #{a_call__.7} parent=0
    _
  %s7 = ssub.s32 1, %s5
  %s8 = scalar_select 0, %s7, %s5
  $region1: #{a_call__.7} parent=0
    #allocation4 [shape = 'u8[131072]{0}', space=vmem, size = 0x20000, scoped, tag = 'input window, operand 0']
    #allocation5 [shape = 'u8[131072]{0}', space=vmem, size = 0x20000, scoped, tag = 'input window, operand 3']
    #allocation6 [shape = 'u8[131072]{0}', space=vmem, size = 0x20000, scoped, tag = 'output window, operand 0']
    loop: start=0, step=1, limit=6
    $region2: #{a_call__.7} parent=1 // loop_pre_header
      _
    $region3: #{a_call__.7} parent=1 // loop_header
      %s10 = sphi 0, %s14
      %p11 = scmp.ge.s32.totalorder %s10, 6
      %s17 = sphi 0, %s29
      %s18 = sphi 0, %s25
      %s19 = sphi 0, %s17
      %s20 = sphi 0, %s18
      %s21 = sphi 0, %s19
      %s22 = sphi 0, %s20
      %s34 = sphi 0, %s36
      %s37 = sphi 0, %s34
      %s38 = sphi 0, %s37
      %s54 = sphi 0, %s38
      %s58 = sphi 0, %s58
      %s60 = sphi 0, %s58
      %s61 = sphi 0, %s60
      %s75 = sphi 0, %s61
      %s79 = sphi 0, %s79
      %s81 = sphi 0, %s79
      %s82 = sphi 0, %s81
      %s96 = sphi 0, %s82
      %s104 = sphi 0, %s106
      %s107 = sphi 0, %s104
      %s108 = sphi 0, %s107
      %s124 = sphi 0, %s108
      %s132 = sphi 0, %s134
      %s135 = sphi 0, %s132
      %s136 = sphi 0, %s135
      %s152 = sphi 0, %s136
    $region4: #{a_call__.7} parent=1 // loop_header_branch
      %13 = sbr.rel (%p11) target = $region8
    $region5: #{a_call__.7} parent=1 // loop_body
      %s15 = ssub.s32 %s10, 1
      %s16 = ssub.s32 %s10, 2
      %s23 = sadd.s32 1, %s18
      %p24 = scmp.ge.s32.totalorder %s23, 2
      %s25 = scalar_select %p24, 0, %s23
      %s26 = sadd.s32 1, %s17
      %s27 = scalar_select %p24, %s26, %s17
      %p28 = scmp.ge.s32.totalorder %s27, 2
      %s29 = scalar_select %p28, 0, %s27
      %s30 = ssub.s32 %s17, %s29
      %s31 = ssub.s32 %s18, %s25
      %s32 = sor.u32 %s30, %s31
      %p33 = scmp.eq.s32.totalorder %s32, 0
      %s35 = sadd.s32 %s34, 1
      %s36 = scalar_select %p33, %s34, %s35
      %p39 = pneg %p33
      %p40 = scmp.eq.s32.totalorder %s10, 3
      %p41 = por %p39, %p40
      %p42 = scmp.ne.s32.totalorder %s34, %s37
      %p43 = scmp.eq.s32.totalorder %s10, 0
      %p44 = por %p42, %p43
      %p45 = scmp.ne.s32.totalorder %s34, %s37
      %p46 = scmp.eq.s32.totalorder %s15, 3
      %p47 = por %p45, %p46
      %p48 = scmp.ne.s32.totalorder %s37, %s38
      %p49 = scmp.eq.s32.totalorder %s15, 0
      %p50 = por %p48, %p49
      %p51 = scmp.ne.s32.totalorder %s37, %s38
      %p52 = scmp.eq.s32.totalorder %s16, 3
      %p53 = por %p51, %p52
      %p55 = scmp.ne.s32.totalorder %s38, %s54
      %p56 = scmp.eq.s32.totalorder %s16, 0
      %p57 = por %p55, %p56
      %s59 = sadd.s32 %s58, 1
      %p62 = scmp.eq.s32.totalorder %s10, 3
      %p63 = scmp.ne.s32.totalorder %s58, %s60
      %p64 = scmp.eq.s32.totalorder %s10, 0
      %p65 = por %p63, %p64
      %p66 = scmp.ne.s32.totalorder %s58, %s60
      %p67 = scmp.eq.s32.totalorder %s15, 3
      %p68 = por %p66, %p67
      %p69 = scmp.ne.s32.totalorder %s60, %s61
      %p70 = scmp.eq.s32.totalorder %s15, 0
      %p71 = por %p69, %p70
      %p72 = scmp.ne.s32.totalorder %s60, %s61
      %p73 = scmp.eq.s32.totalorder %s16, 3
      %p74 = por %p72, %p73
      %p76 = scmp.ne.s32.totalorder %s61, %s75
      %p77 = scmp.eq.s32.totalorder %s16, 0
      %p78 = por %p76, %p77
      %s80 = sadd.s32 %s79, 1
      %p83 = scmp.eq.s32.totalorder %s10, 3
      %p84 = scmp.ne.s32.totalorder %s79, %s81
      %p85 = scmp.eq.s32.totalorder %s10, 0
      %p86 = por %p84, %p85
      %p87 = scmp.ne.s32.totalorder %s79, %s81
      %p88 = scmp.eq.s32.totalorder %s15, 3
      %p89 = por %p87, %p88
      %p90 = scmp.ne.s32.totalorder %s81, %s82
      %p91 = scmp.eq.s32.totalorder %s15, 0
      %p92 = por %p90, %p91
      %p93 = scmp.ne.s32.totalorder %s81, %s82
      %p94 = scmp.eq.s32.totalorder %s16, 3
      %p95 = por %p93, %p94
      %p97 = scmp.ne.s32.totalorder %s82, %s96
      %p98 = scmp.eq.s32.totalorder %s16, 0
      %p99 = por %p97, %p98
      %s100 = ssub.s32 %s17, %s29
      %s101 = ssub.s32 %s18, %s25
      %s102 = sor.u32 %s100, %s101
      %p103 = scmp.eq.s32.totalorder %s102, 0
      %s105 = sadd.s32 %s104, 1
      %s106 = scalar_select %p103, %s104, %s105
      %p109 = pneg %p103
      %p110 = scmp.eq.s32.totalorder %s10, 3
      %p111 = por %p109, %p110
      %p112 = scmp.ne.s32.totalorder %s104, %s107
      %p113 = scmp.eq.s32.totalorder %s10, 0
      %p114 = por %p112, %p113
      %p115 = scmp.ne.s32.totalorder %s104, %s107
      %p116 = scmp.eq.s32.totalorder %s15, 3
      %p117 = por %p115, %p116
      %p118 = scmp.ne.s32.totalorder %s107, %s108
      %p119 = scmp.eq.s32.totalorder %s15, 0
      %p120 = por %p118, %p119
      %p121 = scmp.ne.s32.totalorder %s107, %s108
      %p122 = scmp.eq.s32.totalorder %s16, 3
      %p123 = por %p121, %p122
      %p125 = scmp.ne.s32.totalorder %s108, %s124
      %p126 = scmp.eq.s32.totalorder %s16, 0
      %p127 = por %p125, %p126
      %s128 = ssub.s32 %s17, %s29
      %s129 = ssub.s32 %s18, %s25
      %s130 = sor.u32 %s128, %s129
      %p131 = scmp.eq.s32.totalorder %s130, 0
      %s133 = sadd.s32 %s132, 1
      %s134 = scalar_select %p131, %s132, %s133
      %p137 = pneg %p131
      %p138 = scmp.eq.s32.totalorder %s10, 3
      %p139 = por %p137, %p138
      %p140 = scmp.ne.s32.totalorder %s132, %s135
      %p141 = scmp.eq.s32.totalorder %s10, 0
      %p142 = por %p140, %p141
      %p143 = scmp.ne.s32.totalorder %s132, %s135
      %p144 = scmp.eq.s32.totalorder %s15, 3
      %p145 = por %p143, %p144
      %p146 = scmp.ne.s32.totalorder %s135, %s136
      %p147 = scmp.eq.s32.totalorder %s15, 0
      %p148 = por %p146, %p147
      %p149 = scmp.ne.s32.totalorder %s135, %s136
      %p150 = scmp.eq.s32.totalorder %s16, 3
      %p151 = por %p149, %p150
      %p153 = scmp.ne.s32.totalorder %s136, %s152
      %p154 = scmp.eq.s32.totalorder %s16, 0
      %p155 = por %p153, %p154
      %p156 = scmp.le.s32.totalorder 1, %s10
      %p157 = scmp.lt.s32.totalorder %s10, 5
      %p158 = pnand %p156, %p157
      %p159 = pneg %p158
      // Predicated region
      $region9: #{a_call__.7} parent=5 // pred_check
        _
      $region10: #{a_call__.7} parent=5 // pred_check_branch
        %161 = sbr.rel (%p158) target = $region12
      $region11: #{a_call__.7} parent=5 // pred_region
        %s162 = ssub.s32 %s10, 1
        // Predicated region
        $region13: #{a_call__.7} parent=11 // pred_check
          %p163 = pneg %p71
        $region14: #{a_call__.7} parent=11 // pred_check_branch
          %165 = sbr.rel (%p163) target = $region16
        $region15: #{a_call__.7} parent=11 // pred_region
          _
        $region16: #{a_call__.7} parent=11 // pred_fallthru
          _
        // Predicated region
        $region17: #{a_call__.7} parent=11 // pred_check
          %p166 = pneg %p92
        $region18: #{a_call__.7} parent=11 // pred_check_branch
          %168 = sbr.rel (%p166) target = $region20
        $region19: #{a_call__.7} parent=11 // pred_region
          _
        $region20: #{a_call__.7} parent=11 // pred_fallthru
          _
      $region12: #{a_call__.7} parent=5 // pred_fallthru
        _
      %p169 = scmp.lt.s32.totalorder %s10, 4
      // Predicated region
      $region21: #{a_call__.7} parent=5 // pred_check
        %p170 = pneg %p169
      $region22: #{a_call__.7} parent=5 // pred_check_branch
        %172 = sbr.rel (%p170) target = $region24
      $region23: #{a_call__.7} parent=5 // pred_region
        // Predicated region
        $region25: #{a_call__.7} parent=23 // pred_check
          %p173 = pneg %p44
        $region26: #{a_call__.7} parent=23 // pred_check_branch
          %175 = sbr.rel (%p173) target = $region28
        $region27: #{a_call__.7} parent=23 // pred_region
          %s176 = sand.u32 %s34, 1
          %s177 = sand.u32 %s34, 1
          %s178 = smul.addr %s177, 128
          %s179 = scalar_lea.vmem [#allocation4], %s178
          %s180 = smul.addr %s17, 32
          %s181 = sadd.s32 %s18, %s180
          %s182 = smul.addr %s181, 8
          %s183 = scalar_lea.vmem %s0, %s182
          // Predicated region
          $region29: #{a_call__.7} parent=27 // pred_check
            _
          $region30: #{a_call__.7} parent=27 // pred_check_branch
            %185 = sbr.rel (0) target = $region32
          $region31: #{a_call__.7} parent=27 // pred_region
            // Predicated region
            $region33: #{a_call__.7} parent=31 // pred_check
              _
            $region34: #{a_call__.7} parent=31 // pred_check_branch
              %187 = sbr.rel (0) target = $region36
            $region35: #{a_call__.7} parent=31 // pred_region
              // Predicated region
              $region48: #{a_call__.7} parent=35 // pred_check
                _
              $region49: #{a_call__.7} parent=35 // pred_check_branch
                %233 = sbr.rel (0) target = $region51
              $region50: #{a_call__.7} parent=35 // pred_region
                loop: start=0, step=1, limit=1
                $region52: #{a_call__.7} parent=50 // loop_pre_header
                  _
                $region53: #{a_call__.7} parent=50 // loop_header
                  %s235 = sphi 0, %s239
                  %p236 = scmp.ge.s32.totalorder %s235, 1
                  %s240 = sphi %s183, %s183
                  %s241 = sphi %s179, %s179
                $region54: #{a_call__.7} parent=50 // loop_header_branch
                  %238 = sbr.rel (%p236) target = $region58
                $region55: #{a_call__.7} parent=50 // loop_body
                  %v242 = vld [vmem:[%s240] sm:$0xff]
                  %243 = vst [vmem:[%s241] sm:$0xff] %v242
                  %v244 = vld [vmem:[%s240 + $0x10] sm:$0xff]
                  %245 = vst [vmem:[%s241 + $0x8] sm:$0xff] %v244
                  %v246 = vld [vmem:[%s240 + $0x20] sm:$0xff]
                  %247 = vst [vmem:[%s241 + $0x10] sm:$0xff] %v246
                  %v248 = vld [vmem:[%s240 + $0x30] sm:$0xff]
                  %249 = vst [vmem:[%s241 + $0x18] sm:$0xff] %v248
                  %v250 = vld [vmem:[%s240 + $0x40] sm:$0xff]
                  %251 = vst [vmem:[%s241 + $0x20] sm:$0xff] %v250
                  %v252 = vld [vmem:[%s240 + $0x50] sm:$0xff]
                  %253 = vst [vmem:[%s241 + $0x28] sm:$0xff] %v252
                  %v254 = vld [vmem:[%s240 + $0x60] sm:$0xff]
                  %255 = vst [vmem:[%s241 + $0x30] sm:$0xff] %v254
                  %v256 = vld [vmem:[%s240 + $0x70] sm:$0xff]
                  %257 = vst [vmem:[%s241 + $0x38] sm:$0xff] %v256
                  %v258 = vld [vmem:[%s240 + $0x80] sm:$0xff]
                  %259 = vst [vmem:[%s241 + $0x40] sm:$0xff] %v258
                  %v260 = vld [vmem:[%s240 + $0x90] sm:$0xff]
                  %261 = vst [vmem:[%s241 + $0x48] sm:$0xff] %v260
                  %v262 = vld [vmem:[%s240 + $0xa0] sm:$0xff]
                  %263 = vst [vmem:[%s241 + $0x50] sm:$0xff] %v262
                  %v264 = vld [vmem:[%s240 + $0xb0] sm:$0xff]
                  %265 = vst [vmem:[%s241 + $0x58] sm:$0xff] %v264
                  %v266 = vld [vmem:[%s240 + $0xc0] sm:$0xff]
                  %267 = vst [vmem:[%s241 + $0x60] sm:$0xff] %v266
                  %v268 = vld [vmem:[%s240 + $0xd0] sm:$0xff]
                  %269 = vst [vmem:[%s241 + $0x68] sm:$0xff] %v268
                  %v270 = vld [vmem:[%s240 + $0xe0] sm:$0xff]
                  %271 = vst [vmem:[%s241 + $0x70] sm:$0xff] %v270
                  %v272 = vld [vmem:[%s240 + $0xf0] sm:$0xff]
                  %273 = vst [vmem:[%s241 + $0x78] sm:$0xff] %v272
                $region56: #{a_call__.7} parent=50 // loop_footer
                  %s239 = sadd.s32 1, %s235
                $region57: #{a_call__.7} parent=50 // loop_footer_branch
                  %234 = sbr.rel target = $region53
                $region58: #{a_call__.7} parent=50 // loop_exit
                  _
              $region51: #{a_call__.7} parent=35 // pred_fallthru
                _
              // Predicated region
              $region59: #{a_call__.7} parent=35 // pred_check
                _
              $region60: #{a_call__.7} parent=35 // pred_check_branch
                %275 = sbr.rel target = $region62
              $region61: #{a_call__.7} parent=35 // pred_region
                _
              $region62: #{a_call__.7} parent=35 // pred_fallthru
                _
            $region36: #{a_call__.7} parent=31 // pred_fallthru
              _
            // Predicated region
            $region37: #{a_call__.7} parent=31 // pred_check
              _
            $region38: #{a_call__.7} parent=31 // pred_check_branch
              %189 = sbr.rel target = $region40
            $region39: #{a_call__.7} parent=31 // pred_region
              %s191 = ssub.s32 256, 1
              loop: start=0, step=1, limit=1
              $region41: #{a_call__.7} parent=39 // loop_pre_header
                _
              $region42: #{a_call__.7} parent=39 // loop_header
                %s193 = sphi 0, %s197
                %p194 = scmp.ge.s32.totalorder %s193, 1
                %s198 = sphi %s183, %s183
                %s199 = sphi %s179, %s179
              $region43: #{a_call__.7} parent=39 // loop_header_branch
                %196 = sbr.rel (%p194) target = $region47
              $region44: #{a_call__.7} parent=39 // loop_body
                %v200 = vld [vmem:[%s198] sm:%s191]
                %201 = vst [vmem:[%s199] sm:%s191] %v200
                %v202 = vld [vmem:[%s198 + $0x10] sm:%s191]
                %203 = vst [vmem:[%s199 + $0x8] sm:%s191] %v202
                %v204 = vld [vmem:[%s198 + $0x20] sm:%s191]
                %205 = vst [vmem:[%s199 + $0x10] sm:%s191] %v204
                %v206 = vld [vmem:[%s198 + $0x30] sm:%s191]
                %207 = vst [vmem:[%s199 + $0x18] sm:%s191] %v206
                %v208 = vld [vmem:[%s198 + $0x40] sm:%s191]
                %209 = vst [vmem:[%s199 + $0x20] sm:%s191] %v208
                %v210 = vld [vmem:[%s198 + $0x50] sm:%s191]
                %211 = vst [vmem:[%s199 + $0x28] sm:%s191] %v210
                %v212 = vld [vmem:[%s198 + $0x60] sm:%s191]
                %213 = vst [vmem:[%s199 + $0x30] sm:%s191] %v212
                %v214 = vld [vmem:[%s198 + $0x70] sm:%s191]
                %215 = vst [vmem:[%s199 + $0x38] sm:%s191] %v214
                %v216 = vld [vmem:[%s198 + $0x80] sm:%s191]
                %217 = vst [vmem:[%s199 + $0x40] sm:%s191] %v216
                %v218 = vld [vmem:[%s198 + $0x90] sm:%s191]
                %219 = vst [vmem:[%s199 + $0x48] sm:%s191] %v218
                %v220 = vld [vmem:[%s198 + $0xa0] sm:%s191]
                %221 = vst [vmem:[%s199 + $0x50] sm:%s191] %v220
                %v222 = vld [vmem:[%s198 + $0xb0] sm:%s191]
                %223 = vst [vmem:[%s199 + $0x58] sm:%s191] %v222
                %v224 = vld [vmem:[%s198 + $0xc0] sm:%s191]
                %225 = vst [vmem:[%s199 + $0x60] sm:%s191] %v224
                %v226 = vld [vmem:[%s198 + $0xd0] sm:%s191]
                %227 = vst [vmem:[%s199 + $0x68] sm:%s191] %v226
                %v228 = vld [vmem:[%s198 + $0xe0] sm:%s191]
                %229 = vst [vmem:[%s199 + $0x70] sm:%s191] %v228
                %v230 = vld [vmem:[%s198 + $0xf0] sm:%s191]
                %231 = vst [vmem:[%s199 + $0x78] sm:%s191] %v230
              $region45: #{a_call__.7} parent=39 // loop_footer
                %s197 = sadd.s32 1, %s193
              $region46: #{a_call__.7} parent=39 // loop_footer_branch
                %192 = sbr.rel target = $region42
              $region47: #{a_call__.7} parent=39 // loop_exit
                _
            $region40: #{a_call__.7} parent=31 // pred_fallthru
              _
          $region32: #{a_call__.7} parent=27 // pred_fallthru
            _
          %276 = vnop
        $region28: #{a_call__.7} parent=23 // pred_fallthru
          _
        // Predicated region
        $region63: #{a_call__.7} parent=23 // pred_check
          %p277 = pneg %p114
        $region64: #{a_call__.7} parent=23 // pred_check_branch
          %279 = sbr.rel (%p277) target = $region66
        $region65: #{a_call__.7} parent=23 // pred_region
          %s280 = sand.u32 %s104, 1
          %s281 = sand.u32 %s104, 1
          %s282 = smul.addr %s281, 128
          %s283 = scalar_lea.vmem [#allocation5], %s282
          %s284 = smul.addr %s17, 32
          %s285 = sadd.s32 %s18, %s284
          %s286 = smul.addr %s285, 8
          %s287 = scalar_lea.vmem %s3, %s286
          // Predicated region
          $region67: #{a_call__.7} parent=65 // pred_check
            _
          $region68: #{a_call__.7} parent=65 // pred_check_branch
            %289 = sbr.rel (0) target = $region70
          $region69: #{a_call__.7} parent=65 // pred_region
            // Predicated region
            $region71: #{a_call__.7} parent=69 // pred_check
              _
            $region72: #{a_call__.7} parent=69 // pred_check_branch
              %291 = sbr.rel (0) target = $region74
            $region73: #{a_call__.7} parent=69 // pred_region
              // Predicated region
              $region86: #{a_call__.7} parent=73 // pred_check
                _
              $region87: #{a_call__.7} parent=73 // pred_check_branch
                %337 = sbr.rel (0) target = $region89
              $region88: #{a_call__.7} parent=73 // pred_region
                loop: start=0, step=1, limit=1
                $region90: #{a_call__.7} parent=88 // loop_pre_header
                  _
                $region91: #{a_call__.7} parent=88 // loop_header
                  %s339 = sphi 0, %s343
                  %p340 = scmp.ge.s32.totalorder %s339, 1
                  %s344 = sphi %s287, %s287
                  %s345 = sphi %s283, %s283
                $region92: #{a_call__.7} parent=88 // loop_header_branch
                  %342 = sbr.rel (%p340) target = $region96
                $region93: #{a_call__.7} parent=88 // loop_body
                  %v346 = vld [vmem:[%s344] sm:$0xff]
                  %347 = vst [vmem:[%s345] sm:$0xff] %v346
                  %v348 = vld [vmem:[%s344 + $0x10] sm:$0xff]
                  %349 = vst [vmem:[%s345 + $0x8] sm:$0xff] %v348
                  %v350 = vld [vmem:[%s344 + $0x20] sm:$0xff]
                  %351 = vst [vmem:[%s345 + $0x10] sm:$0xff] %v350
                  %v352 = vld [vmem:[%s344 + $0x30] sm:$0xff]
                  %353 = vst [vmem:[%s345 + $0x18] sm:$0xff] %v352
                  %v354 = vld [vmem:[%s344 + $0x40] sm:$0xff]
                  %355 = vst [vmem:[%s345 + $0x20] sm:$0xff] %v354
                  %v356 = vld [vmem:[%s344 + $0x50] sm:$0xff]
                  %357 = vst [vmem:[%s345 + $0x28] sm:$0xff] %v356
                  %v358 = vld [vmem:[%s344 + $0x60] sm:$0xff]
                  %359 = vst [vmem:[%s345 + $0x30] sm:$0xff] %v358
                  %v360 = vld [vmem:[%s344 + $0x70] sm:$0xff]
                  %361 = vst [vmem:[%s345 + $0x38] sm:$0xff] %v360
                  %v362 = vld [vmem:[%s344 + $0x80] sm:$0xff]
                  %363 = vst [vmem:[%s345 + $0x40] sm:$0xff] %v362
                  %v364 = vld [vmem:[%s344 + $0x90] sm:$0xff]
                  %365 = vst [vmem:[%s345 + $0x48] sm:$0xff] %v364
                  %v366 = vld [vmem:[%s344 + $0xa0] sm:$0xff]
                  %367 = vst [vmem:[%s345 + $0x50] sm:$0xff] %v366
                  %v368 = vld [vmem:[%s344 + $0xb0] sm:$0xff]
                  %369 = vst [vmem:[%s345 + $0x58] sm:$0xff] %v368
                  %v370 = vld [vmem:[%s344 + $0xc0] sm:$0xff]
                  %371 = vst [vmem:[%s345 + $0x60] sm:$0xff] %v370
                  %v372 = vld [vmem:[%s344 + $0xd0] sm:$0xff]
                  %373 = vst [vmem:[%s345 + $0x68] sm:$0xff] %v372
                  %v374 = vld [vmem:[%s344 + $0xe0] sm:$0xff]
                  %375 = vst [vmem:[%s345 + $0x70] sm:$0xff] %v374
                  %v376 = vld [vmem:[%s344 + $0xf0] sm:$0xff]
                  %377 = vst [vmem:[%s345 + $0x78] sm:$0xff] %v376
                $region94: #{a_call__.7} parent=88 // loop_footer
                  %s343 = sadd.s32 1, %s339
                $region95: #{a_call__.7} parent=88 // loop_footer_branch
                  %338 = sbr.rel target = $region91
                $region96: #{a_call__.7} parent=88 // loop_exit
                  _
              $region89: #{a_call__.7} parent=73 // pred_fallthru
                _
              // Predicated region
              $region97: #{a_call__.7} parent=73 // pred_check
                _
              $region98: #{a_call__.7} parent=73 // pred_check_branch
                %379 = sbr.rel target = $region100
              $region99: #{a_call__.7} parent=73 // pred_region
                _
              $region100: #{a_call__.7} parent=73 // pred_fallthru
                _
            $region74: #{a_call__.7} parent=69 // pred_fallthru
              _
            // Predicated region
            $region75: #{a_call__.7} parent=69 // pred_check
              _
            $region76: #{a_call__.7} parent=69 // pred_check_branch
              %293 = sbr.rel target = $region78
            $region77: #{a_call__.7} parent=69 // pred_region
              %s295 = ssub.s32 256, 1
              loop: start=0, step=1, limit=1
              $region79: #{a_call__.7} parent=77 // loop_pre_header
                _
              $region80: #{a_call__.7} parent=77 // loop_header
                %s297 = sphi 0, %s301
                %p298 = scmp.ge.s32.totalorder %s297, 1
                %s302 = sphi %s287, %s287
                %s303 = sphi %s283, %s283
              $region81: #{a_call__.7} parent=77 // loop_header_branch
                %300 = sbr.rel (%p298) target = $region85
              $region82: #{a_call__.7} parent=77 // loop_body
                %v304 = vld [vmem:[%s302] sm:%s295]
                %305 = vst [vmem:[%s303] sm:%s295] %v304
                %v306 = vld [vmem:[%s302 + $0x10] sm:%s295]
                %307 = vst [vmem:[%s303 + $0x8] sm:%s295] %v306
                %v308 = vld [vmem:[%s302 + $0x20] sm:%s295]
                %309 = vst [vmem:[%s303 + $0x10] sm:%s295] %v308
                %v310 = vld [vmem:[%s302 + $0x30] sm:%s295]
                %311 = vst [vmem:[%s303 + $0x18] sm:%s295] %v310
                %v312 = vld [vmem:[%s302 + $0x40] sm:%s295]
                %313 = vst [vmem:[%s303 + $0x20] sm:%s295] %v312
                %v314 = vld [vmem:[%s302 + $0x50] sm:%s295]
                %315 = vst [vmem:[%s303 + $0x28] sm:%s295] %v314
                %v316 = vld [vmem:[%s302 + $0x60] sm:%s295]
                %317 = vst [vmem:[%s303 + $0x30] sm:%s295] %v316
                %v318 = vld [vmem:[%s302 + $0x70] sm:%s295]
                %319 = vst [vmem:[%s303 + $0x38] sm:%s295] %v318
                %v320 = vld [vmem:[%s302 + $0x80] sm:%s295]
                %321 = vst [vmem:[%s303 + $0x40] sm:%s295] %v320
                %v322 = vld [vmem:[%s302 + $0x90] sm:%s295]
                %323 = vst [vmem:[%s303 + $0x48] sm:%s295] %v322
                %v324 = vld [vmem:[%s302 + $0xa0] sm:%s295]
                %325 = vst [vmem:[%s303 + $0x50] sm:%s295] %v324
                %v326 = vld [vmem:[%s302 + $0xb0] sm:%s295]
                %327 = vst [vmem:[%s303 + $0x58] sm:%s295] %v326
                %v328 = vld [vmem:[%s302 + $0xc0] sm:%s295]
                %329 = vst [vmem:[%s303 + $0x60] sm:%s295] %v328
                %v330 = vld [vmem:[%s302 + $0xd0] sm:%s295]
                %331 = vst [vmem:[%s303 + $0x68] sm:%s295] %v330
                %v332 = vld [vmem:[%s302 + $0xe0] sm:%s295]
                %333 = vst [vmem:[%s303 + $0x70] sm:%s295] %v332
                %v334 = vld [vmem:[%s302 + $0xf0] sm:%s295]
                %335 = vst [vmem:[%s303 + $0x78] sm:%s295] %v334
              $region83: #{a_call__.7} parent=77 // loop_footer
                %s301 = sadd.s32 1, %s297
              $region84: #{a_call__.7} parent=77 // loop_footer_branch
                %296 = sbr.rel target = $region80
              $region85: #{a_call__.7} parent=77 // loop_exit
                _
            $region78: #{a_call__.7} parent=69 // pred_fallthru
              _
          $region70: #{a_call__.7} parent=65 // pred_fallthru
            _
          %380 = vnop
        $region66: #{a_call__.7} parent=23 // pred_fallthru
          _
      $region24: #{a_call__.7} parent=5 // pred_fallthru
        _
      %p381 = scmp.le.s32.totalorder 1, %s10
      %p382 = scmp.lt.s32.totalorder %s10, 5
      %p383 = pnand %p381, %p382
      %p384 = pneg %p383
      // Predicated region
      $region101: #{a_call__.7} parent=5 // pred_check
        _
      $region102: #{a_call__.7} parent=5 // pred_check_branch
        %386 = sbr.rel (%p383) target = $region104
      $region103: #{a_call__.7} parent=5 // pred_region
        %s387 = ssub.s32 %s10, 1
        %s388 = sand.u32 %s37, 1
        %s389 = sand.u32 %s37, 1
        %s390 = smul.addr %s389, 128
        %s391 = scalar_lea.vmem [#allocation4], %s390
        // Predicated region
        $region105: #{a_call__.7} parent=103 // pred_check
          %p392 = pneg %p50
        $region106: #{a_call__.7} parent=103 // pred_check_branch
          %394 = sbr.rel (%p392) target = $region108
        $region107: #{a_call__.7} parent=103 // pred_region
          _
        $region108: #{a_call__.7} parent=103 // pred_fallthru
          _
        %s395 = sand.u32 %s107, 1
        %s396 = sand.u32 %s107, 1
        %s397 = smul.addr %s396, 128
        %s398 = scalar_lea.vmem [#allocation5], %s397
        // Predicated region
        $region109: #{a_call__.7} parent=103 // pred_check
          %p399 = pneg %p120
        $region110: #{a_call__.7} parent=103 // pred_check_branch
          %401 = sbr.rel (%p399) target = $region112
        $region111: #{a_call__.7} parent=103 // pred_region
          _
        $region112: #{a_call__.7} parent=103 // pred_fallthru
          _
        %s402 = sand.u32 %s37, 1
        %s403 = sand.u32 %s37, 1
        %s404 = smul.addr %s403, 128
        %s405 = scalar_lea.vmem [#allocation4], %s404
        %p406 = pneg %p50
        %p407 = pneg %p47
        %p408 = pneg %p71
        %p409 = pneg %p68
        %p410 = pneg %p92
        %p411 = pneg %p89
        %s412 = sand.u32 %s107, 1
        %s413 = sand.u32 %s107, 1
        %s414 = smul.addr %s413, 128
        %s415 = scalar_lea.vmem [#allocation5], %s414
        %p416 = pneg %p120
        %p417 = pneg %p117
        %p418 = pneg %p148
        %p419 = pneg %p145
        %s420 = sand.u32 %s135, 1
        %s421 = sand.u32 %s135, 1
        %s422 = smul.addr %s421, 128
        %s423 = scalar_lea.vmem [#allocation6], %s422
        %v425 = vld [vmem:[%s391] sm:$0xff]
        %v426 = vld [vmem:[%s391 + $0x8] sm:$0xff]
        %v427 = vld [vmem:[%s391 + $0x10] sm:$0xff]
        %v428 = vld [vmem:[%s391 + $0x18] sm:$0xff]
        %v429 = vld [vmem:[%s391 + $0x20] sm:$0xff]
        %v430 = vld [vmem:[%s391 + $0x28] sm:$0xff]
        %v431 = vld [vmem:[%s391 + $0x30] sm:$0xff]
        %v432 = vld [vmem:[%s391 + $0x38] sm:$0xff]
        %v433 = vld [vmem:[%s391 + $0x40] sm:$0xff]
        %v434 = vld [vmem:[%s391 + $0x48] sm:$0xff]
        %v435 = vld [vmem:[%s391 + $0x50] sm:$0xff]
        %v436 = vld [vmem:[%s391 + $0x58] sm:$0xff]
        %v437 = vld [vmem:[%s391 + $0x60] sm:$0xff]
        %v438 = vld [vmem:[%s391 + $0x68] sm:$0xff]
        %v439 = vld [vmem:[%s391 + $0x70] sm:$0xff]
        %v440 = vld [vmem:[%s391 + $0x78] sm:$0xff]
        %v441 = vpack.c.bf16 %v425, %v425
        %v442 = vpack.c.bf16 %v426, %v426
        %v443 = vpack.c.bf16 %v427, %v427
        %v444 = vpack.c.bf16 %v428, %v428
        %v445 = vpack.c.bf16 %v429, %v429
        %v446 = vpack.c.bf16 %v430, %v430
        %v447 = vpack.c.bf16 %v431, %v431
        %v448 = vpack.c.bf16 %v432, %v432
        %v449 = vpack.c.bf16 %v433, %v433
        %v450 = vpack.c.bf16 %v434, %v434
        %v451 = vpack.c.bf16 %v435, %v435
        %v452 = vpack.c.bf16 %v436, %v436
        %v453 = vpack.c.bf16 %v437, %v437
        %v454 = vpack.c.bf16 %v438, %v438
        %v455 = vpack.c.bf16 %v439, %v439
        %v456 = vpack.c.bf16 %v440, %v440
        %457 = vst [vmem:[#allocation2] sm:$0xf] 0
        %458 = vst [vmem:[#allocation2 + $0x4] sm:$0xf] 0
        %459 = vst [vmem:[#allocation2 + $0x8] sm:$0xf] 0
        %s460 = scalar_lea.vmem [#allocation2], 76
        %461 = vst [vmem:[%s460] sm:$0xf] 0
        %462 = vst [vmem:[%s460 + $0x4] sm:$0xf] 0
        %463 = vst [vmem:[%s460 + $0x8] sm:$0xf] 0
        %s464 = scalar_lea.vmem [#allocation2], 12
        %465 = vst [vmem:[%s464] sm:$0xf] %v441
        %466 = vst [vmem:[%s464 + $0x4] sm:$0xf] %v442
        %467 = vst [vmem:[%s464 + $0x8] sm:$0xf] %v443
        %468 = vst [vmem:[%s464 + $0xc] sm:$0xf] %v444
        %469 = vst [vmem:[%s464 + $0x10] sm:$0xf] %v445
        %470 = vst [vmem:[%s464 + $0x14] sm:$0xf] %v446
        %471 = vst [vmem:[%s464 + $0x18] sm:$0xf] %v447
        %472 = vst [vmem:[%s464 + $0x1c] sm:$0xf] %v448
        %473 = vst [vmem:[%s464 + $0x20] sm:$0xf] %v449
        %474 = vst [vmem:[%s464 + $0x24] sm:$0xf] %v450
        %475 = vst [vmem:[%s464 + $0x28] sm:$0xf] %v451
        %476 = vst [vmem:[%s464 + $0x2c] sm:$0xf] %v452
        %477 = vst [vmem:[%s464 + $0x30] sm:$0xf] %v453
        %478 = vst [vmem:[%s464 + $0x34] sm:$0xf] %v454
        %479 = vst [vmem:[%s464 + $0x38] sm:$0xf] %v455
        %480 = vst [vmem:[%s464 + $0x3c] sm:$0xf] %v456
        %v481 = vld [vmem:[#allocation2] sm:$0xf]
        %v482 = vld [vmem:[#allocation2 + $0x4] sm:$0xf]
        %v483 = vld [vmem:[#allocation2 + $0x8] sm:$0xf]
        %v484 = vld [vmem:[#allocation2 + $0xc] sm:$0xf]
        %v485 = vld [vmem:[#allocation2 + $0x10] sm:$0xf]
        %v486 = vld [vmem:[#allocation2 + $0x14] sm:$0xf]
        %v487 = vld [vmem:[#allocation2 + $0x18] sm:$0xf]
        %v488 = vld [vmem:[#allocation2 + $0x1c] sm:$0xf]
        %v489 = vld [vmem:[#allocation2 + $0x20] sm:$0xf]
        %v490 = vld [vmem:[#allocation2 + $0x24] sm:$0xf]
        %v491 = vld [vmem:[#allocation2 + $0x28] sm:$0xf]
        %v492 = vld [vmem:[#allocation2 + $0x2c] sm:$0xf]
        %v493 = vld [vmem:[#allocation2 + $0x30] sm:$0xf]
        %v494 = vld [vmem:[#allocation2 + $0x34] sm:$0xf]
        %v495 = vld [vmem:[#allocation2 + $0x38] sm:$0xf]
        %v496 = vld [vmem:[#allocation2 + $0x3c] sm:$0xf]
        %v497 = vld [vmem:[%s1] sm:$0xf]
        %v498 = vld [vmem:[%s1 + $0x4] sm:$0xf]
        %v499 = vld [vmem:[%s1 + $0x8] sm:$0xf]
        %v500 = vld [vmem:[%s1 + $0xc] sm:$0xf]
        %v501 = vld [vmem:[%s1 + $0x10] sm:$0xf]
        %v502 = vld [vmem:[%s1 + $0x14] sm:$0xf]
        %v503 = vld [vmem:[%s1 + $0x18] sm:$0xf]
        %v504 = vld [vmem:[%s1 + $0x1c] sm:$0xf]
        %v505 = vld [vmem:[%s1 + $0x20] sm:$0xf]
        %v506 = vld [vmem:[%s1 + $0x24] sm:$0xf]
        %v507 = vld [vmem:[%s1 + $0x28] sm:$0xf]
        %v508 = vld [vmem:[%s1 + $0x2c] sm:$0xf]
        %v509 = vld [vmem:[%s1 + $0x30] sm:$0xf]
        %v510 = vld [vmem:[%s1 + $0x34] sm:$0xf]
        %v511 = vld [vmem:[%s1 + $0x38] sm:$0xf]
        %v512 = vld [vmem:[%s1 + $0x3c] sm:$0xf]
        %v529 = vunpack.c.l.b16 %v481
        %v530 = vunpack.c.l.b16 %v482
        %v531 = vunpack.c.l.b16 %v483
        %v532 = vunpack.c.l.b16 %v484
        %v533 = vunpack.c.l.b16 %v485
        %v534 = vunpack.c.l.b16 %v486
        %v535 = vunpack.c.l.b16 %v487
        %v536 = vunpack.c.l.b16 %v488
        %v537 = vunpack.c.l.b16 %v489
        %v538 = vunpack.c.l.b16 %v490
        %v539 = vunpack.c.l.b16 %v491
        %v540 = vunpack.c.l.b16 %v492
        %v541 = vunpack.c.l.b16 %v493
        %v542 = vunpack.c.l.b16 %v494
        %v543 = vunpack.c.l.b16 %v495
        %v544 = vunpack.c.l.b16 %v496
        %v545 = vpack.c.b16 %v530, %v529
        %v546 = vpack.c.b16 %v532, %v531
        %v547 = vpack.c.b16 %v534, %v533
        %v548 = vpack.c.b16 %v536, %v535
        %v549 = vpack.c.b16 %v538, %v537
        %v550 = vpack.c.b16 %v540, %v539
        %v551 = vpack.c.b16 %v542, %v541
        %v552 = vpack.c.b16 %v544, %v543
        %v577 = vunpack.c.l.b16 %v497
        %v578 = vunpack.c.l.b16 %v498
        %v579 = vunpack.c.l.b16 %v499
        %v580 = vunpack.c.l.b16 %v500
        %v581 = vunpack.c.l.b16 %v501
        %v582 = vunpack.c.l.b16 %v502
        %v583 = vunpack.c.l.b16 %v503
        %v584 = vunpack.c.l.b16 %v504
        %v585 = vunpack.c.l.b16 %v505
        %v586 = vunpack.c.l.b16 %v506
        %v587 = vunpack.c.l.b16 %v507
        %v588 = vunpack.c.l.b16 %v508
        %v589 = vunpack.c.l.b16 %v509
        %v590 = vunpack.c.l.b16 %v510
        %v591 = vunpack.c.l.b16 %v511
        %v592 = vunpack.c.l.b16 %v512
        %v593 = vpack.c.b16 %v578, %v577
        %v594 = vpack.c.b16 %v580, %v579
        %v595 = vpack.c.b16 %v582, %v581
        %v596 = vpack.c.b16 %v584, %v583
        %v597 = vpack.c.b16 %v586, %v585
        %v598 = vpack.c.b16 %v588, %v587
        %v599 = vpack.c.b16 %v590, %v589
        %v600 = vpack.c.b16 %v592, %v591
        %609 = vmatpush.bf16.msra.mxu0 %v600
        %610 = vmatpush.bf16.msra.mxu0 %v599
        %611 = vmatpush.bf16.msra.mxu0 %v598
        %612 = vmatpush.bf16.msra.mxu0 %v597
        %613 = vmatpush.bf16.msra.mxu0 %v596
        %614 = vmatpush.bf16.msra.mxu0 %v595
        %615 = vmatpush.bf16.msra.mxu0 %v594
        %616 = vmatpush.bf16.msra.mxu0 %v593
        %617 = vmatmul.bf16.gmra.mxu0 %v545
        %v618 = vpop.f32.mrf.mxu0
        %v619 = vadd.f32 0.0, %v618
        %v620 = vpop.f32.mrf.mxu0
        %v621 = vadd.f32 0.0, %v620
        %622 = vmatmul.bf16.gmra.mxu0 %v546
        %v623 = vpop.f32.mrf.mxu0
        %v624 = vadd.f32 0.0, %v623
        %v625 = vpop.f32.mrf.mxu0
        %v626 = vadd.f32 0.0, %v625
        %627 = vmatmul.bf16.gmra.mxu0 %v547
        %v628 = vpop.f32.mrf.mxu0
        %v629 = vadd.f32 0.0, %v628
        %v630 = vpop.f32.mrf.mxu0
        %v631 = vadd.f32 0.0, %v630
        %632 = vmatmul.bf16.gmra.mxu0 %v548
        %v633 = vpop.f32.mrf.mxu0
        %v634 = vadd.f32 0.0, %v633
        %v635 = vpop.f32.mrf.mxu0
        %v636 = vadd.f32 0.0, %v635
        %637 = vmatmul.bf16.gmra.mxu0 %v549
        %v638 = vpop.f32.mrf.mxu0
        %v639 = vadd.f32 0.0, %v638
        %v640 = vpop.f32.mrf.mxu0
        %v641 = vadd.f32 0.0, %v640
        %642 = vmatmul.bf16.gmra.mxu0 %v550
        %v643 = vpop.f32.mrf.mxu0
        %v644 = vadd.f32 0.0, %v643
        %v645 = vpop.f32.mrf.mxu0
        %v646 = vadd.f32 0.0, %v645
        %647 = vmatmul.bf16.gmra.mxu0 %v551
        %v648 = vpop.f32.mrf.mxu0
        %v649 = vadd.f32 0.0, %v648
        %v650 = vpop.f32.mrf.mxu0
        %v651 = vadd.f32 0.0, %v650
        %652 = vmatmul.bf16.gmra.mxu0 %v552
        %v653 = vpop.f32.mrf.mxu0
        %v654 = vadd.f32 0.0, %v653
        %v655 = vpop.f32.mrf.mxu0
        %v656 = vadd.f32 0.0, %v655
        %657 = vdwg.mxu0
        %658 = vst [vmem:[#allocation3] sm:$0xff] %v619
        %659 = vst [vmem:[#allocation3 + $0x8] sm:$0xff] %v621
        %660 = vst [vmem:[#allocation3 + $0x10] sm:$0xff] %v624
        %661 = vst [vmem:[#allocation3 + $0x18] sm:$0xff] %v626
        %662 = vst [vmem:[#allocation3 + $0x20] sm:$0xff] %v629
        %663 = vst [vmem:[#allocation3 + $0x28] sm:$0xff] %v631
        %664 = vst [vmem:[#allocation3 + $0x30] sm:$0xff] %v634
        %665 = vst [vmem:[#allocation3 + $0x38] sm:$0xff] %v636
        %666 = vst [vmem:[#allocation3 + $0x40] sm:$0xff] %v639
        %667 = vst [vmem:[#allocation3 + $0x48] sm:$0xff] %v641
        %668 = vst [vmem:[#allocation3 + $0x50] sm:$0xff] %v644
        %669 = vst [vmem:[#allocation3 + $0x58] sm:$0xff] %v646
        %670 = vst [vmem:[#allocation3 + $0x60] sm:$0xff] %v649
        %671 = vst [vmem:[#allocation3 + $0x68] sm:$0xff] %v651
        %672 = vst [vmem:[#allocation3 + $0x70] sm:$0xff] %v654
        %673 = vst [vmem:[#allocation3 + $0x78] sm:$0xff] %v656
        %s674 = scalar_lea.vmem [#allocation2], 4
        %v675 = vld [vmem:[%s674] sm:$0xf]
        %v676 = vld [vmem:[%s674 + $0x4] sm:$0xf]
        %v677 = vld [vmem:[%s674 + $0x8] sm:$0xf]
        %v678 = vld [vmem:[%s674 + $0xc] sm:$0xf]
        %v679 = vld [vmem:[%s674 + $0x10] sm:$0xf]
        %v680 = vld [vmem:[%s674 + $0x14] sm:$0xf]
        %v681 = vld [vmem:[%s674 + $0x18] sm:$0xf]
        %v682 = vld [vmem:[%s674 + $0x1c] sm:$0xf]
        %v683 = vld [vmem:[%s674 + $0x20] sm:$0xf]
        %v684 = vld [vmem:[%s674 + $0x24] sm:$0xf]
        %v685 = vld [vmem:[%s674 + $0x28] sm:$0xf]
        %v686 = vld [vmem:[%s674 + $0x2c] sm:$0xf]
        %v687 = vld [vmem:[%s674 + $0x30] sm:$0xf]
        %v688 = vld [vmem:[%s674 + $0x34] sm:$0xf]
        %v689 = vld [vmem:[%s674 + $0x38] sm:$0xf]
        %v690 = vld [vmem:[%s674 + $0x3c] sm:$0xf]
        %s691 = scalar_lea.vmem %s1, 64
        %v692 = vld [vmem:[%s691] sm:$0xf]
        %v693 = vld [vmem:[%s691 + $0x4] sm:$0xf]
        %v694 = vld [vmem:[%s691 + $0x8] sm:$0xf]
        %v695 = vld [vmem:[%s691 + $0xc] sm:$0xf]
        %v696 = vld [vmem:[%s691 + $0x10] sm:$0xf]
        %v697 = vld [vmem:[%s691 + $0x14] sm:$0xf]
        %v698 = vld [vmem:[%s691 + $0x18] sm:$0xf]
        %v699 = vld [vmem:[%s691 + $0x1c] sm:$0xf]
        %v700 = vld [vmem:[%s691 + $0x20] sm:$0xf]
        %v701 = vld [vmem:[%s691 + $0x24] sm:$0xf]
        %v702 = vld [vmem:[%s691 + $0x28] sm:$0xf]
        %v703 = vld [vmem:[%s691 + $0x2c] sm:$0xf]
        %v704 = vld [vmem:[%s691 + $0x30] sm:$0xf]
        %v705 = vld [vmem:[%s691 + $0x34] sm:$0xf]
        %v706 = vld [vmem:[%s691 + $0x38] sm:$0xf]
        %v707 = vld [vmem:[%s691 + $0x3c] sm:$0xf]
        %v724 = vunpack.c.l.b16 %v675
        %v725 = vunpack.c.l.b16 %v676
        %v726 = vunpack.c.l.b16 %v677
        %v727 = vunpack.c.l.b16 %v678
        %v728 = vunpack.c.l.b16 %v679
        %v729 = vunpack.c.l.b16 %v680
        %v730 = vunpack.c.l.b16 %v681
        %v731 = vunpack.c.l.b16 %v682
        %v732 = vunpack.c.l.b16 %v683
        %v733 = vunpack.c.l.b16 %v684
        %v734 = vunpack.c.l.b16 %v685
        %v735 = vunpack.c.l.b16 %v686
        %v736 = vunpack.c.l.b16 %v687
        %v737 = vunpack.c.l.b16 %v688
        %v738 = vunpack.c.l.b16 %v689
        %v739 = vunpack.c.l.b16 %v690
        %v740 = vpack.c.b16 %v725, %v724
        %v741 = vpack.c.b16 %v727, %v726
        %v742 = vpack.c.b16 %v729, %v728
        %v743 = vpack.c.b16 %v731, %v730
        %v744 = vpack.c.b16 %v733, %v732
        %v745 = vpack.c.b16 %v735, %v734
        %v746 = vpack.c.b16 %v737, %v736
        %v747 = vpack.c.b16 %v739, %v738
        %v772 = vunpack.c.l.b16 %v692
        %v773 = vunpack.c.l.b16 %v693
        %v774 = vunpack.c.l.b16 %v694
        %v775 = vunpack.c.l.b16 %v695
        %v776 = vunpack.c.l.b16 %v696
        %v777 = vunpack.c.l.b16 %v697
        %v778 = vunpack.c.l.b16 %v698
        %v779 = vunpack.c.l.b16 %v699
        %v780 = vunpack.c.l.b16 %v700
        %v781 = vunpack.c.l.b16 %v701
        %v782 = vunpack.c.l.b16 %v702
        %v783 = vunpack.c.l.b16 %v703
        %v784 = vunpack.c.l.b16 %v704
        %v785 = vunpack.c.l.b16 %v705
        %v786 = vunpack.c.l.b16 %v706
        %v787 = vunpack.c.l.b16 %v707
        %v788 = vpack.c.b16 %v773, %v772
        %v789 = vpack.c.b16 %v775, %v774
        %v790 = vpack.c.b16 %v777, %v776
        %v791 = vpack.c.b16 %v779, %v778
        %v792 = vpack.c.b16 %v781, %v780
        %v793 = vpack.c.b16 %v783, %v782
        %v794 = vpack.c.b16 %v785, %v784
        %v795 = vpack.c.b16 %v787, %v786
        %804 = vmatpush.bf16.msra.mxu0 %v795
        %805 = vmatpush.bf16.msra.mxu0 %v794
        %806 = vmatpush.bf16.msra.mxu0 %v793
        %807 = vmatpush.bf16.msra.mxu0 %v792
        %808 = vmatpush.bf16.msra.mxu0 %v791
        %809 = vmatpush.bf16.msra.mxu0 %v790
        %810 = vmatpush.bf16.msra.mxu0 %v789
        %811 = vmatpush.bf16.msra.mxu0 %v788
        %812 = vmatmul.bf16.gmra.mxu0 %v740
        %v813 = vpop.f32.mrf.mxu0
        %v814 = vadd.f32 0.0, %v813
        %v815 = vpop.f32.mrf.mxu0
        %v816 = vadd.f32 0.0, %v815
        %817 = vmatmul.bf16.gmra.mxu0 %v741
        %v818 = vpop.f32.mrf.mxu0
        %v819 = vadd.f32 0.0, %v818
        %v820 = vpop.f32.mrf.mxu0
        %v821 = vadd.f32 0.0, %v820
        %822 = vmatmul.bf16.gmra.mxu0 %v742
        %v823 = vpop.f32.mrf.mxu0
        %v824 = vadd.f32 0.0, %v823
        %v825 = vpop.f32.mrf.mxu0
        %v826 = vadd.f32 0.0, %v825
        %827 = vmatmul.bf16.gmra.mxu0 %v743
        %v828 = vpop.f32.mrf.mxu0
        %v829 = vadd.f32 0.0, %v828
        %v830 = vpop.f32.mrf.mxu0
        %v831 = vadd.f32 0.0, %v830
        %832 = vmatmul.bf16.gmra.mxu0 %v744
        %v833 = vpop.f32.mrf.mxu0
        %v834 = vadd.f32 0.0, %v833
        %v835 = vpop.f32.mrf.mxu0
        %v836 = vadd.f32 0.0, %v835
        %837 = vmatmul.bf16.gmra.mxu0 %v745
        %v838 = vpop.f32.mrf.mxu0
        %v839 = vadd.f32 0.0, %v838
        %v840 = vpop.f32.mrf.mxu0
        %v841 = vadd.f32 0.0, %v840
        %842 = vmatmul.bf16.gmra.mxu0 %v746
        %v843 = vpop.f32.mrf.mxu0
        %v844 = vadd.f32 0.0, %v843
        %v845 = vpop.f32.mrf.mxu0
        %v846 = vadd.f32 0.0, %v845
        %847 = vmatmul.bf16.gmra.mxu0 %v747
        %v848 = vpop.f32.mrf.mxu0
        %v849 = vadd.f32 0.0, %v848
        %v850 = vpop.f32.mrf.mxu0
        %v851 = vadd.f32 0.0, %v850
        %852 = vdwg.mxu0
        %v853 = vld [vmem:[#allocation3] sm:$0xff]
        %v854 = vld [vmem:[#allocation3 + $0x8] sm:$0xff]
        %v855 = vld [vmem:[#allocation3 + $0x10] sm:$0xff]
        %v856 = vld [vmem:[#allocation3 + $0x18] sm:$0xff]
        %v857 = vld [vmem:[#allocation3 + $0x20] sm:$0xff]
        %v858 = vld [vmem:[#allocation3 + $0x28] sm:$0xff]
        %v859 = vld [vmem:[#allocation3 + $0x30] sm:$0xff]
        %v860 = vld [vmem:[#allocation3 + $0x38] sm:$0xff]
        %v861 = vld [vmem:[#allocation3 + $0x40] sm:$0xff]
        %v862 = vld [vmem:[#allocation3 + $0x48] sm:$0xff]
        %v863 = vld [vmem:[#allocation3 + $0x50] sm:$0xff]
        %v864 = vld [vmem:[#allocation3 + $0x58] sm:$0xff]
        %v865 = vld [vmem:[#allocation3 + $0x60] sm:$0xff]
        %v866 = vld [vmem:[#allocation3 + $0x68] sm:$0xff]
        %v867 = vld [vmem:[#allocation3 + $0x70] sm:$0xff]
        %v868 = vld [vmem:[#allocation3 + $0x78] sm:$0xff]
        %v869 = vadd.f32 %v853, %v814
        %v870 = vadd.f32 %v854, %v816
        %v871 = vadd.f32 %v855, %v819
        %v872 = vadd.f32 %v856, %v821
        %v873 = vadd.f32 %v857, %v824
        %v874 = vadd.f32 %v858, %v826
        %v875 = vadd.f32 %v859, %v829
        %v876 = vadd.f32 %v860, %v831
        %v877 = vadd.f32 %v861, %v834
        %v878 = vadd.f32 %v862, %v836
        %v879 = vadd.f32 %v863, %v839
        %v880 = vadd.f32 %v864, %v841
        %v881 = vadd.f32 %v865, %v844
        %v882 = vadd.f32 %v866, %v846
        %v883 = vadd.f32 %v867, %v849
        %v884 = vadd.f32 %v868, %v851
        %885 = vst [vmem:[#allocation3] sm:$0xff] %v869
        %886 = vst [vmem:[#allocation3 + $0x8] sm:$0xff] %v870
        %887 = vst [vmem:[#allocation3 + $0x10] sm:$0xff] %v871
        %888 = vst [vmem:[#allocation3 + $0x18] sm:$0xff] %v872
        %889 = vst [vmem:[#allocation3 + $0x20] sm:$0xff] %v873
        %890 = vst [vmem:[#allocation3 + $0x28] sm:$0xff] %v874
        %891 = vst [vmem:[#allocation3 + $0x30] sm:$0xff] %v875
        %892 = vst [vmem:[#allocation3 + $0x38] sm:$0xff] %v876
        %893 = vst [vmem:[#allocation3 + $0x40] sm:$0xff] %v877
        %894 = vst [vmem:[#allocation3 + $0x48] sm:$0xff] %v878
        %895 = vst [vmem:[#allocation3 + $0x50] sm:$0xff] %v879
        %896 = vst [vmem:[#allocation3 + $0x58] sm:$0xff] %v880
        %897 = vst [vmem:[#allocation3 + $0x60] sm:$0xff] %v881
        %898 = vst [vmem:[#allocation3 + $0x68] sm:$0xff] %v882
        %899 = vst [vmem:[#allocation3 + $0x70] sm:$0xff] %v883
        %900 = vst [vmem:[#allocation3 + $0x78] sm:$0xff] %v884
        %s901 = scalar_lea.vmem [#allocation2], 8
        %v902 = vld [vmem:[%s901] sm:$0xf]
        %v903 = vld [vmem:[%s901 + $0x4] sm:$0xf]
        %v904 = vld [vmem:[%s901 + $0x8] sm:$0xf]
        %v905 = vld [vmem:[%s901 + $0xc] sm:$0xf]
        %v906 = vld [vmem:[%s901 + $0x10] sm:$0xf]
        %v907 = vld [vmem:[%s901 + $0x14] sm:$0xf]
        %v908 = vld [vmem:[%s901 + $0x18] sm:$0xf]
        %v909 = vld [vmem:[%s901 + $0x1c] sm:$0xf]
        %v910 = vld [vmem:[%s901 + $0x20] sm:$0xf]
        %v911 = vld [vmem:[%s901 + $0x24] sm:$0xf]
        %v912 = vld [vmem:[%s901 + $0x28] sm:$0xf]
        %v913 = vld [vmem:[%s901 + $0x2c] sm:$0xf]
        %v914 = vld [vmem:[%s901 + $0x30] sm:$0xf]
        %v915 = vld [vmem:[%s901 + $0x34] sm:$0xf]
        %v916 = vld [vmem:[%s901 + $0x38] sm:$0xf]
        %v917 = vld [vmem:[%s901 + $0x3c] sm:$0xf]
        %s918 = scalar_lea.vmem %s1, 128
        %v919 = vld [vmem:[%s918] sm:$0xf]
        %v920 = vld [vmem:[%s918 + $0x4] sm:$0xf]
        %v921 = vld [vmem:[%s918 + $0x8] sm:$0xf]
        %v922 = vld [vmem:[%s918 + $0xc] sm:$0xf]
        %v923 = vld [vmem:[%s918 + $0x10] sm:$0xf]
        %v924 = vld [vmem:[%s918 + $0x14] sm:$0xf]
        %v925 = vld [vmem:[%s918 + $0x18] sm:$0xf]
        %v926 = vld [vmem:[%s918 + $0x1c] sm:$0xf]
        %v927 = vld [vmem:[%s918 + $0x20] sm:$0xf]
        %v928 = vld [vmem:[%s918 + $0x24] sm:$0xf]
        %v929 = vld [vmem:[%s918 + $0x28] sm:$0xf]
        %v930 = vld [vmem:[%s918 + $0x2c] sm:$0xf]
        %v931 = vld [vmem:[%s918 + $0x30] sm:$0xf]
        %v932 = vld [vmem:[%s918 + $0x34] sm:$0xf]
        %v933 = vld [vmem:[%s918 + $0x38] sm:$0xf]
        %v934 = vld [vmem:[%s918 + $0x3c] sm:$0xf]
        %v951 = vunpack.c.l.b16 %v902
        %v952 = vunpack.c.l.b16 %v903
        %v953 = vunpack.c.l.b16 %v904
        %v954 = vunpack.c.l.b16 %v905
        %v955 = vunpack.c.l.b16 %v906
        %v956 = vunpack.c.l.b16 %v907
        %v957 = vunpack.c.l.b16 %v908
        %v958 = vunpack.c.l.b16 %v909
        %v959 = vunpack.c.l.b16 %v910
        %v960 = vunpack.c.l.b16 %v911
        %v961 = vunpack.c.l.b16 %v912
        %v962 = vunpack.c.l.b16 %v913
        %v963 = vunpack.c.l.b16 %v914
        %v964 = vunpack.c.l.b16 %v915
        %v965 = vunpack.c.l.b16 %v916
        %v966 = vunpack.c.l.b16 %v917
        %v967 = vpack.c.b16 %v952, %v951
        %v968 = vpack.c.b16 %v954, %v953
        %v969 = vpack.c.b16 %v956, %v955
        %v970 = vpack.c.b16 %v958, %v957
        %v971 = vpack.c.b16 %v960, %v959
        %v972 = vpack.c.b16 %v962, %v961
        %v973 = vpack.c.b16 %v964, %v963
        %v974 = vpack.c.b16 %v966, %v965
        %v999 = vunpack.c.l.b16 %v919
        %v1000 = vunpack.c.l.b16 %v920
        %v1001 = vunpack.c.l.b16 %v921
        %v1002 = vunpack.c.l.b16 %v922
        %v1003 = vunpack.c.l.b16 %v923
        %v1004 = vunpack.c.l.b16 %v924
        %v1005 = vunpack.c.l.b16 %v925
        %v1006 = vunpack.c.l.b16 %v926
        %v1007 = vunpack.c.l.b16 %v927
        %v1008 = vunpack.c.l.b16 %v928
        %v1009 = vunpack.c.l.b16 %v929
        %v1010 = vunpack.c.l.b16 %v930
        %v1011 = vunpack.c.l.b16 %v931
        %v1012 = vunpack.c.l.b16 %v932
        %v1013 = vunpack.c.l.b16 %v933
        %v1014 = vunpack.c.l.b16 %v934
        %v1015 = vpack.c.b16 %v1000, %v999
        %v1016 = vpack.c.b16 %v1002, %v1001
        %v1017 = vpack.c.b16 %v1004, %v1003
        %v1018 = vpack.c.b16 %v1006, %v1005
        %v1019 = vpack.c.b16 %v1008, %v1007
        %v1020 = vpack.c.b16 %v1010, %v1009
        %v1021 = vpack.c.b16 %v1012, %v1011
        %v1022 = vpack.c.b16 %v1014, %v1013
        %1031 = vmatpush.bf16.msra.mxu0 %v1022
        %1032 = vmatpush.bf16.msra.mxu0 %v1021
        %1033 = vmatpush.bf16.msra.mxu0 %v1020
        %1034 = vmatpush.bf16.msra.mxu0 %v1019
        %1035 = vmatpush.bf16.msra.mxu0 %v1018
        %1036 = vmatpush.bf16.msra.mxu0 %v1017
        %1037 = vmatpush.bf16.msra.mxu0 %v1016
        %1038 = vmatpush.bf16.msra.mxu0 %v1015
        %1039 = vmatmul.bf16.gmra.mxu0 %v967
        %v1040 = vpop.f32.mrf.mxu0
        %v1041 = vadd.f32 0.0, %v1040
        %v1042 = vpop.f32.mrf.mxu0
        %v1043 = vadd.f32 0.0, %v1042
        %1044 = vmatmul.bf16.gmra.mxu0 %v968
        %v1045 = vpop.f32.mrf.mxu0
        %v1046 = vadd.f32 0.0, %v1045
        %v1047 = vpop.f32.mrf.mxu0
        %v1048 = vadd.f32 0.0, %v1047
        %1049 = vmatmul.bf16.gmra.mxu0 %v969
        %v1050 = vpop.f32.mrf.mxu0
        %v1051 = vadd.f32 0.0, %v1050
        %v1052 = vpop.f32.mrf.mxu0
        %v1053 = vadd.f32 0.0, %v1052
        %1054 = vmatmul.bf16.gmra.mxu0 %v970
        %v1055 = vpop.f32.mrf.mxu0
        %v1056 = vadd.f32 0.0, %v1055
        %v1057 = vpop.f32.mrf.mxu0
        %v1058 = vadd.f32 0.0, %v1057
        %1059 = vmatmul.bf16.gmra.mxu0 %v971
        %v1060 = vpop.f32.mrf.mxu0
        %v1061 = vadd.f32 0.0, %v1060
        %v1062 = vpop.f32.mrf.mxu0
        %v1063 = vadd.f32 0.0, %v1062
        %1064 = vmatmul.bf16.gmra.mxu0 %v972
        %v1065 = vpop.f32.mrf.mxu0
        %v1066 = vadd.f32 0.0, %v1065
        %v1067 = vpop.f32.mrf.mxu0
        %v1068 = vadd.f32 0.0, %v1067
        %1069 = vmatmul.bf16.gmra.mxu0 %v973
        %v1070 = vpop.f32.mrf.mxu0
        %v1071 = vadd.f32 0.0, %v1070
        %v1072 = vpop.f32.mrf.mxu0
        %v1073 = vadd.f32 0.0, %v1072
        %1074 = vmatmul.bf16.gmra.mxu0 %v974
        %v1075 = vpop.f32.mrf.mxu0
        %v1076 = vadd.f32 0.0, %v1075
        %v1077 = vpop.f32.mrf.mxu0
        %v1078 = vadd.f32 0.0, %v1077
        %1079 = vdwg.mxu0
        %v1080 = vld [vmem:[#allocation3] sm:$0xff]
        %v1081 = vld [vmem:[#allocation3 + $0x8] sm:$0xff]
        %v1082 = vld [vmem:[#allocation3 + $0x10] sm:$0xff]
        %v1083 = vld [vmem:[#allocation3 + $0x18] sm:$0xff]
        %v1084 = vld [vmem:[#allocation3 + $0x20] sm:$0xff]
        %v1085 = vld [vmem:[#allocation3 + $0x28] sm:$0xff]
        %v1086 = vld [vmem:[#allocation3 + $0x30] sm:$0xff]
        %v1087 = vld [vmem:[#allocation3 + $0x38] sm:$0xff]
        %v1088 = vld [vmem:[#allocation3 + $0x40] sm:$0xff]
        %v1089 = vld [vmem:[#allocation3 + $0x48] sm:$0xff]
        %v1090 = vld [vmem:[#allocation3 + $0x50] sm:$0xff]
        %v1091 = vld [vmem:[#allocation3 + $0x58] sm:$0xff]
        %v1092 = vld [vmem:[#allocation3 + $0x60] sm:$0xff]
        %v1093 = vld [vmem:[#allocation3 + $0x68] sm:$0xff]
        %v1094 = vld [vmem:[#allocation3 + $0x70] sm:$0xff]
        %v1095 = vld [vmem:[#allocation3 + $0x78] sm:$0xff]
        %v1096 = vadd.f32 %v1080, %v1041
        %v1097 = vadd.f32 %v1081, %v1043
        %v1098 = vadd.f32 %v1082, %v1046
        %v1099 = vadd.f32 %v1083, %v1048
        %v1100 = vadd.f32 %v1084, %v1051
        %v1101 = vadd.f32 %v1085, %v1053
        %v1102 = vadd.f32 %v1086, %v1056
        %v1103 = vadd.f32 %v1087, %v1058
        %v1104 = vadd.f32 %v1088, %v1061
        %v1105 = vadd.f32 %v1089, %v1063
        %v1106 = vadd.f32 %v1090, %v1066
        %v1107 = vadd.f32 %v1091, %v1068
        %v1108 = vadd.f32 %v1092, %v1071
        %v1109 = vadd.f32 %v1093, %v1073
        %v1110 = vadd.f32 %v1094, %v1076
        %v1111 = vadd.f32 %v1095, %v1078
        %1112 = vst [vmem:[#allocation3] sm:$0xff] %v1096
        %1113 = vst [vmem:[#allocation3 + $0x8] sm:$0xff] %v1097
        %1114 = vst [vmem:[#allocation3 + $0x10] sm:$0xff] %v1098
        %1115 = vst [vmem:[#allocation3 + $0x18] sm:$0xff] %v1099
        %1116 = vst [vmem:[#allocation3 + $0x20] sm:$0xff] %v1100
        %1117 = vst [vmem:[#allocation3 + $0x28] sm:$0xff] %v1101
        %1118 = vst [vmem:[#allocation3 + $0x30] sm:$0xff] %v1102
        %1119 = vst [vmem:[#allocation3 + $0x38] sm:$0xff] %v1103
        %1120 = vst [vmem:[#allocation3 + $0x40] sm:$0xff] %v1104
        %1121 = vst [vmem:[#allocation3 + $0x48] sm:$0xff] %v1105
        %1122 = vst [vmem:[#allocation3 + $0x50] sm:$0xff] %v1106
        %1123 = vst [vmem:[#allocation3 + $0x58] sm:$0xff] %v1107
        %1124 = vst [vmem:[#allocation3 + $0x60] sm:$0xff] %v1108
        %1125 = vst [vmem:[#allocation3 + $0x68] sm:$0xff] %v1109
        %1126 = vst [vmem:[#allocation3 + $0x70] sm:$0xff] %v1110
        %1127 = vst [vmem:[#allocation3 + $0x78] sm:$0xff] %v1111
        %v1128 = vld [vmem:[%s464] sm:$0xf]
        %v1129 = vld [vmem:[%s464 + $0x4] sm:$0xf]
        %v1130 = vld [vmem:[%s464 + $0x8] sm:$0xf]
        %v1131 = vld [vmem:[%s464 + $0xc] sm:$0xf]
        %v1132 = vld [vmem:[%s464 + $0x10] sm:$0xf]
        %v1133 = vld [vmem:[%s464 + $0x14] sm:$0xf]
        %v1134 = vld [vmem:[%s464 + $0x18] sm:$0xf]
        %v1135 = vld [vmem:[%s464 + $0x1c] sm:$0xf]
        %v1136 = vld [vmem:[%s464 + $0x20] sm:$0xf]
        %v1137 = vld [vmem:[%s464 + $0x24] sm:$0xf]
        %v1138 = vld [vmem:[%s464 + $0x28] sm:$0xf]
        %v1139 = vld [vmem:[%s464 + $0x2c] sm:$0xf]
        %v1140 = vld [vmem:[%s464 + $0x30] sm:$0xf]
        %v1141 = vld [vmem:[%s464 + $0x34] sm:$0xf]
        %v1142 = vld [vmem:[%s464 + $0x38] sm:$0xf]
        %v1143 = vld [vmem:[%s464 + $0x3c] sm:$0xf]
        %s1144 = scalar_lea.vmem %s1, 192
        %v1145 = vld [vmem:[%s1144] sm:$0xf]
        %v1146 = vld [vmem:[%s1144 + $0x4] sm:$0xf]
        %v1147 = vld [vmem:[%s1144 + $0x8] sm:$0xf]
        %v1148 = vld [vmem:[%s1144 + $0xc] sm:$0xf]
        %v1149 = vld [vmem:[%s1144 + $0x10] sm:$0xf]
        %v1150 = vld [vmem:[%s1144 + $0x14] sm:$0xf]
        %v1151 = vld [vmem:[%s1144 + $0x18] sm:$0xf]
        %v1152 = vld [vmem:[%s1144 + $0x1c] sm:$0xf]
        %v1153 = vld [vmem:[%s1144 + $0x20] sm:$0xf]
        %v1154 = vld [vmem:[%s1144 + $0x24] sm:$0xf]
        %v1155 = vld [vmem:[%s1144 + $0x28] sm:$0xf]
        %v1156 = vld [vmem:[%s1144 + $0x2c] sm:$0xf]
        %v1157 = vld [vmem:[%s1144 + $0x30] sm:$0xf]
        %v1158 = vld [vmem:[%s1144 + $0x34] sm:$0xf]
        %v1159 = vld [vmem:[%s1144 + $0x38] sm:$0xf]
        %v1160 = vld [vmem:[%s1144 + $0x3c] sm:$0xf]
        %v1177 = vunpack.c.l.b16 %v1128
        %v1178 = vunpack.c.l.b16 %v1129
        %v1179 = vunpack.c.l.b16 %v1130
        %v1180 = vunpack.c.l.b16 %v1131
        %v1181 = vunpack.c.l.b16 %v1132
        %v1182 = vunpack.c.l.b16 %v1133
        %v1183 = vunpack.c.l.b16 %v1134
        %v1184 = vunpack.c.l.b16 %v1135
        %v1185 = vunpack.c.l.b16 %v1136
        %v1186 = vunpack.c.l.b16 %v1137
        %v1187 = vunpack.c.l.b16 %v1138
        %v1188 = vunpack.c.l.b16 %v1139
        %v1189 = vunpack.c.l.b16 %v1140
        %v1190 = vunpack.c.l.b16 %v1141
        %v1191 = vunpack.c.l.b16 %v1142
        %v1192 = vunpack.c.l.b16 %v1143
        %v1193 = vpack.c.b16 %v1178, %v1177
        %v1194 = vpack.c.b16 %v1180, %v1179
        %v1195 = vpack.c.b16 %v1182, %v1181
        %v1196 = vpack.c.b16 %v1184, %v1183
        %v1197 = vpack.c.b16 %v1186, %v1185
        %v1198 = vpack.c.b16 %v1188, %v1187
        %v1199 = vpack.c.b16 %v1190, %v1189
        %v1200 = vpack.c.b16 %v1192, %v1191
        %v1225 = vunpack.c.l.b16 %v1145
        %v1226 = vunpack.c.l.b16 %v1146
        %v1227 = vunpack.c.l.b16 %v1147
        %v1228 = vunpack.c.l.b16 %v1148
        %v1229 = vunpack.c.l.b16 %v1149
        %v1230 = vunpack.c.l.b16 %v1150
        %v1231 = vunpack.c.l.b16 %v1151
        %v1232 = vunpack.c.l.b16 %v1152
        %v1233 = vunpack.c.l.b16 %v1153
        %v1234 = vunpack.c.l.b16 %v1154
        %v1235 = vunpack.c.l.b16 %v1155
        %v1236 = vunpack.c.l.b16 %v1156
        %v1237 = vunpack.c.l.b16 %v1157
        %v1238 = vunpack.c.l.b16 %v1158
        %v1239 = vunpack.c.l.b16 %v1159
        %v1240 = vunpack.c.l.b16 %v1160
        %v1241 = vpack.c.b16 %v1226, %v1225
        %v1242 = vpack.c.b16 %v1228, %v1227
        %v1243 = vpack.c.b16 %v1230, %v1229
        %v1244 = vpack.c.b16 %v1232, %v1231
        %v1245 = vpack.c.b16 %v1234, %v1233
        %v1246 = vpack.c.b16 %v1236, %v1235
        %v1247 = vpack.c.b16 %v1238, %v1237
        %v1248 = vpack.c.b16 %v1240, %v1239
        %1257 = vmatpush.bf16.msra.mxu0 %v1248
        %1258 = vmatpush.bf16.msra.mxu0 %v1247
        %1259 = vmatpush.bf16.msra.mxu0 %v1246
        %1260 = vmatpush.bf16.msra.mxu0 %v1245
        %1261 = vmatpush.bf16.msra.mxu0 %v1244
        %1262 = vmatpush.bf16.msra.mxu0 %v1243
        %1263 = vmatpush.bf16.msra.mxu0 %v1242
        %1264 = vmatpush.bf16.msra.mxu0 %v1241
        %1265 = vmatmul.bf16.gmra.mxu0 %v1193
        %v1266 = vpop.f32.mrf.mxu0
        %v1267 = vadd.f32 0.0, %v1266
        %v1268 = vpop.f32.mrf.mxu0
        %v1269 = vadd.f32 0.0, %v1268
        %1270 = vmatmul.bf16.gmra.mxu0 %v1194
        %v1271 = vpop.f32.mrf.mxu0
        %v1272 = vadd.f32 0.0, %v1271
        %v1273 = vpop.f32.mrf.mxu0
        %v1274 = vadd.f32 0.0, %v1273
        %1275 = vmatmul.bf16.gmra.mxu0 %v1195
        %v1276 = vpop.f32.mrf.mxu0
        %v1277 = vadd.f32 0.0, %v1276
        %v1278 = vpop.f32.mrf.mxu0
        %v1279 = vadd.f32 0.0, %v1278
        %1280 = vmatmul.bf16.gmra.mxu0 %v1196
        %v1281 = vpop.f32.mrf.mxu0
        %v1282 = vadd.f32 0.0, %v1281
        %v1283 = vpop.f32.mrf.mxu0
        %v1284 = vadd.f32 0.0, %v1283
        %1285 = vmatmul.bf16.gmra.mxu0 %v1197
        %v1286 = vpop.f32.mrf.mxu0
        %v1287 = vadd.f32 0.0, %v1286
        %v1288 = vpop.f32.mrf.mxu0
        %v1289 = vadd.f32 0.0, %v1288
        %1290 = vmatmul.bf16.gmra.mxu0 %v1198
        %v1291 = vpop.f32.mrf.mxu0
        %v1292 = vadd.f32 0.0, %v1291
        %v1293 = vpop.f32.mrf.mxu0
        %v1294 = vadd.f32 0.0, %v1293
        %1295 = vmatmul.bf16.gmra.mxu0 %v1199
        %v1296 = vpop.f32.mrf.mxu0
        %v1297 = vadd.f32 0.0, %v1296
        %v1298 = vpop.f32.mrf.mxu0
        %v1299 = vadd.f32 0.0, %v1298
        %1300 = vmatmul.bf16.gmra.mxu0 %v1200
        %v1301 = vpop.f32.mrf.mxu0
        %v1302 = vadd.f32 0.0, %v1301
        %v1303 = vpop.f32.mrf.mxu0
        %v1304 = vadd.f32 0.0, %v1303
        %1305 = vdwg.mxu0
        %v1306 = vld [vmem:[#allocation3] sm:$0xff]
        %v1307 = vld [vmem:[#allocation3 + $0x8] sm:$0xff]
        %v1308 = vld [vmem:[#allocation3 + $0x10] sm:$0xff]
        %v1309 = vld [vmem:[#allocation3 + $0x18] sm:$0xff]
        %v1310 = vld [vmem:[#allocation3 + $0x20] sm:$0xff]
        %v1311 = vld [vmem:[#allocation3 + $0x28] sm:$0xff]
        %v1312 = vld [vmem:[#allocation3 + $0x30] sm:$0xff]
        %v1313 = vld [vmem:[#allocation3 + $0x38] sm:$0xff]
        %v1314 = vld [vmem:[#allocation3 + $0x40] sm:$0xff]
        %v1315 = vld [vmem:[#allocation3 + $0x48] sm:$0xff]
        %v1316 = vld [vmem:[#allocation3 + $0x50] sm:$0xff]
        %v1317 = vld [vmem:[#allocation3 + $0x58] sm:$0xff]
        %v1318 = vld [vmem:[#allocation3 + $0x60] sm:$0xff]
        %v1319 = vld [vmem:[#allocation3 + $0x68] sm:$0xff]
        %v1320 = vld [vmem:[#allocation3 + $0x70] sm:$0xff]
        %v1321 = vld [vmem:[#allocation3 + $0x78] sm:$0xff]
        %v1322 = vadd.f32 %v1306, %v1267
        %v1323 = vadd.f32 %v1307, %v1269
        %v1324 = vadd.f32 %v1308, %v1272
        %v1325 = vadd.f32 %v1309, %v1274
        %v1326 = vadd.f32 %v1310, %v1277
        %v1327 = vadd.f32 %v1311, %v1279
        %v1328 = vadd.f32 %v1312, %v1282
        %v1329 = vadd.f32 %v1313, %v1284
        %v1330 = vadd.f32 %v1314, %v1287
        %v1331 = vadd.f32 %v1315, %v1289
        %v1332 = vadd.f32 %v1316, %v1292
        %v1333 = vadd.f32 %v1317, %v1294
        %v1334 = vadd.f32 %v1318, %v1297
        %v1335 = vadd.f32 %v1319, %v1299
        %v1336 = vadd.f32 %v1320, %v1302
        %v1337 = vadd.f32 %v1321, %v1304
        %1338 = vst [vmem:[#allocation3] sm:$0xff] %v1322
        %1339 = vst [vmem:[#allocation3 + $0x8] sm:$0xff] %v1323
        %1340 = vst [vmem:[#allocation3 + $0x10] sm:$0xff] %v1324
        %1341 = vst [vmem:[#allocation3 + $0x18] sm:$0xff] %v1325
        %1342 = vst [vmem:[#allocation3 + $0x20] sm:$0xff] %v1326
        %1343 = vst [vmem:[#allocation3 + $0x28] sm:$0xff] %v1327
        %1344 = vst [vmem:[#allocation3 + $0x30] sm:$0xff] %v1328
        %1345 = vst [vmem:[#allocation3 + $0x38] sm:$0xff] %v1329
        %1346 = vst [vmem:[#allocation3 + $0x40] sm:$0xff] %v1330
        %1347 = vst [vmem:[#allocation3 + $0x48] sm:$0xff] %v1331
        %1348 = vst [vmem:[#allocation3 + $0x50] sm:$0xff] %v1332
        %1349 = vst [vmem:[#allocation3 + $0x58] sm:$0xff] %v1333
        %1350 = vst [vmem:[#allocation3 + $0x60] sm:$0xff] %v1334
        %1351 = vst [vmem:[#allocation3 + $0x68] sm:$0xff] %v1335
        %1352 = vst [vmem:[#allocation3 + $0x70] sm:$0xff] %v1336
        %1353 = vst [vmem:[#allocation3 + $0x78] sm:$0xff] %v1337
        %s1354 = scalar_lea.vmem [#allocation2], 16
        %v1355 = vld [vmem:[%s1354] sm:$0xf]
        %v1356 = vld [vmem:[%s1354 + $0x4] sm:$0xf]
        %v1357 = vld [vmem:[%s1354 + $0x8] sm:$0xf]
        %v1358 = vld [vmem:[%s1354 + $0xc] sm:$0xf]
        %v1359 = vld [vmem:[%s1354 + $0x10] sm:$0xf]
        %v1360 = vld [vmem:[%s1354 + $0x14] sm:$0xf]
        %v1361 = vld [vmem:[%s1354 + $0x18] sm:$0xf]
        %v1362 = vld [vmem:[%s1354 + $0x1c] sm:$0xf]
        %v1363 = vld [vmem:[%s1354 + $0x20] sm:$0xf]
        %v1364 = vld [vmem:[%s1354 + $0x24] sm:$0xf]
        %v1365 = vld [vmem:[%s1354 + $0x28] sm:$0xf]
        %v1366 = vld [vmem:[%s1354 + $0x2c] sm:$0xf]
        %v1367 = vld [vmem:[%s1354 + $0x30] sm:$0xf]
        %v1368 = vld [vmem:[%s1354 + $0x34] sm:$0xf]
        %v1369 = vld [vmem:[%s1354 + $0x38] sm:$0xf]
        %v1370 = vld [vmem:[%s1354 + $0x3c] sm:$0xf]
        %s1371 = scalar_lea.vmem %s1, 256
        %v1372 = vld [vmem:[%s1371] sm:$0xf]
        %v1373 = vld [vmem:[%s1371 + $0x4] sm:$0xf]
        %v1374 = vld [vmem:[%s1371 + $0x8] sm:$0xf]
        %v1375 = vld [vmem:[%s1371 + $0xc] sm:$0xf]
        %v1376 = vld [vmem:[%s1371 + $0x10] sm:$0xf]
        %v1377 = vld [vmem:[%s1371 + $0x14] sm:$0xf]
        %v1378 = vld [vmem:[%s1371 + $0x18] sm:$0xf]
        %v1379 = vld [vmem:[%s1371 + $0x1c] sm:$0xf]
        %v1380 = vld [vmem:[%s1371 + $0x20] sm:$0xf]
        %v1381 = vld [vmem:[%s1371 + $0x24] sm:$0xf]
        %v1382 = vld [vmem:[%s1371 + $0x28] sm:$0xf]
        %v1383 = vld [vmem:[%s1371 + $0x2c] sm:$0xf]
        %v1384 = vld [vmem:[%s1371 + $0x30] sm:$0xf]
        %v1385 = vld [vmem:[%s1371 + $0x34] sm:$0xf]
        %v1386 = vld [vmem:[%s1371 + $0x38] sm:$0xf]
        %v1387 = vld [vmem:[%s1371 + $0x3c] sm:$0xf]
        %v1404 = vunpack.c.l.b16 %v1355
        %v1405 = vunpack.c.l.b16 %v1356
        %v1406 = vunpack.c.l.b16 %v1357
        %v1407 = vunpack.c.l.b16 %v1358
        %v1408 = vunpack.c.l.b16 %v1359
        %v1409 = vunpack.c.l.b16 %v1360
        %v1410 = vunpack.c.l.b16 %v1361
        %v1411 = vunpack.c.l.b16 %v1362
        %v1412 = vunpack.c.l.b16 %v1363
        %v1413 = vunpack.c.l.b16 %v1364
        %v1414 = vunpack.c.l.b16 %v1365
        %v1415 = vunpack.c.l.b16 %v1366
        %v1416 = vunpack.c.l.b16 %v1367
        %v1417 = vunpack.c.l.b16 %v1368
        %v1418 = vunpack.c.l.b16 %v1369
        %v1419 = vunpack.c.l.b16 %v1370
        %v1420 = vpack.c.b16 %v1405, %v1404
        %v1421 = vpack.c.b16 %v1407, %v1406
        %v1422 = vpack.c.b16 %v1409, %v1408
        %v1423 = vpack.c.b16 %v1411, %v1410
        %v1424 = vpack.c.b16 %v1413, %v1412
        %v1425 = vpack.c.b16 %v1415, %v1414
        %v1426 = vpack.c.b16 %v1417, %v1416
        %v1427 = vpack.c.b16 %v1419, %v1418
        %v1452 = vunpack.c.l.b16 %v1372
        %v1453 = vunpack.c.l.b16 %v1373
        %v1454 = vunpack.c.l.b16 %v1374
        %v1455 = vunpack.c.l.b16 %v1375
        %v1456 = vunpack.c.l.b16 %v1376
        %v1457 = vunpack.c.l.b16 %v1377
        %v1458 = vunpack.c.l.b16 %v1378
        %v1459 = vunpack.c.l.b16 %v1379
        %v1460 = vunpack.c.l.b16 %v1380
        %v1461 = vunpack.c.l.b16 %v1381
        %v1462 = vunpack.c.l.b16 %v1382
        %v1463 = vunpack.c.l.b16 %v1383
        %v1464 = vunpack.c.l.b16 %v1384
        %v1465 = vunpack.c.l.b16 %v1385
        %v1466 = vunpack.c.l.b16 %v1386
        %v1467 = vunpack.c.l.b16 %v1387
        %v1468 = vpack.c.b16 %v1453, %v1452
        %v1469 = vpack.c.b16 %v1455, %v1454
        %v1470 = vpack.c.b16 %v1457, %v1456
        %v1471 = vpack.c.b16 %v1459, %v1458
        %v1472 = vpack.c.b16 %v1461, %v1460
        %v1473 = vpack.c.b16 %v1463, %v1462
        %v1474 = vpack.c.b16 %v1465, %v1464
        %v1475 = vpack.c.b16 %v1467, %v1466
        %1484 = vmatpush.bf16.msra.mxu0 %v1475
        %1485 = vmatpush.bf16.msra.mxu0 %v1474
        %1486 = vmatpush.bf16.msra.mxu0 %v1473
        %1487 = vmatpush.bf16.msra.mxu0 %v1472
        %1488 = vmatpush.bf16.msra.mxu0 %v1471
        %1489 = vmatpush.bf16.msra.mxu0 %v1470
        %1490 = vmatpush.bf16.msra.mxu0 %v1469
        %1491 = vmatpush.bf16.msra.mxu0 %v1468
        %1492 = vmatmul.bf16.gmra.mxu0 %v1420
        %v1493 = vpop.f32.mrf.mxu0
        %v1494 = vadd.f32 0.0, %v1493
        %v1495 = vpop.f32.mrf.mxu0
        %v1496 = vadd.f32 0.0, %v1495
        %1497 = vmatmul.bf16.gmra.mxu0 %v1421
        %v1498 = vpop.f32.mrf.mxu0
        %v1499 = vadd.f32 0.0, %v1498
        %v1500 = vpop.f32.mrf.mxu0
        %v1501 = vadd.f32 0.0, %v1500
        %1502 = vmatmul.bf16.gmra.mxu0 %v1422
        %v1503 = vpop.f32.mrf.mxu0
        %v1504 = vadd.f32 0.0, %v1503
        %v1505 = vpop.f32.mrf.mxu0
        %v1506 = vadd.f32 0.0, %v1505
        %1507 = vmatmul.bf16.gmra.mxu0 %v1423
        %v1508 = vpop.f32.mrf.mxu0
        %v1509 = vadd.f32 0.0, %v1508
        %v1510 = vpop.f32.mrf.mxu0
        %v1511 = vadd.f32 0.0, %v1510
        %1512 = vmatmul.bf16.gmra.mxu0 %v1424
        %v1513 = vpop.f32.mrf.mxu0
        %v1514 = vadd.f32 0.0, %v1513
        %v1515 = vpop.f32.mrf.mxu0
        %v1516 = vadd.f32 0.0, %v1515
        %1517 = vmatmul.bf16.gmra.mxu0 %v1425
        %v1518 = vpop.f32.mrf.mxu0
        %v1519 = vadd.f32 0.0, %v1518
        %v1520 = vpop.f32.mrf.mxu0
        %v1521 = vadd.f32 0.0, %v1520
        %1522 = vmatmul.bf16.gmra.mxu0 %v1426
        %v1523 = vpop.f32.mrf.mxu0
        %v1524 = vadd.f32 0.0, %v1523
        %v1525 = vpop.f32.mrf.mxu0
        %v1526 = vadd.f32 0.0, %v1525
        %1527 = vmatmul.bf16.gmra.mxu0 %v1427
        %v1528 = vpop.f32.mrf.mxu0
        %v1529 = vadd.f32 0.0, %v1528
        %v1530 = vpop.f32.mrf.mxu0
        %v1531 = vadd.f32 0.0, %v1530
        %1532 = vdwg.mxu0
        %v1533 = vld [vmem:[#allocation3] sm:$0xff]
        %v1534 = vld [vmem:[#allocation3 + $0x8] sm:$0xff]
        %v1535 = vld [vmem:[#allocation3 + $0x10] sm:$0xff]
        %v1536 = vld [vmem:[#allocation3 + $0x18] sm:$0xff]
        %v1537 = vld [vmem:[#allocation3 + $0x20] sm:$0xff]
        %v1538 = vld [vmem:[#allocation3 + $0x28] sm:$0xff]
        %v1539 = vld [vmem:[#allocation3 + $0x30] sm:$0xff]
        %v1540 = vld [vmem:[#allocation3 + $0x38] sm:$0xff]
        %v1541 = vld [vmem:[#allocation3 + $0x40] sm:$0xff]
        %v1542 = vld [vmem:[#allocation3 + $0x48] sm:$0xff]
        %v1543 = vld [vmem:[#allocation3 + $0x50] sm:$0xff]
        %v1544 = vld [vmem:[#allocation3 + $0x58] sm:$0xff]
        %v1545 = vld [vmem:[#allocation3 + $0x60] sm:$0xff]
        %v1546 = vld [vmem:[#allocation3 + $0x68] sm:$0xff]
        %v1547 = vld [vmem:[#allocation3 + $0x70] sm:$0xff]
        %v1548 = vld [vmem:[#allocation3 + $0x78] sm:$0xff]
        %v1549 = vadd.f32 %v1533, %v1494
        %v1550 = vadd.f32 %v1534, %v1496
        %v1551 = vadd.f32 %v1535, %v1499
        %v1552 = vadd.f32 %v1536, %v1501
        %v1553 = vadd.f32 %v1537, %v1504
        %v1554 = vadd.f32 %v1538, %v1506
        %v1555 = vadd.f32 %v1539, %v1509
        %v1556 = vadd.f32 %v1540, %v1511
        %v1557 = vadd.f32 %v1541, %v1514
        %v1558 = vadd.f32 %v1542, %v1516
        %v1559 = vadd.f32 %v1543, %v1519
        %v1560 = vadd.f32 %v1544, %v1521
        %v1561 = vadd.f32 %v1545, %v1524
        %v1562 = vadd.f32 %v1546, %v1526
        %v1563 = vadd.f32 %v1547, %v1529
        %v1564 = vadd.f32 %v1548, %v1531
        %1565 = vst [vmem:[#allocation3] sm:$0xff] %v1549
        %1566 = vst [vmem:[#allocation3 + $0x8] sm:$0xff] %v1550
        %1567 = vst [vmem:[#allocation3 + $0x10] sm:$0xff] %v1551
        %1568 = vst [vmem:[#allocation3 + $0x18] sm:$0xff] %v1552
        %1569 = vst [vmem:[#allocation3 + $0x20] sm:$0xff] %v1553
        %1570 = vst [vmem:[#allocation3 + $0x28] sm:$0xff] %v1554
        %1571 = vst [vmem:[#allocation3 + $0x30] sm:$0xff] %v1555
        %1572 = vst [vmem:[#allocation3 + $0x38] sm:$0xff] %v1556
        %1573 = vst [vmem:[#allocation3 + $0x40] sm:$0xff] %v1557
        %1574 = vst [vmem:[#allocation3 + $0x48] sm:$0xff] %v1558
        %1575 = vst [vmem:[#allocation3 + $0x50] sm:$0xff] %v1559
        %1576 = vst [vmem:[#allocation3 + $0x58] sm:$0xff] %v1560
        %1577 = vst [vmem:[#allocation3 + $0x60] sm:$0xff] %v1561
        %1578 = vst [vmem:[#allocation3 + $0x68] sm:$0xff] %v1562
        %1579 = vst [vmem:[#allocation3 + $0x70] sm:$0xff] %v1563
        %1580 = vst [vmem:[#allocation3 + $0x78] sm:$0xff] %v1564
        %s1581 = scalar_lea.vmem [#allocation2], 20
        %v1582 = vld [vmem:[%s1581] sm:$0xf]
        %v1583 = vld [vmem:[%s1581 + $0x4] sm:$0xf]
        %v1584 = vld [vmem:[%s1581 + $0x8] sm:$0xf]
        %v1585 = vld [vmem:[%s1581 + $0xc] sm:$0xf]
        %v1586 = vld [vmem:[%s1581 + $0x10] sm:$0xf]
        %v1587 = vld [vmem:[%s1581 + $0x14] sm:$0xf]
        %v1588 = vld [vmem:[%s1581 + $0x18] sm:$0xf]
        %v1589 = vld [vmem:[%s1581 + $0x1c] sm:$0xf]
        %v1590 = vld [vmem:[%s1581 + $0x20] sm:$0xf]
        %v1591 = vld [vmem:[%s1581 + $0x24] sm:$0xf]
        %v1592 = vld [vmem:[%s1581 + $0x28] sm:$0xf]
        %v1593 = vld [vmem:[%s1581 + $0x2c] sm:$0xf]
        %v1594 = vld [vmem:[%s1581 + $0x30] sm:$0xf]
        %v1595 = vld [vmem:[%s1581 + $0x34] sm:$0xf]
        %v1596 = vld [vmem:[%s1581 + $0x38] sm:$0xf]
        %v1597 = vld [vmem:[%s1581 + $0x3c] sm:$0xf]
        %s1598 = scalar_lea.vmem %s1, 320
        %v1599 = vld [vmem:[%s1598] sm:$0xf]
        %v1600 = vld [vmem:[%s1598 + $0x4] sm:$0xf]
        %v1601 = vld [vmem:[%s1598 + $0x8] sm:$0xf]
        %v1602 = vld [vmem:[%s1598 + $0xc] sm:$0xf]
        %v1603 = vld [vmem:[%s1598 + $0x10] sm:$0xf]
        %v1604 = vld [vmem:[%s1598 + $0x14] sm:$0xf]
        %v1605 = vld [vmem:[%s1598 + $0x18] sm:$0xf]
        %v1606 = vld [vmem:[%s1598 + $0x1c] sm:$0xf]
        %v1607 = vld [vmem:[%s1598 + $0x20] sm:$0xf]
        %v1608 = vld [vmem:[%s1598 + $0x24] sm:$0xf]
        %v1609 = vld [vmem:[%s1598 + $0x28] sm:$0xf]
        %v1610 = vld [vmem:[%s1598 + $0x2c] sm:$0xf]
        %v1611 = vld [vmem:[%s1598 + $0x30] sm:$0xf]
        %v1612 = vld [vmem:[%s1598 + $0x34] sm:$0xf]
        %v1613 = vld [vmem:[%s1598 + $0x38] sm:$0xf]
        %v1614 = vld [vmem:[%s1598 + $0x3c] sm:$0xf]
        %v1631 = vunpack.c.l.b16 %v1582
        %v1632 = vunpack.c.l.b16 %v1583
        %v1633 = vunpack.c.l.b16 %v1584
        %v1634 = vunpack.c.l.b16 %v1585
        %v1635 = vunpack.c.l.b16 %v1586
        %v1636 = vunpack.c.l.b16 %v1587
        %v1637 = vunpack.c.l.b16 %v1588
        %v1638 = vunpack.c.l.b16 %v1589
        %v1639 = vunpack.c.l.b16 %v1590
        %v1640 = vunpack.c.l.b16 %v1591
        %v1641 = vunpack.c.l.b16 %v1592
        %v1642 = vunpack.c.l.b16 %v1593
        %v1643 = vunpack.c.l.b16 %v1594
        %v1644 = vunpack.c.l.b16 %v1595
        %v1645 = vunpack.c.l.b16 %v1596
        %v1646 = vunpack.c.l.b16 %v1597
        %v1647 = vpack.c.b16 %v1632, %v1631
        %v1648 = vpack.c.b16 %v1634, %v1633
        %v1649 = vpack.c.b16 %v1636, %v1635
        %v1650 = vpack.c.b16 %v1638, %v1637
        %v1651 = vpack.c.b16 %v1640, %v1639
        %v1652 = vpack.c.b16 %v1642, %v1641
        %v1653 = vpack.c.b16 %v1644, %v1643
        %v1654 = vpack.c.b16 %v1646, %v1645
        %v1679 = vunpack.c.l.b16 %v1599
        %v1680 = vunpack.c.l.b16 %v1600
        %v1681 = vunpack.c.l.b16 %v1601
        %v1682 = vunpack.c.l.b16 %v1602
        %v1683 = vunpack.c.l.b16 %v1603
        %v1684 = vunpack.c.l.b16 %v1604
        %v1685 = vunpack.c.l.b16 %v1605
        %v1686 = vunpack.c.l.b16 %v1606
        %v1687 = vunpack.c.l.b16 %v1607
        %v1688 = vunpack.c.l.b16 %v1608
        %v1689 = vunpack.c.l.b16 %v1609
        %v1690 = vunpack.c.l.b16 %v1610
        %v1691 = vunpack.c.l.b16 %v1611
        %v1692 = vunpack.c.l.b16 %v1612
        %v1693 = vunpack.c.l.b16 %v1613
        %v1694 = vunpack.c.l.b16 %v1614
        %v1695 = vpack.c.b16 %v1680, %v1679
        %v1696 = vpack.c.b16 %v1682, %v1681
        %v1697 = vpack.c.b16 %v1684, %v1683
        %v1698 = vpack.c.b16 %v1686, %v1685
        %v1699 = vpack.c.b16 %v1688, %v1687
        %v1700 = vpack.c.b16 %v1690, %v1689
        %v1701 = vpack.c.b16 %v1692, %v1691
        %v1702 = vpack.c.b16 %v1694, %v1693
        %1711 = vmatpush.bf16.msra.mxu0 %v1702
        %1712 = vmatpush.bf16.msra.mxu0 %v1701
        %1713 = vmatpush.bf16.msra.mxu0 %v1700
        %1714 = vmatpush.bf16.msra.mxu0 %v1699
        %1715 = vmatpush.bf16.msra.mxu0 %v1698
        %1716 = vmatpush.bf16.msra.mxu0 %v1697
        %1717 = vmatpush.bf16.msra.mxu0 %v1696
        %1718 = vmatpush.bf16.msra.mxu0 %v1695
        %1719 = vmatmul.bf16.gmra.mxu0 %v1647
        %v1720 = vpop.f32.mrf.mxu0
        %v1721 = vadd.f32 0.0, %v1720
        %v1722 = vpop.f32.mrf.mxu0
        %v1723 = vadd.f32 0.0, %v1722
        %1724 = vmatmul.bf16.gmra.mxu0 %v1648
        %v1725 = vpop.f32.mrf.mxu0
        %v1726 = vadd.f32 0.0, %v1725
        %v1727 = vpop.f32.mrf.mxu0
        %v1728 = vadd.f32 0.0, %v1727
        %1729 = vmatmul.bf16.gmra.mxu0 %v1649
        %v1730 = vpop.f32.mrf.mxu0
        %v1731 = vadd.f32 0.0, %v1730
        %v1732 = vpop.f32.mrf.mxu0
        %v1733 = vadd.f32 0.0, %v1732
        %1734 = vmatmul.bf16.gmra.mxu0 %v1650
        %v1735 = vpop.f32.mrf.mxu0
        %v1736 = vadd.f32 0.0, %v1735
        %v1737 = vpop.f32.mrf.mxu0
        %v1738 = vadd.f32 0.0, %v1737
        %1739 = vmatmul.bf16.gmra.mxu0 %v1651
        %v1740 = vpop.f32.mrf.mxu0
        %v1741 = vadd.f32 0.0, %v1740
        %v1742 = vpop.f32.mrf.mxu0
        %v1743 = vadd.f32 0.0, %v1742
        %1744 = vmatmul.bf16.gmra.mxu0 %v1652
        %v1745 = vpop.f32.mrf.mxu0
        %v1746 = vadd.f32 0.0, %v1745
        %v1747 = vpop.f32.mrf.mxu0
        %v1748 = vadd.f32 0.0, %v1747
        %1749 = vmatmul.bf16.gmra.mxu0 %v1653
        %v1750 = vpop.f32.mrf.mxu0
        %v1751 = vadd.f32 0.0, %v1750
        %v1752 = vpop.f32.mrf.mxu0
        %v1753 = vadd.f32 0.0, %v1752
        %1754 = vmatmul.bf16.gmra.mxu0 %v1654
        %v1755 = vpop.f32.mrf.mxu0
        %v1756 = vadd.f32 0.0, %v1755
        %v1757 = vpop.f32.mrf.mxu0
        %v1758 = vadd.f32 0.0, %v1757
        %1759 = vdwg.mxu0
        %v1760 = vld [vmem:[#allocation3] sm:$0xff]
        %v1761 = vld [vmem:[#allocation3 + $0x8] sm:$0xff]
        %v1762 = vld [vmem:[#allocation3 + $0x10] sm:$0xff]
        %v1763 = vld [vmem:[#allocation3 + $0x18] sm:$0xff]
        %v1764 = vld [vmem:[#allocation3 + $0x20] sm:$0xff]
        %v1765 = vld [vmem:[#allocation3 + $0x28] sm:$0xff]
        %v1766 = vld [vmem:[#allocation3 + $0x30] sm:$0xff]
        %v1767 = vld [vmem:[#allocation3 + $0x38] sm:$0xff]
        %v1768 = vld [vmem:[#allocation3 + $0x40] sm:$0xff]
        %v1769 = vld [vmem:[#allocation3 + $0x48] sm:$0xff]
        %v1770 = vld [vmem:[#allocation3 + $0x50] sm:$0xff]
        %v1771 = vld [vmem:[#allocation3 + $0x58] sm:$0xff]
        %v1772 = vld [vmem:[#allocation3 + $0x60] sm:$0xff]
        %v1773 = vld [vmem:[#allocation3 + $0x68] sm:$0xff]
        %v1774 = vld [vmem:[#allocation3 + $0x70] sm:$0xff]
        %v1775 = vld [vmem:[#allocation3 + $0x78] sm:$0xff]
        %v1776 = vadd.f32 %v1760, %v1721
        %v1777 = vadd.f32 %v1761, %v1723
        %v1778 = vadd.f32 %v1762, %v1726
        %v1779 = vadd.f32 %v1763, %v1728
        %v1780 = vadd.f32 %v1764, %v1731
        %v1781 = vadd.f32 %v1765, %v1733
        %v1782 = vadd.f32 %v1766, %v1736
        %v1783 = vadd.f32 %v1767, %v1738
        %v1784 = vadd.f32 %v1768, %v1741
        %v1785 = vadd.f32 %v1769, %v1743
        %v1786 = vadd.f32 %v1770, %v1746
        %v1787 = vadd.f32 %v1771, %v1748
        %v1788 = vadd.f32 %v1772, %v1751
        %v1789 = vadd.f32 %v1773, %v1753
        %v1790 = vadd.f32 %v1774, %v1756
        %v1791 = vadd.f32 %v1775, %v1758
        %1792 = vst [vmem:[#allocation3] sm:$0xff] %v1776
        %1793 = vst [vmem:[#allocation3 + $0x8] sm:$0xff] %v1777
        %1794 = vst [vmem:[#allocation3 + $0x10] sm:$0xff] %v1778
        %1795 = vst [vmem:[#allocation3 + $0x18] sm:$0xff] %v1779
        %1796 = vst [vmem:[#allocation3 + $0x20] sm:$0xff] %v1780
        %1797 = vst [vmem:[#allocation3 + $0x28] sm:$0xff] %v1781
        %1798 = vst [vmem:[#allocation3 + $0x30] sm:$0xff] %v1782
        %1799 = vst [vmem:[#allocation3 + $0x38] sm:$0xff] %v1783
        %1800 = vst [vmem:[#allocation3 + $0x40] sm:$0xff] %v1784
        %1801 = vst [vmem:[#allocation3 + $0x48] sm:$0xff] %v1785
        %1802 = vst [vmem:[#allocation3 + $0x50] sm:$0xff] %v1786
        %1803 = vst [vmem:[#allocation3 + $0x58] sm:$0xff] %v1787
        %1804 = vst [vmem:[#allocation3 + $0x60] sm:$0xff] %v1788
        %1805 = vst [vmem:[#allocation3 + $0x68] sm:$0xff] %v1789
        %1806 = vst [vmem:[#allocation3 + $0x70] sm:$0xff] %v1790
        %1807 = vst [vmem:[#allocation3 + $0x78] sm:$0xff] %v1791
        %s1808 = scalar_lea.vmem [#allocation2], 24
        %v1809 = vld [vmem:[%s1808] sm:$0xf]
        %v1810 = vld [vmem:[%s1808 + $0x4] sm:$0xf]
        %v1811 = vld [vmem:[%s1808 + $0x8] sm:$0xf]
        %v1812 = vld [vmem:[%s1808 + $0xc] sm:$0xf]
        %v1813 = vld [vmem:[%s1808 + $0x10] sm:$0xf]
        %v1814 = vld [vmem:[%s1808 + $0x14] sm:$0xf]
        %v1815 = vld [vmem:[%s1808 + $0x18] sm:$0xf]
        %v1816 = vld [vmem:[%s1808 + $0x1c] sm:$0xf]
        %v1817 = vld [vmem:[%s1808 + $0x20] sm:$0xf]
        %v1818 = vld [vmem:[%s1808 + $0x24] sm:$0xf]
        %v1819 = vld [vmem:[%s1808 + $0x28] sm:$0xf]
        %v1820 = vld [vmem:[%s1808 + $0x2c] sm:$0xf]
        %v1821 = vld [vmem:[%s1808 + $0x30] sm:$0xf]
        %v1822 = vld [vmem:[%s1808 + $0x34] sm:$0xf]
        %v1823 = vld [vmem:[%s1808 + $0x38] sm:$0xf]
        %v1824 = vld [vmem:[%s1808 + $0x3c] sm:$0xf]
        %s1825 = scalar_lea.vmem %s1, 384
        %v1826 = vld [vmem:[%s1825] sm:$0xf]
        %v1827 = vld [vmem:[%s1825 + $0x4] sm:$0xf]
        %v1828 = vld [vmem:[%s1825 + $0x8] sm:$0xf]
        %v1829 = vld [vmem:[%s1825 + $0xc] sm:$0xf]
        %v1830 = vld [vmem:[%s1825 + $0x10] sm:$0xf]
        %v1831 = vld [vmem:[%s1825 + $0x14] sm:$0xf]
        %v1832 = vld [vmem:[%s1825 + $0x18] sm:$0xf]
        %v1833 = vld [vmem:[%s1825 + $0x1c] sm:$0xf]
        %v1834 = vld [vmem:[%s1825 + $0x20] sm:$0xf]
        %v1835 = vld [vmem:[%s1825 + $0x24] sm:$0xf]
        %v1836 = vld [vmem:[%s1825 + $0x28] sm:$0xf]
        %v1837 = vld [vmem:[%s1825 + $0x2c] sm:$0xf]
        %v1838 = vld [vmem:[%s1825 + $0x30] sm:$0xf]
        %v1839 = vld [vmem:[%s1825 + $0x34] sm:$0xf]
        %v1840 = vld [vmem:[%s1825 + $0x38] sm:$0xf]
        %v1841 = vld [vmem:[%s1825 + $0x3c] sm:$0xf]
        %v1858 = vunpack.c.l.b16 %v1809
        %v1859 = vunpack.c.l.b16 %v1810
        %v1860 = vunpack.c.l.b16 %v1811
        %v1861 = vunpack.c.l.b16 %v1812
        %v1862 = vunpack.c.l.b16 %v1813
        %v1863 = vunpack.c.l.b16 %v1814
        %v1864 = vunpack.c.l.b16 %v1815
        %v1865 = vunpack.c.l.b16 %v1816
        %v1866 = vunpack.c.l.b16 %v1817
        %v1867 = vunpack.c.l.b16 %v1818
        %v1868 = vunpack.c.l.b16 %v1819
        %v1869 = vunpack.c.l.b16 %v1820
        %v1870 = vunpack.c.l.b16 %v1821
        %v1871 = vunpack.c.l.b16 %v1822
        %v1872 = vunpack.c.l.b16 %v1823
        %v1873 = vunpack.c.l.b16 %v1824
        %v1874 = vpack.c.b16 %v1859, %v1858
        %v1875 = vpack.c.b16 %v1861, %v1860
        %v1876 = vpack.c.b16 %v1863, %v1862
        %v1877 = vpack.c.b16 %v1865, %v1864
        %v1878 = vpack.c.b16 %v1867, %v1866
        %v1879 = vpack.c.b16 %v1869, %v1868
        %v1880 = vpack.c.b16 %v1871, %v1870
        %v1881 = vpack.c.b16 %v1873, %v1872
        %v1906 = vunpack.c.l.b16 %v1826
        %v1907 = vunpack.c.l.b16 %v1827
        %v1908 = vunpack.c.l.b16 %v1828
        %v1909 = vunpack.c.l.b16 %v1829
        %v1910 = vunpack.c.l.b16 %v1830
        %v1911 = vunpack.c.l.b16 %v1831
        %v1912 = vunpack.c.l.b16 %v1832
        %v1913 = vunpack.c.l.b16 %v1833
        %v1914 = vunpack.c.l.b16 %v1834
        %v1915 = vunpack.c.l.b16 %v1835
        %v1916 = vunpack.c.l.b16 %v1836
        %v1917 = vunpack.c.l.b16 %v1837
        %v1918 = vunpack.c.l.b16 %v1838
        %v1919 = vunpack.c.l.b16 %v1839
        %v1920 = vunpack.c.l.b16 %v1840
        %v1921 = vunpack.c.l.b16 %v1841
        %v1922 = vpack.c.b16 %v1907, %v1906
        %v1923 = vpack.c.b16 %v1909, %v1908
        %v1924 = vpack.c.b16 %v1911, %v1910
        %v1925 = vpack.c.b16 %v1913, %v1912
        %v1926 = vpack.c.b16 %v1915, %v1914
        %v1927 = vpack.c.b16 %v1917, %v1916
        %v1928 = vpack.c.b16 %v1919, %v1918
        %v1929 = vpack.c.b16 %v1921, %v1920
        %1938 = vmatpush.bf16.msra.mxu0 %v1929
        %1939 = vmatpush.bf16.msra.mxu0 %v1928
        %1940 = vmatpush.bf16.msra.mxu0 %v1927
        %1941 = vmatpush.bf16.msra.mxu0 %v1926
        %1942 = vmatpush.bf16.msra.mxu0 %v1925
        %1943 = vmatpush.bf16.msra.mxu0 %v1924
        %1944 = vmatpush.bf16.msra.mxu0 %v1923
        %1945 = vmatpush.bf16.msra.mxu0 %v1922
        %1946 = vmatmul.bf16.gmra.mxu0 %v1874
        %v1947 = vpop.f32.mrf.mxu0
        %v1948 = vadd.f32 0.0, %v1947
        %v1949 = vpop.f32.mrf.mxu0
        %v1950 = vadd.f32 0.0, %v1949
        %1951 = vmatmul.bf16.gmra.mxu0 %v1875
        %v1952 = vpop.f32.mrf.mxu0
        %v1953 = vadd.f32 0.0, %v1952
        %v1954 = vpop.f32.mrf.mxu0
        %v1955 = vadd.f32 0.0, %v1954
        %1956 = vmatmul.bf16.gmra.mxu0 %v1876
        %v1957 = vpop.f32.mrf.mxu0
        %v1958 = vadd.f32 0.0, %v1957
        %v1959 = vpop.f32.mrf.mxu0
        %v1960 = vadd.f32 0.0, %v1959
        %1961 = vmatmul.bf16.gmra.mxu0 %v1877
        %v1962 = vpop.f32.mrf.mxu0
        %v1963 = vadd.f32 0.0, %v1962
        %v1964 = vpop.f32.mrf.mxu0
        %v1965 = vadd.f32 0.0, %v1964
        %1966 = vmatmul.bf16.gmra.mxu0 %v1878
        %v1967 = vpop.f32.mrf.mxu0
        %v1968 = vadd.f32 0.0, %v1967
        %v1969 = vpop.f32.mrf.mxu0
        %v1970 = vadd.f32 0.0, %v1969
        %1971 = vmatmul.bf16.gmra.mxu0 %v1879
        %v1972 = vpop.f32.mrf.mxu0
        %v1973 = vadd.f32 0.0, %v1972
        %v1974 = vpop.f32.mrf.mxu0
        %v1975 = vadd.f32 0.0, %v1974
        %1976 = vmatmul.bf16.gmra.mxu0 %v1880
        %v1977 = vpop.f32.mrf.mxu0
        %v1978 = vadd.f32 0.0, %v1977
        %v1979 = vpop.f32.mrf.mxu0
        %v1980 = vadd.f32 0.0, %v1979
        %1981 = vmatmul.bf16.gmra.mxu0 %v1881
        %v1982 = vpop.f32.mrf.mxu0
        %v1983 = vadd.f32 0.0, %v1982
        %v1984 = vpop.f32.mrf.mxu0
        %v1985 = vadd.f32 0.0, %v1984
        %1986 = vdwg.mxu0
        %v1987 = vld [vmem:[#allocation3] sm:$0xff]
        %v1988 = vld [vmem:[#allocation3 + $0x8] sm:$0xff]
        %v1989 = vld [vmem:[#allocation3 + $0x10] sm:$0xff]
        %v1990 = vld [vmem:[#allocation3 + $0x18] sm:$0xff]
        %v1991 = vld [vmem:[#allocation3 + $0x20] sm:$0xff]
        %v1992 = vld [vmem:[#allocation3 + $0x28] sm:$0xff]
        %v1993 = vld [vmem:[#allocation3 + $0x30] sm:$0xff]
        %v1994 = vld [vmem:[#allocation3 + $0x38] sm:$0xff]
        %v1995 = vld [vmem:[#allocation3 + $0x40] sm:$0xff]
        %v1996 = vld [vmem:[#allocation3 + $0x48] sm:$0xff]
        %v1997 = vld [vmem:[#allocation3 + $0x50] sm:$0xff]
        %v1998 = vld [vmem:[#allocation3 + $0x58] sm:$0xff]
        %v1999 = vld [vmem:[#allocation3 + $0x60] sm:$0xff]
        %v2000 = vld [vmem:[#allocation3 + $0x68] sm:$0xff]
        %v2001 = vld [vmem:[#allocation3 + $0x70] sm:$0xff]
        %v2002 = vld [vmem:[#allocation3 + $0x78] sm:$0xff]
        %v2003 = vadd.f32 %v1987, %v1948
        %v2004 = vadd.f32 %v1988, %v1950
        %v2005 = vadd.f32 %v1989, %v1953
        %v2006 = vadd.f32 %v1990, %v1955
        %v2007 = vadd.f32 %v1991, %v1958
        %v2008 = vadd.f32 %v1992, %v1960
        %v2009 = vadd.f32 %v1993, %v1963
        %v2010 = vadd.f32 %v1994, %v1965
        %v2011 = vadd.f32 %v1995, %v1968
        %v2012 = vadd.f32 %v1996, %v1970
        %v2013 = vadd.f32 %v1997, %v1973
        %v2014 = vadd.f32 %v1998, %v1975
        %v2015 = vadd.f32 %v1999, %v1978
        %v2016 = vadd.f32 %v2000, %v1980
        %v2017 = vadd.f32 %v2001, %v1983
        %v2018 = vadd.f32 %v2002, %v1985
        %2019 = vst [vmem:[#allocation3] sm:$0xff] %v2003
        %2020 = vst [vmem:[#allocation3 + $0x8] sm:$0xff] %v2004
        %2021 = vst [vmem:[#allocation3 + $0x10] sm:$0xff] %v2005
        %2022 = vst [vmem:[#allocation3 + $0x18] sm:$0xff] %v2006
        %2023 = vst [vmem:[#allocation3 + $0x20] sm:$0xff] %v2007
        %2024 = vst [vmem:[#allocation3 + $0x28] sm:$0xff] %v2008
        %2025 = vst [vmem:[#allocation3 + $0x30] sm:$0xff] %v2009
        %2026 = vst [vmem:[#allocation3 + $0x38] sm:$0xff] %v2010
        %2027 = vst [vmem:[#allocation3 + $0x40] sm:$0xff] %v2011
        %2028 = vst [vmem:[#allocation3 + $0x48] sm:$0xff] %v2012
        %2029 = vst [vmem:[#allocation3 + $0x50] sm:$0xff] %v2013
        %2030 = vst [vmem:[#allocation3 + $0x58] sm:$0xff] %v2014
        %2031 = vst [vmem:[#allocation3 + $0x60] sm:$0xff] %v2015
        %2032 = vst [vmem:[#allocation3 + $0x68] sm:$0xff] %v2016
        %2033 = vst [vmem:[#allocation3 + $0x70] sm:$0xff] %v2017
        %2034 = vst [vmem:[#allocation3 + $0x78] sm:$0xff] %v2018
        %v2035 = vld [vmem:[#allocation3] sm:$0xff]
        %v2036 = vld [vmem:[#allocation3 + $0x8] sm:$0xff]
        %v2037 = vld [vmem:[#allocation3 + $0x10] sm:$0xff]
        %v2038 = vld [vmem:[#allocation3 + $0x18] sm:$0xff]
        %v2039 = vld [vmem:[#allocation3 + $0x20] sm:$0xff]
        %v2040 = vld [vmem:[#allocation3 + $0x28] sm:$0xff]
        %v2041 = vld [vmem:[#allocation3 + $0x30] sm:$0xff]
        %v2042 = vld [vmem:[#allocation3 + $0x38] sm:$0xff]
        %v2043 = vld [vmem:[#allocation3 + $0x40] sm:$0xff]
        %v2044 = vld [vmem:[#allocation3 + $0x48] sm:$0xff]
        %v2045 = vld [vmem:[#allocation3 + $0x50] sm:$0xff]
        %v2046 = vld [vmem:[#allocation3 + $0x58] sm:$0xff]
        %v2047 = vld [vmem:[#allocation3 + $0x60] sm:$0xff]
        %v2048 = vld [vmem:[#allocation3 + $0x68] sm:$0xff]
        %v2049 = vld [vmem:[#allocation3 + $0x70] sm:$0xff]
        %v2050 = vld [vmem:[#allocation3 + $0x78] sm:$0xff]
        %v2051 = vld [vmem:[%s2] sm:$0x1]
        %v2053 = vperm.slane %v2051, 0
        %v2055 = vadd.f32 %v2035, %v2053
        %v2056 = vadd.f32 %v2036, %v2053
        %v2057 = vadd.f32 %v2037, %v2053
        %v2058 = vadd.f32 %v2038, %v2053
        %v2059 = vadd.f32 %v2039, %v2053
        %v2060 = vadd.f32 %v2040, %v2053
        %v2061 = vadd.f32 %v2041, %v2053
        %v2062 = vadd.f32 %v2042, %v2053
        %v2063 = vadd.f32 %v2043, %v2053
        %v2064 = vadd.f32 %v2044, %v2053
        %v2065 = vadd.f32 %v2045, %v2053
        %v2066 = vadd.f32 %v2046, %v2053
        %v2067 = vadd.f32 %v2047, %v2053
        %v2068 = vadd.f32 %v2048, %v2053
        %v2069 = vadd.f32 %v2049, %v2053
        %v2070 = vadd.f32 %v2050, %v2053
        %v2071 = vld [vmem:[%s398] sm:$0xff]
        %v2072 = vld [vmem:[%s398 + $0x8] sm:$0xff]
        %v2073 = vld [vmem:[%s398 + $0x10] sm:$0xff]
        %v2074 = vld [vmem:[%s398 + $0x18] sm:$0xff]
        %v2075 = vld [vmem:[%s398 + $0x20] sm:$0xff]
        %v2076 = vld [vmem:[%s398 + $0x28] sm:$0xff]
        %v2077 = vld [vmem:[%s398 + $0x30] sm:$0xff]
        %v2078 = vld [vmem:[%s398 + $0x38] sm:$0xff]
        %v2079 = vld [vmem:[%s398 + $0x40] sm:$0xff]
        %v2080 = vld [vmem:[%s398 + $0x48] sm:$0xff]
        %v2081 = vld [vmem:[%s398 + $0x50] sm:$0xff]
        %v2082 = vld [vmem:[%s398 + $0x58] sm:$0xff]
        %v2083 = vld [vmem:[%s398 + $0x60] sm:$0xff]
        %v2084 = vld [vmem:[%s398 + $0x68] sm:$0xff]
        %v2085 = vld [vmem:[%s398 + $0x70] sm:$0xff]
        %v2086 = vld [vmem:[%s398 + $0x78] sm:$0xff]
        %v2087 = vadd.f32 %v2055, %v2071
        %v2088 = vadd.f32 %v2056, %v2072
        %v2089 = vadd.f32 %v2057, %v2073
        %v2090 = vadd.f32 %v2058, %v2074
        %v2091 = vadd.f32 %v2059, %v2075
        %v2092 = vadd.f32 %v2060, %v2076
        %v2093 = vadd.f32 %v2061, %v2077
        %v2094 = vadd.f32 %v2062, %v2078
        %v2095 = vadd.f32 %v2063, %v2079
        %v2096 = vadd.f32 %v2064, %v2080
        %v2097 = vadd.f32 %v2065, %v2081
        %v2098 = vadd.f32 %v2066, %v2082
        %v2099 = vadd.f32 %v2067, %v2083
        %v2100 = vadd.f32 %v2068, %v2084
        %v2101 = vadd.f32 %v2069, %v2085
        %v2102 = vadd.f32 %v2070, %v2086
        %2103 = vst [vmem:[%s423] sm:$0xff] %v2087
        %2104 = vst [vmem:[%s423 + $0x8] sm:$0xff] %v2088
        %2105 = vst [vmem:[%s423 + $0x10] sm:$0xff] %v2089
        %2106 = vst [vmem:[%s423 + $0x18] sm:$0xff] %v2090
        %2107 = vst [vmem:[%s423 + $0x20] sm:$0xff] %v2091
        %2108 = vst [vmem:[%s423 + $0x28] sm:$0xff] %v2092
        %2109 = vst [vmem:[%s423 + $0x30] sm:$0xff] %v2093
        %2110 = vst [vmem:[%s423 + $0x38] sm:$0xff] %v2094
        %2111 = vst [vmem:[%s423 + $0x40] sm:$0xff] %v2095
        %2112 = vst [vmem:[%s423 + $0x48] sm:$0xff] %v2096
        %2113 = vst [vmem:[%s423 + $0x50] sm:$0xff] %v2097
        %2114 = vst [vmem:[%s423 + $0x58] sm:$0xff] %v2098
        %2115 = vst [vmem:[%s423 + $0x60] sm:$0xff] %v2099
        %2116 = vst [vmem:[%s423 + $0x68] sm:$0xff] %v2100
        %2117 = vst [vmem:[%s423 + $0x70] sm:$0xff] %v2101
        %2118 = vst [vmem:[%s423 + $0x78] sm:$0xff] %v2102
        %s2119 = sand.u32 %s135, 1
        %s2120 = sand.u32 %s135, 1
        %s2121 = smul.addr %s2120, 128
        %s2122 = scalar_lea.vmem [#allocation6], %s2121
        // Predicated region
        $region113: #{a_call__.7} parent=103 // pred_check
          %p2123 = pneg %p145
        $region114: #{a_call__.7} parent=103 // pred_check_branch
          %2125 = sbr.rel (%p2123) target = $region116
        $region115: #{a_call__.7} parent=103 // pred_region
          %s2126 = smul.addr %s19, 32
          %s2127 = sadd.s32 %s20, %s2126
          %s2128 = smul.addr %s2127, 8
          %s2129 = scalar_lea.vmem %s4, %s2128
          // Predicated region
          $region117: #{a_call__.7} parent=115 // pred_check
            _
          $region118: #{a_call__.7} parent=115 // pred_check_branch
            %2131 = sbr.rel (0) target = $region120
          $region119: #{a_call__.7} parent=115 // pred_region
            // Predicated region
            $region121: #{a_call__.7} parent=119 // pred_check
              _
            $region122: #{a_call__.7} parent=119 // pred_check_branch
              %2133 = sbr.rel (0) target = $region124
            $region123: #{a_call__.7} parent=119 // pred_region
              // Predicated region
              $region136: #{a_call__.7} parent=123 // pred_check
                _
              $region137: #{a_call__.7} parent=123 // pred_check_branch
                %2179 = sbr.rel (0) target = $region139
              $region138: #{a_call__.7} parent=123 // pred_region
                loop: start=0, step=1, limit=1
                $region140: #{a_call__.7} parent=138 // loop_pre_header
                  _
                $region141: #{a_call__.7} parent=138 // loop_header
                  %s2181 = sphi 0, %s2185
                  %p2182 = scmp.ge.s32.totalorder %s2181, 1
                  %s2186 = sphi %s2122, %s2122
                  %s2187 = sphi %s2129, %s2129
                $region142: #{a_call__.7} parent=138 // loop_header_branch
                  %2184 = sbr.rel (%p2182) target = $region146
                $region143: #{a_call__.7} parent=138 // loop_body
                  %v2188 = vld [vmem:[%s2186] sm:$0xff]
                  %2189 = vst [vmem:[%s2187] sm:$0xff] %v2188
                  %v2190 = vld [vmem:[%s2186 + $0x8] sm:$0xff]
                  %2191 = vst [vmem:[%s2187 + $0x10] sm:$0xff] %v2190
                  %v2192 = vld [vmem:[%s2186 + $0x10] sm:$0xff]
                  %2193 = vst [vmem:[%s2187 + $0x20] sm:$0xff] %v2192
                  %v2194 = vld [vmem:[%s2186 + $0x18] sm:$0xff]
                  %2195 = vst [vmem:[%s2187 + $0x30] sm:$0xff] %v2194
                  %v2196 = vld [vmem:[%s2186 + $0x20] sm:$0xff]
                  %2197 = vst [vmem:[%s2187 + $0x40] sm:$0xff] %v2196
                  %v2198 = vld [vmem:[%s2186 + $0x28] sm:$0xff]
                  %2199 = vst [vmem:[%s2187 + $0x50] sm:$0xff] %v2198
                  %v2200 = vld [vmem:[%s2186 + $0x30] sm:$0xff]
                  %2201 = vst [vmem:[%s2187 + $0x60] sm:$0xff] %v2200
                  %v2202 = vld [vmem:[%s2186 + $0x38] sm:$0xff]
                  %2203 = vst [vmem:[%s2187 + $0x70] sm:$0xff] %v2202
                  %v2204 = vld [vmem:[%s2186 + $0x40] sm:$0xff]
                  %2205 = vst [vmem:[%s2187 + $0x80] sm:$0xff] %v2204
                  %v2206 = vld [vmem:[%s2186 + $0x48] sm:$0xff]
                  %2207 = vst [vmem:[%s2187 + $0x90] sm:$0xff] %v2206
                  %v2208 = vld [vmem:[%s2186 + $0x50] sm:$0xff]
                  %2209 = vst [vmem:[%s2187 + $0xa0] sm:$0xff] %v2208
                  %v2210 = vld [vmem:[%s2186 + $0x58] sm:$0xff]
                  %2211 = vst [vmem:[%s2187 + $0xb0] sm:$0xff] %v2210
                  %v2212 = vld [vmem:[%s2186 + $0x60] sm:$0xff]
                  %2213 = vst [vmem:[%s2187 + $0xc0] sm:$0xff] %v2212
                  %v2214 = vld [vmem:[%s2186 + $0x68] sm:$0xff]
                  %2215 = vst [vmem:[%s2187 + $0xd0] sm:$0xff] %v2214
                  %v2216 = vld [vmem:[%s2186 + $0x70] sm:$0xff]
                  %2217 = vst [vmem:[%s2187 + $0xe0] sm:$0xff] %v2216
                  %v2218 = vld [vmem:[%s2186 + $0x78] sm:$0xff]
                  %2219 = vst [vmem:[%s2187 + $0xf0] sm:$0xff] %v2218
                $region144: #{a_call__.7} parent=138 // loop_footer
                  %s2185 = sadd.s32 1, %s2181
                $region145: #{a_call__.7} parent=138 // loop_footer_branch
                  %2180 = sbr.rel target = $region141
                $region146: #{a_call__.7} parent=138 // loop_exit
                  _
              $region139: #{a_call__.7} parent=123 // pred_fallthru
                _
              // Predicated region
              $region147: #{a_call__.7} parent=123 // pred_check
                _
              $region148: #{a_call__.7} parent=123 // pred_check_branch
                %2221 = sbr.rel target = $region150
              $region149: #{a_call__.7} parent=123 // pred_region
                _
              $region150: #{a_call__.7} parent=123 // pred_fallthru
                _
            $region124: #{a_call__.7} parent=119 // pred_fallthru
              _
            // Predicated region
            $region125: #{a_call__.7} parent=119 // pred_check
              _
            $region126: #{a_call__.7} parent=119 // pred_check_branch
              %2135 = sbr.rel target = $region128
            $region127: #{a_call__.7} parent=119 // pred_region
              %s2137 = ssub.s32 256, 1
              loop: start=0, step=1, limit=1
              $region129: #{a_call__.7} parent=127 // loop_pre_header
                _
              $region130: #{a_call__.7} parent=127 // loop_header
                %s2139 = sphi 0, %s2143
                %p2140 = scmp.ge.s32.totalorder %s2139, 1
                %s2144 = sphi %s2122, %s2122
                %s2145 = sphi %s2129, %s2129
              $region131: #{a_call__.7} parent=127 // loop_header_branch
                %2142 = sbr.rel (%p2140) target = $region135
              $region132: #{a_call__.7} parent=127 // loop_body
                %v2146 = vld [vmem:[%s2144] sm:%s2137]
                %2147 = vst [vmem:[%s2145] sm:%s2137] %v2146
                %v2148 = vld [vmem:[%s2144 + $0x8] sm:%s2137]
                %2149 = vst [vmem:[%s2145 + $0x10] sm:%s2137] %v2148
                %v2150 = vld [vmem:[%s2144 + $0x10] sm:%s2137]
                %2151 = vst [vmem:[%s2145 + $0x20] sm:%s2137] %v2150
                %v2152 = vld [vmem:[%s2144 + $0x18] sm:%s2137]
                %2153 = vst [vmem:[%s2145 + $0x30] sm:%s2137] %v2152
                %v2154 = vld [vmem:[%s2144 + $0x20] sm:%s2137]
                %2155 = vst [vmem:[%s2145 + $0x40] sm:%s2137] %v2154
                %v2156 = vld [vmem:[%s2144 + $0x28] sm:%s2137]
                %2157 = vst [vmem:[%s2145 + $0x50] sm:%s2137] %v2156
                %v2158 = vld [vmem:[%s2144 + $0x30] sm:%s2137]
                %2159 = vst [vmem:[%s2145 + $0x60] sm:%s2137] %v2158
                %v2160 = vld [vmem:[%s2144 + $0x38] sm:%s2137]
                %2161 = vst [vmem:[%s2145 + $0x70] sm:%s2137] %v2160
                %v2162 = vld [vmem:[%s2144 + $0x40] sm:%s2137]
                %2163 = vst [vmem:[%s2145 + $0x80] sm:%s2137] %v2162
                %v2164 = vld [vmem:[%s2144 + $0x48] sm:%s2137]
                %2165 = vst [vmem:[%s2145 + $0x90] sm:%s2137] %v2164
                %v2166 = vld [vmem:[%s2144 + $0x50] sm:%s2137]
                %2167 = vst [vmem:[%s2145 + $0xa0] sm:%s2137] %v2166
                %v2168 = vld [vmem:[%s2144 + $0x58] sm:%s2137]
                %2169 = vst [vmem:[%s2145 + $0xb0] sm:%s2137] %v2168
                %v2170 = vld [vmem:[%s2144 + $0x60] sm:%s2137]
                %2171 = vst [vmem:[%s2145 + $0xc0] sm:%s2137] %v2170
                %v2172 = vld [vmem:[%s2144 + $0x68] sm:%s2137]
                %2173 = vst [vmem:[%s2145 + $0xd0] sm:%s2137] %v2172
                %v2174 = vld [vmem:[%s2144 + $0x70] sm:%s2137]
                %2175 = vst [vmem:[%s2145 + $0xe0] sm:%s2137] %v2174
                %v2176 = vld [vmem:[%s2144 + $0x78] sm:%s2137]
                %2177 = vst [vmem:[%s2145 + $0xf0] sm:%s2137] %v2176
              $region133: #{a_call__.7} parent=127 // loop_footer
                %s2143 = sadd.s32 1, %s2139
              $region134: #{a_call__.7} parent=127 // loop_footer_branch
                %2138 = sbr.rel target = $region130
              $region135: #{a_call__.7} parent=127 // loop_exit
                _
            $region128: #{a_call__.7} parent=119 // pred_fallthru
              _
          $region120: #{a_call__.7} parent=115 // pred_fallthru
            _
          %2222 = vnop
        $region116: #{a_call__.7} parent=103 // pred_fallthru
          _
      $region104: #{a_call__.7} parent=5 // pred_fallthru
        _
      %p2223 = scmp.le.s32.totalorder 2, %s10
      // Predicated region
      $region151: #{a_call__.7} parent=5 // pred_check
        %p2224 = pneg %p2223
      $region152: #{a_call__.7} parent=5 // pred_check_branch
        %2226 = sbr.rel (%p2224) target = $region154
      $region153: #{a_call__.7} parent=5 // pred_region
        %s2227 = ssub.s32 %s10, 2
        // Predicated region
        $region155: #{a_call__.7} parent=153 // pred_check
          %p2228 = pneg %p151
        $region156: #{a_call__.7} parent=153 // pred_check_branch
          %2230 = sbr.rel (%p2228) target = $region158
        $region157: #{a_call__.7} parent=153 // pred_region
          %s2231 = sand.u32 %s136, 1
          %s2232 = sand.u32 %s136, 1
          %s2233 = smul.addr %s2232, 128
          %s2234 = scalar_lea.vmem [#allocation6], %s2233
        $region158: #{a_call__.7} parent=153 // pred_fallthru
          _
      $region154: #{a_call__.7} parent=5 // pred_fallthru
        _
    $region6: #{a_call__.7} parent=1 // loop_footer
      %s14 = sadd.s32 1, %s10
    $region7: #{a_call__.7} parent=1 // loop_footer_branch
      %9 = sbr.rel target = $region3
    $region8: #{a_call__.7} parent=1 // loop_exit
      _

// kernel: a_call__.5
$region0: #{a_call__.5}
  #allocation0 [shape = 'u32[]', space=smem, size = 0x4, offset = 0x4, fixed_abs, tag = 'smem constant byte address 0x4 - core index']
  #allocation1 [shape = 'u32[72,128]{1,0:T(1,128)}', space=vmem, size = 0x9000, scoped, tag = 'internal scratch']
  #allocation2 [shape = 'bf16[8,22,128]{2,1,0:T(8,128)(2,1)}', space=vmem, size = 0xc000, scoped, tag = 'scratch operand']
  #allocation3 [shape = 'f32[128,128]{1,0:T(8,128)}', space=vmem, size = 0x10000, scoped, tag = 'scratch operand']
  %s0 = inlined_call_operand.vmem [shape: f32[2,16,16,128], index: 0, kind: input, shape index: {}]
  %s1 = inlined_call_operand.hbm [shape: bf16[7,128,128], index: 1, kind: input, shape index: {}]
  %s2 = inlined_call_operand.vmem [shape: f32[1,128], index: 2, kind: input, shape index: {}]
  %s3 = inlined_call_operand.vmem [shape: f32[2,16,16,128], index: 3, kind: output, shape index: {}]
  %s4 = sld [smem:[#allocation0]]
  $region49: #{a_call__.5} parent=0
    _
  %s6 = ssub.s32 1, %s4
  %s7 = scalar_select 0, %s6, %s4
  $region1: #{a_call__.5} parent=0
    #allocation4 [shape = 'u8[229376]{0}', space=vmem, size = 0x38000, scoped, tag = 'input window, operand 1, single buffered']
    #allocation5 [shape = 's32[2]{0}', space=sflag, size = 0x8, scoped, tag = 'scoped memory for a_call__.5']
    %8 = vsyncpa [#allocation5], 0
    loop: start=0, step=1, limit=6
    $region2: #{a_call__.5} parent=1 // loop_pre_header
      _
    $region3: #{a_call__.5} parent=1 // loop_header
      %s10 = sphi 0, %s14
      %p11 = scmp.ge.s32.totalorder %s10, 6
      %s17 = sphi 0, %s29
      %s18 = sphi 0, %s25
      %s19 = sphi 0, %s17
      %s20 = sphi 0, %s18
      %s21 = sphi 0, %s19
      %s22 = sphi 0, %s20
      %s34 = sphi 0, %s36
      %s37 = sphi 0, %s34
      %s38 = sphi 0, %s37
      %s54 = sphi 0, %s38
      %s58 = sphi 0, %s58
      %s60 = sphi 0, %s58
      %s61 = sphi 0, %s60
      %s75 = sphi 0, %s61
      %s79 = sphi 0, %s79
      %s81 = sphi 0, %s79
      %s82 = sphi 0, %s81
      %s96 = sphi 0, %s82
      %s104 = sphi 0, %s106
      %s107 = sphi 0, %s104
      %s108 = sphi 0, %s107
      %s124 = sphi 0, %s108
    $region4: #{a_call__.5} parent=1 // loop_header_branch
      %13 = sbr.rel (%p11) target = $region8
    $region5: #{a_call__.5} parent=1 // loop_body
      %s15 = ssub.s32 %s10, 1
      %s16 = ssub.s32 %s10, 2
      %s23 = sadd.s32 1, %s18
      %p24 = scmp.ge.s32.totalorder %s23, 2
      %s25 = scalar_select %p24, 0, %s23
      %s26 = sadd.s32 1, %s17
      %s27 = scalar_select %p24, %s26, %s17
      %p28 = scmp.ge.s32.totalorder %s27, 2
      %s29 = scalar_select %p28, 0, %s27
      %s30 = ssub.s32 %s17, %s29
      %s31 = ssub.s32 %s18, %s25
      %s32 = sor.u32 %s30, %s31
      %p33 = scmp.eq.s32.totalorder %s32, 0
      %s35 = sadd.s32 %s34, 1
      %s36 = scalar_select %p33, %s34, %s35
      %p39 = pneg %p33
      %p40 = scmp.eq.s32.totalorder %s10, 3
      %p41 = por %p39, %p40
      %p42 = scmp.ne.s32.totalorder %s34, %s37
      %p43 = scmp.eq.s32.totalorder %s10, 0
      %p44 = por %p42, %p43
      %p45 = scmp.ne.s32.totalorder %s34, %s37
      %p46 = scmp.eq.s32.totalorder %s15, 3
      %p47 = por %p45, %p46
      %p48 = scmp.ne.s32.totalorder %s37, %s38
      %p49 = scmp.eq.s32.totalorder %s15, 0
      %p50 = por %p48, %p49
      %p51 = scmp.ne.s32.totalorder %s37, %s38
      %p52 = scmp.eq.s32.totalorder %s16, 3
      %p53 = por %p51, %p52
      %p55 = scmp.ne.s32.totalorder %s38, %s54
      %p56 = scmp.eq.s32.totalorder %s16, 0
      %p57 = por %p55, %p56
      %s59 = sadd.s32 %s58, 1
      %p62 = scmp.eq.s32.totalorder %s10, 3
      %p63 = scmp.ne.s32.totalorder %s58, %s60
      %p64 = scmp.eq.s32.totalorder %s10, 0
      %p65 = por %p63, %p64
      %p66 = scmp.ne.s32.totalorder %s58, %s60
      %p67 = scmp.eq.s32.totalorder %s15, 3
      %p68 = por %p66, %p67
      %p69 = scmp.ne.s32.totalorder %s60, %s61
      %p70 = scmp.eq.s32.totalorder %s15, 0
      %p71 = por %p69, %p70
      %p72 = scmp.ne.s32.totalorder %s60, %s61
      %p73 = scmp.eq.s32.totalorder %s16, 3
      %p74 = por %p72, %p73
      %p76 = scmp.ne.s32.totalorder %s61, %s75
      %p77 = scmp.eq.s32.totalorder %s16, 0
      %p78 = por %p76, %p77
      %s80 = sadd.s32 %s79, 1
      %p83 = scmp.eq.s32.totalorder %s10, 3
      %p84 = scmp.ne.s32.totalorder %s79, %s81
      %p85 = scmp.eq.s32.totalorder %s10, 0
      %p86 = por %p84, %p85
      %p87 = scmp.ne.s32.totalorder %s79, %s81
      %p88 = scmp.eq.s32.totalorder %s15, 3
      %p89 = por %p87, %p88
      %p90 = scmp.ne.s32.totalorder %s81, %s82
      %p91 = scmp.eq.s32.totalorder %s15, 0
      %p92 = por %p90, %p91
      %p93 = scmp.ne.s32.totalorder %s81, %s82
      %p94 = scmp.eq.s32.totalorder %s16, 3
      %p95 = por %p93, %p94
      %p97 = scmp.ne.s32.totalorder %s82, %s96
      %p98 = scmp.eq.s32.totalorder %s16, 0
      %p99 = por %p97, %p98
      %s100 = ssub.s32 %s17, %s29
      %s101 = ssub.s32 %s18, %s25
      %s102 = sor.u32 %s100, %s101
      %p103 = scmp.eq.s32.totalorder %s102, 0
      %s105 = sadd.s32 %s104, 1
      %s106 = scalar_select %p103, %s104, %s105
      %p109 = pneg %p103
      %p110 = scmp.eq.s32.totalorder %s10, 3
      %p111 = por %p109, %p110
      %p112 = scmp.ne.s32.totalorder %s104, %s107
      %p113 = scmp.eq.s32.totalorder %s10, 0
      %p114 = por %p112, %p113
      %p115 = scmp.ne.s32.totalorder %s104, %s107
      %p116 = scmp.eq.s32.totalorder %s15, 3
      %p117 = por %p115, %p116
      %p118 = scmp.ne.s32.totalorder %s107, %s108
      %p119 = scmp.eq.s32.totalorder %s15, 0
      %p120 = por %p118, %p119
      %p121 = scmp.ne.s32.totalorder %s107, %s108
      %p122 = scmp.eq.s32.totalorder %s16, 3
      %p123 = por %p121, %p122
      %p125 = scmp.ne.s32.totalorder %s108, %s124
      %p126 = scmp.eq.s32.totalorder %s16, 0
      %p127 = por %p125, %p126
      %p128 = scmp.le.s32.totalorder 1, %s10
      %p129 = scmp.lt.s32.totalorder %s10, 5
      %p130 = pnand %p128, %p129
      %p131 = pneg %p130
      // Predicated region
      $region9: #{a_call__.5} parent=5 // pred_check
        _
      $region10: #{a_call__.5} parent=5 // pred_check_branch
        %133 = sbr.rel (%p130) target = $region12
      $region11: #{a_call__.5} parent=5 // pred_region
        %s134 = ssub.s32 %s10, 1
        // Predicated region
        $region13: #{a_call__.5} parent=11 // pred_check
          %p135 = pneg %p71
        $region14: #{a_call__.5} parent=11 // pred_check_branch
          %137 = sbr.rel (%p135) target = $region16
        $region15: #{a_call__.5} parent=11 // pred_region
          %139 = vsyncadd [#allocation5], 0
          %s140 = sshll.u32 %s1, 4
          %s141 = int_to_ptr.hbm [resolvable:$true] %s140
          %s142 = sshll.u32 [#allocation4], 4
          %s143 = int_to_ptr.vmem [resolvable:$true] %s142
          %148 = dma.hbm_to_vmem [thread:$0]  %s141, 7168, %s143, [#allocation5], 64, 64, 4
        $region16: #{a_call__.5} parent=11 // pred_fallthru
          _
        // Predicated region
        $region17: #{a_call__.5} parent=11 // pred_check
          %p149 = pneg %p92
        $region18: #{a_call__.5} parent=11 // pred_check_branch
          %151 = sbr.rel (%p149) target = $region20
        $region19: #{a_call__.5} parent=11 // pred_region
          _
        $region20: #{a_call__.5} parent=11 // pred_fallthru
          _
      $region12: #{a_call__.5} parent=5 // pred_fallthru
        _
      %p152 = scmp.lt.s32.totalorder %s10, 4
      // Predicated region
      $region21: #{a_call__.5} parent=5 // pred_check
        %p153 = pneg %p152
      $region22: #{a_call__.5} parent=5 // pred_check_branch
        %155 = sbr.rel (%p153) target = $region24
      $region23: #{a_call__.5} parent=5 // pred_region
        // Predicated region
        $region25: #{a_call__.5} parent=23 // pred_check
          %p156 = pneg %p44
        $region26: #{a_call__.5} parent=23 // pred_check_branch
          %158 = sbr.rel (%p156) target = $region28
        $region27: #{a_call__.5} parent=23 // pred_region
          %s159 = smul.u32 8, %s18
          %p160 = scmp.lt.s32.totalorder %s17, 1
          %s161 = scalar_select %p160, %s17, 1
          %p162 = scmp.lt.s32.totalorder %s159, 15
          %s163 = scalar_select %p162, %s159, 15
          %s164 = smul.addr %s163, 2
          %s165 = smul.addr %s161, 32
          %s166 = sadd.s32 %s164, %s165
          %s167 = smul.addr %s166, 8
          %s168 = scalar_lea.vmem %s0, %s167
          %s169 = smul.u32 8, %s18
        $region28: #{a_call__.5} parent=23 // pred_fallthru
          _
      $region24: #{a_call__.5} parent=5 // pred_fallthru
        _
      %p170 = scmp.le.s32.totalorder 1, %s10
      %p171 = scmp.lt.s32.totalorder %s10, 5
      %p172 = pnand %p170, %p171
      %p173 = pneg %p172
      // Predicated region
      $region29: #{a_call__.5} parent=5 // pred_check
        _
      $region30: #{a_call__.5} parent=5 // pred_check_branch
        %175 = sbr.rel (%p172) target = $region32
      $region31: #{a_call__.5} parent=5 // pred_region
        %s176 = ssub.s32 %s10, 1
        // Predicated region
        $region33: #{a_call__.5} parent=31 // pred_check
          %p177 = pneg %p71
        $region34: #{a_call__.5} parent=31 // pred_check_branch
          %179 = sbr.rel (%p177) target = $region36
        $region35: #{a_call__.5} parent=31 // pred_region
          %181 = dma.done [#allocation5], 7168
        $region36: #{a_call__.5} parent=31 // pred_fallthru
          _
        %s182 = smul.u32 8, %s20
        %p183 = scmp.lt.s32.totalorder %s19, 1
        %s184 = scalar_select %p183, %s19, 1
        %p185 = scmp.lt.s32.totalorder %s182, 15
        %s186 = scalar_select %p185, %s182, 15
        %s187 = smul.addr %s186, 2
        %s188 = smul.addr %s184, 32
        %s189 = sadd.s32 %s187, %s188
        %s190 = smul.addr %s189, 8
        %s191 = scalar_lea.vmem %s0, %s190
        %p192 = pneg %p50
        %p193 = pneg %p47
        %p194 = pneg %p71
        %p195 = pneg %p68
        %p196 = pneg %p92
        %p197 = pneg %p89
        %p198 = pneg %p120
        %p199 = pneg %p117
        %s200 = smul.u32 8, %s20
        %p201 = scmp.lt.s32.totalorder %s19, 1
        %s202 = scalar_select %p201, %s19, 1
        %p203 = scmp.lt.s32.totalorder %s200, 15
        %s204 = scalar_select %p203, %s200, 15
        %s205 = smul.addr %s204, 2
        %s206 = smul.addr %s202, 32
        %s207 = sadd.s32 %s205, %s206
        %s208 = smul.addr %s207, 8
        %s209 = scalar_lea.vmem %s3, %s208
        %s210 = smul.u32 8, %s20
        %p211 = scmp.lt.s32.totalorder %s19, 1
        %s212 = scalar_select %p211, %s19, 1
        %p213 = scmp.lt.s32.totalorder %s210, 15
        %s214 = scalar_select %p213, %s210, 15
        %s215 = smul.addr %s214, 2
        %s216 = smul.addr %s212, 32
        %s217 = sadd.s32 %s215, %s216
        %s218 = smul.addr %s217, 8
        %s219 = scalar_lea.vmem %s0, %s218
        %s220 = smul.u32 8, %s20
        %s221 = smul.u32 8, %s20
        %p222 = scmp.lt.s32.totalorder %s19, 1
        %s223 = scalar_select %p222, %s19, 1
        %p224 = scmp.lt.s32.totalorder %s221, 15
        %s225 = scalar_select %p224, %s221, 15
        %s226 = smul.addr %s225, 2
        %s227 = smul.addr %s223, 32
        %s228 = sadd.s32 %s226, %s227
        %s229 = smul.addr %s228, 8
        %s230 = scalar_lea.vmem %s3, %s229
        %s231 = smul.u32 8, %s20
        %v233 = vld [vmem:[%s219] sm:$0xff]
        %v234 = vld [vmem:[%s219 + $0x8] sm:$0xff]
        %v235 = vld [vmem:[%s219 + $0x10] sm:$0xff]
        %v236 = vld [vmem:[%s219 + $0x18] sm:$0xff]
        %v237 = vld [vmem:[%s219 + $0x20] sm:$0xff]
        %v238 = vld [vmem:[%s219 + $0x28] sm:$0xff]
        %v239 = vld [vmem:[%s219 + $0x30] sm:$0xff]
        %v240 = vld [vmem:[%s219 + $0x38] sm:$0xff]
        %v241 = vld [vmem:[%s219 + $0x40] sm:$0xff]
        %v242 = vld [vmem:[%s219 + $0x48] sm:$0xff]
        %v243 = vld [vmem:[%s219 + $0x50] sm:$0xff]
        %v244 = vld [vmem:[%s219 + $0x58] sm:$0xff]
        %v245 = vld [vmem:[%s219 + $0x60] sm:$0xff]
        %v246 = vld [vmem:[%s219 + $0x68] sm:$0xff]
        %v247 = vld [vmem:[%s219 + $0x70] sm:$0xff]
        %v248 = vld [vmem:[%s219 + $0x78] sm:$0xff]
        %v249 = vpack.c.bf16 %v233, %v233
        %v250 = vpack.c.bf16 %v234, %v234
        %v251 = vpack.c.bf16 %v235, %v235
        %v252 = vpack.c.bf16 %v236, %v236
        %v253 = vpack.c.bf16 %v237, %v237
        %v254 = vpack.c.bf16 %v238, %v238
        %v255 = vpack.c.bf16 %v239, %v239
        %v256 = vpack.c.bf16 %v240, %v240
        %v257 = vpack.c.bf16 %v241, %v241
        %v258 = vpack.c.bf16 %v242, %v242
        %v259 = vpack.c.bf16 %v243, %v243
        %v260 = vpack.c.bf16 %v244, %v244
        %v261 = vpack.c.bf16 %v245, %v245
        %v262 = vpack.c.bf16 %v246, %v246
        %v263 = vpack.c.bf16 %v247, %v247
        %v264 = vpack.c.bf16 %v248, %v248
        %vm265 = vcmask 1041408
        %vm266 = vsmask.f32 1280
        %vm267 = vmand %vm265, %vm266
        %v268 = vld [vmem:[#allocation2] sm:$0x3]
        %v269 = vsel %vm267, 0, %v268
        %270 = vst [vmem:[#allocation2] sm:$0x3] %v269
        %v271 = vld [vmem:[#allocation2 + $0xc] sm:$0x3]
        %v272 = vsel %vm267, 0, %v271
        %273 = vst [vmem:[#allocation2 + $0xc] sm:$0x3] %v272
        %v274 = vld [vmem:[#allocation2 + $0x18] sm:$0x3]
        %v275 = vsel %vm267, 0, %v274
        %276 = vst [vmem:[#allocation2 + $0x18] sm:$0x3] %v275
        %v277 = vld [vmem:[#allocation2 + $0x24] sm:$0x3]
        %v278 = vsel %vm267, 0, %v277
        %279 = vst [vmem:[#allocation2 + $0x24] sm:$0x3] %v278
        %v280 = vld [vmem:[#allocation2 + $0x30] sm:$0x3]
        %v281 = vsel %vm267, 0, %v280
        %282 = vst [vmem:[#allocation2 + $0x30] sm:$0x3] %v281
        %v283 = vld [vmem:[#allocation2 + $0x3c] sm:$0x3]
        %v284 = vsel %vm267, 0, %v283
        %285 = vst [vmem:[#allocation2 + $0x3c] sm:$0x3] %v284
        %v286 = vld [vmem:[#allocation2 + $0x48] sm:$0x3]
        %v287 = vsel %vm267, 0, %v286
        %288 = vst [vmem:[#allocation2 + $0x48] sm:$0x3] %v287
        %v289 = vld [vmem:[#allocation2 + $0x54] sm:$0x3]
        %v290 = vsel %vm267, 0, %v289
        %291 = vst [vmem:[#allocation2 + $0x54] sm:$0x3] %v290
        %vm292 = vcmask 1042433
        %vm293 = vsmask.f32 7942
        %vm294 = vmand %vm292, %vm293
        %v295 = vld [vmem:[#allocation2 + $0x8] sm:$0x6]
        %v296 = vsel %vm294, 0, %v295
        %297 = vst [vmem:[#allocation2 + $0x8] sm:$0x6] %v296
        %v298 = vld [vmem:[#allocation2 + $0x14] sm:$0x6]
        %v299 = vsel %vm294, 0, %v298
        %300 = vst [vmem:[#allocation2 + $0x14] sm:$0x6] %v299
        %v301 = vld [vmem:[#allocation2 + $0x20] sm:$0x6]
        %v302 = vsel %vm294, 0, %v301
        %303 = vst [vmem:[#allocation2 + $0x20] sm:$0x6] %v302
        %v304 = vld [vmem:[#allocation2 + $0x2c] sm:$0x6]
        %v305 = vsel %vm294, 0, %v304
        %306 = vst [vmem:[#allocation2 + $0x2c] sm:$0x6] %v305
        %v307 = vld [vmem:[#allocation2 + $0x38] sm:$0x6]
        %v308 = vsel %vm294, 0, %v307
        %309 = vst [vmem:[#allocation2 + $0x38] sm:$0x6] %v308
        %v310 = vld [vmem:[#allocation2 + $0x44] sm:$0x6]
        %v311 = vsel %vm294, 0, %v310
        %312 = vst [vmem:[#allocation2 + $0x44] sm:$0x6] %v311
        %v313 = vld [vmem:[#allocation2 + $0x50] sm:$0x6]
        %v314 = vsel %vm294, 0, %v313
        %315 = vst [vmem:[#allocation2 + $0x50] sm:$0x6] %v314
        %v316 = vld [vmem:[#allocation2 + $0x5c] sm:$0x6]
        %v317 = vsel %vm294, 0, %v316
        %318 = vst [vmem:[#allocation2 + $0x5c] sm:$0x6] %v317
        %vm319 = vsmask.f32 5392
        %vm320 = vmor %vm266, %vm319
        %v322 = vshrl.u32 %v249, 16
        %v324 = vrot.slane %v322, 6
        %v325 = vshll.u32 %v249, 16
        %v327 = vrot.slane %v325, 7
        %v328 = vor.u32 %v324, %v327
        %v329 = vrot.slane %v328, 4
        %v331 = vshrl.u32 %v250, 16
        %v333 = vrot.slane %v331, 6
        %v334 = vshll.u32 %v250, 16
        %v336 = vrot.slane %v334, 7
        %v337 = vor.u32 %v333, %v336
        %v338 = vsel %vm320, %v329, %v337
        %v339 = vrot.slane %v337, 4
        %v341 = vshrl.u32 %v251, 16
        %v343 = vrot.slane %v341, 6
        %v344 = vshll.u32 %v251, 16
        %v346 = vrot.slane %v344, 7
        %v347 = vor.u32 %v343, %v346
        %v348 = vrot.slane %v347, 4
        %v350 = vshrl.u32 %v252, 16
        %v352 = vrot.slane %v350, 6
        %v353 = vshll.u32 %v252, 16
        %v355 = vrot.slane %v353, 7
        %v356 = vor.u32 %v352, %v355
        %v357 = vsel %vm320, %v348, %v356
        %v358 = vrot.slane %v356, 4
        %v360 = vshrl.u32 %v253, 16
        %v362 = vrot.slane %v360, 6
        %v363 = vshll.u32 %v253, 16
        %v365 = vrot.slane %v363, 7
        %v366 = vor.u32 %v362, %v365
        %v367 = vrot.slane %v366, 4
        %v369 = vshrl.u32 %v254, 16
        %v371 = vrot.slane %v369, 6
        %v372 = vshll.u32 %v254, 16
        %v374 = vrot.slane %v372, 7
        %v375 = vor.u32 %v371, %v374
        %v376 = vsel %vm320, %v367, %v375
        %v377 = vrot.slane %v375, 4
        %v379 = vshrl.u32 %v255, 16
        %v381 = vrot.slane %v379, 6
        %v382 = vshll.u32 %v255, 16
        %v384 = vrot.slane %v382, 7
        %v385 = vor.u32 %v381, %v384
        %v386 = vrot.slane %v385, 4
        %v388 = vshrl.u32 %v256, 16
        %v390 = vrot.slane %v388, 6
        %v391 = vshll.u32 %v256, 16
        %v393 = vrot.slane %v391, 7
        %v394 = vor.u32 %v390, %v393
        %v395 = vsel %vm320, %v386, %v394
        %v396 = vrot.slane %v394, 4
        %v398 = vshrl.u32 %v257, 16
        %v400 = vrot.slane %v398, 6
        %v401 = vshll.u32 %v257, 16
        %v403 = vrot.slane %v401, 7
        %v404 = vor.u32 %v400, %v403
        %v405 = vrot.slane %v404, 4
        %v407 = vshrl.u32 %v258, 16
        %v409 = vrot.slane %v407, 6
        %v410 = vshll.u32 %v258, 16
        %v412 = vrot.slane %v410, 7
        %v413 = vor.u32 %v409, %v412
        %v414 = vsel %vm320, %v405, %v413
        %v415 = vrot.slane %v413, 4
        %v417 = vshrl.u32 %v259, 16
        %v419 = vrot.slane %v417, 6
        %v420 = vshll.u32 %v259, 16
        %v422 = vrot.slane %v420, 7
        %v423 = vor.u32 %v419, %v422
        %v424 = vrot.slane %v423, 4
        %v426 = vshrl.u32 %v260, 16
        %v428 = vrot.slane %v426, 6
        %v429 = vshll.u32 %v260, 16
        %v431 = vrot.slane %v429, 7
        %v432 = vor.u32 %v428, %v431
        %v433 = vsel %vm320, %v424, %v432
        %v434 = vrot.slane %v432, 4
        %v436 = vshrl.u32 %v261, 16
        %v438 = vrot.slane %v436, 6
        %v439 = vshll.u32 %v261, 16
        %v441 = vrot.slane %v439, 7
        %v442 = vor.u32 %v438, %v441
        %v443 = vrot.slane %v442, 4
        %v445 = vshrl.u32 %v262, 16
        %v447 = vrot.slane %v445, 6
        %v448 = vshll.u32 %v262, 16
        %v450 = vrot.slane %v448, 7
        %v451 = vor.u32 %v447, %v450
        %v452 = vsel %vm320, %v443, %v451
        %v453 = vrot.slane %v451, 4
        %v455 = vshrl.u32 %v263, 16
        %v457 = vrot.slane %v455, 6
        %v458 = vshll.u32 %v263, 16
        %v460 = vrot.slane %v458, 7
        %v461 = vor.u32 %v457, %v460
        %v462 = vrot.slane %v461, 4
        %v464 = vshrl.u32 %v264, 16
        %v466 = vrot.slane %v464, 6
        %v467 = vshll.u32 %v264, 16
        %v469 = vrot.slane %v467, 7
        %v470 = vor.u32 %v466, %v469
        %v471 = vsel %vm320, %v462, %v470
        %v472 = vrot.slane %v470, 4
        %vm497 = vcmask 1043457
        %vm498 = vmand %vm497, %vm293
        %v499 = vld [vmem:[#allocation2] sm:$0xe]
        %v500 = vsel %vm498, %v328, %v499
        %501 = vst [vmem:[#allocation2] sm:$0xe] %v500
        %502 = vst [vmem:[#allocation2 + $0x4] sm:$0xf] %v338
        %v503 = vld [vmem:[#allocation2 + $0x8] sm:$0x3]
        %v504 = vsel %vm267, %v339, %v503
        %505 = vst [vmem:[#allocation2 + $0x8] sm:$0x3] %v504
        %v506 = vld [vmem:[#allocation2 + $0xc] sm:$0xe]
        %v507 = vsel %vm498, %v347, %v506
        %508 = vst [vmem:[#allocation2 + $0xc] sm:$0xe] %v507
        %509 = vst [vmem:[#allocation2 + $0x10] sm:$0xf] %v357
        %v510 = vld [vmem:[#allocation2 + $0x14] sm:$0x3]
        %v511 = vsel %vm267, %v358, %v510
        %512 = vst [vmem:[#allocation2 + $0x14] sm:$0x3] %v511
        %v513 = vld [vmem:[#allocation2 + $0x18] sm:$0xe]
        %v514 = vsel %vm498, %v366, %v513
        %515 = vst [vmem:[#allocation2 + $0x18] sm:$0xe] %v514
        %516 = vst [vmem:[#allocation2 + $0x1c] sm:$0xf] %v376
        %v517 = vld [vmem:[#allocation2 + $0x20] sm:$0x3]
        %v518 = vsel %vm267, %v377, %v517
        %519 = vst [vmem:[#allocation2 + $0x20] sm:$0x3] %v518
        %v520 = vld [vmem:[#allocation2 + $0x24] sm:$0xe]
        %v521 = vsel %vm498, %v385, %v520
        %522 = vst [vmem:[#allocation2 + $0x24] sm:$0xe] %v521
        %523 = vst [vmem:[#allocation2 + $0x28] sm:$0xf] %v395
        %v524 = vld [vmem:[#allocation2 + $0x2c] sm:$0x3]
        %v525 = vsel %vm267, %v396, %v524
        %526 = vst [vmem:[#allocation2 + $0x2c] sm:$0x3] %v525
        %v527 = vld [vmem:[#allocation2 + $0x30] sm:$0xe]
        %v528 = vsel %vm498, %v404, %v527
        %529 = vst [vmem:[#allocation2 + $0x30] sm:$0xe] %v528
        %530 = vst [vmem:[#allocation2 + $0x34] sm:$0xf] %v414
        %v531 = vld [vmem:[#allocation2 + $0x38] sm:$0x3]
        %v532 = vsel %vm267, %v415, %v531
        %533 = vst [vmem:[#allocation2 + $0x38] sm:$0x3] %v532
        %v534 = vld [vmem:[#allocation2 + $0x3c] sm:$0xe]
        %v535 = vsel %vm498, %v423, %v534
        %536 = vst [vmem:[#allocation2 + $0x3c] sm:$0xe] %v535
        %537 = vst [vmem:[#allocation2 + $0x40] sm:$0xf] %v433
        %v538 = vld [vmem:[#allocation2 + $0x44] sm:$0x3]
        %v539 = vsel %vm267, %v434, %v538
        %540 = vst [vmem:[#allocation2 + $0x44] sm:$0x3] %v539
        %v541 = vld [vmem:[#allocation2 + $0x48] sm:$0xe]
        %v542 = vsel %vm498, %v442, %v541
        %543 = vst [vmem:[#allocation2 + $0x48] sm:$0xe] %v542
        %544 = vst [vmem:[#allocation2 + $0x4c] sm:$0xf] %v452
        %v545 = vld [vmem:[#allocation2 + $0x50] sm:$0x3]
        %v546 = vsel %vm267, %v453, %v545
        %547 = vst [vmem:[#allocation2 + $0x50] sm:$0x3] %v546
        %v548 = vld [vmem:[#allocation2 + $0x54] sm:$0xe]
        %v549 = vsel %vm498, %v461, %v548
        %550 = vst [vmem:[#allocation2 + $0x54] sm:$0xe] %v549
        %551 = vst [vmem:[#allocation2 + $0x58] sm:$0xf] %v471
        %v552 = vld [vmem:[#allocation2 + $0x5c] sm:$0x3]
        %v553 = vsel %vm267, %v472, %v552
        %554 = vst [vmem:[#allocation2 + $0x5c] sm:$0x3] %v553
        %v555 = vld [vmem:[#allocation2] sm:$0xf]
        %v556 = vld [vmem:[#allocation2 + $0x4] sm:$0xf]
        %v557 = vld [vmem:[#allocation2 + $0xc] sm:$0xf]
        %v558 = vld [vmem:[#allocation2 + $0x10] sm:$0xf]
        %v559 = vld [vmem:[#allocation2 + $0x18] sm:$0xf]
        %v560 = vld [vmem:[#allocation2 + $0x1c] sm:$0xf]
        %v561 = vld [vmem:[#allocation2 + $0x24] sm:$0xf]
        %v562 = vld [vmem:[#allocation2 + $0x28] sm:$0xf]
        %v563 = vld [vmem:[#allocation2 + $0x30] sm:$0xf]
        %v564 = vld [vmem:[#allocation2 + $0x34] sm:$0xf]
        %v565 = vld [vmem:[#allocation2 + $0x3c] sm:$0xf]
        %v566 = vld [vmem:[#allocation2 + $0x40] sm:$0xf]
        %v567 = vld [vmem:[#allocation2 + $0x48] sm:$0xf]
        %v568 = vld [vmem:[#allocation2 + $0x4c] sm:$0xf]
        %v569 = vld [vmem:[#allocation2 + $0x54] sm:$0xf]
        %v570 = vld [vmem:[#allocation2 + $0x58] sm:$0xf]
        %v571 = vld [vmem:[#allocation4] sm:$0xf]
        %v572 = vld [vmem:[#allocation4 + $0x4] sm:$0xf]
        %v573 = vld [vmem:[#allocation4 + $0x8] sm:$0xf]
        %v574 = vld [vmem:[#allocation4 + $0xc] sm:$0xf]
        %v575 = vld [vmem:[#allocation4 + $0x10] sm:$0xf]
        %v576 = vld [vmem:[#allocation4 + $0x14] sm:$0xf]
        %v577 = vld [vmem:[#allocation4 + $0x18] sm:$0xf]
        %v578 = vld [vmem:[#allocation4 + $0x1c] sm:$0xf]
        %v579 = vld [vmem:[#allocation4 + $0x20] sm:$0xf]
        %v580 = vld [vmem:[#allocation4 + $0x24] sm:$0xf]
        %v581 = vld [vmem:[#allocation4 + $0x28] sm:$0xf]
        %v582 = vld [vmem:[#allocation4 + $0x2c] sm:$0xf]
        %v583 = vld [vmem:[#allocation4 + $0x30] sm:$0xf]
        %v584 = vld [vmem:[#allocation4 + $0x34] sm:$0xf]
        %v585 = vld [vmem:[#allocation4 + $0x38] sm:$0xf]
        %v586 = vld [vmem:[#allocation4 + $0x3c] sm:$0xf]
        %v603 = vunpack.c.l.b16 %v555
        %v604 = vunpack.c.l.b16 %v556
        %v605 = vunpack.c.l.b16 %v557
        %v606 = vunpack.c.l.b16 %v558
        %v607 = vunpack.c.l.b16 %v559
        %v608 = vunpack.c.l.b16 %v560
        %v609 = vunpack.c.l.b16 %v561
        %v610 = vunpack.c.l.b16 %v562
        %v611 = vunpack.c.l.b16 %v563
        %v612 = vunpack.c.l.b16 %v564
        %v613 = vunpack.c.l.b16 %v565
        %v614 = vunpack.c.l.b16 %v566
        %v615 = vunpack.c.l.b16 %v567
        %v616 = vunpack.c.l.b16 %v568
        %v617 = vunpack.c.l.b16 %v569
        %v618 = vunpack.c.l.b16 %v570
        %v619 = vpack.c.b16 %v604, %v603
        %v620 = vpack.c.b16 %v606, %v605
        %v621 = vpack.c.b16 %v608, %v607
        %v622 = vpack.c.b16 %v610, %v609
        %v623 = vpack.c.b16 %v612, %v611
        %v624 = vpack.c.b16 %v614, %v613
        %v625 = vpack.c.b16 %v616, %v615
        %v626 = vpack.c.b16 %v618, %v617
        %v651 = vunpack.c.l.b16 %v571
        %v652 = vunpack.c.l.b16 %v572
        %v653 = vunpack.c.l.b16 %v573
        %v654 = vunpack.c.l.b16 %v574
        %v655 = vunpack.c.l.b16 %v575
        %v656 = vunpack.c.l.b16 %v576
        %v657 = vunpack.c.l.b16 %v577
        %v658 = vunpack.c.l.b16 %v578
        %v659 = vunpack.c.l.b16 %v579
        %v660 = vunpack.c.l.b16 %v580
        %v661 = vunpack.c.l.b16 %v581
        %v662 = vunpack.c.l.b16 %v582
        %v663 = vunpack.c.l.b16 %v583
        %v664 = vunpack.c.l.b16 %v584
        %v665 = vunpack.c.l.b16 %v585
        %v666 = vunpack.c.l.b16 %v586
        %v667 = vpack.c.b16 %v652, %v651
        %v668 = vpack.c.b16 %v654, %v653
        %v669 = vpack.c.b16 %v656, %v655
        %v670 = vpack.c.b16 %v658, %v657
        %v671 = vpack.c.b16 %v660, %v659
        %v672 = vpack.c.b16 %v662, %v661
        %v673 = vpack.c.b16 %v664, %v663
        %v674 = vpack.c.b16 %v666, %v665
        %683 = vmatpush.bf16.msra.mxu0 %v674
        %684 = vmatpush.bf16.msra.mxu0 %v673
        %685 = vmatpush.bf16.msra.mxu0 %v672
        %686 = vmatpush.bf16.msra.mxu0 %v671
        %687 = vmatpush.bf16.msra.mxu0 %v670
        %688 = vmatpush.bf16.msra.mxu0 %v669
        %689 = vmatpush.bf16.msra.mxu0 %v668
        %690 = vmatpush.bf16.msra.mxu0 %v667
        %691 = vmatmul.bf16.gmra.mxu0 %v619
        %v692 = vpop.f32.mrf.mxu0
        %v693 = vadd.f32 0.0, %v692
        %v694 = vpop.f32.mrf.mxu0
        %v695 = vadd.f32 0.0, %v694
        %696 = vmatmul.bf16.gmra.mxu0 %v620
        %v697 = vpop.f32.mrf.mxu0
        %v698 = vadd.f32 0.0, %v697
        %v699 = vpop.f32.mrf.mxu0
        %v700 = vadd.f32 0.0, %v699
        %701 = vmatmul.bf16.gmra.mxu0 %v621
        %v702 = vpop.f32.mrf.mxu0
        %v703 = vadd.f32 0.0, %v702
        %v704 = vpop.f32.mrf.mxu0
        %v705 = vadd.f32 0.0, %v704
        %706 = vmatmul.bf16.gmra.mxu0 %v622
        %v707 = vpop.f32.mrf.mxu0
        %v708 = vadd.f32 0.0, %v707
        %v709 = vpop.f32.mrf.mxu0
        %v710 = vadd.f32 0.0, %v709
        %711 = vmatmul.bf16.gmra.mxu0 %v623
        %v712 = vpop.f32.mrf.mxu0
        %v713 = vadd.f32 0.0, %v712
        %v714 = vpop.f32.mrf.mxu0
        %v715 = vadd.f32 0.0, %v714
        %716 = vmatmul.bf16.gmra.mxu0 %v624
        %v717 = vpop.f32.mrf.mxu0
        %v718 = vadd.f32 0.0, %v717
        %v719 = vpop.f32.mrf.mxu0
        %v720 = vadd.f32 0.0, %v719
        %721 = vmatmul.bf16.gmra.mxu0 %v625
        %v722 = vpop.f32.mrf.mxu0
        %v723 = vadd.f32 0.0, %v722
        %v724 = vpop.f32.mrf.mxu0
        %v725 = vadd.f32 0.0, %v724
        %726 = vmatmul.bf16.gmra.mxu0 %v626
        %v727 = vpop.f32.mrf.mxu0
        %v728 = vadd.f32 0.0, %v727
        %v729 = vpop.f32.mrf.mxu0
        %v730 = vadd.f32 0.0, %v729
        %731 = vdwg.mxu0
        %732 = vst [vmem:[#allocation3] sm:$0xff] %v693
        %733 = vst [vmem:[#allocation3 + $0x8] sm:$0xff] %v695
        %734 = vst [vmem:[#allocation3 + $0x10] sm:$0xff] %v698
        %735 = vst [vmem:[#allocation3 + $0x18] sm:$0xff] %v700
        %736 = vst [vmem:[#allocation3 + $0x20] sm:$0xff] %v703
        %737 = vst [vmem:[#allocation3 + $0x28] sm:$0xff] %v705
        %738 = vst [vmem:[#allocation3 + $0x30] sm:$0xff] %v708
        %739 = vst [vmem:[#allocation3 + $0x38] sm:$0xff] %v710
        %740 = vst [vmem:[#allocation3 + $0x40] sm:$0xff] %v713
        %741 = vst [vmem:[#allocation3 + $0x48] sm:$0xff] %v715
        %742 = vst [vmem:[#allocation3 + $0x50] sm:$0xff] %v718
        %743 = vst [vmem:[#allocation3 + $0x58] sm:$0xff] %v720
        %744 = vst [vmem:[#allocation3 + $0x60] sm:$0xff] %v723
        %745 = vst [vmem:[#allocation3 + $0x68] sm:$0xff] %v725
        %746 = vst [vmem:[#allocation3 + $0x70] sm:$0xff] %v728
        %747 = vst [vmem:[#allocation3 + $0x78] sm:$0xff] %v730
        %v748 = vld [vmem:[#allocation2] sm:$0xf]
        %v749 = vld [vmem:[#allocation2 + $0x4] sm:$0xf]
        %v750 = vld [vmem:[#allocation2 + $0x8] sm:$0x1]
        %v751 = vld [vmem:[#allocation2 + $0xc] sm:$0xf]
        %v752 = vld [vmem:[#allocation2 + $0x10] sm:$0xf]
        %v753 = vld [vmem:[#allocation2 + $0x14] sm:$0x1]
        %v754 = vld [vmem:[#allocation2 + $0x18] sm:$0xf]
        %v755 = vld [vmem:[#allocation2 + $0x1c] sm:$0xf]
        %v756 = vld [vmem:[#allocation2 + $0x20] sm:$0x1]
        %v757 = vld [vmem:[#allocation2 + $0x24] sm:$0xf]
        %v758 = vld [vmem:[#allocation2 + $0x28] sm:$0xf]
        %v759 = vld [vmem:[#allocation2 + $0x2c] sm:$0x1]
        %v760 = vld [vmem:[#allocation2 + $0x30] sm:$0xf]
        %v761 = vld [vmem:[#allocation2 + $0x34] sm:$0xf]
        %v762 = vld [vmem:[#allocation2 + $0x38] sm:$0x1]
        %v763 = vld [vmem:[#allocation2 + $0x3c] sm:$0xf]
        %v764 = vld [vmem:[#allocation2 + $0x40] sm:$0xf]
        %v765 = vld [vmem:[#allocation2 + $0x44] sm:$0x1]
        %v766 = vld [vmem:[#allocation2 + $0x48] sm:$0xf]
        %v767 = vld [vmem:[#allocation2 + $0x4c] sm:$0xf]
        %v768 = vld [vmem:[#allocation2 + $0x50] sm:$0x1]
        %v769 = vld [vmem:[#allocation2 + $0x54] sm:$0xf]
        %v770 = vld [vmem:[#allocation2 + $0x58] sm:$0xf]
        %v771 = vld [vmem:[#allocation2 + $0x5c] sm:$0x1]
        %vm772 = vsmask.f32 3328
        %vm773 = vsmask.f32 7440
        %vm774 = vmor %vm772, %vm773
        %v776 = vshrl.u32 %v748, 16
        %v778 = vrot.slane %v776, 4
        %v779 = vshll.u32 %v748, 16
        %v781 = vrot.slane %v779, 5
        %v782 = vor.u32 %v778, %v781
        %v783 = vrot.slane %v782, 4
        %v785 = vshll.u32 %v749, 16
        %v787 = vrot.slane %v785, 5
        %v788 = vsel %vm774, %v783, %v787
        %v789 = vshrl.u32 %v749, 16
        %v791 = vrot.slane %v789, 4
        %v792 = vor.u32 %v791, %v787
        %v793 = vrot.slane %v792, 4
        %v795 = vshll.u32 %v750, 16
        %v797 = vrot.slane %v795, 5
        %v798 = vsel %vm774, %v793, %v797
        %v800 = vshrl.u32 %v751, 16
        %v802 = vrot.slane %v800, 4
        %v803 = vshll.u32 %v751, 16
        %v805 = vrot.slane %v803, 5
        %v806 = vor.u32 %v802, %v805
        %v807 = vrot.slane %v806, 4
        %v809 = vshll.u32 %v752, 16
        %v811 = vrot.slane %v809, 5
        %v812 = vsel %vm774, %v807, %v811
        %v813 = vshrl.u32 %v752, 16
        %v815 = vrot.slane %v813, 4
        %v816 = vor.u32 %v815, %v811
        %v817 = vrot.slane %v816, 4
        %v819 = vshll.u32 %v753, 16
        %v821 = vrot.slane %v819, 5
        %v822 = vsel %vm774, %v817, %v821
        %v824 = vshrl.u32 %v754, 16
        %v826 = vrot.slane %v824, 4
        %v827 = vshll.u32 %v754, 16
        %v829 = vrot.slane %v827, 5
        %v830 = vor.u32 %v826, %v829
        %v831 = vrot.slane %v830, 4
        %v833 = vshll.u32 %v755, 16
        %v835 = vrot.slane %v833, 5
        %v836 = vsel %vm774, %v831, %v835
        %v837 = vshrl.u32 %v755, 16
        %v839 = vrot.slane %v837, 4
        %v840 = vor.u32 %v839, %v835
        %v841 = vrot.slane %v840, 4
        %v843 = vshll.u32 %v756, 16
        %v845 = vrot.slane %v843, 5
        %v846 = vsel %vm774, %v841, %v845
        %v848 = vshrl.u32 %v757, 16
        %v850 = vrot.slane %v848, 4
        %v851 = vshll.u32 %v757, 16
        %v853 = vrot.slane %v851, 5
        %v854 = vor.u32 %v850, %v853
        %v855 = vrot.slane %v854, 4
        %v857 = vshll.u32 %v758, 16
        %v859 = vrot.slane %v857, 5
        %v860 = vsel %vm774, %v855, %v859
        %v861 = vshrl.u32 %v758, 16
        %v863 = vrot.slane %v861, 4
        %v864 = vor.u32 %v863, %v859
        %v865 = vrot.slane %v864, 4
        %v867 = vshll.u32 %v759, 16
        %v869 = vrot.slane %v867, 5
        %v870 = vsel %vm774, %v865, %v869
        %v872 = vshrl.u32 %v760, 16
        %v874 = vrot.slane %v872, 4
        %v875 = vshll.u32 %v760, 16
        %v877 = vrot.slane %v875, 5
        %v878 = vor.u32 %v874, %v877
        %v879 = vrot.slane %v878, 4
        %v881 = vshll.u32 %v761, 16
        %v883 = vrot.slane %v881, 5
        %v884 = vsel %vm774, %v879, %v883
        %v885 = vshrl.u32 %v761, 16
        %v887 = vrot.slane %v885, 4
        %v888 = vor.u32 %v887, %v883
        %v889 = vrot.slane %v888, 4
        %v891 = vshll.u32 %v762, 16
        %v893 = vrot.slane %v891, 5
        %v894 = vsel %vm774, %v889, %v893
        %v896 = vshrl.u32 %v763, 16
        %v898 = vrot.slane %v896, 4
        %v899 = vshll.u32 %v763, 16
        %v901 = vrot.slane %v899, 5
        %v902 = vor.u32 %v898, %v901
        %v903 = vrot.slane %v902, 4
        %v905 = vshll.u32 %v764, 16
        %v907 = vrot.slane %v905, 5
        %v908 = vsel %vm774, %v903, %v907
        %v909 = vshrl.u32 %v764, 16
        %v911 = vrot.slane %v909, 4
        %v912 = vor.u32 %v911, %v907
        %v913 = vrot.slane %v912, 4
        %v915 = vshll.u32 %v765, 16
        %v917 = vrot.slane %v915, 5
        %v918 = vsel %vm774, %v913, %v917
        %v920 = vshrl.u32 %v766, 16
        %v922 = vrot.slane %v920, 4
        %v923 = vshll.u32 %v766, 16
        %v925 = vrot.slane %v923, 5
        %v926 = vor.u32 %v922, %v925
        %v927 = vrot.slane %v926, 4
        %v929 = vshll.u32 %v767, 16
        %v931 = vrot.slane %v929, 5
        %v932 = vsel %vm774, %v927, %v931
        %v933 = vshrl.u32 %v767, 16
        %v935 = vrot.slane %v933, 4
        %v936 = vor.u32 %v935, %v931
        %v937 = vrot.slane %v936, 4
        %v939 = vshll.u32 %v768, 16
        %v941 = vrot.slane %v939, 5
        %v942 = vsel %vm774, %v937, %v941
        %v944 = vshrl.u32 %v769, 16
        %v946 = vrot.slane %v944, 4
        %v947 = vshll.u32 %v769, 16
        %v949 = vrot.slane %v947, 5
        %v950 = vor.u32 %v946, %v949
        %v951 = vrot.slane %v950, 4
        %v953 = vshll.u32 %v770, 16
        %v955 = vrot.slane %v953, 5
        %v956 = vsel %vm774, %v951, %v955
        %v957 = vshrl.u32 %v770, 16
        %v959 = vrot.slane %v957, 4
        %v960 = vor.u32 %v959, %v955
        %v961 = vrot.slane %v960, 4
        %v963 = vshll.u32 %v771, 16
        %v965 = vrot.slane %v963, 5
        %v966 = vsel %vm774, %v961, %v965
        %s967 = scalar_lea.vmem [#allocation4], 64
        %v968 = vld [vmem:[%s967] sm:$0xf]
        %v969 = vld [vmem:[%s967 + $0x4] sm:$0xf]
        %v970 = vld [vmem:[%s967 + $0x8] sm:$0xf]
        %v971 = vld [vmem:[%s967 + $0xc] sm:$0xf]
        %v972 = vld [vmem:[%s967 + $0x10] sm:$0xf]
        %v973 = vld [vmem:[%s967 + $0x14] sm:$0xf]
        %v974 = vld [vmem:[%s967 + $0x18] sm:$0xf]
        %v975 = vld [vmem:[%s967 + $0x1c] sm:$0xf]
        %v976 = vld [vmem:[%s967 + $0x20] sm:$0xf]
        %v977 = vld [vmem:[%s967 + $0x24] sm:$0xf]
        %v978 = vld [vmem:[%s967 + $0x28] sm:$0xf]
        %v979 = vld [vmem:[%s967 + $0x2c] sm:$0xf]
        %v980 = vld [vmem:[%s967 + $0x30] sm:$0xf]
        %v981 = vld [vmem:[%s967 + $0x34] sm:$0xf]
        %v982 = vld [vmem:[%s967 + $0x38] sm:$0xf]
        %v983 = vld [vmem:[%s967 + $0x3c] sm:$0xf]
        %v984 = vunpack.c.l.b16 %v788
        %v985 = vunpack.c.l.b16 %v798
        %v986 = vunpack.c.l.b16 %v812
        %v987 = vunpack.c.l.b16 %v822
        %v988 = vunpack.c.l.b16 %v836
        %v989 = vunpack.c.l.b16 %v846
        %v990 = vunpack.c.l.b16 %v860
        %v991 = vunpack.c.l.b16 %v870
        %v992 = vunpack.c.l.b16 %v884
        %v993 = vunpack.c.l.b16 %v894
        %v994 = vunpack.c.l.b16 %v908
        %v995 = vunpack.c.l.b16 %v918
        %v996 = vunpack.c.l.b16 %v932
        %v997 = vunpack.c.l.b16 %v942
        %v998 = vunpack.c.l.b16 %v956
        %v999 = vunpack.c.l.b16 %v966
        %v1000 = vpack.c.b16 %v985, %v984
        %v1001 = vpack.c.b16 %v987, %v986
        %v1002 = vpack.c.b16 %v989, %v988
        %v1003 = vpack.c.b16 %v991, %v990
        %v1004 = vpack.c.b16 %v993, %v992
        %v1005 = vpack.c.b16 %v995, %v994
        %v1006 = vpack.c.b16 %v997, %v996
        %v1007 = vpack.c.b16 %v999, %v998
        %v1032 = vunpack.c.l.b16 %v968
        %v1033 = vunpack.c.l.b16 %v969
        %v1034 = vunpack.c.l.b16 %v970
        %v1035 = vunpack.c.l.b16 %v971
        %v1036 = vunpack.c.l.b16 %v972
        %v1037 = vunpack.c.l.b16 %v973
        %v1038 = vunpack.c.l.b16 %v974
        %v1039 = vunpack.c.l.b16 %v975
        %v1040 = vunpack.c.l.b16 %v976
        %v1041 = vunpack.c.l.b16 %v977
        %v1042 = vunpack.c.l.b16 %v978
        %v1043 = vunpack.c.l.b16 %v979
        %v1044 = vunpack.c.l.b16 %v980
        %v1045 = vunpack.c.l.b16 %v981
        %v1046 = vunpack.c.l.b16 %v982
        %v1047 = vunpack.c.l.b16 %v983
        %v1048 = vpack.c.b16 %v1033, %v1032
        %v1049 = vpack.c.b16 %v1035, %v1034
        %v1050 = vpack.c.b16 %v1037, %v1036
        %v1051 = vpack.c.b16 %v1039, %v1038
        %v1052 = vpack.c.b16 %v1041, %v1040
        %v1053 = vpack.c.b16 %v1043, %v1042
        %v1054 = vpack.c.b16 %v1045, %v1044
        %v1055 = vpack.c.b16 %v1047, %v1046
        %1064 = vmatpush.bf16.msra.mxu0 %v1055
        %1065 = vmatpush.bf16.msra.mxu0 %v1054
        %1066 = vmatpush.bf16.msra.mxu0 %v1053
        %1067 = vmatpush.bf16.msra.mxu0 %v1052
        %1068 = vmatpush.bf16.msra.mxu0 %v1051
        %1069 = vmatpush.bf16.msra.mxu0 %v1050
        %1070 = vmatpush.bf16.msra.mxu0 %v1049
        %1071 = vmatpush.bf16.msra.mxu0 %v1048
        %1072 = vmatmul.bf16.gmra.mxu0 %v1000
        %v1073 = vpop.f32.mrf.mxu0
        %v1074 = vadd.f32 0.0, %v1073
        %v1075 = vpop.f32.mrf.mxu0
        %v1076 = vadd.f32 0.0, %v1075
        %1077 = vmatmul.bf16.gmra.mxu0 %v1001
        %v1078 = vpop.f32.mrf.mxu0
        %v1079 = vadd.f32 0.0, %v1078
        %v1080 = vpop.f32.mrf.mxu0
        %v1081 = vadd.f32 0.0, %v1080
        %1082 = vmatmul.bf16.gmra.mxu0 %v1002
        %v1083 = vpop.f32.mrf.mxu0
        %v1084 = vadd.f32 0.0, %v1083
        %v1085 = vpop.f32.mrf.mxu0
        %v1086 = vadd.f32 0.0, %v1085
        %1087 = vmatmul.bf16.gmra.mxu0 %v1003
        %v1088 = vpop.f32.mrf.mxu0
        %v1089 = vadd.f32 0.0, %v1088
        %v1090 = vpop.f32.mrf.mxu0
        %v1091 = vadd.f32 0.0, %v1090
        %1092 = vmatmul.bf16.gmra.mxu0 %v1004
        %v1093 = vpop.f32.mrf.mxu0
        %v1094 = vadd.f32 0.0, %v1093
        %v1095 = vpop.f32.mrf.mxu0
        %v1096 = vadd.f32 0.0, %v1095
        %1097 = vmatmul.bf16.gmra.mxu0 %v1005
        %v1098 = vpop.f32.mrf.mxu0
        %v1099 = vadd.f32 0.0, %v1098
        %v1100 = vpop.f32.mrf.mxu0
        %v1101 = vadd.f32 0.0, %v1100
        %1102 = vmatmul.bf16.gmra.mxu0 %v1006
        %v1103 = vpop.f32.mrf.mxu0
        %v1104 = vadd.f32 0.0, %v1103
        %v1105 = vpop.f32.mrf.mxu0
        %v1106 = vadd.f32 0.0, %v1105
        %1107 = vmatmul.bf16.gmra.mxu0 %v1007
        %v1108 = vpop.f32.mrf.mxu0
        %v1109 = vadd.f32 0.0, %v1108
        %v1110 = vpop.f32.mrf.mxu0
        %v1111 = vadd.f32 0.0, %v1110
        %1112 = vdwg.mxu0
        %v1113 = vld [vmem:[#allocation3] sm:$0xff]
        %v1114 = vld [vmem:[#allocation3 + $0x8] sm:$0xff]
        %v1115 = vld [vmem:[#allocation3 + $0x10] sm:$0xff]
        %v1116 = vld [vmem:[#allocation3 + $0x18] sm:$0xff]
        %v1117 = vld [vmem:[#allocation3 + $0x20] sm:$0xff]
        %v1118 = vld [vmem:[#allocation3 + $0x28] sm:$0xff]
        %v1119 = vld [vmem:[#allocation3 + $0x30] sm:$0xff]
        %v1120 = vld [vmem:[#allocation3 + $0x38] sm:$0xff]
        %v1121 = vld [vmem:[#allocation3 + $0x40] sm:$0xff]
        %v1122 = vld [vmem:[#allocation3 + $0x48] sm:$0xff]
        %v1123 = vld [vmem:[#allocation3 + $0x50] sm:$0xff]
        %v1124 = vld [vmem:[#allocation3 + $0x58] sm:$0xff]
        %v1125 = vld [vmem:[#allocation3 + $0x60] sm:$0xff]
        %v1126 = vld [vmem:[#allocation3 + $0x68] sm:$0xff]
        %v1127 = vld [vmem:[#allocation3 + $0x70] sm:$0xff]
        %v1128 = vld [vmem:[#allocation3 + $0x78] sm:$0xff]
        %v1129 = vadd.f32 %v1113, %v1074
        %v1130 = vadd.f32 %v1114, %v1076
        %v1131 = vadd.f32 %v1115, %v1079
        %v1132 = vadd.f32 %v1116, %v1081
        %v1133 = vadd.f32 %v1117, %v1084
        %v1134 = vadd.f32 %v1118, %v1086
        %v1135 = vadd.f32 %v1119, %v1089
        %v1136 = vadd.f32 %v1120, %v1091
        %v1137 = vadd.f32 %v1121, %v1094
        %v1138 = vadd.f32 %v1122, %v1096
        %v1139 = vadd.f32 %v1123, %v1099
        %v1140 = vadd.f32 %v1124, %v1101
        %v1141 = vadd.f32 %v1125, %v1104
        %v1142 = vadd.f32 %v1126, %v1106
        %v1143 = vadd.f32 %v1127, %v1109
        %v1144 = vadd.f32 %v1128, %v1111
        %1145 = vst [vmem:[#allocation3] sm:$0xff] %v1129
        %1146 = vst [vmem:[#allocation3 + $0x8] sm:$0xff] %v1130
        %1147 = vst [vmem:[#allocation3 + $0x10] sm:$0xff] %v1131
        %1148 = vst [vmem:[#allocation3 + $0x18] sm:$0xff] %v1132
        %1149 = vst [vmem:[#allocation3 + $0x20] sm:$0xff] %v1133
        %1150 = vst [vmem:[#allocation3 + $0x28] sm:$0xff] %v1134
        %1151 = vst [vmem:[#allocation3 + $0x30] sm:$0xff] %v1135
        %1152 = vst [vmem:[#allocation3 + $0x38] sm:$0xff] %v1136
        %1153 = vst [vmem:[#allocation3 + $0x40] sm:$0xff] %v1137
        %1154 = vst [vmem:[#allocation3 + $0x48] sm:$0xff] %v1138
        %1155 = vst [vmem:[#allocation3 + $0x50] sm:$0xff] %v1139
        %1156 = vst [vmem:[#allocation3 + $0x58] sm:$0xff] %v1140
        %1157 = vst [vmem:[#allocation3 + $0x60] sm:$0xff] %v1141
        %1158 = vst [vmem:[#allocation3 + $0x68] sm:$0xff] %v1142
        %1159 = vst [vmem:[#allocation3 + $0x70] sm:$0xff] %v1143
        %1160 = vst [vmem:[#allocation3 + $0x78] sm:$0xff] %v1144
        %v1161 = vld [vmem:[#allocation2] sm:$0xe]
        %v1162 = vld [vmem:[#allocation2 + $0x4] sm:$0xf]
        %v1163 = vld [vmem:[#allocation2 + $0x8] sm:$0x1]
        %v1164 = vld [vmem:[#allocation2 + $0xc] sm:$0xe]
        %v1165 = vld [vmem:[#allocation2 + $0x10] sm:$0xf]
        %v1166 = vld [vmem:[#allocation2 + $0x14] sm:$0x1]
        %v1167 = vld [vmem:[#allocation2 + $0x18] sm:$0xe]
        %v1168 = vld [vmem:[#allocation2 + $0x1c] sm:$0xf]
        %v1169 = vld [vmem:[#allocation2 + $0x20] sm:$0x1]
        %v1170 = vld [vmem:[#allocation2 + $0x24] sm:$0xe]
        %v1171 = vld [vmem:[#allocation2 + $0x28] sm:$0xf]
        %v1172 = vld [vmem:[#allocation2 + $0x2c] sm:$0x1]
        %v1173 = vld [vmem:[#allocation2 + $0x30] sm:$0xe]
        %v1174 = vld [vmem:[#allocation2 + $0x34] sm:$0xf]
        %v1175 = vld [vmem:[#allocation2 + $0x38] sm:$0x1]
        %v1176 = vld [vmem:[#allocation2 + $0x3c] sm:$0xe]
        %v1177 = vld [vmem:[#allocation2 + $0x40] sm:$0xf]
        %v1178 = vld [vmem:[#allocation2 + $0x44] sm:$0x1]
        %v1179 = vld [vmem:[#allocation2 + $0x48] sm:$0xe]
        %v1180 = vld [vmem:[#allocation2 + $0x4c] sm:$0xf]
        %v1181 = vld [vmem:[#allocation2 + $0x50] sm:$0x1]
        %v1182 = vld [vmem:[#allocation2 + $0x54] sm:$0xe]
        %v1183 = vld [vmem:[#allocation2 + $0x58] sm:$0xf]
        %v1184 = vld [vmem:[#allocation2 + $0x5c] sm:$0x1]
        %vm1209 = vcmask 1042432
        %vm1210 = vcmask 1046532
        %vm1211 = vmor %vm1209, %vm1210
        %v1212 = vrot.slane %v1161, 5
        %v1213 = vrot.slane %v1212, 4
        %v1214 = vrot.slane %v1162, 5
        %v1215 = vsel %vm1211, %v1213, %v1214
        %v1216 = vrot.slane %v1214, 4
        %v1217 = vrot.slane %v1163, 5
        %v1218 = vsel %vm1211, %v1216, %v1217
        %v1219 = vrot.slane %v1164, 5
        %v1220 = vrot.slane %v1219, 4
        %v1221 = vrot.slane %v1165, 5
        %v1222 = vsel %vm1211, %v1220, %v1221
        %v1223 = vrot.slane %v1221, 4
        %v1224 = vrot.slane %v1166, 5
        %v1225 = vsel %vm1211, %v1223, %v1224
        %v1226 = vrot.slane %v1167, 5
        %v1227 = vrot.slane %v1226, 4
        %v1228 = vrot.slane %v1168, 5
        %v1229 = vsel %vm1211, %v1227, %v1228
        %v1230 = vrot.slane %v1228, 4
        %v1231 = vrot.slane %v1169, 5
        %v1232 = vsel %vm1211, %v1230, %v1231
        %v1233 = vrot.slane %v1170, 5
        %v1234 = vrot.slane %v1233, 4
        %v1235 = vrot.slane %v1171, 5
        %v1236 = vsel %vm1211, %v1234, %v1235
        %v1237 = vrot.slane %v1235, 4
        %v1238 = vrot.slane %v1172, 5
        %v1239 = vsel %vm1211, %v1237, %v1238
        %v1240 = vrot.slane %v1173, 5
        %v1241 = vrot.slane %v1240, 4
        %v1242 = vrot.slane %v1174, 5
        %v1243 = vsel %vm1211, %v1241, %v1242
        %v1244 = vrot.slane %v1242, 4
        %v1245 = vrot.slane %v1175, 5
        %v1246 = vsel %vm1211, %v1244, %v1245
        %v1247 = vrot.slane %v1176, 5
        %v1248 = vrot.slane %v1247, 4
        %v1249 = vrot.slane %v1177, 5
        %v1250 = vsel %vm1211, %v1248, %v1249
        %v1251 = vrot.slane %v1249, 4
        %v1252 = vrot.slane %v1178, 5
        %v1253 = vsel %vm1211, %v1251, %v1252
        %v1254 = vrot.slane %v1179, 5
        %v1255 = vrot.slane %v1254, 4
        %v1256 = vrot.slane %v1180, 5
        %v1257 = vsel %vm1211, %v1255, %v1256
        %v1258 = vrot.slane %v1256, 4
        %v1259 = vrot.slane %v1181, 5
        %v1260 = vsel %vm1211, %v1258, %v1259
        %v1261 = vrot.slane %v1182, 5
        %v1262 = vrot.slane %v1261, 4
        %v1263 = vrot.slane %v1183, 5
        %v1264 = vsel %vm1211, %v1262, %v1263
        %v1265 = vrot.slane %v1263, 4
        %v1266 = vrot.slane %v1184, 5
        %v1267 = vsel %vm1211, %v1265, %v1266
        %s1268 = scalar_lea.vmem [#allocation4], 128
        %v1269 = vld [vmem:[%s1268] sm:$0xf]
        %v1270 = vld [vmem:[%s1268 + $0x4] sm:$0xf]
        %v1271 = vld [vmem:[%s1268 + $0x8] sm:$0xf]
        %v1272 = vld [vmem:[%s1268 + $0xc] sm:$0xf]
        %v1273 = vld [vmem:[%s1268 + $0x10] sm:$0xf]
        %v1274 = vld [vmem:[%s1268 + $0x14] sm:$0xf]
        %v1275 = vld [vmem:[%s1268 + $0x18] sm:$0xf]
        %v1276 = vld [vmem:[%s1268 + $0x1c] sm:$0xf]
        %v1277 = vld [vmem:[%s1268 + $0x20] sm:$0xf]
        %v1278 = vld [vmem:[%s1268 + $0x24] sm:$0xf]
        %v1279 = vld [vmem:[%s1268 + $0x28] sm:$0xf]
        %v1280 = vld [vmem:[%s1268 + $0x2c] sm:$0xf]
        %v1281 = vld [vmem:[%s1268 + $0x30] sm:$0xf]
        %v1282 = vld [vmem:[%s1268 + $0x34] sm:$0xf]
        %v1283 = vld [vmem:[%s1268 + $0x38] sm:$0xf]
        %v1284 = vld [vmem:[%s1268 + $0x3c] sm:$0xf]
        %v1285 = vunpack.c.l.b16 %v1215
        %v1286 = vunpack.c.l.b16 %v1218
        %v1287 = vunpack.c.l.b16 %v1222
        %v1288 = vunpack.c.l.b16 %v1225
        %v1289 = vunpack.c.l.b16 %v1229
        %v1290 = vunpack.c.l.b16 %v1232
        %v1291 = vunpack.c.l.b16 %v1236
        %v1292 = vunpack.c.l.b16 %v1239
        %v1293 = vunpack.c.l.b16 %v1243
        %v1294 = vunpack.c.l.b16 %v1246
        %v1295 = vunpack.c.l.b16 %v1250
        %v1296 = vunpack.c.l.b16 %v1253
        %v1297 = vunpack.c.l.b16 %v1257
        %v1298 = vunpack.c.l.b16 %v1260
        %v1299 = vunpack.c.l.b16 %v1264
        %v1300 = vunpack.c.l.b16 %v1267
        %v1301 = vpack.c.b16 %v1286, %v1285
        %v1302 = vpack.c.b16 %v1288, %v1287
        %v1303 = vpack.c.b16 %v1290, %v1289
        %v1304 = vpack.c.b16 %v1292, %v1291
        %v1305 = vpack.c.b16 %v1294, %v1293
        %v1306 = vpack.c.b16 %v1296, %v1295
        %v1307 = vpack.c.b16 %v1298, %v1297
        %v1308 = vpack.c.b16 %v1300, %v1299
        %v1333 = vunpack.c.l.b16 %v1269
        %v1334 = vunpack.c.l.b16 %v1270
        %v1335 = vunpack.c.l.b16 %v1271
        %v1336 = vunpack.c.l.b16 %v1272
        %v1337 = vunpack.c.l.b16 %v1273
        %v1338 = vunpack.c.l.b16 %v1274
        %v1339 = vunpack.c.l.b16 %v1275
        %v1340 = vunpack.c.l.b16 %v1276
        %v1341 = vunpack.c.l.b16 %v1277
        %v1342 = vunpack.c.l.b16 %v1278
        %v1343 = vunpack.c.l.b16 %v1279
        %v1344 = vunpack.c.l.b16 %v1280
        %v1345 = vunpack.c.l.b16 %v1281
        %v1346 = vunpack.c.l.b16 %v1282
        %v1347 = vunpack.c.l.b16 %v1283
        %v1348 = vunpack.c.l.b16 %v1284
        %v1349 = vpack.c.b16 %v1334, %v1333
        %v1350 = vpack.c.b16 %v1336, %v1335
        %v1351 = vpack.c.b16 %v1338, %v1337
        %v1352 = vpack.c.b16 %v1340, %v1339
        %v1353 = vpack.c.b16 %v1342, %v1341
        %v1354 = vpack.c.b16 %v1344, %v1343
        %v1355 = vpack.c.b16 %v1346, %v1345
        %v1356 = vpack.c.b16 %v1348, %v1347
        %1365 = vmatpush.bf16.msra.mxu0 %v1356
        %1366 = vmatpush.bf16.msra.mxu0 %v1355
        %1367 = vmatpush.bf16.msra.mxu0 %v1354
        %1368 = vmatpush.bf16.msra.mxu0 %v1353
        %1369 = vmatpush.bf16.msra.mxu0 %v1352
        %1370 = vmatpush.bf16.msra.mxu0 %v1351
        %1371 = vmatpush.bf16.msra.mxu0 %v1350
        %1372 = vmatpush.bf16.msra.mxu0 %v1349
        %1373 = vmatmul.bf16.gmra.mxu0 %v1301
        %v1374 = vpop.f32.mrf.mxu0
        %v1375 = vadd.f32 0.0, %v1374
        %v1376 = vpop.f32.mrf.mxu0
        %v1377 = vadd.f32 0.0, %v1376
        %1378 = vmatmul.bf16.gmra.mxu0 %v1302
        %v1379 = vpop.f32.mrf.mxu0
        %v1380 = vadd.f32 0.0, %v1379
        %v1381 = vpop.f32.mrf.mxu0
        %v1382 = vadd.f32 0.0, %v1381
        %1383 = vmatmul.bf16.gmra.mxu0 %v1303
        %v1384 = vpop.f32.mrf.mxu0
        %v1385 = vadd.f32 0.0, %v1384
        %v1386 = vpop.f32.mrf.mxu0
        %v1387 = vadd.f32 0.0, %v1386
        %1388 = vmatmul.bf16.gmra.mxu0 %v1304
        %v1389 = vpop.f32.mrf.mxu0
        %v1390 = vadd.f32 0.0, %v1389
        %v1391 = vpop.f32.mrf.mxu0
        %v1392 = vadd.f32 0.0, %v1391
        %1393 = vmatmul.bf16.gmra.mxu0 %v1305
        %v1394 = vpop.f32.mrf.mxu0
        %v1395 = vadd.f32 0.0, %v1394
        %v1396 = vpop.f32.mrf.mxu0
        %v1397 = vadd.f32 0.0, %v1396
        %1398 = vmatmul.bf16.gmra.mxu0 %v1306
        %v1399 = vpop.f32.mrf.mxu0
        %v1400 = vadd.f32 0.0, %v1399
        %v1401 = vpop.f32.mrf.mxu0
        %v1402 = vadd.f32 0.0, %v1401
        %1403 = vmatmul.bf16.gmra.mxu0 %v1307
        %v1404 = vpop.f32.mrf.mxu0
        %v1405 = vadd.f32 0.0, %v1404
        %v1406 = vpop.f32.mrf.mxu0
        %v1407 = vadd.f32 0.0, %v1406
        %1408 = vmatmul.bf16.gmra.mxu0 %v1308
        %v1409 = vpop.f32.mrf.mxu0
        %v1410 = vadd.f32 0.0, %v1409
        %v1411 = vpop.f32.mrf.mxu0
        %v1412 = vadd.f32 0.0, %v1411
        %1413 = vdwg.mxu0
        %v1414 = vld [vmem:[#allocation3] sm:$0xff]
        %v1415 = vld [vmem:[#allocation3 + $0x8] sm:$0xff]
        %v1416 = vld [vmem:[#allocation3 + $0x10] sm:$0xff]
        %v1417 = vld [vmem:[#allocation3 + $0x18] sm:$0xff]
        %v1418 = vld [vmem:[#allocation3 + $0x20] sm:$0xff]
        %v1419 = vld [vmem:[#allocation3 + $0x28] sm:$0xff]
        %v1420 = vld [vmem:[#allocation3 + $0x30] sm:$0xff]
        %v1421 = vld [vmem:[#allocation3 + $0x38] sm:$0xff]
        %v1422 = vld [vmem:[#allocation3 + $0x40] sm:$0xff]
        %v1423 = vld [vmem:[#allocation3 + $0x48] sm:$0xff]
        %v1424 = vld [vmem:[#allocation3 + $0x50] sm:$0xff]
        %v1425 = vld [vmem:[#allocation3 + $0x58] sm:$0xff]
        %v1426 = vld [vmem:[#allocation3 + $0x60] sm:$0xff]
        %v1427 = vld [vmem:[#allocation3 + $0x68] sm:$0xff]
        %v1428 = vld [vmem:[#allocation3 + $0x70] sm:$0xff]
        %v1429 = vld [vmem:[#allocation3 + $0x78] sm:$0xff]
        %v1430 = vadd.f32 %v1414, %v1375
        %v1431 = vadd.f32 %v1415, %v1377
        %v1432 = vadd.f32 %v1416, %v1380
        %v1433 = vadd.f32 %v1417, %v1382
        %v1434 = vadd.f32 %v1418, %v1385
        %v1435 = vadd.f32 %v1419, %v1387
        %v1436 = vadd.f32 %v1420, %v1390
        %v1437 = vadd.f32 %v1421, %v1392
        %v1438 = vadd.f32 %v1422, %v1395
        %v1439 = vadd.f32 %v1423, %v1397
        %v1440 = vadd.f32 %v1424, %v1400
        %v1441 = vadd.f32 %v1425, %v1402
        %v1442 = vadd.f32 %v1426, %v1405
        %v1443 = vadd.f32 %v1427, %v1407
        %v1444 = vadd.f32 %v1428, %v1410
        %v1445 = vadd.f32 %v1429, %v1412
        %1446 = vst [vmem:[#allocation3] sm:$0xff] %v1430
        %1447 = vst [vmem:[#allocation3 + $0x8] sm:$0xff] %v1431
        %1448 = vst [vmem:[#allocation3 + $0x10] sm:$0xff] %v1432
        %1449 = vst [vmem:[#allocation3 + $0x18] sm:$0xff] %v1433
        %1450 = vst [vmem:[#allocation3 + $0x20] sm:$0xff] %v1434
        %1451 = vst [vmem:[#allocation3 + $0x28] sm:$0xff] %v1435
        %1452 = vst [vmem:[#allocation3 + $0x30] sm:$0xff] %v1436
        %1453 = vst [vmem:[#allocation3 + $0x38] sm:$0xff] %v1437
        %1454 = vst [vmem:[#allocation3 + $0x40] sm:$0xff] %v1438
        %1455 = vst [vmem:[#allocation3 + $0x48] sm:$0xff] %v1439
        %1456 = vst [vmem:[#allocation3 + $0x50] sm:$0xff] %v1440
        %1457 = vst [vmem:[#allocation3 + $0x58] sm:$0xff] %v1441
        %1458 = vst [vmem:[#allocation3 + $0x60] sm:$0xff] %v1442
        %1459 = vst [vmem:[#allocation3 + $0x68] sm:$0xff] %v1443
        %1460 = vst [vmem:[#allocation3 + $0x70] sm:$0xff] %v1444
        %1461 = vst [vmem:[#allocation3 + $0x78] sm:$0xff] %v1445
        %v1462 = vld [vmem:[#allocation2] sm:$0xe]
        %v1463 = vld [vmem:[#allocation2 + $0x4] sm:$0xf]
        %v1464 = vld [vmem:[#allocation2 + $0x8] sm:$0x3]
        %v1465 = vld [vmem:[#allocation2 + $0xc] sm:$0xe]
        %v1466 = vld [vmem:[#allocation2 + $0x10] sm:$0xf]
        %v1467 = vld [vmem:[#allocation2 + $0x14] sm:$0x3]
        %v1468 = vld [vmem:[#allocation2 + $0x18] sm:$0xe]
        %v1469 = vld [vmem:[#allocation2 + $0x1c] sm:$0xf]
        %v1470 = vld [vmem:[#allocation2 + $0x20] sm:$0x3]
        %v1471 = vld [vmem:[#allocation2 + $0x24] sm:$0xe]
        %v1472 = vld [vmem:[#allocation2 + $0x28] sm:$0xf]
        %v1473 = vld [vmem:[#allocation2 + $0x2c] sm:$0x3]
        %v1474 = vld [vmem:[#allocation2 + $0x30] sm:$0xe]
        %v1475 = vld [vmem:[#allocation2 + $0x34] sm:$0xf]
        %v1476 = vld [vmem:[#allocation2 + $0x38] sm:$0x3]
        %v1477 = vld [vmem:[#allocation2 + $0x3c] sm:$0xe]
        %v1478 = vld [vmem:[#allocation2 + $0x40] sm:$0xf]
        %v1479 = vld [vmem:[#allocation2 + $0x44] sm:$0x3]
        %v1480 = vld [vmem:[#allocation2 + $0x48] sm:$0xe]
        %v1481 = vld [vmem:[#allocation2 + $0x4c] sm:$0xf]
        %v1482 = vld [vmem:[#allocation2 + $0x50] sm:$0x3]
        %v1483 = vld [vmem:[#allocation2 + $0x54] sm:$0xe]
        %v1484 = vld [vmem:[#allocation2 + $0x58] sm:$0xf]
        %v1485 = vld [vmem:[#allocation2 + $0x5c] sm:$0x3]
        %vm1486 = vsmask.f32 2304
        %vm1487 = vsmask.f32 6416
        %vm1488 = vmor %vm1486, %vm1487
        %v1490 = vshrl.u32 %v1462, 16
        %v1492 = vrot.slane %v1490, 5
        %v1493 = vshll.u32 %v1462, 16
        %v1495 = vrot.slane %v1493, 6
        %v1496 = vor.u32 %v1492, %v1495
        %v1497 = vrot.slane %v1496, 4
        %v1499 = vshrl.u32 %v1463, 16
        %v1501 = vrot.slane %v1499, 5
        %v1502 = vshll.u32 %v1463, 16
        %v1504 = vrot.slane %v1502, 6
        %v1505 = vor.u32 %v1501, %v1504
        %v1506 = vsel %vm1488, %v1497, %v1505
        %v1507 = vrot.slane %v1505, 4
        %v1509 = vshrl.u32 %v1464, 16
        %v1511 = vrot.slane %v1509, 5
        %v1512 = vshll.u32 %v1464, 16
        %v1514 = vrot.slane %v1512, 6
        %v1515 = vor.u32 %v1511, %v1514
        %v1516 = vsel %vm1488, %v1507, %v1515
        %v1518 = vshrl.u32 %v1465, 16
        %v1520 = vrot.slane %v1518, 5
        %v1521 = vshll.u32 %v1465, 16
        %v1523 = vrot.slane %v1521, 6
        %v1524 = vor.u32 %v1520, %v1523
        %v1525 = vrot.slane %v1524, 4
        %v1527 = vshrl.u32 %v1466, 16
        %v1529 = vrot.slane %v1527, 5
        %v1530 = vshll.u32 %v1466, 16
        %v1532 = vrot.slane %v1530, 6
        %v1533 = vor.u32 %v1529, %v1532
        %v1534 = vsel %vm1488, %v1525, %v1533
        %v1535 = vrot.slane %v1533, 4
        %v1537 = vshrl.u32 %v1467, 16
        %v1539 = vrot.slane %v1537, 5
        %v1540 = vshll.u32 %v1467, 16
        %v1542 = vrot.slane %v1540, 6
        %v1543 = vor.u32 %v1539, %v1542
        %v1544 = vsel %vm1488, %v1535, %v1543
        %v1546 = vshrl.u32 %v1468, 16
        %v1548 = vrot.slane %v1546, 5
        %v1549 = vshll.u32 %v1468, 16
        %v1551 = vrot.slane %v1549, 6
        %v1552 = vor.u32 %v1548, %v1551
        %v1553 = vrot.slane %v1552, 4
        %v1555 = vshrl.u32 %v1469, 16
        %v1557 = vrot.slane %v1555, 5
        %v1558 = vshll.u32 %v1469, 16
        %v1560 = vrot.slane %v1558, 6
        %v1561 = vor.u32 %v1557, %v1560
        %v1562 = vsel %vm1488, %v1553, %v1561
        %v1563 = vrot.slane %v1561, 4
        %v1565 = vshrl.u32 %v1470, 16
        %v1567 = vrot.slane %v1565, 5
        %v1568 = vshll.u32 %v1470, 16
        %v1570 = vrot.slane %v1568, 6
        %v1571 = vor.u32 %v1567, %v1570
        %v1572 = vsel %vm1488, %v1563, %v1571
        %v1574 = vshrl.u32 %v1471, 16
        %v1576 = vrot.slane %v1574, 5
        %v1577 = vshll.u32 %v1471, 16
        %v1579 = vrot.slane %v1577, 6
        %v1580 = vor.u32 %v1576, %v1579
        %v1581 = vrot.slane %v1580, 4
        %v1583 = vshrl.u32 %v1472, 16
        %v1585 = vrot.slane %v1583, 5
        %v1586 = vshll.u32 %v1472, 16
        %v1588 = vrot.slane %v1586, 6
        %v1589 = vor.u32 %v1585, %v1588
        %v1590 = vsel %vm1488, %v1581, %v1589
        %v1591 = vrot.slane %v1589, 4
        %v1593 = vshrl.u32 %v1473, 16
        %v1595 = vrot.slane %v1593, 5
        %v1596 = vshll.u32 %v1473, 16
        %v1598 = vrot.slane %v1596, 6
        %v1599 = vor.u32 %v1595, %v1598
        %v1600 = vsel %vm1488, %v1591, %v1599
        %v1602 = vshrl.u32 %v1474, 16
        %v1604 = vrot.slane %v1602, 5
        %v1605 = vshll.u32 %v1474, 16
        %v1607 = vrot.slane %v1605, 6
        %v1608 = vor.u32 %v1604, %v1607
        %v1609 = vrot.slane %v1608, 4
        %v1611 = vshrl.u32 %v1475, 16
        %v1613 = vrot.slane %v1611, 5
        %v1614 = vshll.u32 %v1475, 16
        %v1616 = vrot.slane %v1614, 6
        %v1617 = vor.u32 %v1613, %v1616
        %v1618 = vsel %vm1488, %v1609, %v1617
        %v1619 = vrot.slane %v1617, 4
        %v1621 = vshrl.u32 %v1476, 16
        %v1623 = vrot.slane %v1621, 5
        %v1624 = vshll.u32 %v1476, 16
        %v1626 = vrot.slane %v1624, 6
        %v1627 = vor.u32 %v1623, %v1626
        %v1628 = vsel %vm1488, %v1619, %v1627
        %v1630 = vshrl.u32 %v1477, 16
        %v1632 = vrot.slane %v1630, 5
        %v1633 = vshll.u32 %v1477, 16
        %v1635 = vrot.slane %v1633, 6
        %v1636 = vor.u32 %v1632, %v1635
        %v1637 = vrot.slane %v1636, 4
        %v1639 = vshrl.u32 %v1478, 16
        %v1641 = vrot.slane %v1639, 5
        %v1642 = vshll.u32 %v1478, 16
        %v1644 = vrot.slane %v1642, 6
        %v1645 = vor.u32 %v1641, %v1644
        %v1646 = vsel %vm1488, %v1637, %v1645
        %v1647 = vrot.slane %v1645, 4
        %v1649 = vshrl.u32 %v1479, 16
        %v1651 = vrot.slane %v1649, 5
        %v1652 = vshll.u32 %v1479, 16
        %v1654 = vrot.slane %v1652, 6
        %v1655 = vor.u32 %v1651, %v1654
        %v1656 = vsel %vm1488, %v1647, %v1655
        %v1658 = vshrl.u32 %v1480, 16
        %v1660 = vrot.slane %v1658, 5
        %v1661 = vshll.u32 %v1480, 16
        %v1663 = vrot.slane %v1661, 6
        %v1664 = vor.u32 %v1660, %v1663
        %v1665 = vrot.slane %v1664, 4
        %v1667 = vshrl.u32 %v1481, 16
        %v1669 = vrot.slane %v1667, 5
        %v1670 = vshll.u32 %v1481, 16
        %v1672 = vrot.slane %v1670, 6
        %v1673 = vor.u32 %v1669, %v1672
        %v1674 = vsel %vm1488, %v1665, %v1673
        %v1675 = vrot.slane %v1673, 4
        %v1677 = vshrl.u32 %v1482, 16
        %v1679 = vrot.slane %v1677, 5
        %v1680 = vshll.u32 %v1482, 16
        %v1682 = vrot.slane %v1680, 6
        %v1683 = vor.u32 %v1679, %v1682
        %v1684 = vsel %vm1488, %v1675, %v1683
        %v1686 = vshrl.u32 %v1483, 16
        %v1688 = vrot.slane %v1686, 5
        %v1689 = vshll.u32 %v1483, 16
        %v1691 = vrot.slane %v1689, 6
        %v1692 = vor.u32 %v1688, %v1691
        %v1693 = vrot.slane %v1692, 4
        %v1695 = vshrl.u32 %v1484, 16
        %v1697 = vrot.slane %v1695, 5
        %v1698 = vshll.u32 %v1484, 16
        %v1700 = vrot.slane %v1698, 6
        %v1701 = vor.u32 %v1697, %v1700
        %v1702 = vsel %vm1488, %v1693, %v1701
        %v1703 = vrot.slane %v1701, 4
        %v1705 = vshrl.u32 %v1485, 16
        %v1707 = vrot.slane %v1705, 5
        %v1708 = vshll.u32 %v1485, 16
        %v1710 = vrot.slane %v1708, 6
        %v1711 = vor.u32 %v1707, %v1710
        %v1712 = vsel %vm1488, %v1703, %v1711
        %s1713 = scalar_lea.vmem [#allocation4], 192
        %v1714 = vld [vmem:[%s1713] sm:$0xf]
        %v1715 = vld [vmem:[%s1713 + $0x4] sm:$0xf]
        %v1716 = vld [vmem:[%s1713 + $0x8] sm:$0xf]
        %v1717 = vld [vmem:[%s1713 + $0xc] sm:$0xf]
        %v1718 = vld [vmem:[%s1713 + $0x10] sm:$0xf]
        %v1719 = vld [vmem:[%s1713 + $0x14] sm:$0xf]
        %v1720 = vld [vmem:[%s1713 + $0x18] sm:$0xf]
        %v1721 = vld [vmem:[%s1713 + $0x1c] sm:$0xf]
        %v1722 = vld [vmem:[%s1713 + $0x20] sm:$0xf]
        %v1723 = vld [vmem:[%s1713 + $0x24] sm:$0xf]
        %v1724 = vld [vmem:[%s1713 + $0x28] sm:$0xf]
        %v1725 = vld [vmem:[%s1713 + $0x2c] sm:$0xf]
        %v1726 = vld [vmem:[%s1713 + $0x30] sm:$0xf]
        %v1727 = vld [vmem:[%s1713 + $0x34] sm:$0xf]
        %v1728 = vld [vmem:[%s1713 + $0x38] sm:$0xf]
        %v1729 = vld [vmem:[%s1713 + $0x3c] sm:$0xf]
        %v1730 = vunpack.c.l.b16 %v1506
        %v1731 = vunpack.c.l.b16 %v1516
        %v1732 = vunpack.c.l.b16 %v1534
        %v1733 = vunpack.c.l.b16 %v1544
        %v1734 = vunpack.c.l.b16 %v1562
        %v1735 = vunpack.c.l.b16 %v1572
        %v1736 = vunpack.c.l.b16 %v1590
        %v1737 = vunpack.c.l.b16 %v1600
        %v1738 = vunpack.c.l.b16 %v1618
        %v1739 = vunpack.c.l.b16 %v1628
        %v1740 = vunpack.c.l.b16 %v1646
        %v1741 = vunpack.c.l.b16 %v1656
        %v1742 = vunpack.c.l.b16 %v1674
        %v1743 = vunpack.c.l.b16 %v1684
        %v1744 = vunpack.c.l.b16 %v1702
        %v1745 = vunpack.c.l.b16 %v1712
        %v1746 = vpack.c.b16 %v1731, %v1730
        %v1747 = vpack.c.b16 %v1733, %v1732
        %v1748 = vpack.c.b16 %v1735, %v1734
        %v1749 = vpack.c.b16 %v1737, %v1736
        %v1750 = vpack.c.b16 %v1739, %v1738
        %v1751 = vpack.c.b16 %v1741, %v1740
        %v1752 = vpack.c.b16 %v1743, %v1742
        %v1753 = vpack.c.b16 %v1745, %v1744
        %v1778 = vunpack.c.l.b16 %v1714
        %v1779 = vunpack.c.l.b16 %v1715
        %v1780 = vunpack.c.l.b16 %v1716
        %v1781 = vunpack.c.l.b16 %v1717
        %v1782 = vunpack.c.l.b16 %v1718
        %v1783 = vunpack.c.l.b16 %v1719
        %v1784 = vunpack.c.l.b16 %v1720
        %v1785 = vunpack.c.l.b16 %v1721
        %v1786 = vunpack.c.l.b16 %v1722
        %v1787 = vunpack.c.l.b16 %v1723
        %v1788 = vunpack.c.l.b16 %v1724
        %v1789 = vunpack.c.l.b16 %v1725
        %v1790 = vunpack.c.l.b16 %v1726
        %v1791 = vunpack.c.l.b16 %v1727
        %v1792 = vunpack.c.l.b16 %v1728
        %v1793 = vunpack.c.l.b16 %v1729
        %v1794 = vpack.c.b16 %v1779, %v1778
        %v1795 = vpack.c.b16 %v1781, %v1780
        %v1796 = vpack.c.b16 %v1783, %v1782
        %v1797 = vpack.c.b16 %v1785, %v1784
        %v1798 = vpack.c.b16 %v1787, %v1786
        %v1799 = vpack.c.b16 %v1789, %v1788
        %v1800 = vpack.c.b16 %v1791, %v1790
        %v1801 = vpack.c.b16 %v1793, %v1792
        %1810 = vmatpush.bf16.msra.mxu0 %v1801
        %1811 = vmatpush.bf16.msra.mxu0 %v1800
        %1812 = vmatpush.bf16.msra.mxu0 %v1799
        %1813 = vmatpush.bf16.msra.mxu0 %v1798
        %1814 = vmatpush.bf16.msra.mxu0 %v1797
        %1815 = vmatpush.bf16.msra.mxu0 %v1796
        %1816 = vmatpush.bf16.msra.mxu0 %v1795
        %1817 = vmatpush.bf16.msra.mxu0 %v1794
        %1818 = vmatmul.bf16.gmra.mxu0 %v1746
        %v1819 = vpop.f32.mrf.mxu0
        %v1820 = vadd.f32 0.0, %v1819
        %v1821 = vpop.f32.mrf.mxu0
        %v1822 = vadd.f32 0.0, %v1821
        %1823 = vmatmul.bf16.gmra.mxu0 %v1747
        %v1824 = vpop.f32.mrf.mxu0
        %v1825 = vadd.f32 0.0, %v1824
        %v1826 = vpop.f32.mrf.mxu0
        %v1827 = vadd.f32 0.0, %v1826
        %1828 = vmatmul.bf16.gmra.mxu0 %v1748
        %v1829 = vpop.f32.mrf.mxu0
        %v1830 = vadd.f32 0.0, %v1829
        %v1831 = vpop.f32.mrf.mxu0
        %v1832 = vadd.f32 0.0, %v1831
        %1833 = vmatmul.bf16.gmra.mxu0 %v1749
        %v1834 = vpop.f32.mrf.mxu0
        %v1835 = vadd.f32 0.0, %v1834
        %v1836 = vpop.f32.mrf.mxu0
        %v1837 = vadd.f32 0.0, %v1836
        %1838 = vmatmul.bf16.gmra.mxu0 %v1750
        %v1839 = vpop.f32.mrf.mxu0
        %v1840 = vadd.f32 0.0, %v1839
        %v1841 = vpop.f32.mrf.mxu0
        %v1842 = vadd.f32 0.0, %v1841
        %1843 = vmatmul.bf16.gmra.mxu0 %v1751
        %v1844 = vpop.f32.mrf.mxu0
        %v1845 = vadd.f32 0.0, %v1844
        %v1846 = vpop.f32.mrf.mxu0
        %v1847 = vadd.f32 0.0, %v1846
        %1848 = vmatmul.bf16.gmra.mxu0 %v1752
        %v1849 = vpop.f32.mrf.mxu0
        %v1850 = vadd.f32 0.0, %v1849
        %v1851 = vpop.f32.mrf.mxu0
        %v1852 = vadd.f32 0.0, %v1851
        %1853 = vmatmul.bf16.gmra.mxu0 %v1753
        %v1854 = vpop.f32.mrf.mxu0
        %v1855 = vadd.f32 0.0, %v1854
        %v1856 = vpop.f32.mrf.mxu0
        %v1857 = vadd.f32 0.0, %v1856
        %1858 = vdwg.mxu0
        %v1859 = vld [vmem:[#allocation3] sm:$0xff]
        %v1860 = vld [vmem:[#allocation3 + $0x8] sm:$0xff]
        %v1861 = vld [vmem:[#allocation3 + $0x10] sm:$0xff]
        %v1862 = vld [vmem:[#allocation3 + $0x18] sm:$0xff]
        %v1863 = vld [vmem:[#allocation3 + $0x20] sm:$0xff]
        %v1864 = vld [vmem:[#allocation3 + $0x28] sm:$0xff]
        %v1865 = vld [vmem:[#allocation3 + $0x30] sm:$0xff]
        %v1866 = vld [vmem:[#allocation3 + $0x38] sm:$0xff]
        %v1867 = vld [vmem:[#allocation3 + $0x40] sm:$0xff]
        %v1868 = vld [vmem:[#allocation3 + $0x48] sm:$0xff]
        %v1869 = vld [vmem:[#allocation3 + $0x50] sm:$0xff]
        %v1870 = vld [vmem:[#allocation3 + $0x58] sm:$0xff]
        %v1871 = vld [vmem:[#allocation3 + $0x60] sm:$0xff]
        %v1872 = vld [vmem:[#allocation3 + $0x68] sm:$0xff]
        %v1873 = vld [vmem:[#allocation3 + $0x70] sm:$0xff]
        %v1874 = vld [vmem:[#allocation3 + $0x78] sm:$0xff]
        %v1875 = vadd.f32 %v1859, %v1820
        %v1876 = vadd.f32 %v1860, %v1822
        %v1877 = vadd.f32 %v1861, %v1825
        %v1878 = vadd.f32 %v1862, %v1827
        %v1879 = vadd.f32 %v1863, %v1830
        %v1880 = vadd.f32 %v1864, %v1832
        %v1881 = vadd.f32 %v1865, %v1835
        %v1882 = vadd.f32 %v1866, %v1837
        %v1883 = vadd.f32 %v1867, %v1840
        %v1884 = vadd.f32 %v1868, %v1842
        %v1885 = vadd.f32 %v1869, %v1845
        %v1886 = vadd.f32 %v1870, %v1847
        %v1887 = vadd.f32 %v1871, %v1850
        %v1888 = vadd.f32 %v1872, %v1852
        %v1889 = vadd.f32 %v1873, %v1855
        %v1890 = vadd.f32 %v1874, %v1857
        %1891 = vst [vmem:[#allocation3] sm:$0xff] %v1875
        %1892 = vst [vmem:[#allocation3 + $0x8] sm:$0xff] %v1876
        %1893 = vst [vmem:[#allocation3 + $0x10] sm:$0xff] %v1877
        %1894 = vst [vmem:[#allocation3 + $0x18] sm:$0xff] %v1878
        %1895 = vst [vmem:[#allocation3 + $0x20] sm:$0xff] %v1879
        %1896 = vst [vmem:[#allocation3 + $0x28] sm:$0xff] %v1880
        %1897 = vst [vmem:[#allocation3 + $0x30] sm:$0xff] %v1881
        %1898 = vst [vmem:[#allocation3 + $0x38] sm:$0xff] %v1882
        %1899 = vst [vmem:[#allocation3 + $0x40] sm:$0xff] %v1883
        %1900 = vst [vmem:[#allocation3 + $0x48] sm:$0xff] %v1884
        %1901 = vst [vmem:[#allocation3 + $0x50] sm:$0xff] %v1885
        %1902 = vst [vmem:[#allocation3 + $0x58] sm:$0xff] %v1886
        %1903 = vst [vmem:[#allocation3 + $0x60] sm:$0xff] %v1887
        %1904 = vst [vmem:[#allocation3 + $0x68] sm:$0xff] %v1888
        %1905 = vst [vmem:[#allocation3 + $0x70] sm:$0xff] %v1889
        %1906 = vst [vmem:[#allocation3 + $0x78] sm:$0xff] %v1890
        %v1907 = vld [vmem:[#allocation2] sm:$0xc]
        %v1908 = vld [vmem:[#allocation2 + $0x4] sm:$0xf]
        %v1909 = vld [vmem:[#allocation2 + $0x8] sm:$0x3]
        %v1910 = vld [vmem:[#allocation2 + $0xc] sm:$0xc]
        %v1911 = vld [vmem:[#allocation2 + $0x10] sm:$0xf]
        %v1912 = vld [vmem:[#allocation2 + $0x14] sm:$0x3]
        %v1913 = vld [vmem:[#allocation2 + $0x18] sm:$0xc]
        %v1914 = vld [vmem:[#allocation2 + $0x1c] sm:$0xf]
        %v1915 = vld [vmem:[#allocation2 + $0x20] sm:$0x3]
        %v1916 = vld [vmem:[#allocation2 + $0x24] sm:$0xc]
        %v1917 = vld [vmem:[#allocation2 + $0x28] sm:$0xf]
        %v1918 = vld [vmem:[#allocation2 + $0x2c] sm:$0x3]
        %v1919 = vld [vmem:[#allocation2 + $0x30] sm:$0xc]
        %v1920 = vld [vmem:[#allocation2 + $0x34] sm:$0xf]
        %v1921 = vld [vmem:[#allocation2 + $0x38] sm:$0x3]
        %v1922 = vld [vmem:[#allocation2 + $0x3c] sm:$0xc]
        %v1923 = vld [vmem:[#allocation2 + $0x40] sm:$0xf]
        %v1924 = vld [vmem:[#allocation2 + $0x44] sm:$0x3]
        %v1925 = vld [vmem:[#allocation2 + $0x48] sm:$0xc]
        %v1926 = vld [vmem:[#allocation2 + $0x4c] sm:$0xf]
        %v1927 = vld [vmem:[#allocation2 + $0x50] sm:$0x3]
        %v1928 = vld [vmem:[#allocation2 + $0x54] sm:$0xc]
        %v1929 = vld [vmem:[#allocation2 + $0x58] sm:$0xf]
        %v1930 = vld [vmem:[#allocation2 + $0x5c] sm:$0x3]
        %vm1955 = vcmask 1045508
        %vm1956 = vmor %vm265, %vm1955
        %v1957 = vrot.slane %v1907, 6
        %v1958 = vrot.slane %v1957, 4
        %v1959 = vrot.slane %v1908, 6
        %v1960 = vsel %vm1956, %v1958, %v1959
        %v1961 = vrot.slane %v1959, 4
        %v1962 = vrot.slane %v1909, 6
        %v1963 = vsel %vm1956, %v1961, %v1962
        %v1964 = vrot.slane %v1910, 6
        %v1965 = vrot.slane %v1964, 4
        %v1966 = vrot.slane %v1911, 6
        %v1967 = vsel %vm1956, %v1965, %v1966
        %v1968 = vrot.slane %v1966, 4
        %v1969 = vrot.slane %v1912, 6
        %v1970 = vsel %vm1956, %v1968, %v1969
        %v1971 = vrot.slane %v1913, 6
        %v1972 = vrot.slane %v1971, 4
        %v1973 = vrot.slane %v1914, 6
        %v1974 = vsel %vm1956, %v1972, %v1973
        %v1975 = vrot.slane %v1973, 4
        %v1976 = vrot.slane %v1915, 6
        %v1977 = vsel %vm1956, %v1975, %v1976
        %v1978 = vrot.slane %v1916, 6
        %v1979 = vrot.slane %v1978, 4
        %v1980 = vrot.slane %v1917, 6
        %v1981 = vsel %vm1956, %v1979, %v1980
        %v1982 = vrot.slane %v1980, 4
        %v1983 = vrot.slane %v1918, 6
        %v1984 = vsel %vm1956, %v1982, %v1983
        %v1985 = vrot.slane %v1919, 6
        %v1986 = vrot.slane %v1985, 4
        %v1987 = vrot.slane %v1920, 6
        %v1988 = vsel %vm1956, %v1986, %v1987
        %v1989 = vrot.slane %v1987, 4
        %v1990 = vrot.slane %v1921, 6
        %v1991 = vsel %vm1956, %v1989, %v1990
        %v1992 = vrot.slane %v1922, 6
        %v1993 = vrot.slane %v1992, 4
        %v1994 = vrot.slane %v1923, 6
        %v1995 = vsel %vm1956, %v1993, %v1994
        %v1996 = vrot.slane %v1994, 4
        %v1997 = vrot.slane %v1924, 6
        %v1998 = vsel %vm1956, %v1996, %v1997
        %v1999 = vrot.slane %v1925, 6
        %v2000 = vrot.slane %v1999, 4
        %v2001 = vrot.slane %v1926, 6
        %v2002 = vsel %vm1956, %v2000, %v2001
        %v2003 = vrot.slane %v2001, 4
        %v2004 = vrot.slane %v1927, 6
        %v2005 = vsel %vm1956, %v2003, %v2004
        %v2006 = vrot.slane %v1928, 6
        %v2007 = vrot.slane %v2006, 4
        %v2008 = vrot.slane %v1929, 6
        %v2009 = vsel %vm1956, %v2007, %v2008
        %v2010 = vrot.slane %v2008, 4
        %v2011 = vrot.slane %v1930, 6
        %v2012 = vsel %vm1956, %v2010, %v2011
        %s2013 = scalar_lea.vmem [#allocation4], 256
        %v2014 = vld [vmem:[%s2013] sm:$0xf]
        %v2015 = vld [vmem:[%s2013 + $0x4] sm:$0xf]
        %v2016 = vld [vmem:[%s2013 + $0x8] sm:$0xf]
        %v2017 = vld [vmem:[%s2013 + $0xc] sm:$0xf]
        %v2018 = vld [vmem:[%s2013 + $0x10] sm:$0xf]
        %v2019 = vld [vmem:[%s2013 + $0x14] sm:$0xf]
        %v2020 = vld [vmem:[%s2013 + $0x18] sm:$0xf]
        %v2021 = vld [vmem:[%s2013 + $0x1c] sm:$0xf]
        %v2022 = vld [vmem:[%s2013 + $0x20] sm:$0xf]
        %v2023 = vld [vmem:[%s2013 + $0x24] sm:$0xf]
        %v2024 = vld [vmem:[%s2013 + $0x28] sm:$0xf]
        %v2025 = vld [vmem:[%s2013 + $0x2c] sm:$0xf]
        %v2026 = vld [vmem:[%s2013 + $0x30] sm:$0xf]
        %v2027 = vld [vmem:[%s2013 + $0x34] sm:$0xf]
        %v2028 = vld [vmem:[%s2013 + $0x38] sm:$0xf]
        %v2029 = vld [vmem:[%s2013 + $0x3c] sm:$0xf]
        %v2030 = vunpack.c.l.b16 %v1960
        %v2031 = vunpack.c.l.b16 %v1963
        %v2032 = vunpack.c.l.b16 %v1967
        %v2033 = vunpack.c.l.b16 %v1970
        %v2034 = vunpack.c.l.b16 %v1974
        %v2035 = vunpack.c.l.b16 %v1977
        %v2036 = vunpack.c.l.b16 %v1981
        %v2037 = vunpack.c.l.b16 %v1984
        %v2038 = vunpack.c.l.b16 %v1988
        %v2039 = vunpack.c.l.b16 %v1991
        %v2040 = vunpack.c.l.b16 %v1995
        %v2041 = vunpack.c.l.b16 %v1998
        %v2042 = vunpack.c.l.b16 %v2002
        %v2043 = vunpack.c.l.b16 %v2005
        %v2044 = vunpack.c.l.b16 %v2009
        %v2045 = vunpack.c.l.b16 %v2012
        %v2046 = vpack.c.b16 %v2031, %v2030
        %v2047 = vpack.c.b16 %v2033, %v2032
        %v2048 = vpack.c.b16 %v2035, %v2034
        %v2049 = vpack.c.b16 %v2037, %v2036
        %v2050 = vpack.c.b16 %v2039, %v2038
        %v2051 = vpack.c.b16 %v2041, %v2040
        %v2052 = vpack.c.b16 %v2043, %v2042
        %v2053 = vpack.c.b16 %v2045, %v2044
        %v2078 = vunpack.c.l.b16 %v2014
        %v2079 = vunpack.c.l.b16 %v2015
        %v2080 = vunpack.c.l.b16 %v2016
        %v2081 = vunpack.c.l.b16 %v2017
        %v2082 = vunpack.c.l.b16 %v2018
        %v2083 = vunpack.c.l.b16 %v2019
        %v2084 = vunpack.c.l.b16 %v2020
        %v2085 = vunpack.c.l.b16 %v2021
        %v2086 = vunpack.c.l.b16 %v2022
        %v2087 = vunpack.c.l.b16 %v2023
        %v2088 = vunpack.c.l.b16 %v2024
        %v2089 = vunpack.c.l.b16 %v2025
        %v2090 = vunpack.c.l.b16 %v2026
        %v2091 = vunpack.c.l.b16 %v2027
        %v2092 = vunpack.c.l.b16 %v2028
        %v2093 = vunpack.c.l.b16 %v2029
        %v2094 = vpack.c.b16 %v2079, %v2078
        %v2095 = vpack.c.b16 %v2081, %v2080
        %v2096 = vpack.c.b16 %v2083, %v2082
        %v2097 = vpack.c.b16 %v2085, %v2084
        %v2098 = vpack.c.b16 %v2087, %v2086
        %v2099 = vpack.c.b16 %v2089, %v2088
        %v2100 = vpack.c.b16 %v2091, %v2090
        %v2101 = vpack.c.b16 %v2093, %v2092
        %2110 = vmatpush.bf16.msra.mxu0 %v2101
        %2111 = vmatpush.bf16.msra.mxu0 %v2100
        %2112 = vmatpush.bf16.msra.mxu0 %v2099
        %2113 = vmatpush.bf16.msra.mxu0 %v2098
        %2114 = vmatpush.bf16.msra.mxu0 %v2097
        %2115 = vmatpush.bf16.msra.mxu0 %v2096
        %2116 = vmatpush.bf16.msra.mxu0 %v2095
        %2117 = vmatpush.bf16.msra.mxu0 %v2094
        %2118 = vmatmul.bf16.gmra.mxu0 %v2046
        %v2119 = vpop.f32.mrf.mxu0
        %v2120 = vadd.f32 0.0, %v2119
        %v2121 = vpop.f32.mrf.mxu0
        %v2122 = vadd.f32 0.0, %v2121
        %2123 = vmatmul.bf16.gmra.mxu0 %v2047
        %v2124 = vpop.f32.mrf.mxu0
        %v2125 = vadd.f32 0.0, %v2124
        %v2126 = vpop.f32.mrf.mxu0
        %v2127 = vadd.f32 0.0, %v2126
        %2128 = vmatmul.bf16.gmra.mxu0 %v2048
        %v2129 = vpop.f32.mrf.mxu0
        %v2130 = vadd.f32 0.0, %v2129
        %v2131 = vpop.f32.mrf.mxu0
        %v2132 = vadd.f32 0.0, %v2131
        %2133 = vmatmul.bf16.gmra.mxu0 %v2049
        %v2134 = vpop.f32.mrf.mxu0
        %v2135 = vadd.f32 0.0, %v2134
        %v2136 = vpop.f32.mrf.mxu0
        %v2137 = vadd.f32 0.0, %v2136
        %2138 = vmatmul.bf16.gmra.mxu0 %v2050
        %v2139 = vpop.f32.mrf.mxu0
        %v2140 = vadd.f32 0.0, %v2139
        %v2141 = vpop.f32.mrf.mxu0
        %v2142 = vadd.f32 0.0, %v2141
        %2143 = vmatmul.bf16.gmra.mxu0 %v2051
        %v2144 = vpop.f32.mrf.mxu0
        %v2145 = vadd.f32 0.0, %v2144
        %v2146 = vpop.f32.mrf.mxu0
        %v2147 = vadd.f32 0.0, %v2146
        %2148 = vmatmul.bf16.gmra.mxu0 %v2052
        %v2149 = vpop.f32.mrf.mxu0
        %v2150 = vadd.f32 0.0, %v2149
        %v2151 = vpop.f32.mrf.mxu0
        %v2152 = vadd.f32 0.0, %v2151
        %2153 = vmatmul.bf16.gmra.mxu0 %v2053
        %v2154 = vpop.f32.mrf.mxu0
        %v2155 = vadd.f32 0.0, %v2154
        %v2156 = vpop.f32.mrf.mxu0
        %v2157 = vadd.f32 0.0, %v2156
        %2158 = vdwg.mxu0
        %v2159 = vld [vmem:[#allocation3] sm:$0xff]
        %v2160 = vld [vmem:[#allocation3 + $0x8] sm:$0xff]
        %v2161 = vld [vmem:[#allocation3 + $0x10] sm:$0xff]
        %v2162 = vld [vmem:[#allocation3 + $0x18] sm:$0xff]
        %v2163 = vld [vmem:[#allocation3 + $0x20] sm:$0xff]
        %v2164 = vld [vmem:[#allocation3 + $0x28] sm:$0xff]
        %v2165 = vld [vmem:[#allocation3 + $0x30] sm:$0xff]
        %v2166 = vld [vmem:[#allocation3 + $0x38] sm:$0xff]
        %v2167 = vld [vmem:[#allocation3 + $0x40] sm:$0xff]
        %v2168 = vld [vmem:[#allocation3 + $0x48] sm:$0xff]
        %v2169 = vld [vmem:[#allocation3 + $0x50] sm:$0xff]
        %v2170 = vld [vmem:[#allocation3 + $0x58] sm:$0xff]
        %v2171 = vld [vmem:[#allocation3 + $0x60] sm:$0xff]
        %v2172 = vld [vmem:[#allocation3 + $0x68] sm:$0xff]
        %v2173 = vld [vmem:[#allocation3 + $0x70] sm:$0xff]
        %v2174 = vld [vmem:[#allocation3 + $0x78] sm:$0xff]
        %v2175 = vadd.f32 %v2159, %v2120
        %v2176 = vadd.f32 %v2160, %v2122
        %v2177 = vadd.f32 %v2161, %v2125
        %v2178 = vadd.f32 %v2162, %v2127
        %v2179 = vadd.f32 %v2163, %v2130
        %v2180 = vadd.f32 %v2164, %v2132
        %v2181 = vadd.f32 %v2165, %v2135
        %v2182 = vadd.f32 %v2166, %v2137
        %v2183 = vadd.f32 %v2167, %v2140
        %v2184 = vadd.f32 %v2168, %v2142
        %v2185 = vadd.f32 %v2169, %v2145
        %v2186 = vadd.f32 %v2170, %v2147
        %v2187 = vadd.f32 %v2171, %v2150
        %v2188 = vadd.f32 %v2172, %v2152
        %v2189 = vadd.f32 %v2173, %v2155
        %v2190 = vadd.f32 %v2174, %v2157
        %2191 = vst [vmem:[#allocation3] sm:$0xff] %v2175
        %2192 = vst [vmem:[#allocation3 + $0x8] sm:$0xff] %v2176
        %2193 = vst [vmem:[#allocation3 + $0x10] sm:$0xff] %v2177
        %2194 = vst [vmem:[#allocation3 + $0x18] sm:$0xff] %v2178
        %2195 = vst [vmem:[#allocation3 + $0x20] sm:$0xff] %v2179
        %2196 = vst [vmem:[#allocation3 + $0x28] sm:$0xff] %v2180
        %2197 = vst [vmem:[#allocation3 + $0x30] sm:$0xff] %v2181
        %2198 = vst [vmem:[#allocation3 + $0x38] sm:$0xff] %v2182
        %2199 = vst [vmem:[#allocation3 + $0x40] sm:$0xff] %v2183
        %2200 = vst [vmem:[#allocation3 + $0x48] sm:$0xff] %v2184
        %2201 = vst [vmem:[#allocation3 + $0x50] sm:$0xff] %v2185
        %2202 = vst [vmem:[#allocation3 + $0x58] sm:$0xff] %v2186
        %2203 = vst [vmem:[#allocation3 + $0x60] sm:$0xff] %v2187
        %2204 = vst [vmem:[#allocation3 + $0x68] sm:$0xff] %v2188
        %2205 = vst [vmem:[#allocation3 + $0x70] sm:$0xff] %v2189
        %2206 = vst [vmem:[#allocation3 + $0x78] sm:$0xff] %v2190
        %v2207 = vld [vmem:[#allocation2] sm:$0xc]
        %v2208 = vld [vmem:[#allocation2 + $0x4] sm:$0xf]
        %v2209 = vld [vmem:[#allocation2 + $0x8] sm:$0x7]
        %v2210 = vld [vmem:[#allocation2 + $0xc] sm:$0xc]
        %v2211 = vld [vmem:[#allocation2 + $0x10] sm:$0xf]
        %v2212 = vld [vmem:[#allocation2 + $0x14] sm:$0x7]
        %v2213 = vld [vmem:[#allocation2 + $0x18] sm:$0xc]
        %v2214 = vld [vmem:[#allocation2 + $0x1c] sm:$0xf]
        %v2215 = vld [vmem:[#allocation2 + $0x20] sm:$0x7]
        %v2216 = vld [vmem:[#allocation2 + $0x24] sm:$0xc]
        %v2217 = vld [vmem:[#allocation2 + $0x28] sm:$0xf]
        %v2218 = vld [vmem:[#allocation2 + $0x2c] sm:$0x7]
        %v2219 = vld [vmem:[#allocation2 + $0x30] sm:$0xc]
        %v2220 = vld [vmem:[#allocation2 + $0x34] sm:$0xf]
        %v2221 = vld [vmem:[#allocation2 + $0x38] sm:$0x7]
        %v2222 = vld [vmem:[#allocation2 + $0x3c] sm:$0xc]
        %v2223 = vld [vmem:[#allocation2 + $0x40] sm:$0xf]
        %v2224 = vld [vmem:[#allocation2 + $0x44] sm:$0x7]
        %v2225 = vld [vmem:[#allocation2 + $0x48] sm:$0xc]
        %v2226 = vld [vmem:[#allocation2 + $0x4c] sm:$0xf]
        %v2227 = vld [vmem:[#allocation2 + $0x50] sm:$0x7]
        %v2228 = vld [vmem:[#allocation2 + $0x54] sm:$0xc]
        %v2229 = vld [vmem:[#allocation2 + $0x58] sm:$0xf]
        %v2230 = vld [vmem:[#allocation2 + $0x5c] sm:$0x7]
        %v2232 = vshrl.u32 %v2207, 16
        %v2234 = vrot.slane %v2232, 6
        %v2235 = vshll.u32 %v2207, 16
        %v2237 = vrot.slane %v2235, 7
        %v2238 = vor.u32 %v2234, %v2237
        %v2239 = vrot.slane %v2238, 4
        %v2241 = vshrl.u32 %v2208, 16
        %v2243 = vrot.slane %v2241, 6
        %v2244 = vshll.u32 %v2208, 16
        %v2246 = vrot.slane %v2244, 7
        %v2247 = vor.u32 %v2243, %v2246
        %v2248 = vsel %vm320, %v2239, %v2247
        %v2249 = vrot.slane %v2247, 4
        %v2251 = vshrl.u32 %v2209, 16
        %v2253 = vrot.slane %v2251, 6
        %v2254 = vshll.u32 %v2209, 16
        %v2256 = vrot.slane %v2254, 7
        %v2257 = vor.u32 %v2253, %v2256
        %v2258 = vsel %vm320, %v2249, %v2257
        %v2260 = vshrl.u32 %v2210, 16
        %v2262 = vrot.slane %v2260, 6
        %v2263 = vshll.u32 %v2210, 16
        %v2265 = vrot.slane %v2263, 7
        %v2266 = vor.u32 %v2262, %v2265
        %v2267 = vrot.slane %v2266, 4
        %v2269 = vshrl.u32 %v2211, 16
        %v2271 = vrot.slane %v2269, 6
        %v2272 = vshll.u32 %v2211, 16
        %v2274 = vrot.slane %v2272, 7
        %v2275 = vor.u32 %v2271, %v2274
        %v2276 = vsel %vm320, %v2267, %v2275
        %v2277 = vrot.slane %v2275, 4
        %v2279 = vshrl.u32 %v2212, 16
        %v2281 = vrot.slane %v2279, 6
        %v2282 = vshll.u32 %v2212, 16
        %v2284 = vrot.slane %v2282, 7
        %v2285 = vor.u32 %v2281, %v2284
        %v2286 = vsel %vm320, %v2277, %v2285
        %v2288 = vshrl.u32 %v2213, 16
        %v2290 = vrot.slane %v2288, 6
        %v2291 = vshll.u32 %v2213, 16
        %v2293 = vrot.slane %v2291, 7
        %v2294 = vor.u32 %v2290, %v2293
        %v2295 = vrot.slane %v2294, 4
        %v2297 = vshrl.u32 %v2214, 16
        %v2299 = vrot.slane %v2297, 6
        %v2300 = vshll.u32 %v2214, 16
        %v2302 = vrot.slane %v2300, 7
        %v2303 = vor.u32 %v2299, %v2302
        %v2304 = vsel %vm320, %v2295, %v2303
        %v2305 = vrot.slane %v2303, 4
        %v2307 = vshrl.u32 %v2215, 16
        %v2309 = vrot.slane %v2307, 6
        %v2310 = vshll.u32 %v2215, 16
        %v2312 = vrot.slane %v2310, 7
        %v2313 = vor.u32 %v2309, %v2312
        %v2314 = vsel %vm320, %v2305, %v2313
        %v2316 = vshrl.u32 %v2216, 16
        %v2318 = vrot.slane %v2316, 6
        %v2319 = vshll.u32 %v2216, 16
        %v2321 = vrot.slane %v2319, 7
        %v2322 = vor.u32 %v2318, %v2321
        %v2323 = vrot.slane %v2322, 4
        %v2325 = vshrl.u32 %v2217, 16
        %v2327 = vrot.slane %v2325, 6
        %v2328 = vshll.u32 %v2217, 16
        %v2330 = vrot.slane %v2328, 7
        %v2331 = vor.u32 %v2327, %v2330
        %v2332 = vsel %vm320, %v2323, %v2331
        %v2333 = vrot.slane %v2331, 4
        %v2335 = vshrl.u32 %v2218, 16
        %v2337 = vrot.slane %v2335, 6
        %v2338 = vshll.u32 %v2218, 16
        %v2340 = vrot.slane %v2338, 7
        %v2341 = vor.u32 %v2337, %v2340
        %v2342 = vsel %vm320, %v2333, %v2341
        %v2344 = vshrl.u32 %v2219, 16
        %v2346 = vrot.slane %v2344, 6
        %v2347 = vshll.u32 %v2219, 16
        %v2349 = vrot.slane %v2347, 7
        %v2350 = vor.u32 %v2346, %v2349
        %v2351 = vrot.slane %v2350, 4
        %v2353 = vshrl.u32 %v2220, 16
        %v2355 = vrot.slane %v2353, 6
        %v2356 = vshll.u32 %v2220, 16
        %v2358 = vrot.slane %v2356, 7
        %v2359 = vor.u32 %v2355, %v2358
        %v2360 = vsel %vm320, %v2351, %v2359
        %v2361 = vrot.slane %v2359, 4
        %v2363 = vshrl.u32 %v2221, 16
        %v2365 = vrot.slane %v2363, 6
        %v2366 = vshll.u32 %v2221, 16
        %v2368 = vrot.slane %v2366, 7
        %v2369 = vor.u32 %v2365, %v2368
        %v2370 = vsel %vm320, %v2361, %v2369
        %v2372 = vshrl.u32 %v2222, 16
        %v2374 = vrot.slane %v2372, 6
        %v2375 = vshll.u32 %v2222, 16
        %v2377 = vrot.slane %v2375, 7
        %v2378 = vor.u32 %v2374, %v2377
        %v2379 = vrot.slane %v2378, 4
        %v2381 = vshrl.u32 %v2223, 16
        %v2383 = vrot.slane %v2381, 6
        %v2384 = vshll.u32 %v2223, 16
        %v2386 = vrot.slane %v2384, 7
        %v2387 = vor.u32 %v2383, %v2386
        %v2388 = vsel %vm320, %v2379, %v2387
        %v2389 = vrot.slane %v2387, 4
        %v2391 = vshrl.u32 %v2224, 16
        %v2393 = vrot.slane %v2391, 6
        %v2394 = vshll.u32 %v2224, 16
        %v2396 = vrot.slane %v2394, 7
        %v2397 = vor.u32 %v2393, %v2396
        %v2398 = vsel %vm320, %v2389, %v2397
        %v2400 = vshrl.u32 %v2225, 16
        %v2402 = vrot.slane %v2400, 6
        %v2403 = vshll.u32 %v2225, 16
        %v2405 = vrot.slane %v2403, 7
        %v2406 = vor.u32 %v2402, %v2405
        %v2407 = vrot.slane %v2406, 4
        %v2409 = vshrl.u32 %v2226, 16
        %v2411 = vrot.slane %v2409, 6
        %v2412 = vshll.u32 %v2226, 16
        %v2414 = vrot.slane %v2412, 7
        %v2415 = vor.u32 %v2411, %v2414
        %v2416 = vsel %vm320, %v2407, %v2415
        %v2417 = vrot.slane %v2415, 4
        %v2419 = vshrl.u32 %v2227, 16
        %v2421 = vrot.slane %v2419, 6
        %v2422 = vshll.u32 %v2227, 16
        %v2424 = vrot.slane %v2422, 7
        %v2425 = vor.u32 %v2421, %v2424
        %v2426 = vsel %vm320, %v2417, %v2425
        %v2428 = vshrl.u32 %v2228, 16
        %v2430 = vrot.slane %v2428, 6
        %v2431 = vshll.u32 %v2228, 16
        %v2433 = vrot.slane %v2431, 7
        %v2434 = vor.u32 %v2430, %v2433
        %v2435 = vrot.slane %v2434, 4
        %v2437 = vshrl.u32 %v2229, 16
        %v2439 = vrot.slane %v2437, 6
        %v2440 = vshll.u32 %v2229, 16
        %v2442 = vrot.slane %v2440, 7
        %v2443 = vor.u32 %v2439, %v2442
        %v2444 = vsel %vm320, %v2435, %v2443
        %v2445 = vrot.slane %v2443, 4
        %v2447 = vshrl.u32 %v2230, 16
        %v2449 = vrot.slane %v2447, 6
        %v2450 = vshll.u32 %v2230, 16
        %v2452 = vrot.slane %v2450, 7
        %v2453 = vor.u32 %v2449, %v2452
        %v2454 = vsel %vm320, %v2445, %v2453
        %s2455 = scalar_lea.vmem [#allocation4], 320
        %v2456 = vld [vmem:[%s2455] sm:$0xf]
        %v2457 = vld [vmem:[%s2455 + $0x4] sm:$0xf]
        %v2458 = vld [vmem:[%s2455 + $0x8] sm:$0xf]
        %v2459 = vld [vmem:[%s2455 + $0xc] sm:$0xf]
        %v2460 = vld [vmem:[%s2455 + $0x10] sm:$0xf]
        %v2461 = vld [vmem:[%s2455 + $0x14] sm:$0xf]
        %v2462 = vld [vmem:[%s2455 + $0x18] sm:$0xf]
        %v2463 = vld [vmem:[%s2455 + $0x1c] sm:$0xf]
        %v2464 = vld [vmem:[%s2455 + $0x20] sm:$0xf]
        %v2465 = vld [vmem:[%s2455 + $0x24] sm:$0xf]
        %v2466 = vld [vmem:[%s2455 + $0x28] sm:$0xf]
        %v2467 = vld [vmem:[%s2455 + $0x2c] sm:$0xf]
        %v2468 = vld [vmem:[%s2455 + $0x30] sm:$0xf]
        %v2469 = vld [vmem:[%s2455 + $0x34] sm:$0xf]
        %v2470 = vld [vmem:[%s2455 + $0x38] sm:$0xf]
        %v2471 = vld [vmem:[%s2455 + $0x3c] sm:$0xf]
        %v2472 = vunpack.c.l.b16 %v2248
        %v2473 = vunpack.c.l.b16 %v2258
        %v2474 = vunpack.c.l.b16 %v2276
        %v2475 = vunpack.c.l.b16 %v2286
        %v2476 = vunpack.c.l.b16 %v2304
        %v2477 = vunpack.c.l.b16 %v2314
        %v2478 = vunpack.c.l.b16 %v2332
        %v2479 = vunpack.c.l.b16 %v2342
        %v2480 = vunpack.c.l.b16 %v2360
        %v2481 = vunpack.c.l.b16 %v2370
        %v2482 = vunpack.c.l.b16 %v2388
        %v2483 = vunpack.c.l.b16 %v2398
        %v2484 = vunpack.c.l.b16 %v2416
        %v2485 = vunpack.c.l.b16 %v2426
        %v2486 = vunpack.c.l.b16 %v2444
        %v2487 = vunpack.c.l.b16 %v2454
        %v2488 = vpack.c.b16 %v2473, %v2472
        %v2489 = vpack.c.b16 %v2475, %v2474
        %v2490 = vpack.c.b16 %v2477, %v2476
        %v2491 = vpack.c.b16 %v2479, %v2478
        %v2492 = vpack.c.b16 %v2481, %v2480
        %v2493 = vpack.c.b16 %v2483, %v2482
        %v2494 = vpack.c.b16 %v2485, %v2484
        %v2495 = vpack.c.b16 %v2487, %v2486
        %v2520 = vunpack.c.l.b16 %v2456
        %v2521 = vunpack.c.l.b16 %v2457
        %v2522 = vunpack.c.l.b16 %v2458
        %v2523 = vunpack.c.l.b16 %v2459
        %v2524 = vunpack.c.l.b16 %v2460
        %v2525 = vunpack.c.l.b16 %v2461
        %v2526 = vunpack.c.l.b16 %v2462
        %v2527 = vunpack.c.l.b16 %v2463
        %v2528 = vunpack.c.l.b16 %v2464
        %v2529 = vunpack.c.l.b16 %v2465
        %v2530 = vunpack.c.l.b16 %v2466
        %v2531 = vunpack.c.l.b16 %v2467
        %v2532 = vunpack.c.l.b16 %v2468
        %v2533 = vunpack.c.l.b16 %v2469
        %v2534 = vunpack.c.l.b16 %v2470
        %v2535 = vunpack.c.l.b16 %v2471
        %v2536 = vpack.c.b16 %v2521, %v2520
        %v2537 = vpack.c.b16 %v2523, %v2522
        %v2538 = vpack.c.b16 %v2525, %v2524
        %v2539 = vpack.c.b16 %v2527, %v2526
        %v2540 = vpack.c.b16 %v2529, %v2528
        %v2541 = vpack.c.b16 %v2531, %v2530
        %v2542 = vpack.c.b16 %v2533, %v2532
        %v2543 = vpack.c.b16 %v2535, %v2534
        %2552 = vmatpush.bf16.msra.mxu0 %v2543
        %2553 = vmatpush.bf16.msra.mxu0 %v2542
        %2554 = vmatpush.bf16.msra.mxu0 %v2541
        %2555 = vmatpush.bf16.msra.mxu0 %v2540
        %2556 = vmatpush.bf16.msra.mxu0 %v2539
        %2557 = vmatpush.bf16.msra.mxu0 %v2538
        %2558 = vmatpush.bf16.msra.mxu0 %v2537
        %2559 = vmatpush.bf16.msra.mxu0 %v2536
        %2560 = vmatmul.bf16.gmra.mxu0 %v2488
        %v2561 = vpop.f32.mrf.mxu0
        %v2562 = vadd.f32 0.0, %v2561
        %v2563 = vpop.f32.mrf.mxu0
        %v2564 = vadd.f32 0.0, %v2563
        %2565 = vmatmul.bf16.gmra.mxu0 %v2489
        %v2566 = vpop.f32.mrf.mxu0
        %v2567 = vadd.f32 0.0, %v2566
        %v2568 = vpop.f32.mrf.mxu0
        %v2569 = vadd.f32 0.0, %v2568
        %2570 = vmatmul.bf16.gmra.mxu0 %v2490
        %v2571 = vpop.f32.mrf.mxu0
        %v2572 = vadd.f32 0.0, %v2571
        %v2573 = vpop.f32.mrf.mxu0
        %v2574 = vadd.f32 0.0, %v2573
        %2575 = vmatmul.bf16.gmra.mxu0 %v2491
        %v2576 = vpop.f32.mrf.mxu0
        %v2577 = vadd.f32 0.0, %v2576
        %v2578 = vpop.f32.mrf.mxu0
        %v2579 = vadd.f32 0.0, %v2578
        %2580 = vmatmul.bf16.gmra.mxu0 %v2492
        %v2581 = vpop.f32.mrf.mxu0
        %v2582 = vadd.f32 0.0, %v2581
        %v2583 = vpop.f32.mrf.mxu0
        %v2584 = vadd.f32 0.0, %v2583
        %2585 = vmatmul.bf16.gmra.mxu0 %v2493
        %v2586 = vpop.f32.mrf.mxu0
        %v2587 = vadd.f32 0.0, %v2586
        %v2588 = vpop.f32.mrf.mxu0
        %v2589 = vadd.f32 0.0, %v2588
        %2590 = vmatmul.bf16.gmra.mxu0 %v2494
        %v2591 = vpop.f32.mrf.mxu0
        %v2592 = vadd.f32 0.0, %v2591
        %v2593 = vpop.f32.mrf.mxu0
        %v2594 = vadd.f32 0.0, %v2593
        %2595 = vmatmul.bf16.gmra.mxu0 %v2495
        %v2596 = vpop.f32.mrf.mxu0
        %v2597 = vadd.f32 0.0, %v2596
        %v2598 = vpop.f32.mrf.mxu0
        %v2599 = vadd.f32 0.0, %v2598
        %2600 = vdwg.mxu0
        %v2601 = vld [vmem:[#allocation3] sm:$0xff]
        %v2602 = vld [vmem:[#allocation3 + $0x8] sm:$0xff]
        %v2603 = vld [vmem:[#allocation3 + $0x10] sm:$0xff]
        %v2604 = vld [vmem:[#allocation3 + $0x18] sm:$0xff]
        %v2605 = vld [vmem:[#allocation3 + $0x20] sm:$0xff]
        %v2606 = vld [vmem:[#allocation3 + $0x28] sm:$0xff]
        %v2607 = vld [vmem:[#allocation3 + $0x30] sm:$0xff]
        %v2608 = vld [vmem:[#allocation3 + $0x38] sm:$0xff]
        %v2609 = vld [vmem:[#allocation3 + $0x40] sm:$0xff]
        %v2610 = vld [vmem:[#allocation3 + $0x48] sm:$0xff]
        %v2611 = vld [vmem:[#allocation3 + $0x50] sm:$0xff]
        %v2612 = vld [vmem:[#allocation3 + $0x58] sm:$0xff]
        %v2613 = vld [vmem:[#allocation3 + $0x60] sm:$0xff]
        %v2614 = vld [vmem:[#allocation3 + $0x68] sm:$0xff]
        %v2615 = vld [vmem:[#allocation3 + $0x70] sm:$0xff]
        %v2616 = vld [vmem:[#allocation3 + $0x78] sm:$0xff]
        %v2617 = vadd.f32 %v2601, %v2562
        %v2618 = vadd.f32 %v2602, %v2564
        %v2619 = vadd.f32 %v2603, %v2567
        %v2620 = vadd.f32 %v2604, %v2569
        %v2621 = vadd.f32 %v2605, %v2572
        %v2622 = vadd.f32 %v2606, %v2574
        %v2623 = vadd.f32 %v2607, %v2577
        %v2624 = vadd.f32 %v2608, %v2579
        %v2625 = vadd.f32 %v2609, %v2582
        %v2626 = vadd.f32 %v2610, %v2584
        %v2627 = vadd.f32 %v2611, %v2587
        %v2628 = vadd.f32 %v2612, %v2589
        %v2629 = vadd.f32 %v2613, %v2592
        %v2630 = vadd.f32 %v2614, %v2594
        %v2631 = vadd.f32 %v2615, %v2597
        %v2632 = vadd.f32 %v2616, %v2599
        %2633 = vst [vmem:[#allocation3] sm:$0xff] %v2617
        %2634 = vst [vmem:[#allocation3 + $0x8] sm:$0xff] %v2618
        %2635 = vst [vmem:[#allocation3 + $0x10] sm:$0xff] %v2619
        %2636 = vst [vmem:[#allocation3 + $0x18] sm:$0xff] %v2620
        %2637 = vst [vmem:[#allocation3 + $0x20] sm:$0xff] %v2621
        %2638 = vst [vmem:[#allocation3 + $0x28] sm:$0xff] %v2622
        %2639 = vst [vmem:[#allocation3 + $0x30] sm:$0xff] %v2623
        %2640 = vst [vmem:[#allocation3 + $0x38] sm:$0xff] %v2624
        %2641 = vst [vmem:[#allocation3 + $0x40] sm:$0xff] %v2625
        %2642 = vst [vmem:[#allocation3 + $0x48] sm:$0xff] %v2626
        %2643 = vst [vmem:[#allocation3 + $0x50] sm:$0xff] %v2627
        %2644 = vst [vmem:[#allocation3 + $0x58] sm:$0xff] %v2628
        %2645 = vst [vmem:[#allocation3 + $0x60] sm:$0xff] %v2629
        %2646 = vst [vmem:[#allocation3 + $0x68] sm:$0xff] %v2630
        %2647 = vst [vmem:[#allocation3 + $0x70] sm:$0xff] %v2631
        %2648 = vst [vmem:[#allocation3 + $0x78] sm:$0xff] %v2632
        %v2649 = vld [vmem:[#allocation2] sm:$0x8]
        %v2650 = vld [vmem:[#allocation2 + $0x4] sm:$0xf]
        %v2651 = vld [vmem:[#allocation2 + $0x8] sm:$0x7]
        %v2652 = vld [vmem:[#allocation2 + $0xc] sm:$0x8]
        %v2653 = vld [vmem:[#allocation2 + $0x10] sm:$0xf]
        %v2654 = vld [vmem:[#allocation2 + $0x14] sm:$0x7]
        %v2655 = vld [vmem:[#allocation2 + $0x18] sm:$0x8]
        %v2656 = vld [vmem:[#allocation2 + $0x1c] sm:$0xf]
        %v2657 = vld [vmem:[#allocation2 + $0x20] sm:$0x7]
        %v2658 = vld [vmem:[#allocation2 + $0x24] sm:$0x8]
        %v2659 = vld [vmem:[#allocation2 + $0x28] sm:$0xf]
        %v2660 = vld [vmem:[#allocation2 + $0x2c] sm:$0x7]
        %v2661 = vld [vmem:[#allocation2 + $0x30] sm:$0x8]
        %v2662 = vld [vmem:[#allocation2 + $0x34] sm:$0xf]
        %v2663 = vld [vmem:[#allocation2 + $0x38] sm:$0x7]
        %v2664 = vld [vmem:[#allocation2 + $0x3c] sm:$0x8]
        %v2665 = vld [vmem:[#allocation2 + $0x40] sm:$0xf]
        %v2666 = vld [vmem:[#allocation2 + $0x44] sm:$0x7]
        %v2667 = vld [vmem:[#allocation2 + $0x48] sm:$0x8]
        %v2668 = vld [vmem:[#allocation2 + $0x4c] sm:$0xf]
        %v2669 = vld [vmem:[#allocation2 + $0x50] sm:$0x7]
        %v2670 = vld [vmem:[#allocation2 + $0x54] sm:$0x8]
        %v2671 = vld [vmem:[#allocation2 + $0x58] sm:$0xf]
        %v2672 = vld [vmem:[#allocation2 + $0x5c] sm:$0x7]
        %vm2697 = vcmask 1040384
        %vm2698 = vcmask 1044484
        %vm2699 = vmor %vm2697, %vm2698
        %v2700 = vrot.slane %v2649, 7
        %v2701 = vrot.slane %v2700, 4
        %v2702 = vrot.slane %v2650, 7
        %v2703 = vsel %vm2699, %v2701, %v2702
        %v2704 = vrot.slane %v2702, 4
        %v2705 = vrot.slane %v2651, 7
        %v2706 = vsel %vm2699, %v2704, %v2705
        %v2707 = vrot.slane %v2652, 7
        %v2708 = vrot.slane %v2707, 4
        %v2709 = vrot.slane %v2653, 7
        %v2710 = vsel %vm2699, %v2708, %v2709
        %v2711 = vrot.slane %v2709, 4
        %v2712 = vrot.slane %v2654, 7
        %v2713 = vsel %vm2699, %v2711, %v2712
        %v2714 = vrot.slane %v2655, 7
        %v2715 = vrot.slane %v2714, 4
        %v2716 = vrot.slane %v2656, 7
        %v2717 = vsel %vm2699, %v2715, %v2716
        %v2718 = vrot.slane %v2716, 4
        %v2719 = vrot.slane %v2657, 7
        %v2720 = vsel %vm2699, %v2718, %v2719
        %v2721 = vrot.slane %v2658, 7
        %v2722 = vrot.slane %v2721, 4
        %v2723 = vrot.slane %v2659, 7
        %v2724 = vsel %vm2699, %v2722, %v2723
        %v2725 = vrot.slane %v2723, 4
        %v2726 = vrot.slane %v2660, 7
        %v2727 = vsel %vm2699, %v2725, %v2726
        %v2728 = vrot.slane %v2661, 7
        %v2729 = vrot.slane %v2728, 4
        %v2730 = vrot.slane %v2662, 7
        %v2731 = vsel %vm2699, %v2729, %v2730
        %v2732 = vrot.slane %v2730, 4
        %v2733 = vrot.slane %v2663, 7
        %v2734 = vsel %vm2699, %v2732, %v2733
        %v2735 = vrot.slane %v2664, 7
        %v2736 = vrot.slane %v2735, 4
        %v2737 = vrot.slane %v2665, 7
        %v2738 = vsel %vm2699, %v2736, %v2737
        %v2739 = vrot.slane %v2737, 4
        %v2740 = vrot.slane %v2666, 7
        %v2741 = vsel %vm2699, %v2739, %v2740
        %v2742 = vrot.slane %v2667, 7
        %v2743 = vrot.slane %v2742, 4
        %v2744 = vrot.slane %v2668, 7
        %v2745 = vsel %vm2699, %v2743, %v2744
        %v2746 = vrot.slane %v2744, 4
        %v2747 = vrot.slane %v2669, 7
        %v2748 = vsel %vm2699, %v2746, %v2747
        %v2749 = vrot.slane %v2670, 7
        %v2750 = vrot.slane %v2749, 4
        %v2751 = vrot.slane %v2671, 7
        %v2752 = vsel %vm2699, %v2750, %v2751
        %v2753 = vrot.slane %v2751, 4
        %v2754 = vrot.slane %v2672, 7
        %v2755 = vsel %vm2699, %v2753, %v2754
        %s2756 = scalar_lea.vmem [#allocation4], 384
        %v2757 = vld [vmem:[%s2756] sm:$0xf]
        %v2758 = vld [vmem:[%s2756 + $0x4] sm:$0xf]
        %v2759 = vld [vmem:[%s2756 + $0x8] sm:$0xf]
        %v2760 = vld [vmem:[%s2756 + $0xc] sm:$0xf]
        %v2761 = vld [vmem:[%s2756 + $0x10] sm:$0xf]
        %v2762 = vld [vmem:[%s2756 + $0x14] sm:$0xf]
        %v2763 = vld [vmem:[%s2756 + $0x18] sm:$0xf]
        %v2764 = vld [vmem:[%s2756 + $0x1c] sm:$0xf]
        %v2765 = vld [vmem:[%s2756 + $0x20] sm:$0xf]
        %v2766 = vld [vmem:[%s2756 + $0x24] sm:$0xf]
        %v2767 = vld [vmem:[%s2756 + $0x28] sm:$0xf]
        %v2768 = vld [vmem:[%s2756 + $0x2c] sm:$0xf]
        %v2769 = vld [vmem:[%s2756 + $0x30] sm:$0xf]
        %v2770 = vld [vmem:[%s2756 + $0x34] sm:$0xf]
        %v2771 = vld [vmem:[%s2756 + $0x38] sm:$0xf]
        %v2772 = vld [vmem:[%s2756 + $0x3c] sm:$0xf]
        %v2773 = vunpack.c.l.b16 %v2703
        %v2774 = vunpack.c.l.b16 %v2706
        %v2775 = vunpack.c.l.b16 %v2710
        %v2776 = vunpack.c.l.b16 %v2713
        %v2777 = vunpack.c.l.b16 %v2717
        %v2778 = vunpack.c.l.b16 %v2720
        %v2779 = vunpack.c.l.b16 %v2724
        %v2780 = vunpack.c.l.b16 %v2727
        %v2781 = vunpack.c.l.b16 %v2731
        %v2782 = vunpack.c.l.b16 %v2734
        %v2783 = vunpack.c.l.b16 %v2738
        %v2784 = vunpack.c.l.b16 %v2741
        %v2785 = vunpack.c.l.b16 %v2745
        %v2786 = vunpack.c.l.b16 %v2748
        %v2787 = vunpack.c.l.b16 %v2752
        %v2788 = vunpack.c.l.b16 %v2755
        %v2789 = vpack.c.b16 %v2774, %v2773
        %v2790 = vpack.c.b16 %v2776, %v2775
        %v2791 = vpack.c.b16 %v2778, %v2777
        %v2792 = vpack.c.b16 %v2780, %v2779
        %v2793 = vpack.c.b16 %v2782, %v2781
        %v2794 = vpack.c.b16 %v2784, %v2783
        %v2795 = vpack.c.b16 %v2786, %v2785
        %v2796 = vpack.c.b16 %v2788, %v2787
        %v2821 = vunpack.c.l.b16 %v2757
        %v2822 = vunpack.c.l.b16 %v2758
        %v2823 = vunpack.c.l.b16 %v2759
        %v2824 = vunpack.c.l.b16 %v2760
        %v2825 = vunpack.c.l.b16 %v2761
        %v2826 = vunpack.c.l.b16 %v2762
        %v2827 = vunpack.c.l.b16 %v2763
        %v2828 = vunpack.c.l.b16 %v2764
        %v2829 = vunpack.c.l.b16 %v2765
        %v2830 = vunpack.c.l.b16 %v2766
        %v2831 = vunpack.c.l.b16 %v2767
        %v2832 = vunpack.c.l.b16 %v2768
        %v2833 = vunpack.c.l.b16 %v2769
        %v2834 = vunpack.c.l.b16 %v2770
        %v2835 = vunpack.c.l.b16 %v2771
        %v2836 = vunpack.c.l.b16 %v2772
        %v2837 = vpack.c.b16 %v2822, %v2821
        %v2838 = vpack.c.b16 %v2824, %v2823
        %v2839 = vpack.c.b16 %v2826, %v2825
        %v2840 = vpack.c.b16 %v2828, %v2827
        %v2841 = vpack.c.b16 %v2830, %v2829
        %v2842 = vpack.c.b16 %v2832, %v2831
        %v2843 = vpack.c.b16 %v2834, %v2833
        %v2844 = vpack.c.b16 %v2836, %v2835
        %2853 = vmatpush.bf16.msra.mxu0 %v2844
        %2854 = vmatpush.bf16.msra.mxu0 %v2843
        %2855 = vmatpush.bf16.msra.mxu0 %v2842
        %2856 = vmatpush.bf16.msra.mxu0 %v2841
        %2857 = vmatpush.bf16.msra.mxu0 %v2840
        %2858 = vmatpush.bf16.msra.mxu0 %v2839
        %2859 = vmatpush.bf16.msra.mxu0 %v2838
        %2860 = vmatpush.bf16.msra.mxu0 %v2837
        %2861 = vmatmul.bf16.gmra.mxu0 %v2789
        %v2862 = vpop.f32.mrf.mxu0
        %v2863 = vadd.f32 0.0, %v2862
        %v2864 = vpop.f32.mrf.mxu0
        %v2865 = vadd.f32 0.0, %v2864
        %2866 = vmatmul.bf16.gmra.mxu0 %v2790
        %v2867 = vpop.f32.mrf.mxu0
        %v2868 = vadd.f32 0.0, %v2867
        %v2869 = vpop.f32.mrf.mxu0
        %v2870 = vadd.f32 0.0, %v2869
        %2871 = vmatmul.bf16.gmra.mxu0 %v2791
        %v2872 = vpop.f32.mrf.mxu0
        %v2873 = vadd.f32 0.0, %v2872
        %v2874 = vpop.f32.mrf.mxu0
        %v2875 = vadd.f32 0.0, %v2874
        %2876 = vmatmul.bf16.gmra.mxu0 %v2792
        %v2877 = vpop.f32.mrf.mxu0
        %v2878 = vadd.f32 0.0, %v2877
        %v2879 = vpop.f32.mrf.mxu0
        %v2880 = vadd.f32 0.0, %v2879
        %2881 = vmatmul.bf16.gmra.mxu0 %v2793
        %v2882 = vpop.f32.mrf.mxu0
        %v2883 = vadd.f32 0.0, %v2882
        %v2884 = vpop.f32.mrf.mxu0
        %v2885 = vadd.f32 0.0, %v2884
        %2886 = vmatmul.bf16.gmra.mxu0 %v2794
        %v2887 = vpop.f32.mrf.mxu0
        %v2888 = vadd.f32 0.0, %v2887
        %v2889 = vpop.f32.mrf.mxu0
        %v2890 = vadd.f32 0.0, %v2889
        %2891 = vmatmul.bf16.gmra.mxu0 %v2795
        %v2892 = vpop.f32.mrf.mxu0
        %v2893 = vadd.f32 0.0, %v2892
        %v2894 = vpop.f32.mrf.mxu0
        %v2895 = vadd.f32 0.0, %v2894
        %2896 = vmatmul.bf16.gmra.mxu0 %v2796
        %v2897 = vpop.f32.mrf.mxu0
        %v2898 = vadd.f32 0.0, %v2897
        %v2899 = vpop.f32.mrf.mxu0
        %v2900 = vadd.f32 0.0, %v2899
        %2901 = vdwg.mxu0
        %v2902 = vld [vmem:[#allocation3] sm:$0xff]
        %v2903 = vld [vmem:[#allocation3 + $0x8] sm:$0xff]
        %v2904 = vld [vmem:[#allocation3 + $0x10] sm:$0xff]
        %v2905 = vld [vmem:[#allocation3 + $0x18] sm:$0xff]
        %v2906 = vld [vmem:[#allocation3 + $0x20] sm:$0xff]
        %v2907 = vld [vmem:[#allocation3 + $0x28] sm:$0xff]
        %v2908 = vld [vmem:[#allocation3 + $0x30] sm:$0xff]
        %v2909 = vld [vmem:[#allocation3 + $0x38] sm:$0xff]
        %v2910 = vld [vmem:[#allocation3 + $0x40] sm:$0xff]
        %v2911 = vld [vmem:[#allocation3 + $0x48] sm:$0xff]
        %v2912 = vld [vmem:[#allocation3 + $0x50] sm:$0xff]
        %v2913 = vld [vmem:[#allocation3 + $0x58] sm:$0xff]
        %v2914 = vld [vmem:[#allocation3 + $0x60] sm:$0xff]
        %v2915 = vld [vmem:[#allocation3 + $0x68] sm:$0xff]
        %v2916 = vld [vmem:[#allocation3 + $0x70] sm:$0xff]
        %v2917 = vld [vmem:[#allocation3 + $0x78] sm:$0xff]
        %v2918 = vadd.f32 %v2902, %v2863
        %v2919 = vadd.f32 %v2903, %v2865
        %v2920 = vadd.f32 %v2904, %v2868
        %v2921 = vadd.f32 %v2905, %v2870
        %v2922 = vadd.f32 %v2906, %v2873
        %v2923 = vadd.f32 %v2907, %v2875
        %v2924 = vadd.f32 %v2908, %v2878
        %v2925 = vadd.f32 %v2909, %v2880
        %v2926 = vadd.f32 %v2910, %v2883
        %v2927 = vadd.f32 %v2911, %v2885
        %v2928 = vadd.f32 %v2912, %v2888
        %v2929 = vadd.f32 %v2913, %v2890
        %v2930 = vadd.f32 %v2914, %v2893
        %v2931 = vadd.f32 %v2915, %v2895
        %v2932 = vadd.f32 %v2916, %v2898
        %v2933 = vadd.f32 %v2917, %v2900
        %2934 = vst [vmem:[#allocation3] sm:$0xff] %v2918
        %2935 = vst [vmem:[#allocation3 + $0x8] sm:$0xff] %v2919
        %2936 = vst [vmem:[#allocation3 + $0x10] sm:$0xff] %v2920
        %2937 = vst [vmem:[#allocation3 + $0x18] sm:$0xff] %v2921
        %2938 = vst [vmem:[#allocation3 + $0x20] sm:$0xff] %v2922
        %2939 = vst [vmem:[#allocation3 + $0x28] sm:$0xff] %v2923
        %2940 = vst [vmem:[#allocation3 + $0x30] sm:$0xff] %v2924
        %2941 = vst [vmem:[#allocation3 + $0x38] sm:$0xff] %v2925
        %2942 = vst [vmem:[#allocation3 + $0x40] sm:$0xff] %v2926
        %2943 = vst [vmem:[#allocation3 + $0x48] sm:$0xff] %v2927
        %2944 = vst [vmem:[#allocation3 + $0x50] sm:$0xff] %v2928
        %2945 = vst [vmem:[#allocation3 + $0x58] sm:$0xff] %v2929
        %2946 = vst [vmem:[#allocation3 + $0x60] sm:$0xff] %v2930
        %2947 = vst [vmem:[#allocation3 + $0x68] sm:$0xff] %v2931
        %2948 = vst [vmem:[#allocation3 + $0x70] sm:$0xff] %v2932
        %2949 = vst [vmem:[#allocation3 + $0x78] sm:$0xff] %v2933
        %v2950 = vld [vmem:[#allocation3] sm:$0xff]
        %v2951 = vld [vmem:[#allocation3 + $0x8] sm:$0xff]
        %v2952 = vld [vmem:[#allocation3 + $0x10] sm:$0xff]
        %v2953 = vld [vmem:[#allocation3 + $0x18] sm:$0xff]
        %v2954 = vld [vmem:[#allocation3 + $0x20] sm:$0xff]
        %v2955 = vld [vmem:[#allocation3 + $0x28] sm:$0xff]
        %v2956 = vld [vmem:[#allocation3 + $0x30] sm:$0xff]
        %v2957 = vld [vmem:[#allocation3 + $0x38] sm:$0xff]
        %v2958 = vld [vmem:[#allocation3 + $0x40] sm:$0xff]
        %v2959 = vld [vmem:[#allocation3 + $0x48] sm:$0xff]
        %v2960 = vld [vmem:[#allocation3 + $0x50] sm:$0xff]
        %v2961 = vld [vmem:[#allocation3 + $0x58] sm:$0xff]
        %v2962 = vld [vmem:[#allocation3 + $0x60] sm:$0xff]
        %v2963 = vld [vmem:[#allocation3 + $0x68] sm:$0xff]
        %v2964 = vld [vmem:[#allocation3 + $0x70] sm:$0xff]
        %v2965 = vld [vmem:[#allocation3 + $0x78] sm:$0xff]
        %v2966 = vld [vmem:[%s2] sm:$0x1]
        %v2968 = vperm.slane %v2966, 0
        %v2970 = vadd.f32 %v2950, %v2968
        %v2971 = vadd.f32 %v2951, %v2968
        %v2972 = vadd.f32 %v2952, %v2968
        %v2973 = vadd.f32 %v2953, %v2968
        %v2974 = vadd.f32 %v2954, %v2968
        %v2975 = vadd.f32 %v2955, %v2968
        %v2976 = vadd.f32 %v2956, %v2968
        %v2977 = vadd.f32 %v2957, %v2968
        %v2978 = vadd.f32 %v2958, %v2968
        %v2979 = vadd.f32 %v2959, %v2968
        %v2980 = vadd.f32 %v2960, %v2968
        %v2981 = vadd.f32 %v2961, %v2968
        %v2982 = vadd.f32 %v2962, %v2968
        %v2983 = vadd.f32 %v2963, %v2968
        %v2984 = vadd.f32 %v2964, %v2968
        %v2985 = vadd.f32 %v2965, %v2968
        %2986 = vst [vmem:[%s230] sm:$0xff] %v2970
        %2987 = vst [vmem:[%s230 + $0x8] sm:$0xff] %v2971
        %2988 = vst [vmem:[%s230 + $0x10] sm:$0xff] %v2972
        %2989 = vst [vmem:[%s230 + $0x18] sm:$0xff] %v2973
        %2990 = vst [vmem:[%s230 + $0x20] sm:$0xff] %v2974
        %2991 = vst [vmem:[%s230 + $0x28] sm:$0xff] %v2975
        %2992 = vst [vmem:[%s230 + $0x30] sm:$0xff] %v2976
        %2993 = vst [vmem:[%s230 + $0x38] sm:$0xff] %v2977
        %2994 = vst [vmem:[%s230 + $0x40] sm:$0xff] %v2978
        %2995 = vst [vmem:[%s230 + $0x48] sm:$0xff] %v2979
        %2996 = vst [vmem:[%s230 + $0x50] sm:$0xff] %v2980
        %2997 = vst [vmem:[%s230 + $0x58] sm:$0xff] %v2981
        %2998 = vst [vmem:[%s230 + $0x60] sm:$0xff] %v2982
        %2999 = vst [vmem:[%s230 + $0x68] sm:$0xff] %v2983
        %3000 = vst [vmem:[%s230 + $0x70] sm:$0xff] %v2984
        %3001 = vst [vmem:[%s230 + $0x78] sm:$0xff] %v2985
        %s3002 = smul.u32 8, %s20
        %p3003 = scmp.lt.s32.totalorder %s19, 1
        %s3004 = scalar_select %p3003, %s19, 1
        %p3005 = scmp.lt.s32.totalorder %s3002, 15
        %s3006 = scalar_select %p3005, %s3002, 15
        %s3007 = smul.addr %s3006, 2
        %s3008 = smul.addr %s3004, 32
        %s3009 = sadd.s32 %s3007, %s3008
        %s3010 = smul.addr %s3009, 8
        %s3011 = scalar_lea.vmem %s3, %s3010
        // Predicated region
        $region37: #{a_call__.5} parent=31 // pred_check
          %p3012 = pneg %p117
        $region38: #{a_call__.5} parent=31 // pred_check_branch
          %3014 = sbr.rel (%p3012) target = $region40
        $region39: #{a_call__.5} parent=31 // pred_region
          %s3015 = smul.u32 8, %s20
        $region40: #{a_call__.5} parent=31 // pred_fallthru
          _
      $region32: #{a_call__.5} parent=5 // pred_fallthru
        _
      %p3016 = scmp.le.s32.totalorder 2, %s10
      // Predicated region
      $region41: #{a_call__.5} parent=5 // pred_check
        %p3017 = pneg %p3016
      $region42: #{a_call__.5} parent=5 // pred_check_branch
        %3019 = sbr.rel (%p3017) target = $region44
      $region43: #{a_call__.5} parent=5 // pred_region
        %s3020 = ssub.s32 %s10, 2
        // Predicated region
        $region45: #{a_call__.5} parent=43 // pred_check
          %p3021 = pneg %p123
        $region46: #{a_call__.5} parent=43 // pred_check_branch
          %3023 = sbr.rel (%p3021) target = $region48
        $region47: #{a_call__.5} parent=43 // pred_region
          %s3024 = smul.u32 8, %s22
          %p3025 = scmp.lt.s32.totalorder %s21, 1
          %s3026 = scalar_select %p3025, %s21, 1
          %p3027 = scmp.lt.s32.totalorder %s3024, 15
          %s3028 = scalar_select %p3027, %s3024, 15
          %s3029 = smul.addr %s3028, 2
          %s3030 = smul.addr %s3026, 32
          %s3031 = sadd.s32 %s3029, %s3030
          %s3032 = smul.addr %s3031, 8
          %s3033 = scalar_lea.vmem %s3, %s3032
        $region48: #{a_call__.5} parent=43 // pred_fallthru
          _
      $region44: #{a_call__.5} parent=5 // pred_fallthru
        _
    $region6: #{a_call__.5} parent=1 // loop_footer
      %s14 = sadd.s32 1, %s10
    $region7: #{a_call__.5} parent=1 // loop_footer_branch
      %9 = sbr.rel target = $region3
    $region8: #{a_call__.5} parent=1 // loop_exit
      _
    %3034 = vsyncpa [#allocation5], 1
    %s3035 = scalar_lea.sflag [#allocation5], 1
    %3036 = vsyncpa %s3035, 1

</llo_original>
